<compile_context>
chip_gen: v5e
topology: v5e:2x2
jax: 0.10.0
libtpu: 0.0.40
codegen_flags: <defaults>
</compile_context>

<pallas_src>
import functools
import math

import jax
import jax.numpy as jnp
from jax.experimental import pallas as pl
from jax.experimental.pallas import tpu as pltpu

# ----------------------------- config ---------------------------------------
VOCAB = 128
TYPE_VOCAB = 2
MAX_POS = 64
HIDDEN = 32
HEADS = 4
HEAD_DIM = HIDDEN // HEADS
INTER = 64
LAYERS = 2
EPS = 1e-12
NEG_INF = -1e9

ENC_KEYS = ("wqkv", "bqkv", "wo", "bo", "ln1_g", "ln1_b",
            "wi", "bi", "wf", "bf", "ln2_g", "ln2_b")


# ----------------------------- in-kernel helpers -----------------------------
def _layernorm(h, g, b):
    mu = jnp.mean(h, axis=-1, keepdims=True)
    d = h - mu
    var = jnp.mean(d * d, axis=-1, keepdims=True)
    return d * jax.lax.rsqrt(var + EPS) * g + b


def _gelu(y):
    # TODO(synk): HF BERT default is erf-based gelu; tanh approximation used.
    c = 0.7978845608028654
    return 0.5 * y * (1.0 + jnp.tanh(c * (y + 0.044715 * y * y * y)))


def _encoder_stack(x, add_rows, wqkv, bqkv, wo, bo, ln1g, ln1b,
                   wi, bi, wf, bf, ln2g, ln2b, *, batch, seq):
    """Fully unrolled transformer encoder on x: (batch*seq, HIDDEN)."""
    scale = 1.0 / math.sqrt(HEAD_DIM)
    for l in range(LAYERS):
        # fused QKV projection: (BS, 3H)
        qkv = jnp.dot(x, wqkv[l], preferred_element_type=jnp.float32) + bqkv[l]
        ctx_rows = []
        for b in range(batch):
            r0 = b * seq
            head_ctx = []
            for h in range(HEADS):
                c0 = h * HEAD_DIM
                q = qkv[r0:r0 + seq, c0:c0 + HEAD_DIM]
                k = qkv[r0:r0 + seq, HIDDEN + c0:HIDDEN + c0 + HEAD_DIM]
                v = qkv[r0:r0 + seq, 2 * HIDDEN + c0:2 * HIDDEN + c0 + HEAD_DIM]
                s = jnp.einsum("qd,kd->qk", q, k,
                               preferred_element_type=jnp.float32)
                s = s * scale + add_rows[b]
                s = s - jnp.max(s, axis=-1, keepdims=True)
                p = jnp.exp(s)
                p = p / jnp.sum(p, axis=-1, keepdims=True)
                head_ctx.append(
                    jnp.dot(p, v, preferred_element_type=jnp.float32))
            ctx_rows.append(jnp.concatenate(head_ctx, axis=-1))   # (S, H)
        ctx = jnp.concatenate(ctx_rows, axis=0)                    # (BS, H)

        attn = jnp.dot(ctx, wo[l], preferred_element_type=jnp.float32) + bo[l]
        x = _layernorm(attn + x, ln1g[l], ln1b[l])
        inter = _gelu(jnp.dot(x, wi[l], preferred_element_type=jnp.float32)
                      + bi[l])
        ffn = jnp.dot(inter, wf[l], preferred_element_type=jnp.float32) + bf[l]
        x = _layernorm(ffn + x, ln2g[l], ln2b[l])
    return x


def _additive_mask_rows(mask, batch):
    # mask: (B, S) float; returns list of (1, S) additive masks per batch.
    return [jnp.where(mask[b:b + 1, :] > 0.5, 0.0, NEG_INF)
            for b in range(batch)]


# ----------------------------- fused kernels ---------------------------------
def _span_kernel(x_ref, mask_ref, embg_ref, embb_ref,
                 wqkv_ref, bqkv_ref, wo_ref, bo_ref,
                 ln1g_ref, ln1b_ref, wi_ref, bi_ref,
                 wf_ref, bf_ref, ln2g_ref, ln2b_ref,
                 qaw_ref, qab_ref,
                 probs_ref, *, batch, seq):
    """BertForQA: embeddings-LN -> encoder -> QA head -> softmax over seq."""
    add_rows = _additive_mask_rows(mask_ref[...], batch)
    x = _layernorm(x_ref[...], embg_ref[...], embb_ref[...])
    x = _encoder_stack(x, add_rows,
                       wqkv_ref, bqkv_ref, wo_ref, bo_ref,
                       ln1g_ref, ln1b_ref, wi_ref, bi_ref,
                       wf_ref, bf_ref, ln2g_ref, ln2b_ref,
                       batch=batch, seq=seq)
    # QA head + per-batch softmax over the sequence axis (start/end columns).
    for b in range(batch):
        x_b = x[b * seq:(b + 1) * seq, :]                       # (S, H)
        logits_b = jnp.dot(x_b, qaw_ref[...],
                           preferred_element_type=jnp.float32) + qab_ref[...]
        m = jnp.max(logits_b, axis=0, keepdims=True)            # (1, 2)
        e = jnp.exp(logits_b - m)
        probs_ref[b] = e / jnp.sum(e, axis=0, keepdims=True)    # (S, 2)


def _cls_kernel(x_ref, mask_ref, embg_ref, embb_ref,
                wqkv_ref, bqkv_ref, wo_ref, bo_ref,
                ln1g_ref, ln1b_ref, wi_ref, bi_ref,
                wf_ref, bf_ref, ln2g_ref, ln2b_ref,
                poolw_ref, poolb_ref, clsw_ref, clsb_ref,
                diff_ref, *, batch, seq):
    """BERTForCLS: encoder -> pooler(tanh) -> classifier -> logit diff."""
    add_rows = _additive_mask_rows(mask_ref[...], batch)
    x = _layernorm(x_ref[...], embg_ref[...], embb_ref[...])
    x = _encoder_stack(x, add_rows,
                       wqkv_ref, bqkv_ref, wo_ref, bo_ref,
                       ln1g_ref, ln1b_ref, wi_ref, bi_ref,
                       wf_ref, bf_ref, ln2g_ref, ln2b_ref,
                       batch=batch, seq=seq)
    cls_tok = jnp.concatenate([x[b * seq:b * seq + 1, :] for b in range(batch)],
                              axis=0)                            # (B, H)
    pooled = jnp.tanh(jnp.dot(cls_tok, poolw_ref[...],
                              preferred_element_type=jnp.float32)
                      + poolb_ref[...])
    logits = (jnp.dot(pooled, clsw_ref[...],
                      preferred_element_type=jnp.float32) + clsb_ref[...])
    diff_ref[...] = logits[:, 1:2] - logits[:, 0:1]              # (B, 1)


# ----------------------------- pallas_call wrappers ---------------------------
def _full_spec(shape):
    nd = len(shape)
    return pl.BlockSpec(shape, lambda *_: (0,) * nd)


def run_span(p, x_emb, mask_f, batch, seq):
    args = [x_emb, mask_f, p["emb_ln_g"], p["emb_ln_b"],
            *[p[k] for k in ENC_KEYS], p["qa_w"], p["qa_b"]]
    return pl.pallas_call(
        functools.partial(_span_kernel, batch=batch, seq=seq),
        out_shape=jax.ShapeDtypeStruct((batch, seq, 2), jnp.float32),
        grid=(1,),
        in_specs=[_full_spec(a.shape) for a in args],
        out_specs=_full_spec((batch, seq, 2)),
        compiler_params=pltpu.CompilerParams(
            dimension_semantics=("arbitrary",)),
    )(*args)


def run_cls(p, x_emb, mask_f, batch, seq):
    args = [x_emb, mask_f, p["emb_ln_g"], p["emb_ln_b"],
            *[p[k] for k in ENC_KEYS],
            p["pool_w"], p["pool_b"], p["cls_w"], p["cls_b"]]
    return pl.pallas_call(
        functools.partial(_cls_kernel, batch=batch, seq=seq),
        out_shape=jax.ShapeDtypeStruct((batch, 1), jnp.float32),
        grid=(1,),
        in_specs=[_full_spec(a.shape) for a in args],
        out_specs=_full_spec((batch, 1)),
        compiler_params=pltpu.CompilerParams(
            dimension_semantics=("arbitrary",)),
    )(*args)


# ----------------------------- model (glue) ----------------------------------
def init_bert_params(key, head):
    keys = iter(jax.random.split(key, 64))

    def w(shape, scale=0.02):
        return (scale * jax.random.normal(next(keys), shape)).astype(jnp.float32)

    p = {
        "word_emb": w((VOCAB, HIDDEN)),
        "pos_emb": w((MAX_POS, HIDDEN)),
        "type_emb": w((TYPE_VOCAB, HIDDEN)),
        "emb_ln_g": jnp.ones((1, HIDDEN), jnp.float32),
        "emb_ln_b": jnp.zeros((1, HIDDEN), jnp.float32),
        # per-layer weights stacked on a leading LAYERS axis (one kernel input each)
        "wqkv": w((LAYERS, HIDDEN, 3 * HIDDEN)),
        "bqkv": jnp.zeros((LAYERS, 1, 3 * HIDDEN), jnp.float32),
        "wo": w((LAYERS, HIDDEN, HIDDEN)),
        "bo": jnp.zeros((LAYERS, 1, HIDDEN), jnp.float32),
        "ln1_g": jnp.ones((LAYERS, 1, HIDDEN), jnp.float32),
        "ln1_b": jnp.zeros((LAYERS, 1, HIDDEN), jnp.float32),
        "wi": w((LAYERS, HIDDEN, INTER)),
        "bi": jnp.zeros((LAYERS, 1, INTER), jnp.float32),
        "wf": w((LAYERS, INTER, HIDDEN)),
        "bf": jnp.zeros((LAYERS, 1, HIDDEN), jnp.float32),
        "ln2_g": jnp.ones((LAYERS, 1, HIDDEN), jnp.float32),
        "ln2_b": jnp.zeros((LAYERS, 1, HIDDEN), jnp.float32),
    }
    if head == "qa":
        p["qa_w"] = w((HIDDEN, 2))
        p["qa_b"] = jnp.zeros((1, 2), jnp.float32)
    else:  # "cls"
        p["pool_w"] = w((HIDDEN, HIDDEN))
        p["pool_b"] = jnp.zeros((1, HIDDEN), jnp.float32)
        p["cls_w"] = w((HIDDEN, 2))
        p["cls_b"] = jnp.zeros((1, 2), jnp.float32)
    return p


def embed(p, input_ids, token_type_ids):
    # Embedding table gather stays in plain JAX (data-dependent gather).
    b, s = input_ids.shape
    emb = (p["word_emb"][input_ids]
           + p["pos_emb"][None, :s, :]
           + p["type_emb"][token_type_ids])
    return emb.reshape(b * s, HIDDEN).astype(jnp.float32)


@jax.jit
def intensive_reader_forward(span_params, ifv_params,
                             input_ids, token_type_ids, attention_mask):
    """Inference branch of BERTWithIntensiveReader.forward (no targets)."""
    batch, seq = input_ids.shape
    mask_f = attention_mask.astype(jnp.float32)                  # (B, S)

    # --- span_cls = BertForQA: fused encoder + QA head + softmax ------------
    x_span = embed(span_params, input_ids, token_type_ids)
    probs = run_span(span_params, x_span, mask_f, batch, seq)    # (B, S, 2)
    start_probs = probs[:, :, 0]
    end_probs = probs[:, :, 1]

    # --- ifv = BERTForCLS: fused encoder + pooler + classifier --------------
    # (the PyTorch module runs this and discards the result; returned here as
    #  an auxiliary so it is not dead-code-eliminated)
    x_ifv = embed(ifv_params, input_ids, token_type_ids)
    diff = run_cls(ifv_params, x_ifv, mask_f, batch, seq)        # (B, 1)
    ifv_diff = diff[:, 0]

    return (start_probs, end_probs), ifv_diff


# ----------------------------- main ------------------------------------------
if __name__ == "__main__":
    key = jax.random.PRNGKey(0)
    k_span, k_ifv, k_ids = jax.random.split(key, 3)

    span_params = init_bert_params(k_span, head="qa")
    ifv_params = init_bert_params(k_ifv, head="cls")

    batch, seq = 2, 8
    input_ids = jax.random.randint(k_ids, (batch, seq), 0, VOCAB, dtype=jnp.int32)
    token_type_ids = jnp.zeros((batch, seq), jnp.int32)
    attention_mask = jnp.ones((batch, seq), jnp.int32)

    (start_probs, end_probs), ifv_diff = intensive_reader_forward(
        span_params, ifv_params, input_ids, token_type_ids, attention_mask)

    jax.block_until_ready((start_probs, end_probs, ifv_diff))

    assert start_probs.shape == (batch, seq) and end_probs.shape == (batch, seq)
    assert ifv_diff.shape == (batch,)
    # softmax rows sum to ~1
    assert jnp.allclose(jnp.sum(start_probs, axis=-1), 1.0, atol=1e-5)
    assert jnp.allclose(jnp.sum(end_probs, axis=-1), 1.0, atol=1e-5)

    print("KERNEL_OK")
</pallas_src>

<mosaic_0001>
module attributes {stable_mosaic.version = 11 : i64} {
  func.func @_cls_kernel(%arg0: i32, %arg1: memref<16x32xf32, #tpu.memory_space<vmem>>, %arg2: memref<2x8xf32, #tpu.memory_space<vmem>>, %arg3: memref<1x32xf32, #tpu.memory_space<vmem>>, %arg4: memref<1x32xf32, #tpu.memory_space<vmem>>, %arg5: memref<2x32x96xf32, #tpu.memory_space<vmem>>, %arg6: memref<2x1x96xf32, #tpu.memory_space<vmem>>, %arg7: memref<2x32x32xf32, #tpu.memory_space<vmem>>, %arg8: memref<2x1x32xf32, #tpu.memory_space<vmem>>, %arg9: memref<2x1x32xf32, #tpu.memory_space<vmem>>, %arg10: memref<2x1x32xf32, #tpu.memory_space<vmem>>, %arg11: memref<2x32x64xf32, #tpu.memory_space<vmem>>, %arg12: memref<2x1x64xf32, #tpu.memory_space<vmem>>, %arg13: memref<2x64x32xf32, #tpu.memory_space<vmem>>, %arg14: memref<2x1x32xf32, #tpu.memory_space<vmem>>, %arg15: memref<2x1x32xf32, #tpu.memory_space<vmem>>, %arg16: memref<2x1x32xf32, #tpu.memory_space<vmem>>, %arg17: memref<32x32xf32, #tpu.memory_space<vmem>>, %arg18: memref<1x32xf32, #tpu.memory_space<vmem>>, %arg19: memref<32x2xf32, #tpu.memory_space<vmem>>, %arg20: memref<1x2xf32, #tpu.memory_space<vmem>>, %arg21: memref<2x1xf32, #tpu.memory_space<vmem>>) attributes {dimension_semantics = [#tpu.dimension_semantics<arbitrary>], iteration_bounds = array<i64: 1>, scalar_prefetch = 0 : i64, scratch_operands = 0 : i64, tpu.core_type = #tpu.core_type<tc>, window_params = [{pipeline_mode = #tpu.pipeline_mode<synchronous>, transform_indices = @transform_0, window_bounds = array<i64: 16, 32>}, {pipeline_mode = #tpu.pipeline_mode<synchronous>, transform_indices = @transform_1, window_bounds = array<i64: 2, 8>}, {pipeline_mode = #tpu.pipeline_mode<synchronous>, transform_indices = @transform_2, window_bounds = array<i64: 1, 32>}, {pipeline_mode = #tpu.pipeline_mode<synchronous>, transform_indices = @transform_3, window_bounds = array<i64: 1, 32>}, {pipeline_mode = #tpu.pipeline_mode<synchronous>, transform_indices = @transform_4, window_bounds = array<i64: 2, 32, 96>}, {pipeline_mode = #tpu.pipeline_mode<synchronous>, transform_indices = @transform_5, window_bounds = array<i64: 2, 1, 96>}, {pipeline_mode = #tpu.pipeline_mode<synchronous>, transform_indices = @transform_6, window_bounds = array<i64: 2, 32, 32>}, {pipeline_mode = #tpu.pipeline_mode<synchronous>, transform_indices = @transform_7, window_bounds = array<i64: 2, 1, 32>}, {pipeline_mode = #tpu.pipeline_mode<synchronous>, transform_indices = @transform_8, window_bounds = array<i64: 2, 1, 32>}, {pipeline_mode = #tpu.pipeline_mode<synchronous>, transform_indices = @transform_9, window_bounds = array<i64: 2, 1, 32>}, {pipeline_mode = #tpu.pipeline_mode<synchronous>, transform_indices = @transform_10, window_bounds = array<i64: 2, 32, 64>}, {pipeline_mode = #tpu.pipeline_mode<synchronous>, transform_indices = @transform_11, window_bounds = array<i64: 2, 1, 64>}, {pipeline_mode = #tpu.pipeline_mode<synchronous>, transform_indices = @transform_12, window_bounds = array<i64: 2, 64, 32>}, {pipeline_mode = #tpu.pipeline_mode<synchronous>, transform_indices = @transform_13, window_bounds = array<i64: 2, 1, 32>}, {pipeline_mode = #tpu.pipeline_mode<synchronous>, transform_indices = @transform_14, window_bounds = array<i64: 2, 1, 32>}, {pipeline_mode = #tpu.pipeline_mode<synchronous>, transform_indices = @transform_15, window_bounds = array<i64: 2, 1, 32>}, {pipeline_mode = #tpu.pipeline_mode<synchronous>, transform_indices = @transform_16, window_bounds = array<i64: 32, 32>}, {pipeline_mode = #tpu.pipeline_mode<synchronous>, transform_indices = @transform_17, window_bounds = array<i64: 1, 32>}, {pipeline_mode = #tpu.pipeline_mode<synchronous>, transform_indices = @transform_18, window_bounds = array<i64: 32, 2>}, {pipeline_mode = #tpu.pipeline_mode<synchronous>, transform_indices = @transform_19, window_bounds = array<i64: 1, 2>}, {pipeline_mode = #tpu.pipeline_mode<synchronous>, transform_indices = @transform_20, window_bounds = array<i64: 2, 1>}]} {
    %c0 = arith.constant 0 : index
    %c0_0 = arith.constant 0 : index
    %0 = vector.load %arg2[%c0, %c0_0] : memref<2x8xf32, #tpu.memory_space<vmem>>, vector<2x8xf32>
    %1 = vector.extract_strided_slice %0 {offsets = [0, 0], sizes = [1, 8], strides = [1, 1]} : vector<2x8xf32> to vector<1x8xf32>
    %cst = arith.constant 5.000000e-01 : f32
    %2 = vector.broadcast %cst : f32 to vector<1x8xf32>
    %3 = arith.cmpf ogt, %1, %2 : vector<1x8xf32>
    %cst_1 = arith.constant 0.000000e+00 : f32
    %cst_2 = arith.constant -1.000000e+09 : f32
    %4 = vector.broadcast %cst_1 : f32 to vector<1x8xf32>
    %5 = vector.broadcast %cst_2 : f32 to vector<1x8xf32>
    %6 = arith.select %3, %4, %5 : vector<1x8xi1>, vector<1x8xf32>
    %7 = vector.extract_strided_slice %0 {offsets = [1, 0], sizes = [1, 8], strides = [1, 1]} : vector<2x8xf32> to vector<1x8xf32>
    %cst_3 = arith.constant 5.000000e-01 : f32
    %8 = vector.broadcast %cst_3 : f32 to vector<1x8xf32>
    %9 = arith.cmpf ogt, %7, %8 : vector<1x8xf32>
    %cst_4 = arith.constant 0.000000e+00 : f32
    %cst_5 = arith.constant -1.000000e+09 : f32
    %10 = vector.broadcast %cst_4 : f32 to vector<1x8xf32>
    %11 = vector.broadcast %cst_5 : f32 to vector<1x8xf32>
    %12 = arith.select %9, %10, %11 : vector<1x8xi1>, vector<1x8xf32>
    %c0_6 = arith.constant 0 : index
    %c0_7 = arith.constant 0 : index
    %13 = vector.load %arg1[%c0_6, %c0_7] : memref<16x32xf32, #tpu.memory_space<vmem>>, vector<16x32xf32>
    %c0_8 = arith.constant 0 : index
    %c0_9 = arith.constant 0 : index
    %14 = vector.load %arg3[%c0_8, %c0_9] : memref<1x32xf32, #tpu.memory_space<vmem>>, vector<1x32xf32>
    %c0_10 = arith.constant 0 : index
    %c0_11 = arith.constant 0 : index
    %15 = vector.load %arg4[%c0_10, %c0_11] : memref<1x32xf32, #tpu.memory_space<vmem>>, vector<1x32xf32>
    %cst_12 = arith.constant dense<0.000000e+00> : vector<16xf32>
    %16 = vector.multi_reduction <add>, %13, %cst_12 [1] : vector<16x32xf32> to vector<16xf32>
    %17 = vector.shape_cast %16 : vector<16xf32> to vector<16x1xf32>
    %cst_13 = arith.constant 3.200000e+01 : f32
    %18 = vector.broadcast %cst_13 : f32 to vector<16x1xf32>
    %19 = arith.divf %17, %18 : vector<16x1xf32>
    %20 = vector.broadcast %19 : vector<16x1xf32> to vector<16x32xf32>
    %21 = arith.subf %13, %20 : vector<16x32xf32>
    %22 = arith.mulf %21, %21 : vector<16x32xf32>
    %cst_14 = arith.constant dense<0.000000e+00> : vector<16xf32>
    %23 = vector.multi_reduction <add>, %22, %cst_14 [1] : vector<16x32xf32> to vector<16xf32>
    %24 = vector.shape_cast %23 : vector<16xf32> to vector<16x1xf32>
    %cst_15 = arith.constant 3.200000e+01 : f32
    %25 = vector.broadcast %cst_15 : f32 to vector<16x1xf32>
    %26 = arith.divf %24, %25 : vector<16x1xf32>
    %cst_16 = arith.constant 9.99999996E-13 : f32
    %27 = vector.broadcast %cst_16 : f32 to vector<16x1xf32>
    %28 = arith.addf %26, %27 : vector<16x1xf32>
    %29 = math.rsqrt %28 : vector<16x1xf32>
    %30 = vector.broadcast %29 : vector<16x1xf32> to vector<16x32xf32>
    %31 = arith.mulf %21, %30 : vector<16x32xf32>
    %32 = vector.broadcast %14 : vector<1x32xf32> to vector<16x32xf32>
    %33 = arith.mulf %31, %32 : vector<16x32xf32>
    %34 = vector.broadcast %15 : vector<1x32xf32> to vector<16x32xf32>
    %35 = arith.addf %33, %34 : vector<16x32xf32>
    %c0_17 = arith.constant 0 : index
    %c0_18 = arith.constant 0 : index
    %c0_19 = arith.constant 0 : index
    %36 = vector.load %arg5[%c0_17, %c0_18, %c0_19] : memref<2x32x96xf32, #tpu.memory_space<vmem>>, vector<1x32x96xf32>
    %37 = vector.shape_cast %36 : vector<1x32x96xf32> to vector<32x96xf32>
    %cst_20 = arith.constant dense<0.000000e+00> : vector<16x96xf32>
    %38 = tpu.matmul %35, %37, %cst_20 {dimension_numbers = #tpu.dot_dimension_numbers<[1], [0], [0], [1], [0, 0, 1, 1], [], []>} : vector<16x32xf32>, vector<32x96xf32>, vector<16x96xf32> -> vector<16x96xf32>
    %c0_21 = arith.constant 0 : index
    %c0_22 = arith.constant 0 : index
    %c0_23 = arith.constant 0 : index
    %39 = vector.load %arg6[%c0_21, %c0_22, %c0_23] : memref<2x1x96xf32, #tpu.memory_space<vmem>>, vector<1x1x96xf32>
    %40 = vector.shape_cast %39 : vector<1x1x96xf32> to vector<1x96xf32>
    %41 = vector.broadcast %40 : vector<1x96xf32> to vector<16x96xf32>
    %42 = arith.addf %38, %41 : vector<16x96xf32>
    %43 = vector.extract_strided_slice %42 {offsets = [0, 0], sizes = [8, 8], strides = [1, 1]} : vector<16x96xf32> to vector<8x8xf32>
    %44 = vector.extract_strided_slice %42 {offsets = [0, 32], sizes = [8, 8], strides = [1, 1]} : vector<16x96xf32> to vector<8x8xf32>
    %45 = vector.extract_strided_slice %42 {offsets = [0, 64], sizes = [8, 8], strides = [1, 1]} : vector<16x96xf32> to vector<8x8xf32>
    "tpu.trace_start"() <{level = 10 : i32, message = "qd,kd->qk"}> : () -> ()
    %cst_24 = arith.constant dense<0.000000e+00> : vector<8x8xf32>
    %46 = tpu.matmul %43, %44, %cst_24 {dimension_numbers = #tpu.dot_dimension_numbers<[1], [1], [0], [0], [0, 0, 1, 0], [], []>} : vector<8x8xf32>, vector<8x8xf32>, vector<8x8xf32> -> vector<8x8xf32>
    "tpu.trace_stop"() : () -> ()
    %cst_25 = arith.constant 0.353553385 : f32
    %47 = vector.broadcast %cst_25 : f32 to vector<8x8xf32>
    %48 = arith.mulf %46, %47 : vector<8x8xf32>
    %49 = vector.broadcast %6 : vector<1x8xf32> to vector<8x8xf32>
    %50 = arith.addf %48, %49 : vector<8x8xf32>
    %cst_26 = arith.constant dense<0xFF800000> : vector<8xf32>
    %51 = vector.multi_reduction <maximumf>, %50, %cst_26 [1] : vector<8x8xf32> to vector<8xf32>
    %52 = vector.shape_cast %51 : vector<8xf32> to vector<8x1xf32>
    %53 = vector.broadcast %52 : vector<8x1xf32> to vector<8x8xf32>
    %54 = arith.subf %50, %53 : vector<8x8xf32>
    %55 = math.exp %54 : vector<8x8xf32>
    %cst_27 = arith.constant dense<0.000000e+00> : vector<8xf32>
    %56 = vector.multi_reduction <add>, %55, %cst_27 [1] : vector<8x8xf32> to vector<8xf32>
    %57 = vector.shape_cast %56 : vector<8xf32> to vector<8x1xf32>
    %58 = vector.broadcast %57 : vector<8x1xf32> to vector<8x8xf32>
    %59 = arith.divf %55, %58 : vector<8x8xf32>
    %cst_28 = arith.constant dense<0.000000e+00> : vector<8x8xf32>
    %60 = tpu.matmul %59, %45, %cst_28 {dimension_numbers = #tpu.dot_dimension_numbers<[1], [0], [0], [1], [0, 0, 1, 1], [], []>} : vector<8x8xf32>, vector<8x8xf32>, vector<8x8xf32> -> vector<8x8xf32>
    %61 = vector.extract_strided_slice %42 {offsets = [0, 8], sizes = [8, 8], strides = [1, 1]} : vector<16x96xf32> to vector<8x8xf32>
    %62 = vector.extract_strided_slice %42 {offsets = [0, 40], sizes = [8, 8], strides = [1, 1]} : vector<16x96xf32> to vector<8x8xf32>
    %63 = vector.extract_strided_slice %42 {offsets = [0, 72], sizes = [8, 8], strides = [1, 1]} : vector<16x96xf32> to vector<8x8xf32>
    "tpu.trace_start"() <{level = 10 : i32, message = "qd,kd->qk"}> : () -> ()
    %cst_29 = arith.constant dense<0.000000e+00> : vector<8x8xf32>
    %64 = tpu.matmul %61, %62, %cst_29 {dimension_numbers = #tpu.dot_dimension_numbers<[1], [1], [0], [0], [0, 0, 1, 0], [], []>} : vector<8x8xf32>, vector<8x8xf32>, vector<8x8xf32> -> vector<8x8xf32>
    "tpu.trace_stop"() : () -> ()
    %cst_30 = arith.constant 0.353553385 : f32
    %65 = vector.broadcast %cst_30 : f32 to vector<8x8xf32>
    %66 = arith.mulf %64, %65 : vector<8x8xf32>
    %67 = vector.broadcast %6 : vector<1x8xf32> to vector<8x8xf32>
    %68 = arith.addf %66, %67 : vector<8x8xf32>
    %cst_31 = arith.constant dense<0xFF800000> : vector<8xf32>
    %69 = vector.multi_reduction <maximumf>, %68, %cst_31 [1] : vector<8x8xf32> to vector<8xf32>
    %70 = vector.shape_cast %69 : vector<8xf32> to vector<8x1xf32>
    %71 = vector.broadcast %70 : vector<8x1xf32> to vector<8x8xf32>
    %72 = arith.subf %68, %71 : vector<8x8xf32>
    %73 = math.exp %72 : vector<8x8xf32>
    %cst_32 = arith.constant dense<0.000000e+00> : vector<8xf32>
    %74 = vector.multi_reduction <add>, %73, %cst_32 [1] : vector<8x8xf32> to vector<8xf32>
    %75 = vector.shape_cast %74 : vector<8xf32> to vector<8x1xf32>
    %76 = vector.broadcast %75 : vector<8x1xf32> to vector<8x8xf32>
    %77 = arith.divf %73, %76 : vector<8x8xf32>
    %cst_33 = arith.constant dense<0.000000e+00> : vector<8x8xf32>
    %78 = tpu.matmul %77, %63, %cst_33 {dimension_numbers = #tpu.dot_dimension_numbers<[1], [0], [0], [1], [0, 0, 1, 1], [], []>} : vector<8x8xf32>, vector<8x8xf32>, vector<8x8xf32> -> vector<8x8xf32>
    %79 = vector.extract_strided_slice %42 {offsets = [0, 16], sizes = [8, 8], strides = [1, 1]} : vector<16x96xf32> to vector<8x8xf32>
    %80 = vector.extract_strided_slice %42 {offsets = [0, 48], sizes = [8, 8], strides = [1, 1]} : vector<16x96xf32> to vector<8x8xf32>
    %81 = vector.extract_strided_slice %42 {offsets = [0, 80], sizes = [8, 8], strides = [1, 1]} : vector<16x96xf32> to vector<8x8xf32>
    "tpu.trace_start"() <{level = 10 : i32, message = "qd,kd->qk"}> : () -> ()
    %cst_34 = arith.constant dense<0.000000e+00> : vector<8x8xf32>
    %82 = tpu.matmul %79, %80, %cst_34 {dimension_numbers = #tpu.dot_dimension_numbers<[1], [1], [0], [0], [0, 0, 1, 0], [], []>} : vector<8x8xf32>, vector<8x8xf32>, vector<8x8xf32> -> vector<8x8xf32>
    "tpu.trace_stop"() : () -> ()
    %cst_35 = arith.constant 0.353553385 : f32
    %83 = vector.broadcast %cst_35 : f32 to vector<8x8xf32>
    %84 = arith.mulf %82, %83 : vector<8x8xf32>
    %85 = vector.broadcast %6 : vector<1x8xf32> to vector<8x8xf32>
    %86 = arith.addf %84, %85 : vector<8x8xf32>
    %cst_36 = arith.constant dense<0xFF800000> : vector<8xf32>
    %87 = vector.multi_reduction <maximumf>, %86, %cst_36 [1] : vector<8x8xf32> to vector<8xf32>
    %88 = vector.shape_cast %87 : vector<8xf32> to vector<8x1xf32>
    %89 = vector.broadcast %88 : vector<8x1xf32> to vector<8x8xf32>
    %90 = arith.subf %86, %89 : vector<8x8xf32>
    %91 = math.exp %90 : vector<8x8xf32>
    %cst_37 = arith.constant dense<0.000000e+00> : vector<8xf32>
    %92 = vector.multi_reduction <add>, %91, %cst_37 [1] : vector<8x8xf32> to vector<8xf32>
    %93 = vector.shape_cast %92 : vector<8xf32> to vector<8x1xf32>
    %94 = vector.broadcast %93 : vector<8x1xf32> to vector<8x8xf32>
    %95 = arith.divf %91, %94 : vector<8x8xf32>
    %cst_38 = arith.constant dense<0.000000e+00> : vector<8x8xf32>
    %96 = tpu.matmul %95, %81, %cst_38 {dimension_numbers = #tpu.dot_dimension_numbers<[1], [0], [0], [1], [0, 0, 1, 1], [], []>} : vector<8x8xf32>, vector<8x8xf32>, vector<8x8xf32> -> vector<8x8xf32>
    %97 = vector.extract_strided_slice %42 {offsets = [0, 24], sizes = [8, 8], strides = [1, 1]} : vector<16x96xf32> to vector<8x8xf32>
    %98 = vector.extract_strided_slice %42 {offsets = [0, 56], sizes = [8, 8], strides = [1, 1]} : vector<16x96xf32> to vector<8x8xf32>
    %99 = vector.extract_strided_slice %42 {offsets = [0, 88], sizes = [8, 8], strides = [1, 1]} : vector<16x96xf32> to vector<8x8xf32>
    "tpu.trace_start"() <{level = 10 : i32, message = "qd,kd->qk"}> : () -> ()
    %cst_39 = arith.constant dense<0.000000e+00> : vector<8x8xf32>
    %100 = tpu.matmul %97, %98, %cst_39 {dimension_numbers = #tpu.dot_dimension_numbers<[1], [1], [0], [0], [0, 0, 1, 0], [], []>} : vector<8x8xf32>, vector<8x8xf32>, vector<8x8xf32> -> vector<8x8xf32>
    "tpu.trace_stop"() : () -> ()
    %cst_40 = arith.constant 0.353553385 : f32
    %101 = vector.broadcast %cst_40 : f32 to vector<8x8xf32>
    %102 = arith.mulf %100, %101 : vector<8x8xf32>
    %103 = vector.broadcast %6 : vector<1x8xf32> to vector<8x8xf32>
    %104 = arith.addf %102, %103 : vector<8x8xf32>
    %cst_41 = arith.constant dense<0xFF800000> : vector<8xf32>
    %105 = vector.multi_reduction <maximumf>, %104, %cst_41 [1] : vector<8x8xf32> to vector<8xf32>
    %106 = vector.shape_cast %105 : vector<8xf32> to vector<8x1xf32>
    %107 = vector.broadcast %106 : vector<8x1xf32> to vector<8x8xf32>
    %108 = arith.subf %104, %107 : vector<8x8xf32>
    %109 = math.exp %108 : vector<8x8xf32>
    %cst_42 = arith.constant dense<0.000000e+00> : vector<8xf32>
    %110 = vector.multi_reduction <add>, %109, %cst_42 [1] : vector<8x8xf32> to vector<8xf32>
    %111 = vector.shape_cast %110 : vector<8xf32> to vector<8x1xf32>
    %112 = vector.broadcast %111 : vector<8x1xf32> to vector<8x8xf32>
    %113 = arith.divf %109, %112 : vector<8x8xf32>
    %cst_43 = arith.constant dense<0.000000e+00> : vector<8x8xf32>
    %114 = tpu.matmul %113, %99, %cst_43 {dimension_numbers = #tpu.dot_dimension_numbers<[1], [0], [0], [1], [0, 0, 1, 1], [], []>} : vector<8x8xf32>, vector<8x8xf32>, vector<8x8xf32> -> vector<8x8xf32>
    %115 = tpu.concatenate %60, %78, %96, %114 in 1 : vector<8x8xf32>, vector<8x8xf32>, vector<8x8xf32>, vector<8x8xf32> -> vector<8x32xf32>
    %116 = vector.extract_strided_slice %42 {offsets = [8, 0], sizes = [8, 8], strides = [1, 1]} : vector<16x96xf32> to vector<8x8xf32>
    %117 = vector.extract_strided_slice %42 {offsets = [8, 32], sizes = [8, 8], strides = [1, 1]} : vector<16x96xf32> to vector<8x8xf32>
    %118 = vector.extract_strided_slice %42 {offsets = [8, 64], sizes = [8, 8], strides = [1, 1]} : vector<16x96xf32> to vector<8x8xf32>
    "tpu.trace_start"() <{level = 10 : i32, message = "qd,kd->qk"}> : () -> ()
    %cst_44 = arith.constant dense<0.000000e+00> : vector<8x8xf32>
    %119 = tpu.matmul %116, %117, %cst_44 {dimension_numbers = #tpu.dot_dimension_numbers<[1], [1], [0], [0], [0, 0, 1, 0], [], []>} : vector<8x8xf32>, vector<8x8xf32>, vector<8x8xf32> -> vector<8x8xf32>
    "tpu.trace_stop"() : () -> ()
    %cst_45 = arith.constant 0.353553385 : f32
    %120 = vector.broadcast %cst_45 : f32 to vector<8x8xf32>
    %121 = arith.mulf %119, %120 : vector<8x8xf32>
    %122 = vector.broadcast %12 : vector<1x8xf32> to vector<8x8xf32>
    %123 = arith.addf %121, %122 : vector<8x8xf32>
    %cst_46 = arith.constant dense<0xFF800000> : vector<8xf32>
    %124 = vector.multi_reduction <maximumf>, %123, %cst_46 [1] : vector<8x8xf32> to vector<8xf32>
    %125 = vector.shape_cast %124 : vector<8xf32> to vector<8x1xf32>
    %126 = vector.broadcast %125 : vector<8x1xf32> to vector<8x8xf32>
    %127 = arith.subf %123, %126 : vector<8x8xf32>
    %128 = math.exp %127 : vector<8x8xf32>
    %cst_47 = arith.constant dense<0.000000e+00> : vector<8xf32>
    %129 = vector.multi_reduction <add>, %128, %cst_47 [1] : vector<8x8xf32> to vector<8xf32>
    %130 = vector.shape_cast %129 : vector<8xf32> to vector<8x1xf32>
    %131 = vector.broadcast %130 : vector<8x1xf32> to vector<8x8xf32>
    %132 = arith.divf %128, %131 : vector<8x8xf32>
    %cst_48 = arith.constant dense<0.000000e+00> : vector<8x8xf32>
    %133 = tpu.matmul %132, %118, %cst_48 {dimension_numbers = #tpu.dot_dimension_numbers<[1], [0], [0], [1], [0, 0, 1, 1], [], []>} : vector<8x8xf32>, vector<8x8xf32>, vector<8x8xf32> -> vector<8x8xf32>
    %134 = vector.extract_strided_slice %42 {offsets = [8, 8], sizes = [8, 8], strides = [1, 1]} : vector<16x96xf32> to vector<8x8xf32>
    %135 = vector.extract_strided_slice %42 {offsets = [8, 40], sizes = [8, 8], strides = [1, 1]} : vector<16x96xf32> to vector<8x8xf32>
    %136 = vector.extract_strided_slice %42 {offsets = [8, 72], sizes = [8, 8], strides = [1, 1]} : vector<16x96xf32> to vector<8x8xf32>
    "tpu.trace_start"() <{level = 10 : i32, message = "qd,kd->qk"}> : () -> ()
    %cst_49 = arith.constant dense<0.000000e+00> : vector<8x8xf32>
    %137 = tpu.matmul %134, %135, %cst_49 {dimension_numbers = #tpu.dot_dimension_numbers<[1], [1], [0], [0], [0, 0, 1, 0], [], []>} : vector<8x8xf32>, vector<8x8xf32>, vector<8x8xf32> -> vector<8x8xf32>
    "tpu.trace_stop"() : () -> ()
    %cst_50 = arith.constant 0.353553385 : f32
    %138 = vector.broadcast %cst_50 : f32 to vector<8x8xf32>
    %139 = arith.mulf %137, %138 : vector<8x8xf32>
    %140 = vector.broadcast %12 : vector<1x8xf32> to vector<8x8xf32>
    %141 = arith.addf %139, %140 : vector<8x8xf32>
    %cst_51 = arith.constant dense<0xFF800000> : vector<8xf32>
    %142 = vector.multi_reduction <maximumf>, %141, %cst_51 [1] : vector<8x8xf32> to vector<8xf32>
    %143 = vector.shape_cast %142 : vector<8xf32> to vector<8x1xf32>
    %144 = vector.broadcast %143 : vector<8x1xf32> to vector<8x8xf32>
    %145 = arith.subf %141, %144 : vector<8x8xf32>
    %146 = math.exp %145 : vector<8x8xf32>
    %cst_52 = arith.constant dense<0.000000e+00> : vector<8xf32>
    %147 = vector.multi_reduction <add>, %146, %cst_52 [1] : vector<8x8xf32> to vector<8xf32>
    %148 = vector.shape_cast %147 : vector<8xf32> to vector<8x1xf32>
    %149 = vector.broadcast %148 : vector<8x1xf32> to vector<8x8xf32>
    %150 = arith.divf %146, %149 : vector<8x8xf32>
    %cst_53 = arith.constant dense<0.000000e+00> : vector<8x8xf32>
    %151 = tpu.matmul %150, %136, %cst_53 {dimension_numbers = #tpu.dot_dimension_numbers<[1], [0], [0], [1], [0, 0, 1, 1], [], []>} : vector<8x8xf32>, vector<8x8xf32>, vector<8x8xf32> -> vector<8x8xf32>
    %152 = vector.extract_strided_slice %42 {offsets = [8, 16], sizes = [8, 8], strides = [1, 1]} : vector<16x96xf32> to vector<8x8xf32>
    %153 = vector.extract_strided_slice %42 {offsets = [8, 48], sizes = [8, 8], strides = [1, 1]} : vector<16x96xf32> to vector<8x8xf32>
    %154 = vector.extract_strided_slice %42 {offsets = [8, 80], sizes = [8, 8], strides = [1, 1]} : vector<16x96xf32> to vector<8x8xf32>
    "tpu.trace_start"() <{level = 10 : i32, message = "qd,kd->qk"}> : () -> ()
    %cst_54 = arith.constant dense<0.000000e+00> : vector<8x8xf32>
    %155 = tpu.matmul %152, %153, %cst_54 {dimension_numbers = #tpu.dot_dimension_numbers<[1], [1], [0], [0], [0, 0, 1, 0], [], []>} : vector<8x8xf32>, vector<8x8xf32>, vector<8x8xf32> -> vector<8x8xf32>
    "tpu.trace_stop"() : () -> ()
    %cst_55 = arith.constant 0.353553385 : f32
    %156 = vector.broadcast %cst_55 : f32 to vector<8x8xf32>
    %157 = arith.mulf %155, %156 : vector<8x8xf32>
    %158 = vector.broadcast %12 : vector<1x8xf32> to vector<8x8xf32>
    %159 = arith.addf %157, %158 : vector<8x8xf32>
    %cst_56 = arith.constant dense<0xFF800000> : vector<8xf32>
    %160 = vector.multi_reduction <maximumf>, %159, %cst_56 [1] : vector<8x8xf32> to vector<8xf32>
    %161 = vector.shape_cast %160 : vector<8xf32> to vector<8x1xf32>
    %162 = vector.broadcast %161 : vector<8x1xf32> to vector<8x8xf32>
    %163 = arith.subf %159, %162 : vector<8x8xf32>
    %164 = math.exp %163 : vector<8x8xf32>
    %cst_57 = arith.constant dense<0.000000e+00> : vector<8xf32>
    %165 = vector.multi_reduction <add>, %164, %cst_57 [1] : vector<8x8xf32> to vector<8xf32>
    %166 = vector.shape_cast %165 : vector<8xf32> to vector<8x1xf32>
    %167 = vector.broadcast %166 : vector<8x1xf32> to vector<8x8xf32>
    %168 = arith.divf %164, %167 : vector<8x8xf32>
    %cst_58 = arith.constant dense<0.000000e+00> : vector<8x8xf32>
    %169 = tpu.matmul %168, %154, %cst_58 {dimension_numbers = #tpu.dot_dimension_numbers<[1], [0], [0], [1], [0, 0, 1, 1], [], []>} : vector<8x8xf32>, vector<8x8xf32>, vector<8x8xf32> -> vector<8x8xf32>
    %170 = vector.extract_strided_slice %42 {offsets = [8, 24], sizes = [8, 8], strides = [1, 1]} : vector<16x96xf32> to vector<8x8xf32>
    %171 = vector.extract_strided_slice %42 {offsets = [8, 56], sizes = [8, 8], strides = [1, 1]} : vector<16x96xf32> to vector<8x8xf32>
    %172 = vector.extract_strided_slice %42 {offsets = [8, 88], sizes = [8, 8], strides = [1, 1]} : vector<16x96xf32> to vector<8x8xf32>
    "tpu.trace_start"() <{level = 10 : i32, message = "qd,kd->qk"}> : () -> ()
    %cst_59 = arith.constant dense<0.000000e+00> : vector<8x8xf32>
    %173 = tpu.matmul %170, %171, %cst_59 {dimension_numbers = #tpu.dot_dimension_numbers<[1], [1], [0], [0], [0, 0, 1, 0], [], []>} : vector<8x8xf32>, vector<8x8xf32>, vector<8x8xf32> -> vector<8x8xf32>
    "tpu.trace_stop"() : () -> ()
    %cst_60 = arith.constant 0.353553385 : f32
    %174 = vector.broadcast %cst_60 : f32 to vector<8x8xf32>
    %175 = arith.mulf %173, %174 : vector<8x8xf32>
    %176 = vector.broadcast %12 : vector<1x8xf32> to vector<8x8xf32>
    %177 = arith.addf %175, %176 : vector<8x8xf32>
    %cst_61 = arith.constant dense<0xFF800000> : vector<8xf32>
    %178 = vector.multi_reduction <maximumf>, %177, %cst_61 [1] : vector<8x8xf32> to vector<8xf32>
    %179 = vector.shape_cast %178 : vector<8xf32> to vector<8x1xf32>
    %180 = vector.broadcast %179 : vector<8x1xf32> to vector<8x8xf32>
    %181 = arith.subf %177, %180 : vector<8x8xf32>
    %182 = math.exp %181 : vector<8x8xf32>
    %cst_62 = arith.constant dense<0.000000e+00> : vector<8xf32>
    %183 = vector.multi_reduction <add>, %182, %cst_62 [1] : vector<8x8xf32> to vector<8xf32>
    %184 = vector.shape_cast %183 : vector<8xf32> to vector<8x1xf32>
    %185 = vector.broadcast %184 : vector<8x1xf32> to vector<8x8xf32>
    %186 = arith.divf %182, %185 : vector<8x8xf32>
    %cst_63 = arith.constant dense<0.000000e+00> : vector<8x8xf32>
    %187 = tpu.matmul %186, %172, %cst_63 {dimension_numbers = #tpu.dot_dimension_numbers<[1], [0], [0], [1], [0, 0, 1, 1], [], []>} : vector<8x8xf32>, vector<8x8xf32>, vector<8x8xf32> -> vector<8x8xf32>
    %188 = tpu.concatenate %133, %151, %169, %187 in 1 : vector<8x8xf32>, vector<8x8xf32>, vector<8x8xf32>, vector<8x8xf32> -> vector<8x32xf32>
    %189 = tpu.concatenate %115, %188 in 0 : vector<8x32xf32>, vector<8x32xf32> -> vector<16x32xf32>
    %c0_64 = arith.constant 0 : index
    %c0_65 = arith.constant 0 : index
    %c0_66 = arith.constant 0 : index
    %190 = vector.load %arg7[%c0_64, %c0_65, %c0_66] : memref<2x32x32xf32, #tpu.memory_space<vmem>>, vector<1x32x32xf32>
    %191 = vector.shape_cast %190 : vector<1x32x32xf32> to vector<32x32xf32>
    %cst_67 = arith.constant dense<0.000000e+00> : vector<16x32xf32>
    %192 = tpu.matmul %189, %191, %cst_67 {dimension_numbers = #tpu.dot_dimension_numbers<[1], [0], [0], [1], [0, 0, 1, 1], [], []>} : vector<16x32xf32>, vector<32x32xf32>, vector<16x32xf32> -> vector<16x32xf32>
    %c0_68 = arith.constant 0 : index
    %c0_69 = arith.constant 0 : index
    %c0_70 = arith.constant 0 : index
    %193 = vector.load %arg8[%c0_68, %c0_69, %c0_70] : memref<2x1x32xf32, #tpu.memory_space<vmem>>, vector<1x1x32xf32>
    %194 = vector.shape_cast %193 : vector<1x1x32xf32> to vector<1x32xf32>
    %195 = vector.broadcast %194 : vector<1x32xf32> to vector<16x32xf32>
    %196 = arith.addf %192, %195 : vector<16x32xf32>
    %197 = arith.addf %196, %35 : vector<16x32xf32>
    %c0_71 = arith.constant 0 : index
    %c0_72 = arith.constant 0 : index
    %c0_73 = arith.constant 0 : index
    %198 = vector.load %arg9[%c0_71, %c0_72, %c0_73] : memref<2x1x32xf32, #tpu.memory_space<vmem>>, vector<1x1x32xf32>
    %199 = vector.shape_cast %198 : vector<1x1x32xf32> to vector<1x32xf32>
    %c0_74 = arith.constant 0 : index
    %c0_75 = arith.constant 0 : index
    %c0_76 = arith.constant 0 : index
    %200 = vector.load %arg10[%c0_74, %c0_75, %c0_76] : memref<2x1x32xf32, #tpu.memory_space<vmem>>, vector<1x1x32xf32>
    %201 = vector.shape_cast %200 : vector<1x1x32xf32> to vector<1x32xf32>
    %cst_77 = arith.constant dense<0.000000e+00> : vector<16xf32>
    %202 = vector.multi_reduction <add>, %197, %cst_77 [1] : vector<16x32xf32> to vector<16xf32>
    %203 = vector.shape_cast %202 : vector<16xf32> to vector<16x1xf32>
    %cst_78 = arith.constant 3.200000e+01 : f32
    %204 = vector.broadcast %cst_78 : f32 to vector<16x1xf32>
    %205 = arith.divf %203, %204 : vector<16x1xf32>
    %206 = vector.broadcast %205 : vector<16x1xf32> to vector<16x32xf32>
    %207 = arith.subf %197, %206 : vector<16x32xf32>
    %208 = arith.mulf %207, %207 : vector<16x32xf32>
    %cst_79 = arith.constant dense<0.000000e+00> : vector<16xf32>
    %209 = vector.multi_reduction <add>, %208, %cst_79 [1] : vector<16x32xf32> to vector<16xf32>
    %210 = vector.shape_cast %209 : vector<16xf32> to vector<16x1xf32>
    %cst_80 = arith.constant 3.200000e+01 : f32
    %211 = vector.broadcast %cst_80 : f32 to vector<16x1xf32>
    %212 = arith.divf %210, %211 : vector<16x1xf32>
    %cst_81 = arith.constant 9.99999996E-13 : f32
    %213 = vector.broadcast %cst_81 : f32 to vector<16x1xf32>
    %214 = arith.addf %212, %213 : vector<16x1xf32>
    %215 = math.rsqrt %214 : vector<16x1xf32>
    %216 = vector.broadcast %215 : vector<16x1xf32> to vector<16x32xf32>
    %217 = arith.mulf %207, %216 : vector<16x32xf32>
    %218 = vector.broadcast %199 : vector<1x32xf32> to vector<16x32xf32>
    %219 = arith.mulf %217, %218 : vector<16x32xf32>
    %220 = vector.broadcast %201 : vector<1x32xf32> to vector<16x32xf32>
    %221 = arith.addf %219, %220 : vector<16x32xf32>
    %c0_82 = arith.constant 0 : index
    %c0_83 = arith.constant 0 : index
    %c0_84 = arith.constant 0 : index
    %222 = vector.load %arg11[%c0_82, %c0_83, %c0_84] : memref<2x32x64xf32, #tpu.memory_space<vmem>>, vector<1x32x64xf32>
    %223 = vector.shape_cast %222 : vector<1x32x64xf32> to vector<32x64xf32>
    %cst_85 = arith.constant dense<0.000000e+00> : vector<16x64xf32>
    %224 = tpu.matmul %221, %223, %cst_85 {dimension_numbers = #tpu.dot_dimension_numbers<[1], [0], [0], [1], [0, 0, 1, 1], [], []>} : vector<16x32xf32>, vector<32x64xf32>, vector<16x64xf32> -> vector<16x64xf32>
    %c0_86 = arith.constant 0 : index
    %c0_87 = arith.constant 0 : index
    %c0_88 = arith.constant 0 : index
    %225 = vector.load %arg12[%c0_86, %c0_87, %c0_88] : memref<2x1x64xf32, #tpu.memory_space<vmem>>, vector<1x1x64xf32>
    %226 = vector.shape_cast %225 : vector<1x1x64xf32> to vector<1x64xf32>
    %227 = vector.broadcast %226 : vector<1x64xf32> to vector<16x64xf32>
    %228 = arith.addf %224, %227 : vector<16x64xf32>
    %cst_89 = arith.constant 5.000000e-01 : f32
    %229 = vector.broadcast %cst_89 : f32 to vector<16x64xf32>
    %230 = arith.mulf %229, %228 : vector<16x64xf32>
    %cst_90 = arith.constant 4.471500e-02 : f32
    %231 = vector.broadcast %cst_90 : f32 to vector<16x64xf32>
    %232 = arith.mulf %231, %228 : vector<16x64xf32>
    %233 = arith.mulf %232, %228 : vector<16x64xf32>
    %234 = arith.mulf %233, %228 : vector<16x64xf32>
    %235 = arith.addf %228, %234 : vector<16x64xf32>
    %cst_91 = arith.constant 0.797884583 : f32
    %236 = vector.broadcast %cst_91 : f32 to vector<16x64xf32>
    %237 = arith.mulf %236, %235 : vector<16x64xf32>
    %238 = math.tanh %237 : vector<16x64xf32>
    %cst_92 = arith.constant 1.000000e+00 : f32
    %239 = vector.broadcast %cst_92 : f32 to vector<16x64xf32>
    %240 = arith.addf %239, %238 : vector<16x64xf32>
    %241 = arith.mulf %230, %240 : vector<16x64xf32>
    %c0_93 = arith.constant 0 : index
    %c0_94 = arith.constant 0 : index
    %c0_95 = arith.constant 0 : index
    %242 = vector.load %arg13[%c0_93, %c0_94, %c0_95] : memref<2x64x32xf32, #tpu.memory_space<vmem>>, vector<1x64x32xf32>
    %243 = vector.shape_cast %242 : vector<1x64x32xf32> to vector<64x32xf32>
    %cst_96 = arith.constant dense<0.000000e+00> : vector<16x32xf32>
    %244 = tpu.matmul %241, %243, %cst_96 {dimension_numbers = #tpu.dot_dimension_numbers<[1], [0], [0], [1], [0, 0, 1, 1], [], []>} : vector<16x64xf32>, vector<64x32xf32>, vector<16x32xf32> -> vector<16x32xf32>
    %c0_97 = arith.constant 0 : index
    %c0_98 = arith.constant 0 : index
    %c0_99 = arith.constant 0 : index
    %245 = vector.load %arg14[%c0_97, %c0_98, %c0_99] : memref<2x1x32xf32, #tpu.memory_space<vmem>>, vector<1x1x32xf32>
    %246 = vector.shape_cast %245 : vector<1x1x32xf32> to vector<1x32xf32>
    %247 = vector.broadcast %246 : vector<1x32xf32> to vector<16x32xf32>
    %248 = arith.addf %244, %247 : vector<16x32xf32>
    %249 = arith.addf %248, %221 : vector<16x32xf32>
    %c0_100 = arith.constant 0 : index
    %c0_101 = arith.constant 0 : index
    %c0_102 = arith.constant 0 : index
    %250 = vector.load %arg15[%c0_100, %c0_101, %c0_102] : memref<2x1x32xf32, #tpu.memory_space<vmem>>, vector<1x1x32xf32>
    %251 = vector.shape_cast %250 : vector<1x1x32xf32> to vector<1x32xf32>
    %c0_103 = arith.constant 0 : index
    %c0_104 = arith.constant 0 : index
    %c0_105 = arith.constant 0 : index
    %252 = vector.load %arg16[%c0_103, %c0_104, %c0_105] : memref<2x1x32xf32, #tpu.memory_space<vmem>>, vector<1x1x32xf32>
    %253 = vector.shape_cast %252 : vector<1x1x32xf32> to vector<1x32xf32>
    %cst_106 = arith.constant dense<0.000000e+00> : vector<16xf32>
    %254 = vector.multi_reduction <add>, %249, %cst_106 [1] : vector<16x32xf32> to vector<16xf32>
    %255 = vector.shape_cast %254 : vector<16xf32> to vector<16x1xf32>
    %cst_107 = arith.constant 3.200000e+01 : f32
    %256 = vector.broadcast %cst_107 : f32 to vector<16x1xf32>
    %257 = arith.divf %255, %256 : vector<16x1xf32>
    %258 = vector.broadcast %257 : vector<16x1xf32> to vector<16x32xf32>
    %259 = arith.subf %249, %258 : vector<16x32xf32>
    %260 = arith.mulf %259, %259 : vector<16x32xf32>
    %cst_108 = arith.constant dense<0.000000e+00> : vector<16xf32>
    %261 = vector.multi_reduction <add>, %260, %cst_108 [1] : vector<16x32xf32> to vector<16xf32>
    %262 = vector.shape_cast %261 : vector<16xf32> to vector<16x1xf32>
    %cst_109 = arith.constant 3.200000e+01 : f32
    %263 = vector.broadcast %cst_109 : f32 to vector<16x1xf32>
    %264 = arith.divf %262, %263 : vector<16x1xf32>
    %cst_110 = arith.constant 9.99999996E-13 : f32
    %265 = vector.broadcast %cst_110 : f32 to vector<16x1xf32>
    %266 = arith.addf %264, %265 : vector<16x1xf32>
    %267 = math.rsqrt %266 : vector<16x1xf32>
    %268 = vector.broadcast %267 : vector<16x1xf32> to vector<16x32xf32>
    %269 = arith.mulf %259, %268 : vector<16x32xf32>
    %270 = vector.broadcast %251 : vector<1x32xf32> to vector<16x32xf32>
    %271 = arith.mulf %269, %270 : vector<16x32xf32>
    %272 = vector.broadcast %253 : vector<1x32xf32> to vector<16x32xf32>
    %273 = arith.addf %271, %272 : vector<16x32xf32>
    %c1 = arith.constant 1 : index
    %c0_111 = arith.constant 0 : index
    %c0_112 = arith.constant 0 : index
    %274 = vector.load %arg5[%c1, %c0_111, %c0_112] : memref<2x32x96xf32, #tpu.memory_space<vmem>>, vector<1x32x96xf32>
    %275 = vector.shape_cast %274 : vector<1x32x96xf32> to vector<32x96xf32>
    %cst_113 = arith.constant dense<0.000000e+00> : vector<16x96xf32>
    %276 = tpu.matmul %273, %275, %cst_113 {dimension_numbers = #tpu.dot_dimension_numbers<[1], [0], [0], [1], [0, 0, 1, 1], [], []>} : vector<16x32xf32>, vector<32x96xf32>, vector<16x96xf32> -> vector<16x96xf32>
    %c1_114 = arith.constant 1 : index
    %c0_115 = arith.constant 0 : index
    %c0_116 = arith.constant 0 : index
    %277 = vector.load %arg6[%c1_114, %c0_115, %c0_116] : memref<2x1x96xf32, #tpu.memory_space<vmem>>, vector<1x1x96xf32>
    %278 = vector.shape_cast %277 : vector<1x1x96xf32> to vector<1x96xf32>
    %279 = vector.broadcast %278 : vector<1x96xf32> to vector<16x96xf32>
    %280 = arith.addf %276, %279 : vector<16x96xf32>
    %281 = vector.extract_strided_slice %280 {offsets = [0, 0], sizes = [8, 8], strides = [1, 1]} : vector<16x96xf32> to vector<8x8xf32>
    %282 = vector.extract_strided_slice %280 {offsets = [0, 32], sizes = [8, 8], strides = [1, 1]} : vector<16x96xf32> to vector<8x8xf32>
    %283 = vector.extract_strided_slice %280 {offsets = [0, 64], sizes = [8, 8], strides = [1, 1]} : vector<16x96xf32> to vector<8x8xf32>
    "tpu.trace_start"() <{level = 10 : i32, message = "qd,kd->qk"}> : () -> ()
    %cst_117 = arith.constant dense<0.000000e+00> : vector<8x8xf32>
    %284 = tpu.matmul %281, %282, %cst_117 {dimension_numbers = #tpu.dot_dimension_numbers<[1], [1], [0], [0], [0, 0, 1, 0], [], []>} : vector<8x8xf32>, vector<8x8xf32>, vector<8x8xf32> -> vector<8x8xf32>
    "tpu.trace_stop"() : () -> ()
    %cst_118 = arith.constant 0.353553385 : f32
    %285 = vector.broadcast %cst_118 : f32 to vector<8x8xf32>
    %286 = arith.mulf %284, %285 : vector<8x8xf32>
    %287 = vector.broadcast %6 : vector<1x8xf32> to vector<8x8xf32>
    %288 = arith.addf %286, %287 : vector<8x8xf32>
    %cst_119 = arith.constant dense<0xFF800000> : vector<8xf32>
    %289 = vector.multi_reduction <maximumf>, %288, %cst_119 [1] : vector<8x8xf32> to vector<8xf32>
    %290 = vector.shape_cast %289 : vector<8xf32> to vector<8x1xf32>
    %291 = vector.broadcast %290 : vector<8x1xf32> to vector<8x8xf32>
    %292 = arith.subf %288, %291 : vector<8x8xf32>
    %293 = math.exp %292 : vector<8x8xf32>
    %cst_120 = arith.constant dense<0.000000e+00> : vector<8xf32>
    %294 = vector.multi_reduction <add>, %293, %cst_120 [1] : vector<8x8xf32> to vector<8xf32>
    %295 = vector.shape_cast %294 : vector<8xf32> to vector<8x1xf32>
    %296 = vector.broadcast %295 : vector<8x1xf32> to vector<8x8xf32>
    %297 = arith.divf %293, %296 : vector<8x8xf32>
    %cst_121 = arith.constant dense<0.000000e+00> : vector<8x8xf32>
    %298 = tpu.matmul %297, %283, %cst_121 {dimension_numbers = #tpu.dot_dimension_numbers<[1], [0], [0], [1], [0, 0, 1, 1], [], []>} : vector<8x8xf32>, vector<8x8xf32>, vector<8x8xf32> -> vector<8x8xf32>
    %299 = vector.extract_strided_slice %280 {offsets = [0, 8], sizes = [8, 8], strides = [1, 1]} : vector<16x96xf32> to vector<8x8xf32>
    %300 = vector.extract_strided_slice %280 {offsets = [0, 40], sizes = [8, 8], strides = [1, 1]} : vector<16x96xf32> to vector<8x8xf32>
    %301 = vector.extract_strided_slice %280 {offsets = [0, 72], sizes = [8, 8], strides = [1, 1]} : vector<16x96xf32> to vector<8x8xf32>
    "tpu.trace_start"() <{level = 10 : i32, message = "qd,kd->qk"}> : () -> ()
    %cst_122 = arith.constant dense<0.000000e+00> : vector<8x8xf32>
    %302 = tpu.matmul %299, %300, %cst_122 {dimension_numbers = #tpu.dot_dimension_numbers<[1], [1], [0], [0], [0, 0, 1, 0], [], []>} : vector<8x8xf32>, vector<8x8xf32>, vector<8x8xf32> -> vector<8x8xf32>
    "tpu.trace_stop"() : () -> ()
    %cst_123 = arith.constant 0.353553385 : f32
    %303 = vector.broadcast %cst_123 : f32 to vector<8x8xf32>
    %304 = arith.mulf %302, %303 : vector<8x8xf32>
    %305 = vector.broadcast %6 : vector<1x8xf32> to vector<8x8xf32>
    %306 = arith.addf %304, %305 : vector<8x8xf32>
    %cst_124 = arith.constant dense<0xFF800000> : vector<8xf32>
    %307 = vector.multi_reduction <maximumf>, %306, %cst_124 [1] : vector<8x8xf32> to vector<8xf32>
    %308 = vector.shape_cast %307 : vector<8xf32> to vector<8x1xf32>
    %309 = vector.broadcast %308 : vector<8x1xf32> to vector<8x8xf32>
    %310 = arith.subf %306, %309 : vector<8x8xf32>
    %311 = math.exp %310 : vector<8x8xf32>
    %cst_125 = arith.constant dense<0.000000e+00> : vector<8xf32>
    %312 = vector.multi_reduction <add>, %311, %cst_125 [1] : vector<8x8xf32> to vector<8xf32>
    %313 = vector.shape_cast %312 : vector<8xf32> to vector<8x1xf32>
    %314 = vector.broadcast %313 : vector<8x1xf32> to vector<8x8xf32>
    %315 = arith.divf %311, %314 : vector<8x8xf32>
    %cst_126 = arith.constant dense<0.000000e+00> : vector<8x8xf32>
    %316 = tpu.matmul %315, %301, %cst_126 {dimension_numbers = #tpu.dot_dimension_numbers<[1], [0], [0], [1], [0, 0, 1, 1], [], []>} : vector<8x8xf32>, vector<8x8xf32>, vector<8x8xf32> -> vector<8x8xf32>
    %317 = vector.extract_strided_slice %280 {offsets = [0, 16], sizes = [8, 8], strides = [1, 1]} : vector<16x96xf32> to vector<8x8xf32>
    %318 = vector.extract_strided_slice %280 {offsets = [0, 48], sizes = [8, 8], strides = [1, 1]} : vector<16x96xf32> to vector<8x8xf32>
    %319 = vector.extract_strided_slice %280 {offsets = [0, 80], sizes = [8, 8], strides = [1, 1]} : vector<16x96xf32> to vector<8x8xf32>
    "tpu.trace_start"() <{level = 10 : i32, message = "qd,kd->qk"}> : () -> ()
    %cst_127 = arith.constant dense<0.000000e+00> : vector<8x8xf32>
    %320 = tpu.matmul %317, %318, %cst_127 {dimension_numbers = #tpu.dot_dimension_numbers<[1], [1], [0], [0], [0, 0, 1, 0], [], []>} : vector<8x8xf32>, vector<8x8xf32>, vector<8x8xf32> -> vector<8x8xf32>
    "tpu.trace_stop"() : () -> ()
    %cst_128 = arith.constant 0.353553385 : f32
    %321 = vector.broadcast %cst_128 : f32 to vector<8x8xf32>
    %322 = arith.mulf %320, %321 : vector<8x8xf32>
    %323 = vector.broadcast %6 : vector<1x8xf32> to vector<8x8xf32>
    %324 = arith.addf %322, %323 : vector<8x8xf32>
    %cst_129 = arith.constant dense<0xFF800000> : vector<8xf32>
    %325 = vector.multi_reduction <maximumf>, %324, %cst_129 [1] : vector<8x8xf32> to vector<8xf32>
    %326 = vector.shape_cast %325 : vector<8xf32> to vector<8x1xf32>
    %327 = vector.broadcast %326 : vector<8x1xf32> to vector<8x8xf32>
    %328 = arith.subf %324, %327 : vector<8x8xf32>
    %329 = math.exp %328 : vector<8x8xf32>
    %cst_130 = arith.constant dense<0.000000e+00> : vector<8xf32>
    %330 = vector.multi_reduction <add>, %329, %cst_130 [1] : vector<8x8xf32> to vector<8xf32>
    %331 = vector.shape_cast %330 : vector<8xf32> to vector<8x1xf32>
    %332 = vector.broadcast %331 : vector<8x1xf32> to vector<8x8xf32>
    %333 = arith.divf %329, %332 : vector<8x8xf32>
    %cst_131 = arith.constant dense<0.000000e+00> : vector<8x8xf32>
    %334 = tpu.matmul %333, %319, %cst_131 {dimension_numbers = #tpu.dot_dimension_numbers<[1], [0], [0], [1], [0, 0, 1, 1], [], []>} : vector<8x8xf32>, vector<8x8xf32>, vector<8x8xf32> -> vector<8x8xf32>
    %335 = vector.extract_strided_slice %280 {offsets = [0, 24], sizes = [8, 8], strides = [1, 1]} : vector<16x96xf32> to vector<8x8xf32>
    %336 = vector.extract_strided_slice %280 {offsets = [0, 56], sizes = [8, 8], strides = [1, 1]} : vector<16x96xf32> to vector<8x8xf32>
    %337 = vector.extract_strided_slice %280 {offsets = [0, 88], sizes = [8, 8], strides = [1, 1]} : vector<16x96xf32> to vector<8x8xf32>
    "tpu.trace_start"() <{level = 10 : i32, message = "qd,kd->qk"}> : () -> ()
    %cst_132 = arith.constant dense<0.000000e+00> : vector<8x8xf32>
    %338 = tpu.matmul %335, %336, %cst_132 {dimension_numbers = #tpu.dot_dimension_numbers<[1], [1], [0], [0], [0, 0, 1, 0], [], []>} : vector<8x8xf32>, vector<8x8xf32>, vector<8x8xf32> -> vector<8x8xf32>
    "tpu.trace_stop"() : () -> ()
    %cst_133 = arith.constant 0.353553385 : f32
    %339 = vector.broadcast %cst_133 : f32 to vector<8x8xf32>
    %340 = arith.mulf %338, %339 : vector<8x8xf32>
    %341 = vector.broadcast %6 : vector<1x8xf32> to vector<8x8xf32>
    %342 = arith.addf %340, %341 : vector<8x8xf32>
    %cst_134 = arith.constant dense<0xFF800000> : vector<8xf32>
    %343 = vector.multi_reduction <maximumf>, %342, %cst_134 [1] : vector<8x8xf32> to vector<8xf32>
    %344 = vector.shape_cast %343 : vector<8xf32> to vector<8x1xf32>
    %345 = vector.broadcast %344 : vector<8x1xf32> to vector<8x8xf32>
    %346 = arith.subf %342, %345 : vector<8x8xf32>
    %347 = math.exp %346 : vector<8x8xf32>
    %cst_135 = arith.constant dense<0.000000e+00> : vector<8xf32>
    %348 = vector.multi_reduction <add>, %347, %cst_135 [1] : vector<8x8xf32> to vector<8xf32>
    %349 = vector.shape_cast %348 : vector<8xf32> to vector<8x1xf32>
    %350 = vector.broadcast %349 : vector<8x1xf32> to vector<8x8xf32>
    %351 = arith.divf %347, %350 : vector<8x8xf32>
    %cst_136 = arith.constant dense<0.000000e+00> : vector<8x8xf32>
    %352 = tpu.matmul %351, %337, %cst_136 {dimension_numbers = #tpu.dot_dimension_numbers<[1], [0], [0], [1], [0, 0, 1, 1], [], []>} : vector<8x8xf32>, vector<8x8xf32>, vector<8x8xf32> -> vector<8x8xf32>
    %353 = tpu.concatenate %298, %316, %334, %352 in 1 : vector<8x8xf32>, vector<8x8xf32>, vector<8x8xf32>, vector<8x8xf32> -> vector<8x32xf32>
    %354 = vector.extract_strided_slice %280 {offsets = [8, 0], sizes = [8, 8], strides = [1, 1]} : vector<16x96xf32> to vector<8x8xf32>
    %355 = vector.extract_strided_slice %280 {offsets = [8, 32], sizes = [8, 8], strides = [1, 1]} : vector<16x96xf32> to vector<8x8xf32>
    %356 = vector.extract_strided_slice %280 {offsets = [8, 64], sizes = [8, 8], strides = [1, 1]} : vector<16x96xf32> to vector<8x8xf32>
    "tpu.trace_start"() <{level = 10 : i32, message = "qd,kd->qk"}> : () -> ()
    %cst_137 = arith.constant dense<0.000000e+00> : vector<8x8xf32>
    %357 = tpu.matmul %354, %355, %cst_137 {dimension_numbers = #tpu.dot_dimension_numbers<[1], [1], [0], [0], [0, 0, 1, 0], [], []>} : vector<8x8xf32>, vector<8x8xf32>, vector<8x8xf32> -> vector<8x8xf32>
    "tpu.trace_stop"() : () -> ()
    %cst_138 = arith.constant 0.353553385 : f32
    %358 = vector.broadcast %cst_138 : f32 to vector<8x8xf32>
    %359 = arith.mulf %357, %358 : vector<8x8xf32>
    %360 = vector.broadcast %12 : vector<1x8xf32> to vector<8x8xf32>
    %361 = arith.addf %359, %360 : vector<8x8xf32>
    %cst_139 = arith.constant dense<0xFF800000> : vector<8xf32>
    %362 = vector.multi_reduction <maximumf>, %361, %cst_139 [1] : vector<8x8xf32> to vector<8xf32>
    %363 = vector.shape_cast %362 : vector<8xf32> to vector<8x1xf32>
    %364 = vector.broadcast %363 : vector<8x1xf32> to vector<8x8xf32>
    %365 = arith.subf %361, %364 : vector<8x8xf32>
    %366 = math.exp %365 : vector<8x8xf32>
    %cst_140 = arith.constant dense<0.000000e+00> : vector<8xf32>
    %367 = vector.multi_reduction <add>, %366, %cst_140 [1] : vector<8x8xf32> to vector<8xf32>
    %368 = vector.shape_cast %367 : vector<8xf32> to vector<8x1xf32>
    %369 = vector.broadcast %368 : vector<8x1xf32> to vector<8x8xf32>
    %370 = arith.divf %366, %369 : vector<8x8xf32>
    %cst_141 = arith.constant dense<0.000000e+00> : vector<8x8xf32>
    %371 = tpu.matmul %370, %356, %cst_141 {dimension_numbers = #tpu.dot_dimension_numbers<[1], [0], [0], [1], [0, 0, 1, 1], [], []>} : vector<8x8xf32>, vector<8x8xf32>, vector<8x8xf32> -> vector<8x8xf32>
    %372 = vector.extract_strided_slice %280 {offsets = [8, 8], sizes = [8, 8], strides = [1, 1]} : vector<16x96xf32> to vector<8x8xf32>
    %373 = vector.extract_strided_slice %280 {offsets = [8, 40], sizes = [8, 8], strides = [1, 1]} : vector<16x96xf32> to vector<8x8xf32>
    %374 = vector.extract_strided_slice %280 {offsets = [8, 72], sizes = [8, 8], strides = [1, 1]} : vector<16x96xf32> to vector<8x8xf32>
    "tpu.trace_start"() <{level = 10 : i32, message = "qd,kd->qk"}> : () -> ()
    %cst_142 = arith.constant dense<0.000000e+00> : vector<8x8xf32>
    %375 = tpu.matmul %372, %373, %cst_142 {dimension_numbers = #tpu.dot_dimension_numbers<[1], [1], [0], [0], [0, 0, 1, 0], [], []>} : vector<8x8xf32>, vector<8x8xf32>, vector<8x8xf32> -> vector<8x8xf32>
    "tpu.trace_stop"() : () -> ()
    %cst_143 = arith.constant 0.353553385 : f32
    %376 = vector.broadcast %cst_143 : f32 to vector<8x8xf32>
    %377 = arith.mulf %375, %376 : vector<8x8xf32>
    %378 = vector.broadcast %12 : vector<1x8xf32> to vector<8x8xf32>
    %379 = arith.addf %377, %378 : vector<8x8xf32>
    %cst_144 = arith.constant dense<0xFF800000> : vector<8xf32>
    %380 = vector.multi_reduction <maximumf>, %379, %cst_144 [1] : vector<8x8xf32> to vector<8xf32>
    %381 = vector.shape_cast %380 : vector<8xf32> to vector<8x1xf32>
    %382 = vector.broadcast %381 : vector<8x1xf32> to vector<8x8xf32>
    %383 = arith.subf %379, %382 : vector<8x8xf32>
    %384 = math.exp %383 : vector<8x8xf32>
    %cst_145 = arith.constant dense<0.000000e+00> : vector<8xf32>
    %385 = vector.multi_reduction <add>, %384, %cst_145 [1] : vector<8x8xf32> to vector<8xf32>
    %386 = vector.shape_cast %385 : vector<8xf32> to vector<8x1xf32>
    %387 = vector.broadcast %386 : vector<8x1xf32> to vector<8x8xf32>
    %388 = arith.divf %384, %387 : vector<8x8xf32>
    %cst_146 = arith.constant dense<0.000000e+00> : vector<8x8xf32>
    %389 = tpu.matmul %388, %374, %cst_146 {dimension_numbers = #tpu.dot_dimension_numbers<[1], [0], [0], [1], [0, 0, 1, 1], [], []>} : vector<8x8xf32>, vector<8x8xf32>, vector<8x8xf32> -> vector<8x8xf32>
    %390 = vector.extract_strided_slice %280 {offsets = [8, 16], sizes = [8, 8], strides = [1, 1]} : vector<16x96xf32> to vector<8x8xf32>
    %391 = vector.extract_strided_slice %280 {offsets = [8, 48], sizes = [8, 8], strides = [1, 1]} : vector<16x96xf32> to vector<8x8xf32>
    %392 = vector.extract_strided_slice %280 {offsets = [8, 80], sizes = [8, 8], strides = [1, 1]} : vector<16x96xf32> to vector<8x8xf32>
    "tpu.trace_start"() <{level = 10 : i32, message = "qd,kd->qk"}> : () -> ()
    %cst_147 = arith.constant dense<0.000000e+00> : vector<8x8xf32>
    %393 = tpu.matmul %390, %391, %cst_147 {dimension_numbers = #tpu.dot_dimension_numbers<[1], [1], [0], [0], [0, 0, 1, 0], [], []>} : vector<8x8xf32>, vector<8x8xf32>, vector<8x8xf32> -> vector<8x8xf32>
    "tpu.trace_stop"() : () -> ()
    %cst_148 = arith.constant 0.353553385 : f32
    %394 = vector.broadcast %cst_148 : f32 to vector<8x8xf32>
    %395 = arith.mulf %393, %394 : vector<8x8xf32>
    %396 = vector.broadcast %12 : vector<1x8xf32> to vector<8x8xf32>
    %397 = arith.addf %395, %396 : vector<8x8xf32>
    %cst_149 = arith.constant dense<0xFF800000> : vector<8xf32>
    %398 = vector.multi_reduction <maximumf>, %397, %cst_149 [1] : vector<8x8xf32> to vector<8xf32>
    %399 = vector.shape_cast %398 : vector<8xf32> to vector<8x1xf32>
    %400 = vector.broadcast %399 : vector<8x1xf32> to vector<8x8xf32>
    %401 = arith.subf %397, %400 : vector<8x8xf32>
    %402 = math.exp %401 : vector<8x8xf32>
    %cst_150 = arith.constant dense<0.000000e+00> : vector<8xf32>
    %403 = vector.multi_reduction <add>, %402, %cst_150 [1] : vector<8x8xf32> to vector<8xf32>
    %404 = vector.shape_cast %403 : vector<8xf32> to vector<8x1xf32>
    %405 = vector.broadcast %404 : vector<8x1xf32> to vector<8x8xf32>
    %406 = arith.divf %402, %405 : vector<8x8xf32>
    %cst_151 = arith.constant dense<0.000000e+00> : vector<8x8xf32>
    %407 = tpu.matmul %406, %392, %cst_151 {dimension_numbers = #tpu.dot_dimension_numbers<[1], [0], [0], [1], [0, 0, 1, 1], [], []>} : vector<8x8xf32>, vector<8x8xf32>, vector<8x8xf32> -> vector<8x8xf32>
    %408 = vector.extract_strided_slice %280 {offsets = [8, 24], sizes = [8, 8], strides = [1, 1]} : vector<16x96xf32> to vector<8x8xf32>
    %409 = vector.extract_strided_slice %280 {offsets = [8, 56], sizes = [8, 8], strides = [1, 1]} : vector<16x96xf32> to vector<8x8xf32>
    %410 = vector.extract_strided_slice %280 {offsets = [8, 88], sizes = [8, 8], strides = [1, 1]} : vector<16x96xf32> to vector<8x8xf32>
    "tpu.trace_start"() <{level = 10 : i32, message = "qd,kd->qk"}> : () -> ()
    %cst_152 = arith.constant dense<0.000000e+00> : vector<8x8xf32>
    %411 = tpu.matmul %408, %409, %cst_152 {dimension_numbers = #tpu.dot_dimension_numbers<[1], [1], [0], [0], [0, 0, 1, 0], [], []>} : vector<8x8xf32>, vector<8x8xf32>, vector<8x8xf32> -> vector<8x8xf32>
    "tpu.trace_stop"() : () -> ()
    %cst_153 = arith.constant 0.353553385 : f32
    %412 = vector.broadcast %cst_153 : f32 to vector<8x8xf32>
    %413 = arith.mulf %411, %412 : vector<8x8xf32>
    %414 = vector.broadcast %12 : vector<1x8xf32> to vector<8x8xf32>
    %415 = arith.addf %413, %414 : vector<8x8xf32>
    %cst_154 = arith.constant dense<0xFF800000> : vector<8xf32>
    %416 = vector.multi_reduction <maximumf>, %415, %cst_154 [1] : vector<8x8xf32> to vector<8xf32>
    %417 = vector.shape_cast %416 : vector<8xf32> to vector<8x1xf32>
    %418 = vector.broadcast %417 : vector<8x1xf32> to vector<8x8xf32>
    %419 = arith.subf %415, %418 : vector<8x8xf32>
    %420 = math.exp %419 : vector<8x8xf32>
    %cst_155 = arith.constant dense<0.000000e+00> : vector<8xf32>
    %421 = vector.multi_reduction <add>, %420, %cst_155 [1] : vector<8x8xf32> to vector<8xf32>
    %422 = vector.shape_cast %421 : vector<8xf32> to vector<8x1xf32>
    %423 = vector.broadcast %422 : vector<8x1xf32> to vector<8x8xf32>
    %424 = arith.divf %420, %423 : vector<8x8xf32>
    %cst_156 = arith.constant dense<0.000000e+00> : vector<8x8xf32>
    %425 = tpu.matmul %424, %410, %cst_156 {dimension_numbers = #tpu.dot_dimension_numbers<[1], [0], [0], [1], [0, 0, 1, 1], [], []>} : vector<8x8xf32>, vector<8x8xf32>, vector<8x8xf32> -> vector<8x8xf32>
    %426 = tpu.concatenate %371, %389, %407, %425 in 1 : vector<8x8xf32>, vector<8x8xf32>, vector<8x8xf32>, vector<8x8xf32> -> vector<8x32xf32>
    %427 = tpu.concatenate %353, %426 in 0 : vector<8x32xf32>, vector<8x32xf32> -> vector<16x32xf32>
    %c1_157 = arith.constant 1 : index
    %c0_158 = arith.constant 0 : index
    %c0_159 = arith.constant 0 : index
    %428 = vector.load %arg7[%c1_157, %c0_158, %c0_159] : memref<2x32x32xf32, #tpu.memory_space<vmem>>, vector<1x32x32xf32>
    %429 = vector.shape_cast %428 : vector<1x32x32xf32> to vector<32x32xf32>
    %cst_160 = arith.constant dense<0.000000e+00> : vector<16x32xf32>
    %430 = tpu.matmul %427, %429, %cst_160 {dimension_numbers = #tpu.dot_dimension_numbers<[1], [0], [0], [1], [0, 0, 1, 1], [], []>} : vector<16x32xf32>, vector<32x32xf32>, vector<16x32xf32> -> vector<16x32xf32>
    %c1_161 = arith.constant 1 : index
    %c0_162 = arith.constant 0 : index
    %c0_163 = arith.constant 0 : index
    %431 = vector.load %arg8[%c1_161, %c0_162, %c0_163] : memref<2x1x32xf32, #tpu.memory_space<vmem>>, vector<1x1x32xf32>
    %432 = vector.shape_cast %431 : vector<1x1x32xf32> to vector<1x32xf32>
    %433 = vector.broadcast %432 : vector<1x32xf32> to vector<16x32xf32>
    %434 = arith.addf %430, %433 : vector<16x32xf32>
    %435 = arith.addf %434, %273 : vector<16x32xf32>
    %c1_164 = arith.constant 1 : index
    %c0_165 = arith.constant 0 : index
    %c0_166 = arith.constant 0 : index
    %436 = vector.load %arg9[%c1_164, %c0_165, %c0_166] : memref<2x1x32xf32, #tpu.memory_space<vmem>>, vector<1x1x32xf32>
    %437 = vector.shape_cast %436 : vector<1x1x32xf32> to vector<1x32xf32>
    %c1_167 = arith.constant 1 : index
    %c0_168 = arith.constant 0 : index
    %c0_169 = arith.constant 0 : index
    %438 = vector.load %arg10[%c1_167, %c0_168, %c0_169] : memref<2x1x32xf32, #tpu.memory_space<vmem>>, vector<1x1x32xf32>
    %439 = vector.shape_cast %438 : vector<1x1x32xf32> to vector<1x32xf32>
    %cst_170 = arith.constant dense<0.000000e+00> : vector<16xf32>
    %440 = vector.multi_reduction <add>, %435, %cst_170 [1] : vector<16x32xf32> to vector<16xf32>
    %441 = vector.shape_cast %440 : vector<16xf32> to vector<16x1xf32>
    %cst_171 = arith.constant 3.200000e+01 : f32
    %442 = vector.broadcast %cst_171 : f32 to vector<16x1xf32>
    %443 = arith.divf %441, %442 : vector<16x1xf32>
    %444 = vector.broadcast %443 : vector<16x1xf32> to vector<16x32xf32>
    %445 = arith.subf %435, %444 : vector<16x32xf32>
    %446 = arith.mulf %445, %445 : vector<16x32xf32>
    %cst_172 = arith.constant dense<0.000000e+00> : vector<16xf32>
    %447 = vector.multi_reduction <add>, %446, %cst_172 [1] : vector<16x32xf32> to vector<16xf32>
    %448 = vector.shape_cast %447 : vector<16xf32> to vector<16x1xf32>
    %cst_173 = arith.constant 3.200000e+01 : f32
    %449 = vector.broadcast %cst_173 : f32 to vector<16x1xf32>
    %450 = arith.divf %448, %449 : vector<16x1xf32>
    %cst_174 = arith.constant 9.99999996E-13 : f32
    %451 = vector.broadcast %cst_174 : f32 to vector<16x1xf32>
    %452 = arith.addf %450, %451 : vector<16x1xf32>
    %453 = math.rsqrt %452 : vector<16x1xf32>
    %454 = vector.broadcast %453 : vector<16x1xf32> to vector<16x32xf32>
    %455 = arith.mulf %445, %454 : vector<16x32xf32>
    %456 = vector.broadcast %437 : vector<1x32xf32> to vector<16x32xf32>
    %457 = arith.mulf %455, %456 : vector<16x32xf32>
    %458 = vector.broadcast %439 : vector<1x32xf32> to vector<16x32xf32>
    %459 = arith.addf %457, %458 : vector<16x32xf32>
    %c1_175 = arith.constant 1 : index
    %c0_176 = arith.constant 0 : index
    %c0_177 = arith.constant 0 : index
    %460 = vector.load %arg11[%c1_175, %c0_176, %c0_177] : memref<2x32x64xf32, #tpu.memory_space<vmem>>, vector<1x32x64xf32>
    %461 = vector.shape_cast %460 : vector<1x32x64xf32> to vector<32x64xf32>
    %cst_178 = arith.constant dense<0.000000e+00> : vector<16x64xf32>
    %462 = tpu.matmul %459, %461, %cst_178 {dimension_numbers = #tpu.dot_dimension_numbers<[1], [0], [0], [1], [0, 0, 1, 1], [], []>} : vector<16x32xf32>, vector<32x64xf32>, vector<16x64xf32> -> vector<16x64xf32>
    %c1_179 = arith.constant 1 : index
    %c0_180 = arith.constant 0 : index
    %c0_181 = arith.constant 0 : index
    %463 = vector.load %arg12[%c1_179, %c0_180, %c0_181] : memref<2x1x64xf32, #tpu.memory_space<vmem>>, vector<1x1x64xf32>
    %464 = vector.shape_cast %463 : vector<1x1x64xf32> to vector<1x64xf32>
    %465 = vector.broadcast %464 : vector<1x64xf32> to vector<16x64xf32>
    %466 = arith.addf %462, %465 : vector<16x64xf32>
    %cst_182 = arith.constant 5.000000e-01 : f32
    %467 = vector.broadcast %cst_182 : f32 to vector<16x64xf32>
    %468 = arith.mulf %467, %466 : vector<16x64xf32>
    %cst_183 = arith.constant 4.471500e-02 : f32
    %469 = vector.broadcast %cst_183 : f32 to vector<16x64xf32>
    %470 = arith.mulf %469, %466 : vector<16x64xf32>
    %471 = arith.mulf %470, %466 : vector<16x64xf32>
    %472 = arith.mulf %471, %466 : vector<16x64xf32>
    %473 = arith.addf %466, %472 : vector<16x64xf32>
    %cst_184 = arith.constant 0.797884583 : f32
    %474 = vector.broadcast %cst_184 : f32 to vector<16x64xf32>
    %475 = arith.mulf %474, %473 : vector<16x64xf32>
    %476 = math.tanh %475 : vector<16x64xf32>
    %cst_185 = arith.constant 1.000000e+00 : f32
    %477 = vector.broadcast %cst_185 : f32 to vector<16x64xf32>
    %478 = arith.addf %477, %476 : vector<16x64xf32>
    %479 = arith.mulf %468, %478 : vector<16x64xf32>
    %c1_186 = arith.constant 1 : index
    %c0_187 = arith.constant 0 : index
    %c0_188 = arith.constant 0 : index
    %480 = vector.load %arg13[%c1_186, %c0_187, %c0_188] : memref<2x64x32xf32, #tpu.memory_space<vmem>>, vector<1x64x32xf32>
    %481 = vector.shape_cast %480 : vector<1x64x32xf32> to vector<64x32xf32>
    %cst_189 = arith.constant dense<0.000000e+00> : vector<16x32xf32>
    %482 = tpu.matmul %479, %481, %cst_189 {dimension_numbers = #tpu.dot_dimension_numbers<[1], [0], [0], [1], [0, 0, 1, 1], [], []>} : vector<16x64xf32>, vector<64x32xf32>, vector<16x32xf32> -> vector<16x32xf32>
    %c1_190 = arith.constant 1 : index
    %c0_191 = arith.constant 0 : index
    %c0_192 = arith.constant 0 : index
    %483 = vector.load %arg14[%c1_190, %c0_191, %c0_192] : memref<2x1x32xf32, #tpu.memory_space<vmem>>, vector<1x1x32xf32>
    %484 = vector.shape_cast %483 : vector<1x1x32xf32> to vector<1x32xf32>
    %485 = vector.broadcast %484 : vector<1x32xf32> to vector<16x32xf32>
    %486 = arith.addf %482, %485 : vector<16x32xf32>
    %487 = arith.addf %486, %459 : vector<16x32xf32>
    %c1_193 = arith.constant 1 : index
    %c0_194 = arith.constant 0 : index
    %c0_195 = arith.constant 0 : index
    %488 = vector.load %arg15[%c1_193, %c0_194, %c0_195] : memref<2x1x32xf32, #tpu.memory_space<vmem>>, vector<1x1x32xf32>
    %489 = vector.shape_cast %488 : vector<1x1x32xf32> to vector<1x32xf32>
    %c1_196 = arith.constant 1 : index
    %c0_197 = arith.constant 0 : index
    %c0_198 = arith.constant 0 : index
    %490 = vector.load %arg16[%c1_196, %c0_197, %c0_198] : memref<2x1x32xf32, #tpu.memory_space<vmem>>, vector<1x1x32xf32>
    %491 = vector.shape_cast %490 : vector<1x1x32xf32> to vector<1x32xf32>
    %cst_199 = arith.constant dense<0.000000e+00> : vector<16xf32>
    %492 = vector.multi_reduction <add>, %487, %cst_199 [1] : vector<16x32xf32> to vector<16xf32>
    %493 = vector.shape_cast %492 : vector<16xf32> to vector<16x1xf32>
    %cst_200 = arith.constant 3.200000e+01 : f32
    %494 = vector.broadcast %cst_200 : f32 to vector<16x1xf32>
    %495 = arith.divf %493, %494 : vector<16x1xf32>
    %496 = vector.broadcast %495 : vector<16x1xf32> to vector<16x32xf32>
    %497 = arith.subf %487, %496 : vector<16x32xf32>
    %498 = arith.mulf %497, %497 : vector<16x32xf32>
    %cst_201 = arith.constant dense<0.000000e+00> : vector<16xf32>
    %499 = vector.multi_reduction <add>, %498, %cst_201 [1] : vector<16x32xf32> to vector<16xf32>
    %500 = vector.shape_cast %499 : vector<16xf32> to vector<16x1xf32>
    %cst_202 = arith.constant 3.200000e+01 : f32
    %501 = vector.broadcast %cst_202 : f32 to vector<16x1xf32>
    %502 = arith.divf %500, %501 : vector<16x1xf32>
    %cst_203 = arith.constant 9.99999996E-13 : f32
    %503 = vector.broadcast %cst_203 : f32 to vector<16x1xf32>
    %504 = arith.addf %502, %503 : vector<16x1xf32>
    %505 = math.rsqrt %504 : vector<16x1xf32>
    %506 = vector.broadcast %505 : vector<16x1xf32> to vector<16x32xf32>
    %507 = arith.mulf %497, %506 : vector<16x32xf32>
    %508 = vector.broadcast %489 : vector<1x32xf32> to vector<16x32xf32>
    %509 = arith.mulf %507, %508 : vector<16x32xf32>
    %510 = vector.broadcast %491 : vector<1x32xf32> to vector<16x32xf32>
    %511 = arith.addf %509, %510 : vector<16x32xf32>
    %512 = vector.extract_strided_slice %511 {offsets = [0, 0], sizes = [1, 32], strides = [1, 1]} : vector<16x32xf32> to vector<1x32xf32>
    %513 = vector.extract_strided_slice %511 {offsets = [8, 0], sizes = [1, 32], strides = [1, 1]} : vector<16x32xf32> to vector<1x32xf32>
    %514 = tpu.concatenate %512, %513 in 0 : vector<1x32xf32>, vector<1x32xf32> -> vector<2x32xf32>
    %c0_204 = arith.constant 0 : index
    %c0_205 = arith.constant 0 : index
    %515 = vector.load %arg17[%c0_204, %c0_205] : memref<32x32xf32, #tpu.memory_space<vmem>>, vector<32x32xf32>
    %cst_206 = arith.constant dense<0.000000e+00> : vector<2x32xf32>
    %516 = tpu.matmul %514, %515, %cst_206 {dimension_numbers = #tpu.dot_dimension_numbers<[1], [0], [0], [1], [0, 0, 1, 1], [], []>} : vector<2x32xf32>, vector<32x32xf32>, vector<2x32xf32> -> vector<2x32xf32>
    %c0_207 = arith.constant 0 : index
    %c0_208 = arith.constant 0 : index
    %517 = vector.load %arg18[%c0_207, %c0_208] : memref<1x32xf32, #tpu.memory_space<vmem>>, vector<1x32xf32>
    %518 = vector.broadcast %517 : vector<1x32xf32> to vector<2x32xf32>
    %519 = arith.addf %516, %518 : vector<2x32xf32>
    %520 = math.tanh %519 : vector<2x32xf32>
    %c0_209 = arith.constant 0 : index
    %c0_210 = arith.constant 0 : index
    %521 = vector.load %arg19[%c0_209, %c0_210] : memref<32x2xf32, #tpu.memory_space<vmem>>, vector<32x2xf32>
    %cst_211 = arith.constant dense<0.000000e+00> : vector<2x2xf32>
    %522 = tpu.matmul %520, %521, %cst_211 {dimension_numbers = #tpu.dot_dimension_numbers<[1], [0], [0], [1], [0, 0, 1, 1], [], []>} : vector<2x32xf32>, vector<32x2xf32>, vector<2x2xf32> -> vector<2x2xf32>
    %c0_212 = arith.constant 0 : index
    %c0_213 = arith.constant 0 : index
    %523 = vector.load %arg20[%c0_212, %c0_213] : memref<1x2xf32, #tpu.memory_space<vmem>>, vector<1x2xf32>
    %524 = vector.broadcast %523 : vector<1x2xf32> to vector<2x2xf32>
    %525 = arith.addf %522, %524 : vector<2x2xf32>
    %526 = vector.extract_strided_slice %525 {offsets = [0, 1], sizes = [2, 1], strides = [1, 1]} : vector<2x2xf32> to vector<2x1xf32>
    %527 = vector.extract_strided_slice %525 {offsets = [0, 0], sizes = [2, 1], strides = [1, 1]} : vector<2x2xf32> to vector<2x1xf32>
    %528 = arith.subf %526, %527 : vector<2x1xf32>
    %c0_214 = arith.constant 0 : index
    %c0_215 = arith.constant 0 : index
    %529 = vector.load %arg21[%c0_214, %c0_215] : memref<2x1xf32, #tpu.memory_space<vmem>>, vector<2x1xf32>
    tpu.vector_store %arg21[%c0_214, %c0_215], %528 {strides = array<i32>} : memref<2x1xf32, #tpu.memory_space<vmem>>, vector<2x1xf32>,
    return
  }
  func.func @transform_0(%arg0: i32) -> (i32, i32) {
    %c0_i32 = arith.constant 0 : i32
    %c0_i32_0 = arith.constant 0 : i32
    %c0_i32_1 = arith.constant 0 : i32
    return %c0_i32, %c0_i32_0 : i32, i32
  }
  func.func @transform_1(%arg0: i32) -> (i32, i32) {
    %c0_i32 = arith.constant 0 : i32
    %c0_i32_0 = arith.constant 0 : i32
    %c0_i32_1 = arith.constant 0 : i32
    return %c0_i32, %c0_i32_0 : i32, i32
  }
  func.func @transform_2(%arg0: i32) -> (i32, i32) {
    %c0_i32 = arith.constant 0 : i32
    %c0_i32_0 = arith.constant 0 : i32
    %c0_i32_1 = arith.constant 0 : i32
    return %c0_i32, %c0_i32_0 : i32, i32
  }
  func.func @transform_3(%arg0: i32) -> (i32, i32) {
    %c0_i32 = arith.constant 0 : i32
    %c0_i32_0 = arith.constant 0 : i32
    %c0_i32_1 = arith.constant 0 : i32
    return %c0_i32, %c0_i32_0 : i32, i32
  }
  func.func @transform_4(%arg0: i32) -> (i32, i32, i32) {
    %c0_i32 = arith.constant 0 : i32
    %c0_i32_0 = arith.constant 0 : i32
    %c0_i32_1 = arith.constant 0 : i32
    %c0_i32_2 = arith.constant 0 : i32
    return %c0_i32, %c0_i32_0, %c0_i32_1 : i32, i32, i32
  }
  func.func @transform_5(%arg0: i32) -> (i32, i32, i32) {
    %c0_i32 = arith.constant 0 : i32
    %c0_i32_0 = arith.constant 0 : i32
    %c0_i32_1 = arith.constant 0 : i32
    %c0_i32_2 = arith.constant 0 : i32
    return %c0_i32, %c0_i32_0, %c0_i32_1 : i32, i32, i32
  }
  func.func @transform_6(%arg0: i32) -> (i32, i32, i32) {
    %c0_i32 = arith.constant 0 : i32
    %c0_i32_0 = arith.constant 0 : i32
    %c0_i32_1 = arith.constant 0 : i32
    %c0_i32_2 = arith.constant 0 : i32
    return %c0_i32, %c0_i32_0, %c0_i32_1 : i32, i32, i32
  }
  func.func @transform_7(%arg0: i32) -> (i32, i32, i32) {
    %c0_i32 = arith.constant 0 : i32
    %c0_i32_0 = arith.constant 0 : i32
    %c0_i32_1 = arith.constant 0 : i32
    %c0_i32_2 = arith.constant 0 : i32
    return %c0_i32, %c0_i32_0, %c0_i32_1 : i32, i32, i32
  }
  func.func @transform_8(%arg0: i32) -> (i32, i32, i32) {
    %c0_i32 = arith.constant 0 : i32
    %c0_i32_0 = arith.constant 0 : i32
    %c0_i32_1 = arith.constant 0 : i32
    %c0_i32_2 = arith.constant 0 : i32
    return %c0_i32, %c0_i32_0, %c0_i32_1 : i32, i32, i32
  }
  func.func @transform_9(%arg0: i32) -> (i32, i32, i32) {
    %c0_i32 = arith.constant 0 : i32
    %c0_i32_0 = arith.constant 0 : i32
    %c0_i32_1 = arith.constant 0 : i32
    %c0_i32_2 = arith.constant 0 : i32
    return %c0_i32, %c0_i32_0, %c0_i32_1 : i32, i32, i32
  }
  func.func @transform_10(%arg0: i32) -> (i32, i32, i32) {
    %c0_i32 = arith.constant 0 : i32
    %c0_i32_0 = arith.constant 0 : i32
    %c0_i32_1 = arith.constant 0 : i32
    %c0_i32_2 = arith.constant 0 : i32
    return %c0_i32, %c0_i32_0, %c0_i32_1 : i32, i32, i32
  }
  func.func @transform_11(%arg0: i32) -> (i32, i32, i32) {
    %c0_i32 = arith.constant 0 : i32
    %c0_i32_0 = arith.constant 0 : i32
    %c0_i32_1 = arith.constant 0 : i32
    %c0_i32_2 = arith.constant 0 : i32
    return %c0_i32, %c0_i32_0, %c0_i32_1 : i32, i32, i32
  }
  func.func @transform_12(%arg0: i32) -> (i32, i32, i32) {
    %c0_i32 = arith.constant 0 : i32
    %c0_i32_0 = arith.constant 0 : i32
    %c0_i32_1 = arith.constant 0 : i32
    %c0_i32_2 = arith.constant 0 : i32
    return %c0_i32, %c0_i32_0, %c0_i32_1 : i32, i32, i32
  }
  func.func @transform_13(%arg0: i32) -> (i32, i32, i32) {
    %c0_i32 = arith.constant 0 : i32
    %c0_i32_0 = arith.constant 0 : i32
    %c0_i32_1 = arith.constant 0 : i32
    %c0_i32_2 = arith.constant 0 : i32
    return %c0_i32, %c0_i32_0, %c0_i32_1 : i32, i32, i32
  }
  func.func @transform_14(%arg0: i32) -> (i32, i32, i32) {
    %c0_i32 = arith.constant 0 : i32
    %c0_i32_0 = arith.constant 0 : i32
    %c0_i32_1 = arith.constant 0 : i32
    %c0_i32_2 = arith.constant 0 : i32
    return %c0_i32, %c0_i32_0, %c0_i32_1 : i32, i32, i32
  }
  func.func @transform_15(%arg0: i32) -> (i32, i32, i32) {
    %c0_i32 = arith.constant 0 : i32
    %c0_i32_0 = arith.constant 0 : i32
    %c0_i32_1 = arith.constant 0 : i32
    %c0_i32_2 = arith.constant 0 : i32
    return %c0_i32, %c0_i32_0, %c0_i32_1 : i32, i32, i32
  }
  func.func @transform_16(%arg0: i32) -> (i32, i32) {
    %c0_i32 = arith.constant 0 : i32
    %c0_i32_0 = arith.constant 0 : i32
    %c0_i32_1 = arith.constant 0 : i32
    return %c0_i32, %c0_i32_0 : i32, i32
  }
  func.func @transform_17(%arg0: i32) -> (i32, i32) {
    %c0_i32 = arith.constant 0 : i32
    %c0_i32_0 = arith.constant 0 : i32
    %c0_i32_1 = arith.constant 0 : i32
    return %c0_i32, %c0_i32_0 : i32, i32
  }
  func.func @transform_18(%arg0: i32) -> (i32, i32) {
    %c0_i32 = arith.constant 0 : i32
    %c0_i32_0 = arith.constant 0 : i32
    %c0_i32_1 = arith.constant 0 : i32
    return %c0_i32, %c0_i32_0 : i32, i32
  }
  func.func @transform_19(%arg0: i32) -> (i32, i32) {
    %c0_i32 = arith.constant 0 : i32
    %c0_i32_0 = arith.constant 0 : i32
    %c0_i32_1 = arith.constant 0 : i32
    return %c0_i32, %c0_i32_0 : i32, i32
  }
  func.func @transform_20(%arg0: i32) -> (i32, i32) {
    %c0_i32 = arith.constant 0 : i32
    %c0_i32_0 = arith.constant 0 : i32
    %c0_i32_1 = arith.constant 0 : i32
    return %c0_i32, %c0_i32_0 : i32, i32
  }
}

module attributes {stable_mosaic.version = 11 : i64} {
  func.func @_span_kernel(%arg0: i32, %arg1: memref<16x32xf32, #tpu.memory_space<vmem>>, %arg2: memref<2x8xf32, #tpu.memory_space<vmem>>, %arg3: memref<1x32xf32, #tpu.memory_space<vmem>>, %arg4: memref<1x32xf32, #tpu.memory_space<vmem>>, %arg5: memref<2x32x96xf32, #tpu.memory_space<vmem>>, %arg6: memref<2x1x96xf32, #tpu.memory_space<vmem>>, %arg7: memref<2x32x32xf32, #tpu.memory_space<vmem>>, %arg8: memref<2x1x32xf32, #tpu.memory_space<vmem>>, %arg9: memref<2x1x32xf32, #tpu.memory_space<vmem>>, %arg10: memref<2x1x32xf32, #tpu.memory_space<vmem>>, %arg11: memref<2x32x64xf32, #tpu.memory_space<vmem>>, %arg12: memref<2x1x64xf32, #tpu.memory_space<vmem>>, %arg13: memref<2x64x32xf32, #tpu.memory_space<vmem>>, %arg14: memref<2x1x32xf32, #tpu.memory_space<vmem>>, %arg15: memref<2x1x32xf32, #tpu.memory_space<vmem>>, %arg16: memref<2x1x32xf32, #tpu.memory_space<vmem>>, %arg17: memref<32x2xf32, #tpu.memory_space<vmem>>, %arg18: memref<1x2xf32, #tpu.memory_space<vmem>>, %arg19: memref<2x8x2xf32, #tpu.memory_space<vmem>>) attributes {dimension_semantics = [#tpu.dimension_semantics<arbitrary>], iteration_bounds = array<i64: 1>, scalar_prefetch = 0 : i64, scratch_operands = 0 : i64, tpu.core_type = #tpu.core_type<tc>, window_params = [{pipeline_mode = #tpu.pipeline_mode<synchronous>, transform_indices = @transform_0, window_bounds = array<i64: 16, 32>}, {pipeline_mode = #tpu.pipeline_mode<synchronous>, transform_indices = @transform_1, window_bounds = array<i64: 2, 8>}, {pipeline_mode = #tpu.pipeline_mode<synchronous>, transform_indices = @transform_2, window_bounds = array<i64: 1, 32>}, {pipeline_mode = #tpu.pipeline_mode<synchronous>, transform_indices = @transform_3, window_bounds = array<i64: 1, 32>}, {pipeline_mode = #tpu.pipeline_mode<synchronous>, transform_indices = @transform_4, window_bounds = array<i64: 2, 32, 96>}, {pipeline_mode = #tpu.pipeline_mode<synchronous>, transform_indices = @transform_5, window_bounds = array<i64: 2, 1, 96>}, {pipeline_mode = #tpu.pipeline_mode<synchronous>, transform_indices = @transform_6, window_bounds = array<i64: 2, 32, 32>}, {pipeline_mode = #tpu.pipeline_mode<synchronous>, transform_indices = @transform_7, window_bounds = array<i64: 2, 1, 32>}, {pipeline_mode = #tpu.pipeline_mode<synchronous>, transform_indices = @transform_8, window_bounds = array<i64: 2, 1, 32>}, {pipeline_mode = #tpu.pipeline_mode<synchronous>, transform_indices = @transform_9, window_bounds = array<i64: 2, 1, 32>}, {pipeline_mode = #tpu.pipeline_mode<synchronous>, transform_indices = @transform_10, window_bounds = array<i64: 2, 32, 64>}, {pipeline_mode = #tpu.pipeline_mode<synchronous>, transform_indices = @transform_11, window_bounds = array<i64: 2, 1, 64>}, {pipeline_mode = #tpu.pipeline_mode<synchronous>, transform_indices = @transform_12, window_bounds = array<i64: 2, 64, 32>}, {pipeline_mode = #tpu.pipeline_mode<synchronous>, transform_indices = @transform_13, window_bounds = array<i64: 2, 1, 32>}, {pipeline_mode = #tpu.pipeline_mode<synchronous>, transform_indices = @transform_14, window_bounds = array<i64: 2, 1, 32>}, {pipeline_mode = #tpu.pipeline_mode<synchronous>, transform_indices = @transform_15, window_bounds = array<i64: 2, 1, 32>}, {pipeline_mode = #tpu.pipeline_mode<synchronous>, transform_indices = @transform_16, window_bounds = array<i64: 32, 2>}, {pipeline_mode = #tpu.pipeline_mode<synchronous>, transform_indices = @transform_17, window_bounds = array<i64: 1, 2>}, {pipeline_mode = #tpu.pipeline_mode<synchronous>, transform_indices = @transform_18, window_bounds = array<i64: 2, 8, 2>}]} {
    %c0 = arith.constant 0 : index
    %c0_0 = arith.constant 0 : index
    %0 = vector.load %arg2[%c0, %c0_0] : memref<2x8xf32, #tpu.memory_space<vmem>>, vector<2x8xf32>
    %1 = vector.extract_strided_slice %0 {offsets = [0, 0], sizes = [1, 8], strides = [1, 1]} : vector<2x8xf32> to vector<1x8xf32>
    %cst = arith.constant 5.000000e-01 : f32
    %2 = vector.broadcast %cst : f32 to vector<1x8xf32>
    %3 = arith.cmpf ogt, %1, %2 : vector<1x8xf32>
    %cst_1 = arith.constant 0.000000e+00 : f32
    %cst_2 = arith.constant -1.000000e+09 : f32
    %4 = vector.broadcast %cst_1 : f32 to vector<1x8xf32>
    %5 = vector.broadcast %cst_2 : f32 to vector<1x8xf32>
    %6 = arith.select %3, %4, %5 : vector<1x8xi1>, vector<1x8xf32>
    %7 = vector.extract_strided_slice %0 {offsets = [1, 0], sizes = [1, 8], strides = [1, 1]} : vector<2x8xf32> to vector<1x8xf32>
    %cst_3 = arith.constant 5.000000e-01 : f32
    %8 = vector.broadcast %cst_3 : f32 to vector<1x8xf32>
    %9 = arith.cmpf ogt, %7, %8 : vector<1x8xf32>
    %cst_4 = arith.constant 0.000000e+00 : f32
    %cst_5 = arith.constant -1.000000e+09 : f32
    %10 = vector.broadcast %cst_4 : f32 to vector<1x8xf32>
    %11 = vector.broadcast %cst_5 : f32 to vector<1x8xf32>
    %12 = arith.select %9, %10, %11 : vector<1x8xi1>, vector<1x8xf32>
    %c0_6 = arith.constant 0 : index
    %c0_7 = arith.constant 0 : index
    %13 = vector.load %arg1[%c0_6, %c0_7] : memref<16x32xf32, #tpu.memory_space<vmem>>, vector<16x32xf32>
    %c0_8 = arith.constant 0 : index
    %c0_9 = arith.constant 0 : index
    %14 = vector.load %arg3[%c0_8, %c0_9] : memref<1x32xf32, #tpu.memory_space<vmem>>, vector<1x32xf32>
    %c0_10 = arith.constant 0 : index
    %c0_11 = arith.constant 0 : index
    %15 = vector.load %arg4[%c0_10, %c0_11] : memref<1x32xf32, #tpu.memory_space<vmem>>, vector<1x32xf32>
    %cst_12 = arith.constant dense<0.000000e+00> : vector<16xf32>
    %16 = vector.multi_reduction <add>, %13, %cst_12 [1] : vector<16x32xf32> to vector<16xf32>
    %17 = vector.shape_cast %16 : vector<16xf32> to vector<16x1xf32>
    %cst_13 = arith.constant 3.200000e+01 : f32
    %18 = vector.broadcast %cst_13 : f32 to vector<16x1xf32>
    %19 = arith.divf %17, %18 : vector<16x1xf32>
    %20 = vector.broadcast %19 : vector<16x1xf32> to vector<16x32xf32>
    %21 = arith.subf %13, %20 : vector<16x32xf32>
    %22 = arith.mulf %21, %21 : vector<16x32xf32>
    %cst_14 = arith.constant dense<0.000000e+00> : vector<16xf32>
    %23 = vector.multi_reduction <add>, %22, %cst_14 [1] : vector<16x32xf32> to vector<16xf32>
    %24 = vector.shape_cast %23 : vector<16xf32> to vector<16x1xf32>
    %cst_15 = arith.constant 3.200000e+01 : f32
    %25 = vector.broadcast %cst_15 : f32 to vector<16x1xf32>
    %26 = arith.divf %24, %25 : vector<16x1xf32>
    %cst_16 = arith.constant 9.99999996E-13 : f32
    %27 = vector.broadcast %cst_16 : f32 to vector<16x1xf32>
    %28 = arith.addf %26, %27 : vector<16x1xf32>
    %29 = math.rsqrt %28 : vector<16x1xf32>
    %30 = vector.broadcast %29 : vector<16x1xf32> to vector<16x32xf32>
    %31 = arith.mulf %21, %30 : vector<16x32xf32>
    %32 = vector.broadcast %14 : vector<1x32xf32> to vector<16x32xf32>
    %33 = arith.mulf %31, %32 : vector<16x32xf32>
    %34 = vector.broadcast %15 : vector<1x32xf32> to vector<16x32xf32>
    %35 = arith.addf %33, %34 : vector<16x32xf32>
    %c0_17 = arith.constant 0 : index
    %c0_18 = arith.constant 0 : index
    %c0_19 = arith.constant 0 : index
    %36 = vector.load %arg5[%c0_17, %c0_18, %c0_19] : memref<2x32x96xf32, #tpu.memory_space<vmem>>, vector<1x32x96xf32>
    %37 = vector.shape_cast %36 : vector<1x32x96xf32> to vector<32x96xf32>
    %cst_20 = arith.constant dense<0.000000e+00> : vector<16x96xf32>
    %38 = tpu.matmul %35, %37, %cst_20 {dimension_numbers = #tpu.dot_dimension_numbers<[1], [0], [0], [1], [0, 0, 1, 1], [], []>} : vector<16x32xf32>, vector<32x96xf32>, vector<16x96xf32> -> vector<16x96xf32>
    %c0_21 = arith.constant 0 : index
    %c0_22 = arith.constant 0 : index
    %c0_23 = arith.constant 0 : index
    %39 = vector.load %arg6[%c0_21, %c0_22, %c0_23] : memref<2x1x96xf32, #tpu.memory_space<vmem>>, vector<1x1x96xf32>
    %40 = vector.shape_cast %39 : vector<1x1x96xf32> to vector<1x96xf32>
    %41 = vector.broadcast %40 : vector<1x96xf32> to vector<16x96xf32>
    %42 = arith.addf %38, %41 : vector<16x96xf32>
    %43 = vector.extract_strided_slice %42 {offsets = [0, 0], sizes = [8, 8], strides = [1, 1]} : vector<16x96xf32> to vector<8x8xf32>
    %44 = vector.extract_strided_slice %42 {offsets = [0, 32], sizes = [8, 8], strides = [1, 1]} : vector<16x96xf32> to vector<8x8xf32>
    %45 = vector.extract_strided_slice %42 {offsets = [0, 64], sizes = [8, 8], strides = [1, 1]} : vector<16x96xf32> to vector<8x8xf32>
    "tpu.trace_start"() <{level = 10 : i32, message = "qd,kd->qk"}> : () -> ()
    %cst_24 = arith.constant dense<0.000000e+00> : vector<8x8xf32>
    %46 = tpu.matmul %43, %44, %cst_24 {dimension_numbers = #tpu.dot_dimension_numbers<[1], [1], [0], [0], [0, 0, 1, 0], [], []>} : vector<8x8xf32>, vector<8x8xf32>, vector<8x8xf32> -> vector<8x8xf32>
    "tpu.trace_stop"() : () -> ()
    %cst_25 = arith.constant 0.353553385 : f32
    %47 = vector.broadcast %cst_25 : f32 to vector<8x8xf32>
    %48 = arith.mulf %46, %47 : vector<8x8xf32>
    %49 = vector.broadcast %6 : vector<1x8xf32> to vector<8x8xf32>
    %50 = arith.addf %48, %49 : vector<8x8xf32>
    %cst_26 = arith.constant dense<0xFF800000> : vector<8xf32>
    %51 = vector.multi_reduction <maximumf>, %50, %cst_26 [1] : vector<8x8xf32> to vector<8xf32>
    %52 = vector.shape_cast %51 : vector<8xf32> to vector<8x1xf32>
    %53 = vector.broadcast %52 : vector<8x1xf32> to vector<8x8xf32>
    %54 = arith.subf %50, %53 : vector<8x8xf32>
    %55 = math.exp %54 : vector<8x8xf32>
    %cst_27 = arith.constant dense<0.000000e+00> : vector<8xf32>
    %56 = vector.multi_reduction <add>, %55, %cst_27 [1] : vector<8x8xf32> to vector<8xf32>
    %57 = vector.shape_cast %56 : vector<8xf32> to vector<8x1xf32>
    %58 = vector.broadcast %57 : vector<8x1xf32> to vector<8x8xf32>
    %59 = arith.divf %55, %58 : vector<8x8xf32>
    %cst_28 = arith.constant dense<0.000000e+00> : vector<8x8xf32>
    %60 = tpu.matmul %59, %45, %cst_28 {dimension_numbers = #tpu.dot_dimension_numbers<[1], [0], [0], [1], [0, 0, 1, 1], [], []>} : vector<8x8xf32>, vector<8x8xf32>, vector<8x8xf32> -> vector<8x8xf32>
    %61 = vector.extract_strided_slice %42 {offsets = [0, 8], sizes = [8, 8], strides = [1, 1]} : vector<16x96xf32> to vector<8x8xf32>
    %62 = vector.extract_strided_slice %42 {offsets = [0, 40], sizes = [8, 8], strides = [1, 1]} : vector<16x96xf32> to vector<8x8xf32>
    %63 = vector.extract_strided_slice %42 {offsets = [0, 72], sizes = [8, 8], strides = [1, 1]} : vector<16x96xf32> to vector<8x8xf32>
    "tpu.trace_start"() <{level = 10 : i32, message = "qd,kd->qk"}> : () -> ()
    %cst_29 = arith.constant dense<0.000000e+00> : vector<8x8xf32>
    %64 = tpu.matmul %61, %62, %cst_29 {dimension_numbers = #tpu.dot_dimension_numbers<[1], [1], [0], [0], [0, 0, 1, 0], [], []>} : vector<8x8xf32>, vector<8x8xf32>, vector<8x8xf32> -> vector<8x8xf32>
    "tpu.trace_stop"() : () -> ()
    %cst_30 = arith.constant 0.353553385 : f32
    %65 = vector.broadcast %cst_30 : f32 to vector<8x8xf32>
    %66 = arith.mulf %64, %65 : vector<8x8xf32>
    %67 = vector.broadcast %6 : vector<1x8xf32> to vector<8x8xf32>
    %68 = arith.addf %66, %67 : vector<8x8xf32>
    %cst_31 = arith.constant dense<0xFF800000> : vector<8xf32>
    %69 = vector.multi_reduction <maximumf>, %68, %cst_31 [1] : vector<8x8xf32> to vector<8xf32>
    %70 = vector.shape_cast %69 : vector<8xf32> to vector<8x1xf32>
    %71 = vector.broadcast %70 : vector<8x1xf32> to vector<8x8xf32>
    %72 = arith.subf %68, %71 : vector<8x8xf32>
    %73 = math.exp %72 : vector<8x8xf32>
    %cst_32 = arith.constant dense<0.000000e+00> : vector<8xf32>
    %74 = vector.multi_reduction <add>, %73, %cst_32 [1] : vector<8x8xf32> to vector<8xf32>
    %75 = vector.shape_cast %74 : vector<8xf32> to vector<8x1xf32>
    %76 = vector.broadcast %75 : vector<8x1xf32> to vector<8x8xf32>
    %77 = arith.divf %73, %76 : vector<8x8xf32>
    %cst_33 = arith.constant dense<0.000000e+00> : vector<8x8xf32>
    %78 = tpu.matmul %77, %63, %cst_33 {dimension_numbers = #tpu.dot_dimension_numbers<[1], [0], [0], [1], [0, 0, 1, 1], [], []>} : vector<8x8xf32>, vector<8x8xf32>, vector<8x8xf32> -> vector<8x8xf32>
    %79 = vector.extract_strided_slice %42 {offsets = [0, 16], sizes = [8, 8], strides = [1, 1]} : vector<16x96xf32> to vector<8x8xf32>
    %80 = vector.extract_strided_slice %42 {offsets = [0, 48], sizes = [8, 8], strides = [1, 1]} : vector<16x96xf32> to vector<8x8xf32>
    %81 = vector.extract_strided_slice %42 {offsets = [0, 80], sizes = [8, 8], strides = [1, 1]} : vector<16x96xf32> to vector<8x8xf32>
    "tpu.trace_start"() <{level = 10 : i32, message = "qd,kd->qk"}> : () -> ()
    %cst_34 = arith.constant dense<0.000000e+00> : vector<8x8xf32>
    %82 = tpu.matmul %79, %80, %cst_34 {dimension_numbers = #tpu.dot_dimension_numbers<[1], [1], [0], [0], [0, 0, 1, 0], [], []>} : vector<8x8xf32>, vector<8x8xf32>, vector<8x8xf32> -> vector<8x8xf32>
    "tpu.trace_stop"() : () -> ()
    %cst_35 = arith.constant 0.353553385 : f32
    %83 = vector.broadcast %cst_35 : f32 to vector<8x8xf32>
    %84 = arith.mulf %82, %83 : vector<8x8xf32>
    %85 = vector.broadcast %6 : vector<1x8xf32> to vector<8x8xf32>
    %86 = arith.addf %84, %85 : vector<8x8xf32>
    %cst_36 = arith.constant dense<0xFF800000> : vector<8xf32>
    %87 = vector.multi_reduction <maximumf>, %86, %cst_36 [1] : vector<8x8xf32> to vector<8xf32>
    %88 = vector.shape_cast %87 : vector<8xf32> to vector<8x1xf32>
    %89 = vector.broadcast %88 : vector<8x1xf32> to vector<8x8xf32>
    %90 = arith.subf %86, %89 : vector<8x8xf32>
    %91 = math.exp %90 : vector<8x8xf32>
    %cst_37 = arith.constant dense<0.000000e+00> : vector<8xf32>
    %92 = vector.multi_reduction <add>, %91, %cst_37 [1] : vector<8x8xf32> to vector<8xf32>
    %93 = vector.shape_cast %92 : vector<8xf32> to vector<8x1xf32>
    %94 = vector.broadcast %93 : vector<8x1xf32> to vector<8x8xf32>
    %95 = arith.divf %91, %94 : vector<8x8xf32>
    %cst_38 = arith.constant dense<0.000000e+00> : vector<8x8xf32>
    %96 = tpu.matmul %95, %81, %cst_38 {dimension_numbers = #tpu.dot_dimension_numbers<[1], [0], [0], [1], [0, 0, 1, 1], [], []>} : vector<8x8xf32>, vector<8x8xf32>, vector<8x8xf32> -> vector<8x8xf32>
    %97 = vector.extract_strided_slice %42 {offsets = [0, 24], sizes = [8, 8], strides = [1, 1]} : vector<16x96xf32> to vector<8x8xf32>
    %98 = vector.extract_strided_slice %42 {offsets = [0, 56], sizes = [8, 8], strides = [1, 1]} : vector<16x96xf32> to vector<8x8xf32>
    %99 = vector.extract_strided_slice %42 {offsets = [0, 88], sizes = [8, 8], strides = [1, 1]} : vector<16x96xf32> to vector<8x8xf32>
    "tpu.trace_start"() <{level = 10 : i32, message = "qd,kd->qk"}> : () -> ()
    %cst_39 = arith.constant dense<0.000000e+00> : vector<8x8xf32>
    %100 = tpu.matmul %97, %98, %cst_39 {dimension_numbers = #tpu.dot_dimension_numbers<[1], [1], [0], [0], [0, 0, 1, 0], [], []>} : vector<8x8xf32>, vector<8x8xf32>, vector<8x8xf32> -> vector<8x8xf32>
    "tpu.trace_stop"() : () -> ()
    %cst_40 = arith.constant 0.353553385 : f32
    %101 = vector.broadcast %cst_40 : f32 to vector<8x8xf32>
    %102 = arith.mulf %100, %101 : vector<8x8xf32>
    %103 = vector.broadcast %6 : vector<1x8xf32> to vector<8x8xf32>
    %104 = arith.addf %102, %103 : vector<8x8xf32>
    %cst_41 = arith.constant dense<0xFF800000> : vector<8xf32>
    %105 = vector.multi_reduction <maximumf>, %104, %cst_41 [1] : vector<8x8xf32> to vector<8xf32>
    %106 = vector.shape_cast %105 : vector<8xf32> to vector<8x1xf32>
    %107 = vector.broadcast %106 : vector<8x1xf32> to vector<8x8xf32>
    %108 = arith.subf %104, %107 : vector<8x8xf32>
    %109 = math.exp %108 : vector<8x8xf32>
    %cst_42 = arith.constant dense<0.000000e+00> : vector<8xf32>
    %110 = vector.multi_reduction <add>, %109, %cst_42 [1] : vector<8x8xf32> to vector<8xf32>
    %111 = vector.shape_cast %110 : vector<8xf32> to vector<8x1xf32>
    %112 = vector.broadcast %111 : vector<8x1xf32> to vector<8x8xf32>
    %113 = arith.divf %109, %112 : vector<8x8xf32>
    %cst_43 = arith.constant dense<0.000000e+00> : vector<8x8xf32>
    %114 = tpu.matmul %113, %99, %cst_43 {dimension_numbers = #tpu.dot_dimension_numbers<[1], [0], [0], [1], [0, 0, 1, 1], [], []>} : vector<8x8xf32>, vector<8x8xf32>, vector<8x8xf32> -> vector<8x8xf32>
    %115 = tpu.concatenate %60, %78, %96, %114 in 1 : vector<8x8xf32>, vector<8x8xf32>, vector<8x8xf32>, vector<8x8xf32> -> vector<8x32xf32>
    %116 = vector.extract_strided_slice %42 {offsets = [8, 0], sizes = [8, 8], strides = [1, 1]} : vector<16x96xf32> to vector<8x8xf32>
    %117 = vector.extract_strided_slice %42 {offsets = [8, 32], sizes = [8, 8], strides = [1, 1]} : vector<16x96xf32> to vector<8x8xf32>
    %118 = vector.extract_strided_slice %42 {offsets = [8, 64], sizes = [8, 8], strides = [1, 1]} : vector<16x96xf32> to vector<8x8xf32>
    "tpu.trace_start"() <{level = 10 : i32, message = "qd,kd->qk"}> : () -> ()
    %cst_44 = arith.constant dense<0.000000e+00> : vector<8x8xf32>
    %119 = tpu.matmul %116, %117, %cst_44 {dimension_numbers = #tpu.dot_dimension_numbers<[1], [1], [0], [0], [0, 0, 1, 0], [], []>} : vector<8x8xf32>, vector<8x8xf32>, vector<8x8xf32> -> vector<8x8xf32>
    "tpu.trace_stop"() : () -> ()
    %cst_45 = arith.constant 0.353553385 : f32
    %120 = vector.broadcast %cst_45 : f32 to vector<8x8xf32>
    %121 = arith.mulf %119, %120 : vector<8x8xf32>
    %122 = vector.broadcast %12 : vector<1x8xf32> to vector<8x8xf32>
    %123 = arith.addf %121, %122 : vector<8x8xf32>
    %cst_46 = arith.constant dense<0xFF800000> : vector<8xf32>
    %124 = vector.multi_reduction <maximumf>, %123, %cst_46 [1] : vector<8x8xf32> to vector<8xf32>
    %125 = vector.shape_cast %124 : vector<8xf32> to vector<8x1xf32>
    %126 = vector.broadcast %125 : vector<8x1xf32> to vector<8x8xf32>
    %127 = arith.subf %123, %126 : vector<8x8xf32>
    %128 = math.exp %127 : vector<8x8xf32>
    %cst_47 = arith.constant dense<0.000000e+00> : vector<8xf32>
    %129 = vector.multi_reduction <add>, %128, %cst_47 [1] : vector<8x8xf32> to vector<8xf32>
    %130 = vector.shape_cast %129 : vector<8xf32> to vector<8x1xf32>
    %131 = vector.broadcast %130 : vector<8x1xf32> to vector<8x8xf32>
    %132 = arith.divf %128, %131 : vector<8x8xf32>
    %cst_48 = arith.constant dense<0.000000e+00> : vector<8x8xf32>
    %133 = tpu.matmul %132, %118, %cst_48 {dimension_numbers = #tpu.dot_dimension_numbers<[1], [0], [0], [1], [0, 0, 1, 1], [], []>} : vector<8x8xf32>, vector<8x8xf32>, vector<8x8xf32> -> vector<8x8xf32>
    %134 = vector.extract_strided_slice %42 {offsets = [8, 8], sizes = [8, 8], strides = [1, 1]} : vector<16x96xf32> to vector<8x8xf32>
    %135 = vector.extract_strided_slice %42 {offsets = [8, 40], sizes = [8, 8], strides = [1, 1]} : vector<16x96xf32> to vector<8x8xf32>
    %136 = vector.extract_strided_slice %42 {offsets = [8, 72], sizes = [8, 8], strides = [1, 1]} : vector<16x96xf32> to vector<8x8xf32>
    "tpu.trace_start"() <{level = 10 : i32, message = "qd,kd->qk"}> : () -> ()
    %cst_49 = arith.constant dense<0.000000e+00> : vector<8x8xf32>
    %137 = tpu.matmul %134, %135, %cst_49 {dimension_numbers = #tpu.dot_dimension_numbers<[1], [1], [0], [0], [0, 0, 1, 0], [], []>} : vector<8x8xf32>, vector<8x8xf32>, vector<8x8xf32> -> vector<8x8xf32>
    "tpu.trace_stop"() : () -> ()
    %cst_50 = arith.constant 0.353553385 : f32
    %138 = vector.broadcast %cst_50 : f32 to vector<8x8xf32>
    %139 = arith.mulf %137, %138 : vector<8x8xf32>
    %140 = vector.broadcast %12 : vector<1x8xf32> to vector<8x8xf32>
    %141 = arith.addf %139, %140 : vector<8x8xf32>
    %cst_51 = arith.constant dense<0xFF800000> : vector<8xf32>
    %142 = vector.multi_reduction <maximumf>, %141, %cst_51 [1] : vector<8x8xf32> to vector<8xf32>
    %143 = vector.shape_cast %142 : vector<8xf32> to vector<8x1xf32>
    %144 = vector.broadcast %143 : vector<8x1xf32> to vector<8x8xf32>
    %145 = arith.subf %141, %144 : vector<8x8xf32>
    %146 = math.exp %145 : vector<8x8xf32>
    %cst_52 = arith.constant dense<0.000000e+00> : vector<8xf32>
    %147 = vector.multi_reduction <add>, %146, %cst_52 [1] : vector<8x8xf32> to vector<8xf32>
    %148 = vector.shape_cast %147 : vector<8xf32> to vector<8x1xf32>
    %149 = vector.broadcast %148 : vector<8x1xf32> to vector<8x8xf32>
    %150 = arith.divf %146, %149 : vector<8x8xf32>
    %cst_53 = arith.constant dense<0.000000e+00> : vector<8x8xf32>
    %151 = tpu.matmul %150, %136, %cst_53 {dimension_numbers = #tpu.dot_dimension_numbers<[1], [0], [0], [1], [0, 0, 1, 1], [], []>} : vector<8x8xf32>, vector<8x8xf32>, vector<8x8xf32> -> vector<8x8xf32>
    %152 = vector.extract_strided_slice %42 {offsets = [8, 16], sizes = [8, 8], strides = [1, 1]} : vector<16x96xf32> to vector<8x8xf32>
    %153 = vector.extract_strided_slice %42 {offsets = [8, 48], sizes = [8, 8], strides = [1, 1]} : vector<16x96xf32> to vector<8x8xf32>
    %154 = vector.extract_strided_slice %42 {offsets = [8, 80], sizes = [8, 8], strides = [1, 1]} : vector<16x96xf32> to vector<8x8xf32>
    "tpu.trace_start"() <{level = 10 : i32, message = "qd,kd->qk"}> : () -> ()
    %cst_54 = arith.constant dense<0.000000e+00> : vector<8x8xf32>
    %155 = tpu.matmul %152, %153, %cst_54 {dimension_numbers = #tpu.dot_dimension_numbers<[1], [1], [0], [0], [0, 0, 1, 0], [], []>} : vector<8x8xf32>, vector<8x8xf32>, vector<8x8xf32> -> vector<8x8xf32>
    "tpu.trace_stop"() : () -> ()
    %cst_55 = arith.constant 0.353553385 : f32
    %156 = vector.broadcast %cst_55 : f32 to vector<8x8xf32>
    %157 = arith.mulf %155, %156 : vector<8x8xf32>
    %158 = vector.broadcast %12 : vector<1x8xf32> to vector<8x8xf32>
    %159 = arith.addf %157, %158 : vector<8x8xf32>
    %cst_56 = arith.constant dense<0xFF800000> : vector<8xf32>
    %160 = vector.multi_reduction <maximumf>, %159, %cst_56 [1] : vector<8x8xf32> to vector<8xf32>
    %161 = vector.shape_cast %160 : vector<8xf32> to vector<8x1xf32>
    %162 = vector.broadcast %161 : vector<8x1xf32> to vector<8x8xf32>
    %163 = arith.subf %159, %162 : vector<8x8xf32>
    %164 = math.exp %163 : vector<8x8xf32>
    %cst_57 = arith.constant dense<0.000000e+00> : vector<8xf32>
    %165 = vector.multi_reduction <add>, %164, %cst_57 [1] : vector<8x8xf32> to vector<8xf32>
    %166 = vector.shape_cast %165 : vector<8xf32> to vector<8x1xf32>
    %167 = vector.broadcast %166 : vector<8x1xf32> to vector<8x8xf32>
    %168 = arith.divf %164, %167 : vector<8x8xf32>
    %cst_58 = arith.constant dense<0.000000e+00> : vector<8x8xf32>
    %169 = tpu.matmul %168, %154, %cst_58 {dimension_numbers = #tpu.dot_dimension_numbers<[1], [0], [0], [1], [0, 0, 1, 1], [], []>} : vector<8x8xf32>, vector<8x8xf32>, vector<8x8xf32> -> vector<8x8xf32>
    %170 = vector.extract_strided_slice %42 {offsets = [8, 24], sizes = [8, 8], strides = [1, 1]} : vector<16x96xf32> to vector<8x8xf32>
    %171 = vector.extract_strided_slice %42 {offsets = [8, 56], sizes = [8, 8], strides = [1, 1]} : vector<16x96xf32> to vector<8x8xf32>
    %172 = vector.extract_strided_slice %42 {offsets = [8, 88], sizes = [8, 8], strides = [1, 1]} : vector<16x96xf32> to vector<8x8xf32>
    "tpu.trace_start"() <{level = 10 : i32, message = "qd,kd->qk"}> : () -> ()
    %cst_59 = arith.constant dense<0.000000e+00> : vector<8x8xf32>
    %173 = tpu.matmul %170, %171, %cst_59 {dimension_numbers = #tpu.dot_dimension_numbers<[1], [1], [0], [0], [0, 0, 1, 0], [], []>} : vector<8x8xf32>, vector<8x8xf32>, vector<8x8xf32> -> vector<8x8xf32>
    "tpu.trace_stop"() : () -> ()
    %cst_60 = arith.constant 0.353553385 : f32
    %174 = vector.broadcast %cst_60 : f32 to vector<8x8xf32>
    %175 = arith.mulf %173, %174 : vector<8x8xf32>
    %176 = vector.broadcast %12 : vector<1x8xf32> to vector<8x8xf32>
    %177 = arith.addf %175, %176 : vector<8x8xf32>
    %cst_61 = arith.constant dense<0xFF800000> : vector<8xf32>
    %178 = vector.multi_reduction <maximumf>, %177, %cst_61 [1] : vector<8x8xf32> to vector<8xf32>
    %179 = vector.shape_cast %178 : vector<8xf32> to vector<8x1xf32>
    %180 = vector.broadcast %179 : vector<8x1xf32> to vector<8x8xf32>
    %181 = arith.subf %177, %180 : vector<8x8xf32>
    %182 = math.exp %181 : vector<8x8xf32>
    %cst_62 = arith.constant dense<0.000000e+00> : vector<8xf32>
    %183 = vector.multi_reduction <add>, %182, %cst_62 [1] : vector<8x8xf32> to vector<8xf32>
    %184 = vector.shape_cast %183 : vector<8xf32> to vector<8x1xf32>
    %185 = vector.broadcast %184 : vector<8x1xf32> to vector<8x8xf32>
    %186 = arith.divf %182, %185 : vector<8x8xf32>
    %cst_63 = arith.constant dense<0.000000e+00> : vector<8x8xf32>
    %187 = tpu.matmul %186, %172, %cst_63 {dimension_numbers = #tpu.dot_dimension_numbers<[1], [0], [0], [1], [0, 0, 1, 1], [], []>} : vector<8x8xf32>, vector<8x8xf32>, vector<8x8xf32> -> vector<8x8xf32>
    %188 = tpu.concatenate %133, %151, %169, %187 in 1 : vector<8x8xf32>, vector<8x8xf32>, vector<8x8xf32>, vector<8x8xf32> -> vector<8x32xf32>
    %189 = tpu.concatenate %115, %188 in 0 : vector<8x32xf32>, vector<8x32xf32> -> vector<16x32xf32>
    %c0_64 = arith.constant 0 : index
    %c0_65 = arith.constant 0 : index
    %c0_66 = arith.constant 0 : index
    %190 = vector.load %arg7[%c0_64, %c0_65, %c0_66] : memref<2x32x32xf32, #tpu.memory_space<vmem>>, vector<1x32x32xf32>
    %191 = vector.shape_cast %190 : vector<1x32x32xf32> to vector<32x32xf32>
    %cst_67 = arith.constant dense<0.000000e+00> : vector<16x32xf32>
    %192 = tpu.matmul %189, %191, %cst_67 {dimension_numbers = #tpu.dot_dimension_numbers<[1], [0], [0], [1], [0, 0, 1, 1], [], []>} : vector<16x32xf32>, vector<32x32xf32>, vector<16x32xf32> -> vector<16x32xf32>
    %c0_68 = arith.constant 0 : index
    %c0_69 = arith.constant 0 : index
    %c0_70 = arith.constant 0 : index
    %193 = vector.load %arg8[%c0_68, %c0_69, %c0_70] : memref<2x1x32xf32, #tpu.memory_space<vmem>>, vector<1x1x32xf32>
    %194 = vector.shape_cast %193 : vector<1x1x32xf32> to vector<1x32xf32>
    %195 = vector.broadcast %194 : vector<1x32xf32> to vector<16x32xf32>
    %196 = arith.addf %192, %195 : vector<16x32xf32>
    %197 = arith.addf %196, %35 : vector<16x32xf32>
    %c0_71 = arith.constant 0 : index
    %c0_72 = arith.constant 0 : index
    %c0_73 = arith.constant 0 : index
    %198 = vector.load %arg9[%c0_71, %c0_72, %c0_73] : memref<2x1x32xf32, #tpu.memory_space<vmem>>, vector<1x1x32xf32>
    %199 = vector.shape_cast %198 : vector<1x1x32xf32> to vector<1x32xf32>
    %c0_74 = arith.constant 0 : index
    %c0_75 = arith.constant 0 : index
    %c0_76 = arith.constant 0 : index
    %200 = vector.load %arg10[%c0_74, %c0_75, %c0_76] : memref<2x1x32xf32, #tpu.memory_space<vmem>>, vector<1x1x32xf32>
    %201 = vector.shape_cast %200 : vector<1x1x32xf32> to vector<1x32xf32>
    %cst_77 = arith.constant dense<0.000000e+00> : vector<16xf32>
    %202 = vector.multi_reduction <add>, %197, %cst_77 [1] : vector<16x32xf32> to vector<16xf32>
    %203 = vector.shape_cast %202 : vector<16xf32> to vector<16x1xf32>
    %cst_78 = arith.constant 3.200000e+01 : f32
    %204 = vector.broadcast %cst_78 : f32 to vector<16x1xf32>
    %205 = arith.divf %203, %204 : vector<16x1xf32>
    %206 = vector.broadcast %205 : vector<16x1xf32> to vector<16x32xf32>
    %207 = arith.subf %197, %206 : vector<16x32xf32>
    %208 = arith.mulf %207, %207 : vector<16x32xf32>
    %cst_79 = arith.constant dense<0.000000e+00> : vector<16xf32>
    %209 = vector.multi_reduction <add>, %208, %cst_79 [1] : vector<16x32xf32> to vector<16xf32>
    %210 = vector.shape_cast %209 : vector<16xf32> to vector<16x1xf32>
    %cst_80 = arith.constant 3.200000e+01 : f32
    %211 = vector.broadcast %cst_80 : f32 to vector<16x1xf32>
    %212 = arith.divf %210, %211 : vector<16x1xf32>
    %cst_81 = arith.constant 9.99999996E-13 : f32
    %213 = vector.broadcast %cst_81 : f32 to vector<16x1xf32>
    %214 = arith.addf %212, %213 : vector<16x1xf32>
    %215 = math.rsqrt %214 : vector<16x1xf32>
    %216 = vector.broadcast %215 : vector<16x1xf32> to vector<16x32xf32>
    %217 = arith.mulf %207, %216 : vector<16x32xf32>
    %218 = vector.broadcast %199 : vector<1x32xf32> to vector<16x32xf32>
    %219 = arith.mulf %217, %218 : vector<16x32xf32>
    %220 = vector.broadcast %201 : vector<1x32xf32> to vector<16x32xf32>
    %221 = arith.addf %219, %220 : vector<16x32xf32>
    %c0_82 = arith.constant 0 : index
    %c0_83 = arith.constant 0 : index
    %c0_84 = arith.constant 0 : index
    %222 = vector.load %arg11[%c0_82, %c0_83, %c0_84] : memref<2x32x64xf32, #tpu.memory_space<vmem>>, vector<1x32x64xf32>
    %223 = vector.shape_cast %222 : vector<1x32x64xf32> to vector<32x64xf32>
    %cst_85 = arith.constant dense<0.000000e+00> : vector<16x64xf32>
    %224 = tpu.matmul %221, %223, %cst_85 {dimension_numbers = #tpu.dot_dimension_numbers<[1], [0], [0], [1], [0, 0, 1, 1], [], []>} : vector<16x32xf32>, vector<32x64xf32>, vector<16x64xf32> -> vector<16x64xf32>
    %c0_86 = arith.constant 0 : index
    %c0_87 = arith.constant 0 : index
    %c0_88 = arith.constant 0 : index
    %225 = vector.load %arg12[%c0_86, %c0_87, %c0_88] : memref<2x1x64xf32, #tpu.memory_space<vmem>>, vector<1x1x64xf32>
    %226 = vector.shape_cast %225 : vector<1x1x64xf32> to vector<1x64xf32>
    %227 = vector.broadcast %226 : vector<1x64xf32> to vector<16x64xf32>
    %228 = arith.addf %224, %227 : vector<16x64xf32>
    %cst_89 = arith.constant 5.000000e-01 : f32
    %229 = vector.broadcast %cst_89 : f32 to vector<16x64xf32>
    %230 = arith.mulf %229, %228 : vector<16x64xf32>
    %cst_90 = arith.constant 4.471500e-02 : f32
    %231 = vector.broadcast %cst_90 : f32 to vector<16x64xf32>
    %232 = arith.mulf %231, %228 : vector<16x64xf32>
    %233 = arith.mulf %232, %228 : vector<16x64xf32>
    %234 = arith.mulf %233, %228 : vector<16x64xf32>
    %235 = arith.addf %228, %234 : vector<16x64xf32>
    %cst_91 = arith.constant 0.797884583 : f32
    %236 = vector.broadcast %cst_91 : f32 to vector<16x64xf32>
    %237 = arith.mulf %236, %235 : vector<16x64xf32>
    %238 = math.tanh %237 : vector<16x64xf32>
    %cst_92 = arith.constant 1.000000e+00 : f32
    %239 = vector.broadcast %cst_92 : f32 to vector<16x64xf32>
    %240 = arith.addf %239, %238 : vector<16x64xf32>
    %241 = arith.mulf %230, %240 : vector<16x64xf32>
    %c0_93 = arith.constant 0 : index
    %c0_94 = arith.constant 0 : index
    %c0_95 = arith.constant 0 : index
    %242 = vector.load %arg13[%c0_93, %c0_94, %c0_95] : memref<2x64x32xf32, #tpu.memory_space<vmem>>, vector<1x64x32xf32>
    %243 = vector.shape_cast %242 : vector<1x64x32xf32> to vector<64x32xf32>
    %cst_96 = arith.constant dense<0.000000e+00> : vector<16x32xf32>
    %244 = tpu.matmul %241, %243, %cst_96 {dimension_numbers = #tpu.dot_dimension_numbers<[1], [0], [0], [1], [0, 0, 1, 1], [], []>} : vector<16x64xf32>, vector<64x32xf32>, vector<16x32xf32> -> vector<16x32xf32>
    %c0_97 = arith.constant 0 : index
    %c0_98 = arith.constant 0 : index
    %c0_99 = arith.constant 0 : index
    %245 = vector.load %arg14[%c0_97, %c0_98, %c0_99] : memref<2x1x32xf32, #tpu.memory_space<vmem>>, vector<1x1x32xf32>
    %246 = vector.shape_cast %245 : vector<1x1x32xf32> to vector<1x32xf32>
    %247 = vector.broadcast %246 : vector<1x32xf32> to vector<16x32xf32>
    %248 = arith.addf %244, %247 : vector<16x32xf32>
    %249 = arith.addf %248, %221 : vector<16x32xf32>
    %c0_100 = arith.constant 0 : index
    %c0_101 = arith.constant 0 : index
    %c0_102 = arith.constant 0 : index
    %250 = vector.load %arg15[%c0_100, %c0_101, %c0_102] : memref<2x1x32xf32, #tpu.memory_space<vmem>>, vector<1x1x32xf32>
    %251 = vector.shape_cast %250 : vector<1x1x32xf32> to vector<1x32xf32>
    %c0_103 = arith.constant 0 : index
    %c0_104 = arith.constant 0 : index
    %c0_105 = arith.constant 0 : index
    %252 = vector.load %arg16[%c0_103, %c0_104, %c0_105] : memref<2x1x32xf32, #tpu.memory_space<vmem>>, vector<1x1x32xf32>
    %253 = vector.shape_cast %252 : vector<1x1x32xf32> to vector<1x32xf32>
    %cst_106 = arith.constant dense<0.000000e+00> : vector<16xf32>
    %254 = vector.multi_reduction <add>, %249, %cst_106 [1] : vector<16x32xf32> to vector<16xf32>
    %255 = vector.shape_cast %254 : vector<16xf32> to vector<16x1xf32>
    %cst_107 = arith.constant 3.200000e+01 : f32
    %256 = vector.broadcast %cst_107 : f32 to vector<16x1xf32>
    %257 = arith.divf %255, %256 : vector<16x1xf32>
    %258 = vector.broadcast %257 : vector<16x1xf32> to vector<16x32xf32>
    %259 = arith.subf %249, %258 : vector<16x32xf32>
    %260 = arith.mulf %259, %259 : vector<16x32xf32>
    %cst_108 = arith.constant dense<0.000000e+00> : vector<16xf32>
    %261 = vector.multi_reduction <add>, %260, %cst_108 [1] : vector<16x32xf32> to vector<16xf32>
    %262 = vector.shape_cast %261 : vector<16xf32> to vector<16x1xf32>
    %cst_109 = arith.constant 3.200000e+01 : f32
    %263 = vector.broadcast %cst_109 : f32 to vector<16x1xf32>
    %264 = arith.divf %262, %263 : vector<16x1xf32>
    %cst_110 = arith.constant 9.99999996E-13 : f32
    %265 = vector.broadcast %cst_110 : f32 to vector<16x1xf32>
    %266 = arith.addf %264, %265 : vector<16x1xf32>
    %267 = math.rsqrt %266 : vector<16x1xf32>
    %268 = vector.broadcast %267 : vector<16x1xf32> to vector<16x32xf32>
    %269 = arith.mulf %259, %268 : vector<16x32xf32>
    %270 = vector.broadcast %251 : vector<1x32xf32> to vector<16x32xf32>
    %271 = arith.mulf %269, %270 : vector<16x32xf32>
    %272 = vector.broadcast %253 : vector<1x32xf32> to vector<16x32xf32>
    %273 = arith.addf %271, %272 : vector<16x32xf32>
    %c1 = arith.constant 1 : index
    %c0_111 = arith.constant 0 : index
    %c0_112 = arith.constant 0 : index
    %274 = vector.load %arg5[%c1, %c0_111, %c0_112] : memref<2x32x96xf32, #tpu.memory_space<vmem>>, vector<1x32x96xf32>
    %275 = vector.shape_cast %274 : vector<1x32x96xf32> to vector<32x96xf32>
    %cst_113 = arith.constant dense<0.000000e+00> : vector<16x96xf32>
    %276 = tpu.matmul %273, %275, %cst_113 {dimension_numbers = #tpu.dot_dimension_numbers<[1], [0], [0], [1], [0, 0, 1, 1], [], []>} : vector<16x32xf32>, vector<32x96xf32>, vector<16x96xf32> -> vector<16x96xf32>
    %c1_114 = arith.constant 1 : index
    %c0_115 = arith.constant 0 : index
    %c0_116 = arith.constant 0 : index
    %277 = vector.load %arg6[%c1_114, %c0_115, %c0_116] : memref<2x1x96xf32, #tpu.memory_space<vmem>>, vector<1x1x96xf32>
    %278 = vector.shape_cast %277 : vector<1x1x96xf32> to vector<1x96xf32>
    %279 = vector.broadcast %278 : vector<1x96xf32> to vector<16x96xf32>
    %280 = arith.addf %276, %279 : vector<16x96xf32>
    %281 = vector.extract_strided_slice %280 {offsets = [0, 0], sizes = [8, 8], strides = [1, 1]} : vector<16x96xf32> to vector<8x8xf32>
    %282 = vector.extract_strided_slice %280 {offsets = [0, 32], sizes = [8, 8], strides = [1, 1]} : vector<16x96xf32> to vector<8x8xf32>
    %283 = vector.extract_strided_slice %280 {offsets = [0, 64], sizes = [8, 8], strides = [1, 1]} : vector<16x96xf32> to vector<8x8xf32>
    "tpu.trace_start"() <{level = 10 : i32, message = "qd,kd->qk"}> : () -> ()
    %cst_117 = arith.constant dense<0.000000e+00> : vector<8x8xf32>
    %284 = tpu.matmul %281, %282, %cst_117 {dimension_numbers = #tpu.dot_dimension_numbers<[1], [1], [0], [0], [0, 0, 1, 0], [], []>} : vector<8x8xf32>, vector<8x8xf32>, vector<8x8xf32> -> vector<8x8xf32>
    "tpu.trace_stop"() : () -> ()
    %cst_118 = arith.constant 0.353553385 : f32
    %285 = vector.broadcast %cst_118 : f32 to vector<8x8xf32>
    %286 = arith.mulf %284, %285 : vector<8x8xf32>
    %287 = vector.broadcast %6 : vector<1x8xf32> to vector<8x8xf32>
    %288 = arith.addf %286, %287 : vector<8x8xf32>
    %cst_119 = arith.constant dense<0xFF800000> : vector<8xf32>
    %289 = vector.multi_reduction <maximumf>, %288, %cst_119 [1] : vector<8x8xf32> to vector<8xf32>
    %290 = vector.shape_cast %289 : vector<8xf32> to vector<8x1xf32>
    %291 = vector.broadcast %290 : vector<8x1xf32> to vector<8x8xf32>
    %292 = arith.subf %288, %291 : vector<8x8xf32>
    %293 = math.exp %292 : vector<8x8xf32>
    %cst_120 = arith.constant dense<0.000000e+00> : vector<8xf32>
    %294 = vector.multi_reduction <add>, %293, %cst_120 [1] : vector<8x8xf32> to vector<8xf32>
    %295 = vector.shape_cast %294 : vector<8xf32> to vector<8x1xf32>
    %296 = vector.broadcast %295 : vector<8x1xf32> to vector<8x8xf32>
    %297 = arith.divf %293, %296 : vector<8x8xf32>
    %cst_121 = arith.constant dense<0.000000e+00> : vector<8x8xf32>
    %298 = tpu.matmul %297, %283, %cst_121 {dimension_numbers = #tpu.dot_dimension_numbers<[1], [0], [0], [1], [0, 0, 1, 1], [], []>} : vector<8x8xf32>, vector<8x8xf32>, vector<8x8xf32> -> vector<8x8xf32>
    %299 = vector.extract_strided_slice %280 {offsets = [0, 8], sizes = [8, 8], strides = [1, 1]} : vector<16x96xf32> to vector<8x8xf32>
    %300 = vector.extract_strided_slice %280 {offsets = [0, 40], sizes = [8, 8], strides = [1, 1]} : vector<16x96xf32> to vector<8x8xf32>
    %301 = vector.extract_strided_slice %280 {offsets = [0, 72], sizes = [8, 8], strides = [1, 1]} : vector<16x96xf32> to vector<8x8xf32>
    "tpu.trace_start"() <{level = 10 : i32, message = "qd,kd->qk"}> : () -> ()
    %cst_122 = arith.constant dense<0.000000e+00> : vector<8x8xf32>
    %302 = tpu.matmul %299, %300, %cst_122 {dimension_numbers = #tpu.dot_dimension_numbers<[1], [1], [0], [0], [0, 0, 1, 0], [], []>} : vector<8x8xf32>, vector<8x8xf32>, vector<8x8xf32> -> vector<8x8xf32>
    "tpu.trace_stop"() : () -> ()
    %cst_123 = arith.constant 0.353553385 : f32
    %303 = vector.broadcast %cst_123 : f32 to vector<8x8xf32>
    %304 = arith.mulf %302, %303 : vector<8x8xf32>
    %305 = vector.broadcast %6 : vector<1x8xf32> to vector<8x8xf32>
    %306 = arith.addf %304, %305 : vector<8x8xf32>
    %cst_124 = arith.constant dense<0xFF800000> : vector<8xf32>
    %307 = vector.multi_reduction <maximumf>, %306, %cst_124 [1] : vector<8x8xf32> to vector<8xf32>
    %308 = vector.shape_cast %307 : vector<8xf32> to vector<8x1xf32>
    %309 = vector.broadcast %308 : vector<8x1xf32> to vector<8x8xf32>
    %310 = arith.subf %306, %309 : vector<8x8xf32>
    %311 = math.exp %310 : vector<8x8xf32>
    %cst_125 = arith.constant dense<0.000000e+00> : vector<8xf32>
    %312 = vector.multi_reduction <add>, %311, %cst_125 [1] : vector<8x8xf32> to vector<8xf32>
    %313 = vector.shape_cast %312 : vector<8xf32> to vector<8x1xf32>
    %314 = vector.broadcast %313 : vector<8x1xf32> to vector<8x8xf32>
    %315 = arith.divf %311, %314 : vector<8x8xf32>
    %cst_126 = arith.constant dense<0.000000e+00> : vector<8x8xf32>
    %316 = tpu.matmul %315, %301, %cst_126 {dimension_numbers = #tpu.dot_dimension_numbers<[1], [0], [0], [1], [0, 0, 1, 1], [], []>} : vector<8x8xf32>, vector<8x8xf32>, vector<8x8xf32> -> vector<8x8xf32>
    %317 = vector.extract_strided_slice %280 {offsets = [0, 16], sizes = [8, 8], strides = [1, 1]} : vector<16x96xf32> to vector<8x8xf32>
    %318 = vector.extract_strided_slice %280 {offsets = [0, 48], sizes = [8, 8], strides = [1, 1]} : vector<16x96xf32> to vector<8x8xf32>
    %319 = vector.extract_strided_slice %280 {offsets = [0, 80], sizes = [8, 8], strides = [1, 1]} : vector<16x96xf32> to vector<8x8xf32>
    "tpu.trace_start"() <{level = 10 : i32, message = "qd,kd->qk"}> : () -> ()
    %cst_127 = arith.constant dense<0.000000e+00> : vector<8x8xf32>
    %320 = tpu.matmul %317, %318, %cst_127 {dimension_numbers = #tpu.dot_dimension_numbers<[1], [1], [0], [0], [0, 0, 1, 0], [], []>} : vector<8x8xf32>, vector<8x8xf32>, vector<8x8xf32> -> vector<8x8xf32>
    "tpu.trace_stop"() : () -> ()
    %cst_128 = arith.constant 0.353553385 : f32
    %321 = vector.broadcast %cst_128 : f32 to vector<8x8xf32>
    %322 = arith.mulf %320, %321 : vector<8x8xf32>
    %323 = vector.broadcast %6 : vector<1x8xf32> to vector<8x8xf32>
    %324 = arith.addf %322, %323 : vector<8x8xf32>
    %cst_129 = arith.constant dense<0xFF800000> : vector<8xf32>
    %325 = vector.multi_reduction <maximumf>, %324, %cst_129 [1] : vector<8x8xf32> to vector<8xf32>
    %326 = vector.shape_cast %325 : vector<8xf32> to vector<8x1xf32>
    %327 = vector.broadcast %326 : vector<8x1xf32> to vector<8x8xf32>
    %328 = arith.subf %324, %327 : vector<8x8xf32>
    %329 = math.exp %328 : vector<8x8xf32>
    %cst_130 = arith.constant dense<0.000000e+00> : vector<8xf32>
    %330 = vector.multi_reduction <add>, %329, %cst_130 [1] : vector<8x8xf32> to vector<8xf32>
    %331 = vector.shape_cast %330 : vector<8xf32> to vector<8x1xf32>
    %332 = vector.broadcast %331 : vector<8x1xf32> to vector<8x8xf32>
    %333 = arith.divf %329, %332 : vector<8x8xf32>
    %cst_131 = arith.constant dense<0.000000e+00> : vector<8x8xf32>
    %334 = tpu.matmul %333, %319, %cst_131 {dimension_numbers = #tpu.dot_dimension_numbers<[1], [0], [0], [1], [0, 0, 1, 1], [], []>} : vector<8x8xf32>, vector<8x8xf32>, vector<8x8xf32> -> vector<8x8xf32>
    %335 = vector.extract_strided_slice %280 {offsets = [0, 24], sizes = [8, 8], strides = [1, 1]} : vector<16x96xf32> to vector<8x8xf32>
    %336 = vector.extract_strided_slice %280 {offsets = [0, 56], sizes = [8, 8], strides = [1, 1]} : vector<16x96xf32> to vector<8x8xf32>
    %337 = vector.extract_strided_slice %280 {offsets = [0, 88], sizes = [8, 8], strides = [1, 1]} : vector<16x96xf32> to vector<8x8xf32>
    "tpu.trace_start"() <{level = 10 : i32, message = "qd,kd->qk"}> : () -> ()
    %cst_132 = arith.constant dense<0.000000e+00> : vector<8x8xf32>
    %338 = tpu.matmul %335, %336, %cst_132 {dimension_numbers = #tpu.dot_dimension_numbers<[1], [1], [0], [0], [0, 0, 1, 0], [], []>} : vector<8x8xf32>, vector<8x8xf32>, vector<8x8xf32> -> vector<8x8xf32>
    "tpu.trace_stop"() : () -> ()
    %cst_133 = arith.constant 0.353553385 : f32
    %339 = vector.broadcast %cst_133 : f32 to vector<8x8xf32>
    %340 = arith.mulf %338, %339 : vector<8x8xf32>
    %341 = vector.broadcast %6 : vector<1x8xf32> to vector<8x8xf32>
    %342 = arith.addf %340, %341 : vector<8x8xf32>
    %cst_134 = arith.constant dense<0xFF800000> : vector<8xf32>
    %343 = vector.multi_reduction <maximumf>, %342, %cst_134 [1] : vector<8x8xf32> to vector<8xf32>
    %344 = vector.shape_cast %343 : vector<8xf32> to vector<8x1xf32>
    %345 = vector.broadcast %344 : vector<8x1xf32> to vector<8x8xf32>
    %346 = arith.subf %342, %345 : vector<8x8xf32>
    %347 = math.exp %346 : vector<8x8xf32>
    %cst_135 = arith.constant dense<0.000000e+00> : vector<8xf32>
    %348 = vector.multi_reduction <add>, %347, %cst_135 [1] : vector<8x8xf32> to vector<8xf32>
    %349 = vector.shape_cast %348 : vector<8xf32> to vector<8x1xf32>
    %350 = vector.broadcast %349 : vector<8x1xf32> to vector<8x8xf32>
    %351 = arith.divf %347, %350 : vector<8x8xf32>
    %cst_136 = arith.constant dense<0.000000e+00> : vector<8x8xf32>
    %352 = tpu.matmul %351, %337, %cst_136 {dimension_numbers = #tpu.dot_dimension_numbers<[1], [0], [0], [1], [0, 0, 1, 1], [], []>} : vector<8x8xf32>, vector<8x8xf32>, vector<8x8xf32> -> vector<8x8xf32>
    %353 = tpu.concatenate %298, %316, %334, %352 in 1 : vector<8x8xf32>, vector<8x8xf32>, vector<8x8xf32>, vector<8x8xf32> -> vector<8x32xf32>
    %354 = vector.extract_strided_slice %280 {offsets = [8, 0], sizes = [8, 8], strides = [1, 1]} : vector<16x96xf32> to vector<8x8xf32>
    %355 = vector.extract_strided_slice %280 {offsets = [8, 32], sizes = [8, 8], strides = [1, 1]} : vector<16x96xf32> to vector<8x8xf32>
    %356 = vector.extract_strided_slice %280 {offsets = [8, 64], sizes = [8, 8], strides = [1, 1]} : vector<16x96xf32> to vector<8x8xf32>
    "tpu.trace_start"() <{level = 10 : i32, message = "qd,kd->qk"}> : () -> ()
    %cst_137 = arith.constant dense<0.000000e+00> : vector<8x8xf32>
    %357 = tpu.matmul %354, %355, %cst_137 {dimension_numbers = #tpu.dot_dimension_numbers<[1], [1], [0], [0], [0, 0, 1, 0], [], []>} : vector<8x8xf32>, vector<8x8xf32>, vector<8x8xf32> -> vector<8x8xf32>
    "tpu.trace_stop"() : () -> ()
    %cst_138 = arith.constant 0.353553385 : f32
    %358 = vector.broadcast %cst_138 : f32 to vector<8x8xf32>
    %359 = arith.mulf %357, %358 : vector<8x8xf32>
    %360 = vector.broadcast %12 : vector<1x8xf32> to vector<8x8xf32>
    %361 = arith.addf %359, %360 : vector<8x8xf32>
    %cst_139 = arith.constant dense<0xFF800000> : vector<8xf32>
    %362 = vector.multi_reduction <maximumf>, %361, %cst_139 [1] : vector<8x8xf32> to vector<8xf32>
    %363 = vector.shape_cast %362 : vector<8xf32> to vector<8x1xf32>
    %364 = vector.broadcast %363 : vector<8x1xf32> to vector<8x8xf32>
    %365 = arith.subf %361, %364 : vector<8x8xf32>
    %366 = math.exp %365 : vector<8x8xf32>
    %cst_140 = arith.constant dense<0.000000e+00> : vector<8xf32>
    %367 = vector.multi_reduction <add>, %366, %cst_140 [1] : vector<8x8xf32> to vector<8xf32>
    %368 = vector.shape_cast %367 : vector<8xf32> to vector<8x1xf32>
    %369 = vector.broadcast %368 : vector<8x1xf32> to vector<8x8xf32>
    %370 = arith.divf %366, %369 : vector<8x8xf32>
    %cst_141 = arith.constant dense<0.000000e+00> : vector<8x8xf32>
    %371 = tpu.matmul %370, %356, %cst_141 {dimension_numbers = #tpu.dot_dimension_numbers<[1], [0], [0], [1], [0, 0, 1, 1], [], []>} : vector<8x8xf32>, vector<8x8xf32>, vector<8x8xf32> -> vector<8x8xf32>
    %372 = vector.extract_strided_slice %280 {offsets = [8, 8], sizes = [8, 8], strides = [1, 1]} : vector<16x96xf32> to vector<8x8xf32>
    %373 = vector.extract_strided_slice %280 {offsets = [8, 40], sizes = [8, 8], strides = [1, 1]} : vector<16x96xf32> to vector<8x8xf32>
    %374 = vector.extract_strided_slice %280 {offsets = [8, 72], sizes = [8, 8], strides = [1, 1]} : vector<16x96xf32> to vector<8x8xf32>
    "tpu.trace_start"() <{level = 10 : i32, message = "qd,kd->qk"}> : () -> ()
    %cst_142 = arith.constant dense<0.000000e+00> : vector<8x8xf32>
    %375 = tpu.matmul %372, %373, %cst_142 {dimension_numbers = #tpu.dot_dimension_numbers<[1], [1], [0], [0], [0, 0, 1, 0], [], []>} : vector<8x8xf32>, vector<8x8xf32>, vector<8x8xf32> -> vector<8x8xf32>
    "tpu.trace_stop"() : () -> ()
    %cst_143 = arith.constant 0.353553385 : f32
    %376 = vector.broadcast %cst_143 : f32 to vector<8x8xf32>
    %377 = arith.mulf %375, %376 : vector<8x8xf32>
    %378 = vector.broadcast %12 : vector<1x8xf32> to vector<8x8xf32>
    %379 = arith.addf %377, %378 : vector<8x8xf32>
    %cst_144 = arith.constant dense<0xFF800000> : vector<8xf32>
    %380 = vector.multi_reduction <maximumf>, %379, %cst_144 [1] : vector<8x8xf32> to vector<8xf32>
    %381 = vector.shape_cast %380 : vector<8xf32> to vector<8x1xf32>
    %382 = vector.broadcast %381 : vector<8x1xf32> to vector<8x8xf32>
    %383 = arith.subf %379, %382 : vector<8x8xf32>
    %384 = math.exp %383 : vector<8x8xf32>
    %cst_145 = arith.constant dense<0.000000e+00> : vector<8xf32>
    %385 = vector.multi_reduction <add>, %384, %cst_145 [1] : vector<8x8xf32> to vector<8xf32>
    %386 = vector.shape_cast %385 : vector<8xf32> to vector<8x1xf32>
    %387 = vector.broadcast %386 : vector<8x1xf32> to vector<8x8xf32>
    %388 = arith.divf %384, %387 : vector<8x8xf32>
    %cst_146 = arith.constant dense<0.000000e+00> : vector<8x8xf32>
    %389 = tpu.matmul %388, %374, %cst_146 {dimension_numbers = #tpu.dot_dimension_numbers<[1], [0], [0], [1], [0, 0, 1, 1], [], []>} : vector<8x8xf32>, vector<8x8xf32>, vector<8x8xf32> -> vector<8x8xf32>
    %390 = vector.extract_strided_slice %280 {offsets = [8, 16], sizes = [8, 8], strides = [1, 1]} : vector<16x96xf32> to vector<8x8xf32>
    %391 = vector.extract_strided_slice %280 {offsets = [8, 48], sizes = [8, 8], strides = [1, 1]} : vector<16x96xf32> to vector<8x8xf32>
    %392 = vector.extract_strided_slice %280 {offsets = [8, 80], sizes = [8, 8], strides = [1, 1]} : vector<16x96xf32> to vector<8x8xf32>
    "tpu.trace_start"() <{level = 10 : i32, message = "qd,kd->qk"}> : () -> ()
    %cst_147 = arith.constant dense<0.000000e+00> : vector<8x8xf32>
    %393 = tpu.matmul %390, %391, %cst_147 {dimension_numbers = #tpu.dot_dimension_numbers<[1], [1], [0], [0], [0, 0, 1, 0], [], []>} : vector<8x8xf32>, vector<8x8xf32>, vector<8x8xf32> -> vector<8x8xf32>
    "tpu.trace_stop"() : () -> ()
    %cst_148 = arith.constant 0.353553385 : f32
    %394 = vector.broadcast %cst_148 : f32 to vector<8x8xf32>
    %395 = arith.mulf %393, %394 : vector<8x8xf32>
    %396 = vector.broadcast %12 : vector<1x8xf32> to vector<8x8xf32>
    %397 = arith.addf %395, %396 : vector<8x8xf32>
    %cst_149 = arith.constant dense<0xFF800000> : vector<8xf32>
    %398 = vector.multi_reduction <maximumf>, %397, %cst_149 [1] : vector<8x8xf32> to vector<8xf32>
    %399 = vector.shape_cast %398 : vector<8xf32> to vector<8x1xf32>
    %400 = vector.broadcast %399 : vector<8x1xf32> to vector<8x8xf32>
    %401 = arith.subf %397, %400 : vector<8x8xf32>
    %402 = math.exp %401 : vector<8x8xf32>
    %cst_150 = arith.constant dense<0.000000e+00> : vector<8xf32>
    %403 = vector.multi_reduction <add>, %402, %cst_150 [1] : vector<8x8xf32> to vector<8xf32>
    %404 = vector.shape_cast %403 : vector<8xf32> to vector<8x1xf32>
    %405 = vector.broadcast %404 : vector<8x1xf32> to vector<8x8xf32>
    %406 = arith.divf %402, %405 : vector<8x8xf32>
    %cst_151 = arith.constant dense<0.000000e+00> : vector<8x8xf32>
    %407 = tpu.matmul %406, %392, %cst_151 {dimension_numbers = #tpu.dot_dimension_numbers<[1], [0], [0], [1], [0, 0, 1, 1], [], []>} : vector<8x8xf32>, vector<8x8xf32>, vector<8x8xf32> -> vector<8x8xf32>
    %408 = vector.extract_strided_slice %280 {offsets = [8, 24], sizes = [8, 8], strides = [1, 1]} : vector<16x96xf32> to vector<8x8xf32>
    %409 = vector.extract_strided_slice %280 {offsets = [8, 56], sizes = [8, 8], strides = [1, 1]} : vector<16x96xf32> to vector<8x8xf32>
    %410 = vector.extract_strided_slice %280 {offsets = [8, 88], sizes = [8, 8], strides = [1, 1]} : vector<16x96xf32> to vector<8x8xf32>
    "tpu.trace_start"() <{level = 10 : i32, message = "qd,kd->qk"}> : () -> ()
    %cst_152 = arith.constant dense<0.000000e+00> : vector<8x8xf32>
    %411 = tpu.matmul %408, %409, %cst_152 {dimension_numbers = #tpu.dot_dimension_numbers<[1], [1], [0], [0], [0, 0, 1, 0], [], []>} : vector<8x8xf32>, vector<8x8xf32>, vector<8x8xf32> -> vector<8x8xf32>
    "tpu.trace_stop"() : () -> ()
    %cst_153 = arith.constant 0.353553385 : f32
    %412 = vector.broadcast %cst_153 : f32 to vector<8x8xf32>
    %413 = arith.mulf %411, %412 : vector<8x8xf32>
    %414 = vector.broadcast %12 : vector<1x8xf32> to vector<8x8xf32>
    %415 = arith.addf %413, %414 : vector<8x8xf32>
    %cst_154 = arith.constant dense<0xFF800000> : vector<8xf32>
    %416 = vector.multi_reduction <maximumf>, %415, %cst_154 [1] : vector<8x8xf32> to vector<8xf32>
    %417 = vector.shape_cast %416 : vector<8xf32> to vector<8x1xf32>
    %418 = vector.broadcast %417 : vector<8x1xf32> to vector<8x8xf32>
    %419 = arith.subf %415, %418 : vector<8x8xf32>
    %420 = math.exp %419 : vector<8x8xf32>
    %cst_155 = arith.constant dense<0.000000e+00> : vector<8xf32>
    %421 = vector.multi_reduction <add>, %420, %cst_155 [1] : vector<8x8xf32> to vector<8xf32>
    %422 = vector.shape_cast %421 : vector<8xf32> to vector<8x1xf32>
    %423 = vector.broadcast %422 : vector<8x1xf32> to vector<8x8xf32>
    %424 = arith.divf %420, %423 : vector<8x8xf32>
    %cst_156 = arith.constant dense<0.000000e+00> : vector<8x8xf32>
    %425 = tpu.matmul %424, %410, %cst_156 {dimension_numbers = #tpu.dot_dimension_numbers<[1], [0], [0], [1], [0, 0, 1, 1], [], []>} : vector<8x8xf32>, vector<8x8xf32>, vector<8x8xf32> -> vector<8x8xf32>
    %426 = tpu.concatenate %371, %389, %407, %425 in 1 : vector<8x8xf32>, vector<8x8xf32>, vector<8x8xf32>, vector<8x8xf32> -> vector<8x32xf32>
    %427 = tpu.concatenate %353, %426 in 0 : vector<8x32xf32>, vector<8x32xf32> -> vector<16x32xf32>
    %c1_157 = arith.constant 1 : index
    %c0_158 = arith.constant 0 : index
    %c0_159 = arith.constant 0 : index
    %428 = vector.load %arg7[%c1_157, %c0_158, %c0_159] : memref<2x32x32xf32, #tpu.memory_space<vmem>>, vector<1x32x32xf32>
    %429 = vector.shape_cast %428 : vector<1x32x32xf32> to vector<32x32xf32>
    %cst_160 = arith.constant dense<0.000000e+00> : vector<16x32xf32>
    %430 = tpu.matmul %427, %429, %cst_160 {dimension_numbers = #tpu.dot_dimension_numbers<[1], [0], [0], [1], [0, 0, 1, 1], [], []>} : vector<16x32xf32>, vector<32x32xf32>, vector<16x32xf32> -> vector<16x32xf32>
    %c1_161 = arith.constant 1 : index
    %c0_162 = arith.constant 0 : index
    %c0_163 = arith.constant 0 : index
    %431 = vector.load %arg8[%c1_161, %c0_162, %c0_163] : memref<2x1x32xf32, #tpu.memory_space<vmem>>, vector<1x1x32xf32>
    %432 = vector.shape_cast %431 : vector<1x1x32xf32> to vector<1x32xf32>
    %433 = vector.broadcast %432 : vector<1x32xf32> to vector<16x32xf32>
    %434 = arith.addf %430, %433 : vector<16x32xf32>
    %435 = arith.addf %434, %273 : vector<16x32xf32>
    %c1_164 = arith.constant 1 : index
    %c0_165 = arith.constant 0 : index
    %c0_166 = arith.constant 0 : index
    %436 = vector.load %arg9[%c1_164, %c0_165, %c0_166] : memref<2x1x32xf32, #tpu.memory_space<vmem>>, vector<1x1x32xf32>
    %437 = vector.shape_cast %436 : vector<1x1x32xf32> to vector<1x32xf32>
    %c1_167 = arith.constant 1 : index
    %c0_168 = arith.constant 0 : index
    %c0_169 = arith.constant 0 : index
    %438 = vector.load %arg10[%c1_167, %c0_168, %c0_169] : memref<2x1x32xf32, #tpu.memory_space<vmem>>, vector<1x1x32xf32>
    %439 = vector.shape_cast %438 : vector<1x1x32xf32> to vector<1x32xf32>
    %cst_170 = arith.constant dense<0.000000e+00> : vector<16xf32>
    %440 = vector.multi_reduction <add>, %435, %cst_170 [1] : vector<16x32xf32> to vector<16xf32>
    %441 = vector.shape_cast %440 : vector<16xf32> to vector<16x1xf32>
    %cst_171 = arith.constant 3.200000e+01 : f32
    %442 = vector.broadcast %cst_171 : f32 to vector<16x1xf32>
    %443 = arith.divf %441, %442 : vector<16x1xf32>
    %444 = vector.broadcast %443 : vector<16x1xf32> to vector<16x32xf32>
    %445 = arith.subf %435, %444 : vector<16x32xf32>
    %446 = arith.mulf %445, %445 : vector<16x32xf32>
    %cst_172 = arith.constant dense<0.000000e+00> : vector<16xf32>
    %447 = vector.multi_reduction <add>, %446, %cst_172 [1] : vector<16x32xf32> to vector<16xf32>
    %448 = vector.shape_cast %447 : vector<16xf32> to vector<16x1xf32>
    %cst_173 = arith.constant 3.200000e+01 : f32
    %449 = vector.broadcast %cst_173 : f32 to vector<16x1xf32>
    %450 = arith.divf %448, %449 : vector<16x1xf32>
    %cst_174 = arith.constant 9.99999996E-13 : f32
    %451 = vector.broadcast %cst_174 : f32 to vector<16x1xf32>
    %452 = arith.addf %450, %451 : vector<16x1xf32>
    %453 = math.rsqrt %452 : vector<16x1xf32>
    %454 = vector.broadcast %453 : vector<16x1xf32> to vector<16x32xf32>
    %455 = arith.mulf %445, %454 : vector<16x32xf32>
    %456 = vector.broadcast %437 : vector<1x32xf32> to vector<16x32xf32>
    %457 = arith.mulf %455, %456 : vector<16x32xf32>
    %458 = vector.broadcast %439 : vector<1x32xf32> to vector<16x32xf32>
    %459 = arith.addf %457, %458 : vector<16x32xf32>
    %c1_175 = arith.constant 1 : index
    %c0_176 = arith.constant 0 : index
    %c0_177 = arith.constant 0 : index
    %460 = vector.load %arg11[%c1_175, %c0_176, %c0_177] : memref<2x32x64xf32, #tpu.memory_space<vmem>>, vector<1x32x64xf32>
    %461 = vector.shape_cast %460 : vector<1x32x64xf32> to vector<32x64xf32>
    %cst_178 = arith.constant dense<0.000000e+00> : vector<16x64xf32>
    %462 = tpu.matmul %459, %461, %cst_178 {dimension_numbers = #tpu.dot_dimension_numbers<[1], [0], [0], [1], [0, 0, 1, 1], [], []>} : vector<16x32xf32>, vector<32x64xf32>, vector<16x64xf32> -> vector<16x64xf32>
    %c1_179 = arith.constant 1 : index
    %c0_180 = arith.constant 0 : index
    %c0_181 = arith.constant 0 : index
    %463 = vector.load %arg12[%c1_179, %c0_180, %c0_181] : memref<2x1x64xf32, #tpu.memory_space<vmem>>, vector<1x1x64xf32>
    %464 = vector.shape_cast %463 : vector<1x1x64xf32> to vector<1x64xf32>
    %465 = vector.broadcast %464 : vector<1x64xf32> to vector<16x64xf32>
    %466 = arith.addf %462, %465 : vector<16x64xf32>
    %cst_182 = arith.constant 5.000000e-01 : f32
    %467 = vector.broadcast %cst_182 : f32 to vector<16x64xf32>
    %468 = arith.mulf %467, %466 : vector<16x64xf32>
    %cst_183 = arith.constant 4.471500e-02 : f32
    %469 = vector.broadcast %cst_183 : f32 to vector<16x64xf32>
    %470 = arith.mulf %469, %466 : vector<16x64xf32>
    %471 = arith.mulf %470, %466 : vector<16x64xf32>
    %472 = arith.mulf %471, %466 : vector<16x64xf32>
    %473 = arith.addf %466, %472 : vector<16x64xf32>
    %cst_184 = arith.constant 0.797884583 : f32
    %474 = vector.broadcast %cst_184 : f32 to vector<16x64xf32>
    %475 = arith.mulf %474, %473 : vector<16x64xf32>
    %476 = math.tanh %475 : vector<16x64xf32>
    %cst_185 = arith.constant 1.000000e+00 : f32
    %477 = vector.broadcast %cst_185 : f32 to vector<16x64xf32>
    %478 = arith.addf %477, %476 : vector<16x64xf32>
    %479 = arith.mulf %468, %478 : vector<16x64xf32>
    %c1_186 = arith.constant 1 : index
    %c0_187 = arith.constant 0 : index
    %c0_188 = arith.constant 0 : index
    %480 = vector.load %arg13[%c1_186, %c0_187, %c0_188] : memref<2x64x32xf32, #tpu.memory_space<vmem>>, vector<1x64x32xf32>
    %481 = vector.shape_cast %480 : vector<1x64x32xf32> to vector<64x32xf32>
    %cst_189 = arith.constant dense<0.000000e+00> : vector<16x32xf32>
    %482 = tpu.matmul %479, %481, %cst_189 {dimension_numbers = #tpu.dot_dimension_numbers<[1], [0], [0], [1], [0, 0, 1, 1], [], []>} : vector<16x64xf32>, vector<64x32xf32>, vector<16x32xf32> -> vector<16x32xf32>
    %c1_190 = arith.constant 1 : index
    %c0_191 = arith.constant 0 : index
    %c0_192 = arith.constant 0 : index
    %483 = vector.load %arg14[%c1_190, %c0_191, %c0_192] : memref<2x1x32xf32, #tpu.memory_space<vmem>>, vector<1x1x32xf32>
    %484 = vector.shape_cast %483 : vector<1x1x32xf32> to vector<1x32xf32>
    %485 = vector.broadcast %484 : vector<1x32xf32> to vector<16x32xf32>
    %486 = arith.addf %482, %485 : vector<16x32xf32>
    %487 = arith.addf %486, %459 : vector<16x32xf32>
    %c1_193 = arith.constant 1 : index
    %c0_194 = arith.constant 0 : index
    %c0_195 = arith.constant 0 : index
    %488 = vector.load %arg15[%c1_193, %c0_194, %c0_195] : memref<2x1x32xf32, #tpu.memory_space<vmem>>, vector<1x1x32xf32>
    %489 = vector.shape_cast %488 : vector<1x1x32xf32> to vector<1x32xf32>
    %c1_196 = arith.constant 1 : index
    %c0_197 = arith.constant 0 : index
    %c0_198 = arith.constant 0 : index
    %490 = vector.load %arg16[%c1_196, %c0_197, %c0_198] : memref<2x1x32xf32, #tpu.memory_space<vmem>>, vector<1x1x32xf32>
    %491 = vector.shape_cast %490 : vector<1x1x32xf32> to vector<1x32xf32>
    %cst_199 = arith.constant dense<0.000000e+00> : vector<16xf32>
    %492 = vector.multi_reduction <add>, %487, %cst_199 [1] : vector<16x32xf32> to vector<16xf32>
    %493 = vector.shape_cast %492 : vector<16xf32> to vector<16x1xf32>
    %cst_200 = arith.constant 3.200000e+01 : f32
    %494 = vector.broadcast %cst_200 : f32 to vector<16x1xf32>
    %495 = arith.divf %493, %494 : vector<16x1xf32>
    %496 = vector.broadcast %495 : vector<16x1xf32> to vector<16x32xf32>
    %497 = arith.subf %487, %496 : vector<16x32xf32>
    %498 = arith.mulf %497, %497 : vector<16x32xf32>
    %cst_201 = arith.constant dense<0.000000e+00> : vector<16xf32>
    %499 = vector.multi_reduction <add>, %498, %cst_201 [1] : vector<16x32xf32> to vector<16xf32>
    %500 = vector.shape_cast %499 : vector<16xf32> to vector<16x1xf32>
    %cst_202 = arith.constant 3.200000e+01 : f32
    %501 = vector.broadcast %cst_202 : f32 to vector<16x1xf32>
    %502 = arith.divf %500, %501 : vector<16x1xf32>
    %cst_203 = arith.constant 9.99999996E-13 : f32
    %503 = vector.broadcast %cst_203 : f32 to vector<16x1xf32>
    %504 = arith.addf %502, %503 : vector<16x1xf32>
    %505 = math.rsqrt %504 : vector<16x1xf32>
    %506 = vector.broadcast %505 : vector<16x1xf32> to vector<16x32xf32>
    %507 = arith.mulf %497, %506 : vector<16x32xf32>
    %508 = vector.broadcast %489 : vector<1x32xf32> to vector<16x32xf32>
    %509 = arith.mulf %507, %508 : vector<16x32xf32>
    %510 = vector.broadcast %491 : vector<1x32xf32> to vector<16x32xf32>
    %511 = arith.addf %509, %510 : vector<16x32xf32>
    %512 = vector.extract_strided_slice %511 {offsets = [0, 0], sizes = [8, 32], strides = [1, 1]} : vector<16x32xf32> to vector<8x32xf32>
    %c0_204 = arith.constant 0 : index
    %c0_205 = arith.constant 0 : index
    %513 = vector.load %arg17[%c0_204, %c0_205] : memref<32x2xf32, #tpu.memory_space<vmem>>, vector<32x2xf32>
    %cst_206 = arith.constant dense<0.000000e+00> : vector<8x2xf32>
    %514 = tpu.matmul %512, %513, %cst_206 {dimension_numbers = #tpu.dot_dimension_numbers<[1], [0], [0], [1], [0, 0, 1, 1], [], []>} : vector<8x32xf32>, vector<32x2xf32>, vector<8x2xf32> -> vector<8x2xf32>
    %c0_207 = arith.constant 0 : index
    %c0_208 = arith.constant 0 : index
    %515 = vector.load %arg18[%c0_207, %c0_208] : memref<1x2xf32, #tpu.memory_space<vmem>>, vector<1x2xf32>
    %516 = vector.broadcast %515 : vector<1x2xf32> to vector<8x2xf32>
    %517 = arith.addf %514, %516 : vector<8x2xf32>
    %cst_209 = arith.constant dense<0xFF800000> : vector<2xf32>
    %518 = vector.multi_reduction <maximumf>, %517, %cst_209 [0] : vector<8x2xf32> to vector<2xf32>
    %519 = vector.shape_cast %518 : vector<2xf32> to vector<1x2xf32>
    %520 = vector.broadcast %519 : vector<1x2xf32> to vector<8x2xf32>
    %521 = arith.subf %517, %520 : vector<8x2xf32>
    %522 = math.exp %521 : vector<8x2xf32>
    %cst_210 = arith.constant dense<0.000000e+00> : vector<2xf32>
    %523 = vector.multi_reduction <add>, %522, %cst_210 [0] : vector<8x2xf32> to vector<2xf32>
    %524 = vector.shape_cast %523 : vector<2xf32> to vector<1x2xf32>
    %525 = vector.broadcast %524 : vector<1x2xf32> to vector<8x2xf32>
    %526 = arith.divf %522, %525 : vector<8x2xf32>
    %c0_211 = arith.constant 0 : index
    %c0_212 = arith.constant 0 : index
    %c0_213 = arith.constant 0 : index
    %527 = vector.load %arg19[%c0_211, %c0_212, %c0_213] : memref<2x8x2xf32, #tpu.memory_space<vmem>>, vector<1x8x2xf32>
    %528 = vector.shape_cast %527 : vector<1x8x2xf32> to vector<8x2xf32>
    %529 = vector.shape_cast %526 : vector<8x2xf32> to vector<1x8x2xf32>
    tpu.vector_store %arg19[%c0_211, %c0_212, %c0_213], %529 {strides = array<i32>} : memref<2x8x2xf32, #tpu.memory_space<vmem>>, vector<1x8x2xf32>,
    %530 = vector.extract_strided_slice %511 {offsets = [8, 0], sizes = [8, 32], strides = [1, 1]} : vector<16x32xf32> to vector<8x32xf32>
    %c0_214 = arith.constant 0 : index
    %c0_215 = arith.constant 0 : index
    %531 = vector.load %arg17[%c0_214, %c0_215] : memref<32x2xf32, #tpu.memory_space<vmem>>, vector<32x2xf32>
    %cst_216 = arith.constant dense<0.000000e+00> : vector<8x2xf32>
    %532 = tpu.matmul %530, %531, %cst_216 {dimension_numbers = #tpu.dot_dimension_numbers<[1], [0], [0], [1], [0, 0, 1, 1], [], []>} : vector<8x32xf32>, vector<32x2xf32>, vector<8x2xf32> -> vector<8x2xf32>
    %c0_217 = arith.constant 0 : index
    %c0_218 = arith.constant 0 : index
    %533 = vector.load %arg18[%c0_217, %c0_218] : memref<1x2xf32, #tpu.memory_space<vmem>>, vector<1x2xf32>
    %534 = vector.broadcast %533 : vector<1x2xf32> to vector<8x2xf32>
    %535 = arith.addf %532, %534 : vector<8x2xf32>
    %cst_219 = arith.constant dense<0xFF800000> : vector<2xf32>
    %536 = vector.multi_reduction <maximumf>, %535, %cst_219 [0] : vector<8x2xf32> to vector<2xf32>
    %537 = vector.shape_cast %536 : vector<2xf32> to vector<1x2xf32>
    %538 = vector.broadcast %537 : vector<1x2xf32> to vector<8x2xf32>
    %539 = arith.subf %535, %538 : vector<8x2xf32>
    %540 = math.exp %539 : vector<8x2xf32>
    %cst_220 = arith.constant dense<0.000000e+00> : vector<2xf32>
    %541 = vector.multi_reduction <add>, %540, %cst_220 [0] : vector<8x2xf32> to vector<2xf32>
    %542 = vector.shape_cast %541 : vector<2xf32> to vector<1x2xf32>
    %543 = vector.broadcast %542 : vector<1x2xf32> to vector<8x2xf32>
    %544 = arith.divf %540, %543 : vector<8x2xf32>
    %c1_221 = arith.constant 1 : index
    %c0_222 = arith.constant 0 : index
    %c0_223 = arith.constant 0 : index
    %545 = vector.load %arg19[%c1_221, %c0_222, %c0_223] : memref<2x8x2xf32, #tpu.memory_space<vmem>>, vector<1x8x2xf32>
    %546 = vector.shape_cast %545 : vector<1x8x2xf32> to vector<8x2xf32>
    %547 = vector.shape_cast %544 : vector<8x2xf32> to vector<1x8x2xf32>
    tpu.vector_store %arg19[%c1_221, %c0_222, %c0_223], %547 {strides = array<i32>} : memref<2x8x2xf32, #tpu.memory_space<vmem>>, vector<1x8x2xf32>,
    return
  }
  func.func @transform_0(%arg0: i32) -> (i32, i32) {
    %c0_i32 = arith.constant 0 : i32
    %c0_i32_0 = arith.constant 0 : i32
    %c0_i32_1 = arith.constant 0 : i32
    return %c0_i32, %c0_i32_0 : i32, i32
  }
  func.func @transform_1(%arg0: i32) -> (i32, i32) {
    %c0_i32 = arith.constant 0 : i32
    %c0_i32_0 = arith.constant 0 : i32
    %c0_i32_1 = arith.constant 0 : i32
    return %c0_i32, %c0_i32_0 : i32, i32
  }
  func.func @transform_2(%arg0: i32) -> (i32, i32) {
    %c0_i32 = arith.constant 0 : i32
    %c0_i32_0 = arith.constant 0 : i32
    %c0_i32_1 = arith.constant 0 : i32
    return %c0_i32, %c0_i32_0 : i32, i32
  }
  func.func @transform_3(%arg0: i32) -> (i32, i32) {
    %c0_i32 = arith.constant 0 : i32
    %c0_i32_0 = arith.constant 0 : i32
    %c0_i32_1 = arith.constant 0 : i32
    return %c0_i32, %c0_i32_0 : i32, i32
  }
  func.func @transform_4(%arg0: i32) -> (i32, i32, i32) {
    %c0_i32 = arith.constant 0 : i32
    %c0_i32_0 = arith.constant 0 : i32
    %c0_i32_1 = arith.constant 0 : i32
    %c0_i32_2 = arith.constant 0 : i32
    return %c0_i32, %c0_i32_0, %c0_i32_1 : i32, i32, i32
  }
  func.func @transform_5(%arg0: i32) -> (i32, i32, i32) {
    %c0_i32 = arith.constant 0 : i32
    %c0_i32_0 = arith.constant 0 : i32
    %c0_i32_1 = arith.constant 0 : i32
    %c0_i32_2 = arith.constant 0 : i32
    return %c0_i32, %c0_i32_0, %c0_i32_1 : i32, i32, i32
  }
  func.func @transform_6(%arg0: i32) -> (i32, i32, i32) {
    %c0_i32 = arith.constant 0 : i32
    %c0_i32_0 = arith.constant 0 : i32
    %c0_i32_1 = arith.constant 0 : i32
    %c0_i32_2 = arith.constant 0 : i32
    return %c0_i32, %c0_i32_0, %c0_i32_1 : i32, i32, i32
  }
  func.func @transform_7(%arg0: i32) -> (i32, i32, i32) {
    %c0_i32 = arith.constant 0 : i32
    %c0_i32_0 = arith.constant 0 : i32
    %c0_i32_1 = arith.constant 0 : i32
    %c0_i32_2 = arith.constant 0 : i32
    return %c0_i32, %c0_i32_0, %c0_i32_1 : i32, i32, i32
  }
  func.func @transform_8(%arg0: i32) -> (i32, i32, i32) {
    %c0_i32 = arith.constant 0 : i32
    %c0_i32_0 = arith.constant 0 : i32
    %c0_i32_1 = arith.constant 0 : i32
    %c0_i32_2 = arith.constant 0 : i32
    return %c0_i32, %c0_i32_0, %c0_i32_1 : i32, i32, i32
  }
  func.func @transform_9(%arg0: i32) -> (i32, i32, i32) {
    %c0_i32 = arith.constant 0 : i32
    %c0_i32_0 = arith.constant 0 : i32
    %c0_i32_1 = arith.constant 0 : i32
    %c0_i32_2 = arith.constant 0 : i32
    return %c0_i32, %c0_i32_0, %c0_i32_1 : i32, i32, i32
  }
  func.func @transform_10(%arg0: i32) -> (i32, i32, i32) {
    %c0_i32 = arith.constant 0 : i32
    %c0_i32_0 = arith.constant 0 : i32
    %c0_i32_1 = arith.constant 0 : i32
    %c0_i32_2 = arith.constant 0 : i32
    return %c0_i32, %c0_i32_0, %c0_i32_1 : i32, i32, i32
  }
  func.func @transform_11(%arg0: i32) -> (i32, i32, i32) {
    %c0_i32 = arith.constant 0 : i32
    %c0_i32_0 = arith.constant 0 : i32
    %c0_i32_1 = arith.constant 0 : i32
    %c0_i32_2 = arith.constant 0 : i32
    return %c0_i32, %c0_i32_0, %c0_i32_1 : i32, i32, i32
  }
  func.func @transform_12(%arg0: i32) -> (i32, i32, i32) {
    %c0_i32 = arith.constant 0 : i32
    %c0_i32_0 = arith.constant 0 : i32
    %c0_i32_1 = arith.constant 0 : i32
    %c0_i32_2 = arith.constant 0 : i32
    return %c0_i32, %c0_i32_0, %c0_i32_1 : i32, i32, i32
  }
  func.func @transform_13(%arg0: i32) -> (i32, i32, i32) {
    %c0_i32 = arith.constant 0 : i32
    %c0_i32_0 = arith.constant 0 : i32
    %c0_i32_1 = arith.constant 0 : i32
    %c0_i32_2 = arith.constant 0 : i32
    return %c0_i32, %c0_i32_0, %c0_i32_1 : i32, i32, i32
  }
  func.func @transform_14(%arg0: i32) -> (i32, i32, i32) {
    %c0_i32 = arith.constant 0 : i32
    %c0_i32_0 = arith.constant 0 : i32
    %c0_i32_1 = arith.constant 0 : i32
    %c0_i32_2 = arith.constant 0 : i32
    return %c0_i32, %c0_i32_0, %c0_i32_1 : i32, i32, i32
  }
  func.func @transform_15(%arg0: i32) -> (i32, i32, i32) {
    %c0_i32 = arith.constant 0 : i32
    %c0_i32_0 = arith.constant 0 : i32
    %c0_i32_1 = arith.constant 0 : i32
    %c0_i32_2 = arith.constant 0 : i32
    return %c0_i32, %c0_i32_0, %c0_i32_1 : i32, i32, i32
  }
  func.func @transform_16(%arg0: i32) -> (i32, i32) {
    %c0_i32 = arith.constant 0 : i32
    %c0_i32_0 = arith.constant 0 : i32
    %c0_i32_1 = arith.constant 0 : i32
    return %c0_i32, %c0_i32_0 : i32, i32
  }
  func.func @transform_17(%arg0: i32) -> (i32, i32) {
    %c0_i32 = arith.constant 0 : i32
    %c0_i32_0 = arith.constant 0 : i32
    %c0_i32_1 = arith.constant 0 : i32
    return %c0_i32, %c0_i32_0 : i32, i32
  }
  func.func @transform_18(%arg0: i32) -> (i32, i32, i32) {
    %c0_i32 = arith.constant 0 : i32
    %c0_i32_0 = arith.constant 0 : i32
    %c0_i32_1 = arith.constant 0 : i32
    %c0_i32_2 = arith.constant 0 : i32
    return %c0_i32, %c0_i32_0, %c0_i32_1 : i32, i32, i32
  }
}

</mosaic_0001>

<llo_original>
// kernel: intensive_reader_forward.2
$region0: #{intensive_reader_forward.2}
  #allocation0 [shape = 'u32[]', space=smem, size = 0x4, offset = 0x4, fixed_abs, tag = 'smem constant byte address 0x4 - core index']
  #allocation1 [shape = 'u32[72,128]{1,0:T(1,128)}', space=vmem, size = 0x9000, scoped, tag = 'internal scratch']
  %s0 = inlined_call_operand.vmem [shape: f32[16,32], index: 0, kind: input, shape index: {}]
  %s1 = inlined_call_operand.vmem [shape: f32[2,8], index: 1, kind: input, shape index: {}]
  %s2 = inlined_call_operand.vmem [shape: f32[1,32], index: 2, kind: input, shape index: {}]
  %s3 = inlined_call_operand.vmem [shape: f32[1,32], index: 3, kind: input, shape index: {}]
  %s4 = inlined_call_operand.vmem [shape: f32[2,32,96], index: 4, kind: input, shape index: {}]
  %s5 = inlined_call_operand.vmem [shape: f32[2,1,96], index: 5, kind: input, shape index: {}]
  %s6 = inlined_call_operand.vmem [shape: f32[2,32,32], index: 6, kind: input, shape index: {}]
  %s7 = inlined_call_operand.vmem [shape: f32[2,1,32], index: 7, kind: input, shape index: {}]
  %s8 = inlined_call_operand.vmem [shape: f32[2,1,32], index: 8, kind: input, shape index: {}]
  %s9 = inlined_call_operand.vmem [shape: f32[2,1,32], index: 9, kind: input, shape index: {}]
  %s10 = inlined_call_operand.vmem [shape: f32[2,32,64], index: 10, kind: input, shape index: {}]
  %s11 = inlined_call_operand.vmem [shape: f32[2,1,64], index: 11, kind: input, shape index: {}]
  %s12 = inlined_call_operand.vmem [shape: f32[2,64,32], index: 12, kind: input, shape index: {}]
  %s13 = inlined_call_operand.vmem [shape: f32[2,1,32], index: 13, kind: input, shape index: {}]
  %s14 = inlined_call_operand.vmem [shape: f32[2,1,32], index: 14, kind: input, shape index: {}]
  %s15 = inlined_call_operand.vmem [shape: f32[2,1,32], index: 15, kind: input, shape index: {}]
  %s16 = inlined_call_operand.vmem [shape: f32[32,2], index: 16, kind: input, shape index: {}]
  %s17 = inlined_call_operand.vmem [shape: f32[1,2], index: 17, kind: input, shape index: {}]
  %s18 = inlined_call_operand.vmem [shape: f32[2,8,2], index: 18, kind: output, shape index: {}]
  %s19 = sld [smem:[#allocation0]]
  $region82: #{intensive_reader_forward.2} parent=0
    _
  %s21 = ssub.s32 1, %s19
  %s22 = scalar_select 0, %s21, %s19
  // Predicated region
  $region2: #{intensive_reader_forward.2} parent=0 // pred_check
    _
  $region3: #{intensive_reader_forward.2} parent=0 // pred_check_branch
    %24 = sbr.rel (0) target = $region5
  $region4: #{intensive_reader_forward.2} parent=0 // pred_region
    _
  $region5: #{intensive_reader_forward.2} parent=0 // pred_fallthru
    _
  // Predicated region
  $region6: #{intensive_reader_forward.2} parent=0 // pred_check
    _
  $region7: #{intensive_reader_forward.2} parent=0 // pred_check_branch
    %26 = sbr.rel (0) target = $region9
  $region8: #{intensive_reader_forward.2} parent=0 // pred_region
    _
  $region9: #{intensive_reader_forward.2} parent=0 // pred_fallthru
    _
  // Predicated region
  $region10: #{intensive_reader_forward.2} parent=0 // pred_check
    _
  $region11: #{intensive_reader_forward.2} parent=0 // pred_check_branch
    %28 = sbr.rel (0) target = $region13
  $region12: #{intensive_reader_forward.2} parent=0 // pred_region
    _
  $region13: #{intensive_reader_forward.2} parent=0 // pred_fallthru
    _
  // Predicated region
  $region14: #{intensive_reader_forward.2} parent=0 // pred_check
    _
  $region15: #{intensive_reader_forward.2} parent=0 // pred_check_branch
    %30 = sbr.rel (0) target = $region17
  $region16: #{intensive_reader_forward.2} parent=0 // pred_region
    _
  $region17: #{intensive_reader_forward.2} parent=0 // pred_fallthru
    _
  // Predicated region
  $region18: #{intensive_reader_forward.2} parent=0 // pred_check
    _
  $region19: #{intensive_reader_forward.2} parent=0 // pred_check_branch
    %32 = sbr.rel (0) target = $region21
  $region20: #{intensive_reader_forward.2} parent=0 // pred_region
    _
  $region21: #{intensive_reader_forward.2} parent=0 // pred_fallthru
    _
  // Predicated region
  $region22: #{intensive_reader_forward.2} parent=0 // pred_check
    _
  $region23: #{intensive_reader_forward.2} parent=0 // pred_check_branch
    %34 = sbr.rel (0) target = $region25
  $region24: #{intensive_reader_forward.2} parent=0 // pred_region
    _
  $region25: #{intensive_reader_forward.2} parent=0 // pred_fallthru
    _
  // Predicated region
  $region26: #{intensive_reader_forward.2} parent=0 // pred_check
    _
  $region27: #{intensive_reader_forward.2} parent=0 // pred_check_branch
    %36 = sbr.rel (0) target = $region29
  $region28: #{intensive_reader_forward.2} parent=0 // pred_region
    _
  $region29: #{intensive_reader_forward.2} parent=0 // pred_fallthru
    _
  // Predicated region
  $region30: #{intensive_reader_forward.2} parent=0 // pred_check
    _
  $region31: #{intensive_reader_forward.2} parent=0 // pred_check_branch
    %38 = sbr.rel (0) target = $region33
  $region32: #{intensive_reader_forward.2} parent=0 // pred_region
    _
  $region33: #{intensive_reader_forward.2} parent=0 // pred_fallthru
    _
  // Predicated region
  $region34: #{intensive_reader_forward.2} parent=0 // pred_check
    _
  $region35: #{intensive_reader_forward.2} parent=0 // pred_check_branch
    %40 = sbr.rel (0) target = $region37
  $region36: #{intensive_reader_forward.2} parent=0 // pred_region
    _
  $region37: #{intensive_reader_forward.2} parent=0 // pred_fallthru
    _
  // Predicated region
  $region38: #{intensive_reader_forward.2} parent=0 // pred_check
    _
  $region39: #{intensive_reader_forward.2} parent=0 // pred_check_branch
    %42 = sbr.rel (0) target = $region41
  $region40: #{intensive_reader_forward.2} parent=0 // pred_region
    _
  $region41: #{intensive_reader_forward.2} parent=0 // pred_fallthru
    _
  // Predicated region
  $region42: #{intensive_reader_forward.2} parent=0 // pred_check
    _
  $region43: #{intensive_reader_forward.2} parent=0 // pred_check_branch
    %44 = sbr.rel (0) target = $region45
  $region44: #{intensive_reader_forward.2} parent=0 // pred_region
    _
  $region45: #{intensive_reader_forward.2} parent=0 // pred_fallthru
    _
  // Predicated region
  $region46: #{intensive_reader_forward.2} parent=0 // pred_check
    _
  $region47: #{intensive_reader_forward.2} parent=0 // pred_check_branch
    %46 = sbr.rel (0) target = $region49
  $region48: #{intensive_reader_forward.2} parent=0 // pred_region
    _
  $region49: #{intensive_reader_forward.2} parent=0 // pred_fallthru
    _
  // Predicated region
  $region50: #{intensive_reader_forward.2} parent=0 // pred_check
    _
  $region51: #{intensive_reader_forward.2} parent=0 // pred_check_branch
    %48 = sbr.rel (0) target = $region53
  $region52: #{intensive_reader_forward.2} parent=0 // pred_region
    _
  $region53: #{intensive_reader_forward.2} parent=0 // pred_fallthru
    _
  // Predicated region
  $region54: #{intensive_reader_forward.2} parent=0 // pred_check
    _
  $region55: #{intensive_reader_forward.2} parent=0 // pred_check_branch
    %50 = sbr.rel (0) target = $region57
  $region56: #{intensive_reader_forward.2} parent=0 // pred_region
    _
  $region57: #{intensive_reader_forward.2} parent=0 // pred_fallthru
    _
  // Predicated region
  $region58: #{intensive_reader_forward.2} parent=0 // pred_check
    _
  $region59: #{intensive_reader_forward.2} parent=0 // pred_check_branch
    %52 = sbr.rel (0) target = $region61
  $region60: #{intensive_reader_forward.2} parent=0 // pred_region
    _
  $region61: #{intensive_reader_forward.2} parent=0 // pred_fallthru
    _
  // Predicated region
  $region62: #{intensive_reader_forward.2} parent=0 // pred_check
    _
  $region63: #{intensive_reader_forward.2} parent=0 // pred_check_branch
    %54 = sbr.rel (0) target = $region65
  $region64: #{intensive_reader_forward.2} parent=0 // pred_region
    _
  $region65: #{intensive_reader_forward.2} parent=0 // pred_fallthru
    _
  // Predicated region
  $region66: #{intensive_reader_forward.2} parent=0 // pred_check
    _
  $region67: #{intensive_reader_forward.2} parent=0 // pred_check_branch
    %56 = sbr.rel (0) target = $region69
  $region68: #{intensive_reader_forward.2} parent=0 // pred_region
    _
  $region69: #{intensive_reader_forward.2} parent=0 // pred_fallthru
    _
  // Predicated region
  $region70: #{intensive_reader_forward.2} parent=0 // pred_check
    _
  $region71: #{intensive_reader_forward.2} parent=0 // pred_check_branch
    %58 = sbr.rel (0) target = $region73
  $region72: #{intensive_reader_forward.2} parent=0 // pred_region
    _
  $region73: #{intensive_reader_forward.2} parent=0 // pred_fallthru
    _
  %v59 = vld [vmem:[%s1] sm:$0x3]
  %vm60 = vcmp.gt.f32.partialorder %v59, 0.5
  %v61 = vsel %vm60, 0.0, -1e+09
  %v62 = vld [vmem:[%s0] sm:$0xff]
  %v63 = vld [vmem:[%s0 + $0x8] sm:$0xff]
  %v64 = vld [vmem:[%s2] sm:$0x1]
  %v65 = vld [vmem:[%s3] sm:$0x1]
  %vm66 = vcmask 261120
  %v67 = vsel %vm66, %v62, 0.0
  %68 = vadd.xlane.f32.xlu0 %v67
  %v69 = vpop.xlane.xlu0 %68
  %v70 = vsel %vm66, %v63, 0.0
  %71 = vadd.xlane.f32.xlu0 %v70
  %v72 = vpop.xlane.xlu0 %71
  %v73 = vrcp.pop 32.0
  %v74 = vmul.f32 32.0, %v73
  %v75 = vsub.f32 1.0, %v74
  %v76 = vmul.f32 %v73, %v75
  %v77 = vadd.f32 %v73, %v76
  %vm78 = vweird.f32 %v73
  %v79 = vsel %vm78, %v73, %v77
  %v80 = vmul.f32 %v69, %v79
  %v81 = vmul.f32 %v72, %v79
  %v82 = vsub.f32 %v62, %v80
  %v83 = vsub.f32 %v63, %v81
  %v84 = vmul.f32 %v82, %v82
  %v85 = vmul.f32 %v83, %v83
  %v86 = vsel %vm66, %v84, 0.0
  %87 = vadd.xlane.f32.xlu0 %v86
  %v88 = vpop.xlane.xlu0 %87
  %v89 = vsel %vm66, %v85, 0.0
  %90 = vadd.xlane.f32.xlu0 %v89
  %v91 = vpop.xlane.xlu0 %90
  %v92 = vmul.f32 %v88, %v79
  %v93 = vmul.f32 %v91, %v79
  %v94 = vadd.f32 %v92, 1e-12
  %v95 = vadd.f32 %v93, 1e-12
  %v96 = vrsqrt.pop %v94
  %v97 = vmul.f32 %v96, %v94
  %v98 = vmul.f32 %v97, %v96
  %v99 = vmul.f32 0.5, %v98
  %v100 = vsub.f32 1.5, %v99
  %v101 = vmul.f32 %v96, %v100
  %vm102 = vweird.f32 %v94
  %vm103 = vweird.f32 %v96
  %vm104 = vmor %vm102, %vm103
  %v105 = vsel %vm104, %v96, %v101
  %v106 = vrsqrt.pop %v95
  %v107 = vmul.f32 %v106, %v95
  %v108 = vmul.f32 %v107, %v106
  %v109 = vmul.f32 0.5, %v108
  %v110 = vsub.f32 1.5, %v109
  %v111 = vmul.f32 %v106, %v110
  %vm112 = vweird.f32 %v95
  %vm113 = vweird.f32 %v106
  %vm114 = vmor %vm112, %vm113
  %v115 = vsel %vm114, %v106, %v111
  %v116 = vmul.f32 %v82, %v105
  %v117 = vmul.f32 %v83, %v115
  %v119 = vperm.slane %v64, 0
  %v121 = vmul.f32 %v116, %v119
  %v122 = vmul.f32 %v117, %v119
  %v124 = vperm.slane %v65, 0
  %v126 = vadd.f32 %v121, %v124
  %v127 = vadd.f32 %v122, %v124
  %v128 = vld [vmem:[%s4] sm:$0xff]
  %v129 = vld [vmem:[%s4 + $0x8] sm:$0xff]
  %v130 = vld [vmem:[%s4 + $0x10] sm:$0xff]
  %v131 = vld [vmem:[%s4 + $0x18] sm:$0xff]
  %v132 = vld [vmem:[%s5] sm:$0x1]
  %v134 = vperm.slane %v132, 0
  %v137 = vsel %vm66, %v126, 0
  %v140 = vsel %vm66, %v127, 0
  %142 = vmatpush.msra.mxu0 0.0
  %143 = vmatpush.msra.mxu0 0.0
  %144 = vmatpush.msra.mxu0 0.0
  %145 = vmatpush.msra.mxu0 0.0
  %146 = vmatpush.msra.mxu0 0.0
  %147 = vmatpush.msra.mxu0 0.0
  %148 = vmatpush.msra.mxu0 0.0
  %149 = vmatpush.msra.mxu0 0.0
  %150 = vmatpush.msra.mxu0 0.0
  %151 = vmatpush.msra.mxu0 0.0
  %152 = vmatpush.msra.mxu0 0.0
  %153 = vmatpush.msra.mxu0 0.0
  %154 = vmatpush.msra.mxu0 %v131
  %155 = vmatpush.msra.mxu0 %v130
  %156 = vmatpush.msra.mxu0 %v129
  %157 = vmatpush.msra.mxu0 %v128
  %158 = vmatmul.f32.gmra.mxu0 %v137
  %v159 = vpop.f32.mrf.mxu0
  %v160 = vadd.f32 %v134, %v159
  %161 = vmatmul.f32.gmra.mxu0 %v140
  %v162 = vpop.f32.mrf.mxu0
  %v163 = vadd.f32 %v134, %v162
  %164 = vdwg.mxu0
  %166 = vrot.lane.b32.xlu0 %v160, 96
  %v167 = vpop.permute.xlu0 %166
  %vm168 = vcmask 64512
  %v169 = vsel %vm168, %v160, 0
  %v171 = vsel %vm168, %v167, 0
  %173 = vmatpush.xpose.msra.mxu0 0.0
  %174 = vmatpush.xpose.msra.mxu0 0.0
  %175 = vmatpush.xpose.msra.mxu0 0.0
  %176 = vmatpush.xpose.msra.mxu0 0.0
  %177 = vmatpush.xpose.msra.mxu0 0.0
  %178 = vmatpush.xpose.msra.mxu0 0.0
  %179 = vmatpush.xpose.msra.mxu0 0.0
  %180 = vmatpush.xpose.msra.mxu0 0.0
  %181 = vmatpush.xpose.msra.mxu0 0.0
  %182 = vmatpush.xpose.msra.mxu0 0.0
  %183 = vmatpush.xpose.msra.mxu0 0.0
  %184 = vmatpush.xpose.msra.mxu0 0.0
  %185 = vmatpush.xpose.msra.mxu0 0.0
  %186 = vmatpush.xpose.msra.mxu0 0.0
  %187 = vmatpush.xpose.msra.mxu0 0.0
  %188 = vmatpush.xpose.msra.mxu0 %v171
  %189 = vmatmul.f32.gmra.mxu0 %v169
  %v190 = vpop.f32.mrf.mxu0
  %v191 = vadd.f32 0.0, %v190
  %192 = vdwg.mxu0
  %v193 = vmul.f32 %v191, 0.35355338
  %v194 = vperm.slane %v61, 0
  %v195 = vadd.f32 %v193, %v194
  %v196 = vsel %vm168, %v195, -inf
  %197 = vmax.xlane.f32.xlu0 %v196
  %v198 = vpop.xlane.xlu0 %197
  %v199 = vsub.f32 %v195, %v198
  %v200 = vmul.f32 %v199, 1.442695
  %v201 = vpow.pop %v200
  %v202 = vsel %vm168, %v201, 0.0
  %203 = vadd.xlane.f32.xlu0 %v202
  %v204 = vpop.xlane.xlu0 %203
  %v205 = vrcp.pop %v204
  %v206 = vmul.f32 %v204, %v205
  %v207 = vsub.f32 1.0, %v206
  %v208 = vmul.f32 %v205, %v207
  %v209 = vadd.f32 %v205, %v208
  %vm210 = vweird.f32 %v204
  %vm211 = vweird.f32 %v205
  %vm212 = vmor %vm210, %vm211
  %v213 = vsel %vm212, %v205, %v209
  %v214 = vand.u32 2147483647, %v204
  %vm215 = vcmp.eq.f32.partialorder %v214, 8.507059e+37
  %v216 = vand.u32 %v204, 2147483648
  %v217 = vor.u32 1.1754944e-38, %v216
  %v218 = vsel %vm215, %v217, %v213
  %v219 = vmul.f32 %v201, %v218
  %220 = vrot.lane.b32.xlu0 %v160, 64
  %v221 = vpop.permute.xlu0 %220
  %v224 = vsel %vm168, %v219, 0
  %226 = vmatpush.msra.mxu0 0.0
  %227 = vmatpush.msra.mxu0 0.0
  %228 = vmatpush.msra.mxu0 0.0
  %229 = vmatpush.msra.mxu0 0.0
  %230 = vmatpush.msra.mxu0 0.0
  %231 = vmatpush.msra.mxu0 0.0
  %232 = vmatpush.msra.mxu0 0.0
  %233 = vmatpush.msra.mxu0 0.0
  %234 = vmatpush.msra.mxu0 0.0
  %235 = vmatpush.msra.mxu0 0.0
  %236 = vmatpush.msra.mxu0 0.0
  %237 = vmatpush.msra.mxu0 0.0
  %238 = vmatpush.msra.mxu0 0.0
  %239 = vmatpush.msra.mxu0 0.0
  %240 = vmatpush.msra.mxu0 0.0
  %241 = vmatpush.msra.mxu0 %v221
  %242 = vmatmul.f32.gmra.mxu0 %v224
  %v243 = vpop.f32.mrf.mxu0
  %v244 = vadd.f32 0.0, %v243
  %245 = vdwg.mxu0
  %246 = vrot.lane.b32.xlu0 %v160, 120
  %v247 = vpop.permute.xlu0 %246
  %248 = vrot.lane.b32.xlu0 %v160, 88
  %v249 = vpop.permute.xlu0 %248
  %v250 = vsel %vm168, %v247, 0
  %v252 = vsel %vm168, %v249, 0
  %254 = vmatpush.xpose.msra.mxu0 0.0
  %255 = vmatpush.xpose.msra.mxu0 0.0
  %256 = vmatpush.xpose.msra.mxu0 0.0
  %257 = vmatpush.xpose.msra.mxu0 0.0
  %258 = vmatpush.xpose.msra.mxu0 0.0
  %259 = vmatpush.xpose.msra.mxu0 0.0
  %260 = vmatpush.xpose.msra.mxu0 0.0
  %261 = vmatpush.xpose.msra.mxu0 0.0
  %262 = vmatpush.xpose.msra.mxu0 0.0
  %263 = vmatpush.xpose.msra.mxu0 0.0
  %264 = vmatpush.xpose.msra.mxu0 0.0
  %265 = vmatpush.xpose.msra.mxu0 0.0
  %266 = vmatpush.xpose.msra.mxu0 0.0
  %267 = vmatpush.xpose.msra.mxu0 0.0
  %268 = vmatpush.xpose.msra.mxu0 0.0
  %269 = vmatpush.xpose.msra.mxu0 %v252
  %270 = vmatmul.f32.gmra.mxu0 %v250
  %v271 = vpop.f32.mrf.mxu0
  %v272 = vadd.f32 0.0, %v271
  %273 = vdwg.mxu0
  %v274 = vmul.f32 %v272, 0.35355338
  %v275 = vadd.f32 %v274, %v194
  %v276 = vsel %vm168, %v275, -inf
  %277 = vmax.xlane.f32.xlu0 %v276
  %v278 = vpop.xlane.xlu0 %277
  %v279 = vsub.f32 %v275, %v278
  %v280 = vmul.f32 %v279, 1.442695
  %v281 = vpow.pop %v280
  %v282 = vsel %vm168, %v281, 0.0
  %283 = vadd.xlane.f32.xlu0 %v282
  %v284 = vpop.xlane.xlu0 %283
  %v285 = vrcp.pop %v284
  %v286 = vmul.f32 %v284, %v285
  %v287 = vsub.f32 1.0, %v286
  %v288 = vmul.f32 %v285, %v287
  %v289 = vadd.f32 %v285, %v288
  %vm290 = vweird.f32 %v284
  %vm291 = vweird.f32 %v285
  %vm292 = vmor %vm290, %vm291
  %v293 = vsel %vm292, %v285, %v289
  %v294 = vand.u32 2147483647, %v284
  %vm295 = vcmp.eq.f32.partialorder %v294, 8.507059e+37
  %v296 = vand.u32 %v284, 2147483648
  %v297 = vor.u32 1.1754944e-38, %v296
  %v298 = vsel %vm295, %v297, %v293
  %v299 = vmul.f32 %v281, %v298
  %300 = vrot.lane.b32.xlu0 %v160, 56
  %v301 = vpop.permute.xlu0 %300
  %v304 = vsel %vm168, %v299, 0
  %306 = vmatpush.msra.mxu0 0.0
  %307 = vmatpush.msra.mxu0 0.0
  %308 = vmatpush.msra.mxu0 0.0
  %309 = vmatpush.msra.mxu0 0.0
  %310 = vmatpush.msra.mxu0 0.0
  %311 = vmatpush.msra.mxu0 0.0
  %312 = vmatpush.msra.mxu0 0.0
  %313 = vmatpush.msra.mxu0 0.0
  %314 = vmatpush.msra.mxu0 0.0
  %315 = vmatpush.msra.mxu0 0.0
  %316 = vmatpush.msra.mxu0 0.0
  %317 = vmatpush.msra.mxu0 0.0
  %318 = vmatpush.msra.mxu0 0.0
  %319 = vmatpush.msra.mxu0 0.0
  %320 = vmatpush.msra.mxu0 0.0
  %321 = vmatpush.msra.mxu0 %v301
  %322 = vmatmul.f32.gmra.mxu0 %v304
  %v323 = vpop.f32.mrf.mxu0
  %v324 = vadd.f32 0.0, %v323
  %325 = vdwg.mxu0
  %326 = vrot.lane.b32.xlu0 %v160, 112
  %v327 = vpop.permute.xlu0 %326
  %328 = vrot.lane.b32.xlu0 %v160, 80
  %v329 = vpop.permute.xlu0 %328
  %v330 = vsel %vm168, %v327, 0
  %v332 = vsel %vm168, %v329, 0
  %334 = vmatpush.xpose.msra.mxu0 0.0
  %335 = vmatpush.xpose.msra.mxu0 0.0
  %336 = vmatpush.xpose.msra.mxu0 0.0
  %337 = vmatpush.xpose.msra.mxu0 0.0
  %338 = vmatpush.xpose.msra.mxu0 0.0
  %339 = vmatpush.xpose.msra.mxu0 0.0
  %340 = vmatpush.xpose.msra.mxu0 0.0
  %341 = vmatpush.xpose.msra.mxu0 0.0
  %342 = vmatpush.xpose.msra.mxu0 0.0
  %343 = vmatpush.xpose.msra.mxu0 0.0
  %344 = vmatpush.xpose.msra.mxu0 0.0
  %345 = vmatpush.xpose.msra.mxu0 0.0
  %346 = vmatpush.xpose.msra.mxu0 0.0
  %347 = vmatpush.xpose.msra.mxu0 0.0
  %348 = vmatpush.xpose.msra.mxu0 0.0
  %349 = vmatpush.xpose.msra.mxu0 %v332
  %350 = vmatmul.f32.gmra.mxu0 %v330
  %v351 = vpop.f32.mrf.mxu0
  %v352 = vadd.f32 0.0, %v351
  %353 = vdwg.mxu0
  %v354 = vmul.f32 %v352, 0.35355338
  %v355 = vadd.f32 %v354, %v194
  %v356 = vsel %vm168, %v355, -inf
  %357 = vmax.xlane.f32.xlu0 %v356
  %v358 = vpop.xlane.xlu0 %357
  %v359 = vsub.f32 %v355, %v358
  %v360 = vmul.f32 %v359, 1.442695
  %v361 = vpow.pop %v360
  %v362 = vsel %vm168, %v361, 0.0
  %363 = vadd.xlane.f32.xlu0 %v362
  %v364 = vpop.xlane.xlu0 %363
  %v365 = vrcp.pop %v364
  %v366 = vmul.f32 %v364, %v365
  %v367 = vsub.f32 1.0, %v366
  %v368 = vmul.f32 %v365, %v367
  %v369 = vadd.f32 %v365, %v368
  %vm370 = vweird.f32 %v364
  %vm371 = vweird.f32 %v365
  %vm372 = vmor %vm370, %vm371
  %v373 = vsel %vm372, %v365, %v369
  %v374 = vand.u32 2147483647, %v364
  %vm375 = vcmp.eq.f32.partialorder %v374, 8.507059e+37
  %v376 = vand.u32 %v364, 2147483648
  %v377 = vor.u32 1.1754944e-38, %v376
  %v378 = vsel %vm375, %v377, %v373
  %v379 = vmul.f32 %v361, %v378
  %380 = vrot.lane.b32.xlu0 %v160, 48
  %v381 = vpop.permute.xlu0 %380
  %v384 = vsel %vm168, %v379, 0
  %386 = vmatpush.msra.mxu0 0.0
  %387 = vmatpush.msra.mxu0 0.0
  %388 = vmatpush.msra.mxu0 0.0
  %389 = vmatpush.msra.mxu0 0.0
  %390 = vmatpush.msra.mxu0 0.0
  %391 = vmatpush.msra.mxu0 0.0
  %392 = vmatpush.msra.mxu0 0.0
  %393 = vmatpush.msra.mxu0 0.0
  %394 = vmatpush.msra.mxu0 0.0
  %395 = vmatpush.msra.mxu0 0.0
  %396 = vmatpush.msra.mxu0 0.0
  %397 = vmatpush.msra.mxu0 0.0
  %398 = vmatpush.msra.mxu0 0.0
  %399 = vmatpush.msra.mxu0 0.0
  %400 = vmatpush.msra.mxu0 0.0
  %401 = vmatpush.msra.mxu0 %v381
  %402 = vmatmul.f32.gmra.mxu0 %v384
  %v403 = vpop.f32.mrf.mxu0
  %v404 = vadd.f32 0.0, %v403
  %405 = vdwg.mxu0
  %406 = vrot.lane.b32.xlu0 %v160, 104
  %v407 = vpop.permute.xlu0 %406
  %408 = vrot.lane.b32.xlu0 %v160, 72
  %v409 = vpop.permute.xlu0 %408
  %v410 = vsel %vm168, %v407, 0
  %v412 = vsel %vm168, %v409, 0
  %414 = vmatpush.xpose.msra.mxu0 0.0
  %415 = vmatpush.xpose.msra.mxu0 0.0
  %416 = vmatpush.xpose.msra.mxu0 0.0
  %417 = vmatpush.xpose.msra.mxu0 0.0
  %418 = vmatpush.xpose.msra.mxu0 0.0
  %419 = vmatpush.xpose.msra.mxu0 0.0
  %420 = vmatpush.xpose.msra.mxu0 0.0
  %421 = vmatpush.xpose.msra.mxu0 0.0
  %422 = vmatpush.xpose.msra.mxu0 0.0
  %423 = vmatpush.xpose.msra.mxu0 0.0
  %424 = vmatpush.xpose.msra.mxu0 0.0
  %425 = vmatpush.xpose.msra.mxu0 0.0
  %426 = vmatpush.xpose.msra.mxu0 0.0
  %427 = vmatpush.xpose.msra.mxu0 0.0
  %428 = vmatpush.xpose.msra.mxu0 0.0
  %429 = vmatpush.xpose.msra.mxu0 %v412
  %430 = vmatmul.f32.gmra.mxu0 %v410
  %v431 = vpop.f32.mrf.mxu0
  %v432 = vadd.f32 0.0, %v431
  %433 = vdwg.mxu0
  %v434 = vmul.f32 %v432, 0.35355338
  %v435 = vadd.f32 %v434, %v194
  %v436 = vsel %vm168, %v435, -inf
  %437 = vmax.xlane.f32.xlu0 %v436
  %v438 = vpop.xlane.xlu0 %437
  %v439 = vsub.f32 %v435, %v438
  %v440 = vmul.f32 %v439, 1.442695
  %v441 = vpow.pop %v440
  %v442 = vsel %vm168, %v441, 0.0
  %443 = vadd.xlane.f32.xlu0 %v442
  %v444 = vpop.xlane.xlu0 %443
  %v445 = vrcp.pop %v444
  %v446 = vmul.f32 %v444, %v445
  %v447 = vsub.f32 1.0, %v446
  %v448 = vmul.f32 %v445, %v447
  %v449 = vadd.f32 %v445, %v448
  %vm450 = vweird.f32 %v444
  %vm451 = vweird.f32 %v445
  %vm452 = vmor %vm450, %vm451
  %v453 = vsel %vm452, %v445, %v449
  %v454 = vand.u32 2147483647, %v444
  %vm455 = vcmp.eq.f32.partialorder %v454, 8.507059e+37
  %v456 = vand.u32 %v444, 2147483648
  %v457 = vor.u32 1.1754944e-38, %v456
  %v458 = vsel %vm455, %v457, %v453
  %v459 = vmul.f32 %v441, %v458
  %460 = vrot.lane.b32.xlu0 %v160, 40
  %v461 = vpop.permute.xlu0 %460
  %v464 = vsel %vm168, %v459, 0
  %466 = vmatpush.msra.mxu0 0.0
  %467 = vmatpush.msra.mxu0 0.0
  %468 = vmatpush.msra.mxu0 0.0
  %469 = vmatpush.msra.mxu0 0.0
  %470 = vmatpush.msra.mxu0 0.0
  %471 = vmatpush.msra.mxu0 0.0
  %472 = vmatpush.msra.mxu0 0.0
  %473 = vmatpush.msra.mxu0 0.0
  %474 = vmatpush.msra.mxu0 0.0
  %475 = vmatpush.msra.mxu0 0.0
  %476 = vmatpush.msra.mxu0 0.0
  %477 = vmatpush.msra.mxu0 0.0
  %478 = vmatpush.msra.mxu0 0.0
  %479 = vmatpush.msra.mxu0 0.0
  %480 = vmatpush.msra.mxu0 0.0
  %481 = vmatpush.msra.mxu0 %v461
  %482 = vmatmul.f32.gmra.mxu0 %v464
  %v483 = vpop.f32.mrf.mxu0
  %v484 = vadd.f32 0.0, %v483
  %485 = vdwg.mxu0
  %487 = vrot.lane.b32.xlu0 %v324, 8
  %v488 = vpop.permute.xlu0 %487
  %491 = vrot.lane.b32.xlu0 %v404, 16
  %v492 = vpop.permute.xlu0 %491
  %495 = vrot.lane.b32.xlu0 %v484, 24
  %v496 = vpop.permute.xlu0 %495
  %v498 = vsel %vm168, %v244, %v488
  %vm499 = vcmask 130048
  %v500 = vsel %vm499, %v498, %v492
  %vm501 = vcmask 195584
  %v502 = vsel %vm501, %v500, %v496
  %504 = vrot.lane.b32.xlu0 %v163, 96
  %v505 = vpop.permute.xlu0 %504
  %v506 = vsel %vm168, %v163, 0
  %v508 = vsel %vm168, %v505, 0
  %510 = vmatpush.xpose.msra.mxu0 0.0
  %511 = vmatpush.xpose.msra.mxu0 0.0
  %512 = vmatpush.xpose.msra.mxu0 0.0
  %513 = vmatpush.xpose.msra.mxu0 0.0
  %514 = vmatpush.xpose.msra.mxu0 0.0
  %515 = vmatpush.xpose.msra.mxu0 0.0
  %516 = vmatpush.xpose.msra.mxu0 0.0
  %517 = vmatpush.xpose.msra.mxu0 0.0
  %518 = vmatpush.xpose.msra.mxu0 0.0
  %519 = vmatpush.xpose.msra.mxu0 0.0
  %520 = vmatpush.xpose.msra.mxu0 0.0
  %521 = vmatpush.xpose.msra.mxu0 0.0
  %522 = vmatpush.xpose.msra.mxu0 0.0
  %523 = vmatpush.xpose.msra.mxu0 0.0
  %524 = vmatpush.xpose.msra.mxu0 0.0
  %525 = vmatpush.xpose.msra.mxu0 %v508
  %526 = vmatmul.f32.gmra.mxu0 %v506
  %v527 = vpop.f32.mrf.mxu0
  %v528 = vadd.f32 0.0, %v527
  %529 = vdwg.mxu0
  %v530 = vmul.f32 %v528, 0.35355338
  %v531 = vperm.slane %v61, 1
  %v532 = vadd.f32 %v530, %v531
  %v533 = vsel %vm168, %v532, -inf
  %534 = vmax.xlane.f32.xlu0 %v533
  %v535 = vpop.xlane.xlu0 %534
  %v536 = vsub.f32 %v532, %v535
  %v537 = vmul.f32 %v536, 1.442695
  %v538 = vpow.pop %v537
  %v539 = vsel %vm168, %v538, 0.0
  %540 = vadd.xlane.f32.xlu0 %v539
  %v541 = vpop.xlane.xlu0 %540
  %v542 = vrcp.pop %v541
  %v543 = vmul.f32 %v541, %v542
  %v544 = vsub.f32 1.0, %v543
  %v545 = vmul.f32 %v542, %v544
  %v546 = vadd.f32 %v542, %v545
  %vm547 = vweird.f32 %v541
  %vm548 = vweird.f32 %v542
  %vm549 = vmor %vm547, %vm548
  %v550 = vsel %vm549, %v542, %v546
  %v551 = vand.u32 2147483647, %v541
  %vm552 = vcmp.eq.f32.partialorder %v551, 8.507059e+37
  %v553 = vand.u32 %v541, 2147483648
  %v554 = vor.u32 1.1754944e-38, %v553
  %v555 = vsel %vm552, %v554, %v550
  %v556 = vmul.f32 %v538, %v555
  %557 = vrot.lane.b32.xlu0 %v163, 64
  %v558 = vpop.permute.xlu0 %557
  %v561 = vsel %vm168, %v556, 0
  %563 = vmatpush.msra.mxu0 0.0
  %564 = vmatpush.msra.mxu0 0.0
  %565 = vmatpush.msra.mxu0 0.0
  %566 = vmatpush.msra.mxu0 0.0
  %567 = vmatpush.msra.mxu0 0.0
  %568 = vmatpush.msra.mxu0 0.0
  %569 = vmatpush.msra.mxu0 0.0
  %570 = vmatpush.msra.mxu0 0.0
  %571 = vmatpush.msra.mxu0 0.0
  %572 = vmatpush.msra.mxu0 0.0
  %573 = vmatpush.msra.mxu0 0.0
  %574 = vmatpush.msra.mxu0 0.0
  %575 = vmatpush.msra.mxu0 0.0
  %576 = vmatpush.msra.mxu0 0.0
  %577 = vmatpush.msra.mxu0 0.0
  %578 = vmatpush.msra.mxu0 %v558
  %579 = vmatmul.f32.gmra.mxu0 %v561
  %v580 = vpop.f32.mrf.mxu0
  %v581 = vadd.f32 0.0, %v580
  %582 = vdwg.mxu0
  %583 = vrot.lane.b32.xlu0 %v163, 120
  %v584 = vpop.permute.xlu0 %583
  %585 = vrot.lane.b32.xlu0 %v163, 88
  %v586 = vpop.permute.xlu0 %585
  %v587 = vsel %vm168, %v584, 0
  %v589 = vsel %vm168, %v586, 0
  %591 = vmatpush.xpose.msra.mxu0 0.0
  %592 = vmatpush.xpose.msra.mxu0 0.0
  %593 = vmatpush.xpose.msra.mxu0 0.0
  %594 = vmatpush.xpose.msra.mxu0 0.0
  %595 = vmatpush.xpose.msra.mxu0 0.0
  %596 = vmatpush.xpose.msra.mxu0 0.0
  %597 = vmatpush.xpose.msra.mxu0 0.0
  %598 = vmatpush.xpose.msra.mxu0 0.0
  %599 = vmatpush.xpose.msra.mxu0 0.0
  %600 = vmatpush.xpose.msra.mxu0 0.0
  %601 = vmatpush.xpose.msra.mxu0 0.0
  %602 = vmatpush.xpose.msra.mxu0 0.0
  %603 = vmatpush.xpose.msra.mxu0 0.0
  %604 = vmatpush.xpose.msra.mxu0 0.0
  %605 = vmatpush.xpose.msra.mxu0 0.0
  %606 = vmatpush.xpose.msra.mxu0 %v589
  %607 = vmatmul.f32.gmra.mxu0 %v587
  %v608 = vpop.f32.mrf.mxu0
  %v609 = vadd.f32 0.0, %v608
  %610 = vdwg.mxu0
  %v611 = vmul.f32 %v609, 0.35355338
  %v612 = vadd.f32 %v611, %v531
  %v613 = vsel %vm168, %v612, -inf
  %614 = vmax.xlane.f32.xlu0 %v613
  %v615 = vpop.xlane.xlu0 %614
  %v616 = vsub.f32 %v612, %v615
  %v617 = vmul.f32 %v616, 1.442695
  %v618 = vpow.pop %v617
  %v619 = vsel %vm168, %v618, 0.0
  %620 = vadd.xlane.f32.xlu0 %v619
  %v621 = vpop.xlane.xlu0 %620
  %v622 = vrcp.pop %v621
  %v623 = vmul.f32 %v621, %v622
  %v624 = vsub.f32 1.0, %v623
  %v625 = vmul.f32 %v622, %v624
  %v626 = vadd.f32 %v622, %v625
  %vm627 = vweird.f32 %v621
  %vm628 = vweird.f32 %v622
  %vm629 = vmor %vm627, %vm628
  %v630 = vsel %vm629, %v622, %v626
  %v631 = vand.u32 2147483647, %v621
  %vm632 = vcmp.eq.f32.partialorder %v631, 8.507059e+37
  %v633 = vand.u32 %v621, 2147483648
  %v634 = vor.u32 1.1754944e-38, %v633
  %v635 = vsel %vm632, %v634, %v630
  %v636 = vmul.f32 %v618, %v635
  %637 = vrot.lane.b32.xlu0 %v163, 56
  %v638 = vpop.permute.xlu0 %637
  %v641 = vsel %vm168, %v636, 0
  %643 = vmatpush.msra.mxu0 0.0
  %644 = vmatpush.msra.mxu0 0.0
  %645 = vmatpush.msra.mxu0 0.0
  %646 = vmatpush.msra.mxu0 0.0
  %647 = vmatpush.msra.mxu0 0.0
  %648 = vmatpush.msra.mxu0 0.0
  %649 = vmatpush.msra.mxu0 0.0
  %650 = vmatpush.msra.mxu0 0.0
  %651 = vmatpush.msra.mxu0 0.0
  %652 = vmatpush.msra.mxu0 0.0
  %653 = vmatpush.msra.mxu0 0.0
  %654 = vmatpush.msra.mxu0 0.0
  %655 = vmatpush.msra.mxu0 0.0
  %656 = vmatpush.msra.mxu0 0.0
  %657 = vmatpush.msra.mxu0 0.0
  %658 = vmatpush.msra.mxu0 %v638
  %659 = vmatmul.f32.gmra.mxu0 %v641
  %v660 = vpop.f32.mrf.mxu0
  %v661 = vadd.f32 0.0, %v660
  %662 = vdwg.mxu0
  %663 = vrot.lane.b32.xlu0 %v163, 112
  %v664 = vpop.permute.xlu0 %663
  %665 = vrot.lane.b32.xlu0 %v163, 80
  %v666 = vpop.permute.xlu0 %665
  %v667 = vsel %vm168, %v664, 0
  %v669 = vsel %vm168, %v666, 0
  %671 = vmatpush.xpose.msra.mxu0 0.0
  %672 = vmatpush.xpose.msra.mxu0 0.0
  %673 = vmatpush.xpose.msra.mxu0 0.0
  %674 = vmatpush.xpose.msra.mxu0 0.0
  %675 = vmatpush.xpose.msra.mxu0 0.0
  %676 = vmatpush.xpose.msra.mxu0 0.0
  %677 = vmatpush.xpose.msra.mxu0 0.0
  %678 = vmatpush.xpose.msra.mxu0 0.0
  %679 = vmatpush.xpose.msra.mxu0 0.0
  %680 = vmatpush.xpose.msra.mxu0 0.0
  %681 = vmatpush.xpose.msra.mxu0 0.0
  %682 = vmatpush.xpose.msra.mxu0 0.0
  %683 = vmatpush.xpose.msra.mxu0 0.0
  %684 = vmatpush.xpose.msra.mxu0 0.0
  %685 = vmatpush.xpose.msra.mxu0 0.0
  %686 = vmatpush.xpose.msra.mxu0 %v669
  %687 = vmatmul.f32.gmra.mxu0 %v667
  %v688 = vpop.f32.mrf.mxu0
  %v689 = vadd.f32 0.0, %v688
  %690 = vdwg.mxu0
  %v691 = vmul.f32 %v689, 0.35355338
  %v692 = vadd.f32 %v691, %v531
  %v693 = vsel %vm168, %v692, -inf
  %694 = vmax.xlane.f32.xlu0 %v693
  %v695 = vpop.xlane.xlu0 %694
  %v696 = vsub.f32 %v692, %v695
  %v697 = vmul.f32 %v696, 1.442695
  %v698 = vpow.pop %v697
  %v699 = vsel %vm168, %v698, 0.0
  %700 = vadd.xlane.f32.xlu0 %v699
  %v701 = vpop.xlane.xlu0 %700
  %v702 = vrcp.pop %v701
  %v703 = vmul.f32 %v701, %v702
  %v704 = vsub.f32 1.0, %v703
  %v705 = vmul.f32 %v702, %v704
  %v706 = vadd.f32 %v702, %v705
  %vm707 = vweird.f32 %v701
  %vm708 = vweird.f32 %v702
  %vm709 = vmor %vm707, %vm708
  %v710 = vsel %vm709, %v702, %v706
  %v711 = vand.u32 2147483647, %v701
  %vm712 = vcmp.eq.f32.partialorder %v711, 8.507059e+37
  %v713 = vand.u32 %v701, 2147483648
  %v714 = vor.u32 1.1754944e-38, %v713
  %v715 = vsel %vm712, %v714, %v710
  %v716 = vmul.f32 %v698, %v715
  %717 = vrot.lane.b32.xlu0 %v163, 48
  %v718 = vpop.permute.xlu0 %717
  %v721 = vsel %vm168, %v716, 0
  %723 = vmatpush.msra.mxu0 0.0
  %724 = vmatpush.msra.mxu0 0.0
  %725 = vmatpush.msra.mxu0 0.0
  %726 = vmatpush.msra.mxu0 0.0
  %727 = vmatpush.msra.mxu0 0.0
  %728 = vmatpush.msra.mxu0 0.0
  %729 = vmatpush.msra.mxu0 0.0
  %730 = vmatpush.msra.mxu0 0.0
  %731 = vmatpush.msra.mxu0 0.0
  %732 = vmatpush.msra.mxu0 0.0
  %733 = vmatpush.msra.mxu0 0.0
  %734 = vmatpush.msra.mxu0 0.0
  %735 = vmatpush.msra.mxu0 0.0
  %736 = vmatpush.msra.mxu0 0.0
  %737 = vmatpush.msra.mxu0 0.0
  %738 = vmatpush.msra.mxu0 %v718
  %739 = vmatmul.f32.gmra.mxu0 %v721
  %v740 = vpop.f32.mrf.mxu0
  %v741 = vadd.f32 0.0, %v740
  %742 = vdwg.mxu0
  %743 = vrot.lane.b32.xlu0 %v163, 104
  %v744 = vpop.permute.xlu0 %743
  %745 = vrot.lane.b32.xlu0 %v163, 72
  %v746 = vpop.permute.xlu0 %745
  %v747 = vsel %vm168, %v744, 0
  %v749 = vsel %vm168, %v746, 0
  %751 = vmatpush.xpose.msra.mxu0 0.0
  %752 = vmatpush.xpose.msra.mxu0 0.0
  %753 = vmatpush.xpose.msra.mxu0 0.0
  %754 = vmatpush.xpose.msra.mxu0 0.0
  %755 = vmatpush.xpose.msra.mxu0 0.0
  %756 = vmatpush.xpose.msra.mxu0 0.0
  %757 = vmatpush.xpose.msra.mxu0 0.0
  %758 = vmatpush.xpose.msra.mxu0 0.0
  %759 = vmatpush.xpose.msra.mxu0 0.0
  %760 = vmatpush.xpose.msra.mxu0 0.0
  %761 = vmatpush.xpose.msra.mxu0 0.0
  %762 = vmatpush.xpose.msra.mxu0 0.0
  %763 = vmatpush.xpose.msra.mxu0 0.0
  %764 = vmatpush.xpose.msra.mxu0 0.0
  %765 = vmatpush.xpose.msra.mxu0 0.0
  %766 = vmatpush.xpose.msra.mxu0 %v749
  %767 = vmatmul.f32.gmra.mxu0 %v747
  %v768 = vpop.f32.mrf.mxu0
  %v769 = vadd.f32 0.0, %v768
  %770 = vdwg.mxu0
  %v771 = vmul.f32 %v769, 0.35355338
  %v772 = vadd.f32 %v771, %v531
  %v773 = vsel %vm168, %v772, -inf
  %774 = vmax.xlane.f32.xlu0 %v773
  %v775 = vpop.xlane.xlu0 %774
  %v776 = vsub.f32 %v772, %v775
  %v777 = vmul.f32 %v776, 1.442695
  %v778 = vpow.pop %v777
  %v779 = vsel %vm168, %v778, 0.0
  %780 = vadd.xlane.f32.xlu0 %v779
  %v781 = vpop.xlane.xlu0 %780
  %v782 = vrcp.pop %v781
  %v783 = vmul.f32 %v781, %v782
  %v784 = vsub.f32 1.0, %v783
  %v785 = vmul.f32 %v782, %v784
  %v786 = vadd.f32 %v782, %v785
  %vm787 = vweird.f32 %v781
  %vm788 = vweird.f32 %v782
  %vm789 = vmor %vm787, %vm788
  %v790 = vsel %vm789, %v782, %v786
  %v791 = vand.u32 2147483647, %v781
  %vm792 = vcmp.eq.f32.partialorder %v791, 8.507059e+37
  %v793 = vand.u32 %v781, 2147483648
  %v794 = vor.u32 1.1754944e-38, %v793
  %v795 = vsel %vm792, %v794, %v790
  %v796 = vmul.f32 %v778, %v795
  %797 = vrot.lane.b32.xlu0 %v163, 40
  %v798 = vpop.permute.xlu0 %797
  %v801 = vsel %vm168, %v796, 0
  %803 = vmatpush.msra.mxu0 0.0
  %804 = vmatpush.msra.mxu0 0.0
  %805 = vmatpush.msra.mxu0 0.0
  %806 = vmatpush.msra.mxu0 0.0
  %807 = vmatpush.msra.mxu0 0.0
  %808 = vmatpush.msra.mxu0 0.0
  %809 = vmatpush.msra.mxu0 0.0
  %810 = vmatpush.msra.mxu0 0.0
  %811 = vmatpush.msra.mxu0 0.0
  %812 = vmatpush.msra.mxu0 0.0
  %813 = vmatpush.msra.mxu0 0.0
  %814 = vmatpush.msra.mxu0 0.0
  %815 = vmatpush.msra.mxu0 0.0
  %816 = vmatpush.msra.mxu0 0.0
  %817 = vmatpush.msra.mxu0 0.0
  %818 = vmatpush.msra.mxu0 %v798
  %819 = vmatmul.f32.gmra.mxu0 %v801
  %v820 = vpop.f32.mrf.mxu0
  %v821 = vadd.f32 0.0, %v820
  %822 = vdwg.mxu0
  %824 = vrot.lane.b32.xlu0 %v661, 8
  %v825 = vpop.permute.xlu0 %824
  %828 = vrot.lane.b32.xlu0 %v741, 16
  %v829 = vpop.permute.xlu0 %828
  %832 = vrot.lane.b32.xlu0 %v821, 24
  %v833 = vpop.permute.xlu0 %832
  %v835 = vsel %vm168, %v581, %v825
  %v836 = vsel %vm499, %v835, %v829
  %v837 = vsel %vm501, %v836, %v833
  %v838 = vld [vmem:[%s6] sm:$0xff]
  %v839 = vld [vmem:[%s6 + $0x8] sm:$0xff]
  %v840 = vld [vmem:[%s6 + $0x10] sm:$0xff]
  %v841 = vld [vmem:[%s6 + $0x18] sm:$0xff]
  %v842 = vld [vmem:[%s7] sm:$0x1]
  %v844 = vperm.slane %v842, 0
  %v847 = vsel %vm66, %v502, 0
  %v850 = vsel %vm66, %v837, 0
  %852 = vmatpush.msra.mxu0 0.0
  %853 = vmatpush.msra.mxu0 0.0
  %854 = vmatpush.msra.mxu0 0.0
  %855 = vmatpush.msra.mxu0 0.0
  %856 = vmatpush.msra.mxu0 0.0
  %857 = vmatpush.msra.mxu0 0.0
  %858 = vmatpush.msra.mxu0 0.0
  %859 = vmatpush.msra.mxu0 0.0
  %860 = vmatpush.msra.mxu0 0.0
  %861 = vmatpush.msra.mxu0 0.0
  %862 = vmatpush.msra.mxu0 0.0
  %863 = vmatpush.msra.mxu0 0.0
  %864 = vmatpush.msra.mxu0 %v841
  %865 = vmatpush.msra.mxu0 %v840
  %866 = vmatpush.msra.mxu0 %v839
  %867 = vmatpush.msra.mxu0 %v838
  %868 = vmatmul.f32.gmra.mxu0 %v847
  %v869 = vpop.f32.mrf.mxu0
  %v870 = vadd.f32 %v844, %v869
  %871 = vmatmul.f32.gmra.mxu0 %v850
  %v872 = vpop.f32.mrf.mxu0
  %v873 = vadd.f32 %v844, %v872
  %874 = vdwg.mxu0
  %v875 = vadd.f32 %v870, %v126
  %v876 = vadd.f32 %v873, %v127
  %v877 = vld [vmem:[%s8] sm:$0x1]
  %v878 = vld [vmem:[%s9] sm:$0x1]
  %v879 = vsel %vm66, %v875, 0.0
  %880 = vadd.xlane.f32.xlu0 %v879
  %v881 = vpop.xlane.xlu0 %880
  %v882 = vsel %vm66, %v876, 0.0
  %883 = vadd.xlane.f32.xlu0 %v882
  %v884 = vpop.xlane.xlu0 %883
  %v885 = vmul.f32 %v881, %v79
  %v886 = vmul.f32 %v884, %v79
  %v887 = vsub.f32 %v875, %v885
  %v888 = vsub.f32 %v876, %v886
  %v889 = vmul.f32 %v887, %v887
  %v890 = vmul.f32 %v888, %v888
  %v891 = vsel %vm66, %v889, 0.0
  %892 = vadd.xlane.f32.xlu0 %v891
  %v893 = vpop.xlane.xlu0 %892
  %v894 = vsel %vm66, %v890, 0.0
  %895 = vadd.xlane.f32.xlu0 %v894
  %v896 = vpop.xlane.xlu0 %895
  %v897 = vmul.f32 %v893, %v79
  %v898 = vmul.f32 %v896, %v79
  %v899 = vadd.f32 %v897, 1e-12
  %v900 = vadd.f32 %v898, 1e-12
  %v901 = vrsqrt.pop %v899
  %v902 = vmul.f32 %v901, %v899
  %v903 = vmul.f32 %v902, %v901
  %v904 = vmul.f32 0.5, %v903
  %v905 = vsub.f32 1.5, %v904
  %v906 = vmul.f32 %v901, %v905
  %vm907 = vweird.f32 %v899
  %vm908 = vweird.f32 %v901
  %vm909 = vmor %vm907, %vm908
  %v910 = vsel %vm909, %v901, %v906
  %v911 = vrsqrt.pop %v900
  %v912 = vmul.f32 %v911, %v900
  %v913 = vmul.f32 %v912, %v911
  %v914 = vmul.f32 0.5, %v913
  %v915 = vsub.f32 1.5, %v914
  %v916 = vmul.f32 %v911, %v915
  %vm917 = vweird.f32 %v900
  %vm918 = vweird.f32 %v911
  %vm919 = vmor %vm917, %vm918
  %v920 = vsel %vm919, %v911, %v916
  %v921 = vmul.f32 %v887, %v910
  %v922 = vmul.f32 %v888, %v920
  %v924 = vperm.slane %v877, 0
  %v926 = vmul.f32 %v921, %v924
  %v927 = vmul.f32 %v922, %v924
  %v929 = vperm.slane %v878, 0
  %v931 = vadd.f32 %v926, %v929
  %v932 = vadd.f32 %v927, %v929
  %v933 = vld [vmem:[%s10] sm:$0xff]
  %v934 = vld [vmem:[%s10 + $0x8] sm:$0xff]
  %v935 = vld [vmem:[%s10 + $0x10] sm:$0xff]
  %v936 = vld [vmem:[%s10 + $0x18] sm:$0xff]
  %v937 = vld [vmem:[%s11] sm:$0x1]
  %v939 = vperm.slane %v937, 0
  %v942 = vsel %vm66, %v931, 0
  %v945 = vsel %vm66, %v932, 0
  %947 = vmatpush.msra.mxu0 0.0
  %948 = vmatpush.msra.mxu0 0.0
  %949 = vmatpush.msra.mxu0 0.0
  %950 = vmatpush.msra.mxu0 0.0
  %951 = vmatpush.msra.mxu0 0.0
  %952 = vmatpush.msra.mxu0 0.0
  %953 = vmatpush.msra.mxu0 0.0
  %954 = vmatpush.msra.mxu0 0.0
  %955 = vmatpush.msra.mxu0 0.0
  %956 = vmatpush.msra.mxu0 0.0
  %957 = vmatpush.msra.mxu0 0.0
  %958 = vmatpush.msra.mxu0 0.0
  %959 = vmatpush.msra.mxu0 %v936
  %960 = vmatpush.msra.mxu0 %v935
  %961 = vmatpush.msra.mxu0 %v934
  %962 = vmatpush.msra.mxu0 %v933
  %963 = vmatmul.f32.gmra.mxu0 %v942
  %v964 = vpop.f32.mrf.mxu0
  %v965 = vadd.f32 %v939, %v964
  %966 = vmatmul.f32.gmra.mxu0 %v945
  %v967 = vpop.f32.mrf.mxu0
  %v968 = vadd.f32 %v939, %v967
  %969 = vdwg.mxu0
  %v970 = vmul.f32 %v965, 0.5
  %v971 = vmul.f32 %v968, 0.5
  %v972 = vmul.f32 %v965, 0.044715
  %v973 = vmul.f32 %v968, 0.044715
  %v974 = vmul.f32 %v972, %v965
  %v975 = vmul.f32 %v973, %v968
  %v976 = vmul.f32 %v974, %v965
  %v977 = vmul.f32 %v975, %v968
  %v978 = vadd.f32 %v965, %v976
  %v979 = vadd.f32 %v968, %v977
  %v980 = vmul.f32 %v978, 0.7978846
  %v981 = vmul.f32 %v979, 0.7978846
  %v982 = vtanh.pop %v980
  %v983 = vtanh.pop %v981
  %v984 = vadd.f32 %v982, 1.0
  %v985 = vadd.f32 %v983, 1.0
  %v986 = vmul.f32 %v970, %v984
  %v987 = vmul.f32 %v971, %v985
  %v988 = vld [vmem:[%s12] sm:$0xff]
  %v989 = vld [vmem:[%s12 + $0x8] sm:$0xff]
  %v990 = vld [vmem:[%s12 + $0x10] sm:$0xff]
  %v991 = vld [vmem:[%s12 + $0x18] sm:$0xff]
  %v992 = vld [vmem:[%s12 + $0x20] sm:$0xff]
  %v993 = vld [vmem:[%s12 + $0x28] sm:$0xff]
  %v994 = vld [vmem:[%s12 + $0x30] sm:$0xff]
  %v995 = vld [vmem:[%s12 + $0x38] sm:$0xff]
  %v996 = vld [vmem:[%s13] sm:$0x1]
  %v998 = vperm.slane %v996, 0
  %vm1000 = vcmask 523264
  %v1002 = vsel %vm1000, %v986, 0
  %v1005 = vsel %vm1000, %v987, 0
  %1007 = vmatpush.msra.mxu0 0.0
  %1008 = vmatpush.msra.mxu0 0.0
  %1009 = vmatpush.msra.mxu0 0.0
  %1010 = vmatpush.msra.mxu0 0.0
  %1011 = vmatpush.msra.mxu0 0.0
  %1012 = vmatpush.msra.mxu0 0.0
  %1013 = vmatpush.msra.mxu0 0.0
  %1014 = vmatpush.msra.mxu0 0.0
  %1015 = vmatpush.msra.mxu0 %v995
  %1016 = vmatpush.msra.mxu0 %v994
  %1017 = vmatpush.msra.mxu0 %v993
  %1018 = vmatpush.msra.mxu0 %v992
  %1019 = vmatpush.msra.mxu0 %v991
  %1020 = vmatpush.msra.mxu0 %v990
  %1021 = vmatpush.msra.mxu0 %v989
  %1022 = vmatpush.msra.mxu0 %v988
  %1023 = vmatmul.f32.gmra.mxu0 %v1002
  %v1024 = vpop.f32.mrf.mxu0
  %v1025 = vadd.f32 %v998, %v1024
  %1026 = vmatmul.f32.gmra.mxu0 %v1005
  %v1027 = vpop.f32.mrf.mxu0
  %v1028 = vadd.f32 %v998, %v1027
  %1029 = vdwg.mxu0
  %v1030 = vadd.f32 %v1025, %v931
  %v1031 = vadd.f32 %v1028, %v932
  %v1032 = vld [vmem:[%s14] sm:$0x1]
  %v1033 = vld [vmem:[%s15] sm:$0x1]
  %v1034 = vsel %vm66, %v1030, 0.0
  %1035 = vadd.xlane.f32.xlu0 %v1034
  %v1036 = vpop.xlane.xlu0 %1035
  %v1037 = vsel %vm66, %v1031, 0.0
  %1038 = vadd.xlane.f32.xlu0 %v1037
  %v1039 = vpop.xlane.xlu0 %1038
  %v1040 = vmul.f32 %v1036, %v79
  %v1041 = vmul.f32 %v1039, %v79
  %v1042 = vsub.f32 %v1030, %v1040
  %v1043 = vsub.f32 %v1031, %v1041
  %v1044 = vmul.f32 %v1042, %v1042
  %v1045 = vmul.f32 %v1043, %v1043
  %v1046 = vsel %vm66, %v1044, 0.0
  %1047 = vadd.xlane.f32.xlu0 %v1046
  %v1048 = vpop.xlane.xlu0 %1047
  %v1049 = vsel %vm66, %v1045, 0.0
  %1050 = vadd.xlane.f32.xlu0 %v1049
  %v1051 = vpop.xlane.xlu0 %1050
  %v1052 = vmul.f32 %v1048, %v79
  %v1053 = vmul.f32 %v1051, %v79
  %v1054 = vadd.f32 %v1052, 1e-12
  %v1055 = vadd.f32 %v1053, 1e-12
  %v1056 = vrsqrt.pop %v1054
  %v1057 = vmul.f32 %v1056, %v1054
  %v1058 = vmul.f32 %v1057, %v1056
  %v1059 = vmul.f32 0.5, %v1058
  %v1060 = vsub.f32 1.5, %v1059
  %v1061 = vmul.f32 %v1056, %v1060
  %vm1062 = vweird.f32 %v1054
  %vm1063 = vweird.f32 %v1056
  %vm1064 = vmor %vm1062, %vm1063
  %v1065 = vsel %vm1064, %v1056, %v1061
  %v1066 = vrsqrt.pop %v1055
  %v1067 = vmul.f32 %v1066, %v1055
  %v1068 = vmul.f32 %v1067, %v1066
  %v1069 = vmul.f32 0.5, %v1068
  %v1070 = vsub.f32 1.5, %v1069
  %v1071 = vmul.f32 %v1066, %v1070
  %vm1072 = vweird.f32 %v1055
  %vm1073 = vweird.f32 %v1066
  %vm1074 = vmor %vm1072, %vm1073
  %v1075 = vsel %vm1074, %v1066, %v1071
  %v1076 = vmul.f32 %v1042, %v1065
  %v1077 = vmul.f32 %v1043, %v1075
  %v1079 = vperm.slane %v1032, 0
  %v1081 = vmul.f32 %v1076, %v1079
  %v1082 = vmul.f32 %v1077, %v1079
  %v1084 = vperm.slane %v1033, 0
  %v1086 = vadd.f32 %v1081, %v1084
  %v1087 = vadd.f32 %v1082, %v1084
  %s1088 = scalar_lea.vmem %s4, 32
  %v1089 = vld [vmem:[%s1088] sm:$0xff]
  %v1090 = vld [vmem:[%s1088 + $0x8] sm:$0xff]
  %v1091 = vld [vmem:[%s1088 + $0x10] sm:$0xff]
  %v1092 = vld [vmem:[%s1088 + $0x18] sm:$0xff]
  %s1093 = scalar_lea.vmem %s5, 1
  %v1094 = vld [vmem:[%s1093] sm:$0x1]
  %v1096 = vperm.slane %v1094, 0
  %v1099 = vsel %vm66, %v1086, 0
  %v1102 = vsel %vm66, %v1087, 0
  %1104 = vmatpush.msra.mxu0 0.0
  %1105 = vmatpush.msra.mxu0 0.0
  %1106 = vmatpush.msra.mxu0 0.0
  %1107 = vmatpush.msra.mxu0 0.0
  %1108 = vmatpush.msra.mxu0 0.0
  %1109 = vmatpush.msra.mxu0 0.0
  %1110 = vmatpush.msra.mxu0 0.0
  %1111 = vmatpush.msra.mxu0 0.0
  %1112 = vmatpush.msra.mxu0 0.0
  %1113 = vmatpush.msra.mxu0 0.0
  %1114 = vmatpush.msra.mxu0 0.0
  %1115 = vmatpush.msra.mxu0 0.0
  %1116 = vmatpush.msra.mxu0 %v1092
  %1117 = vmatpush.msra.mxu0 %v1091
  %1118 = vmatpush.msra.mxu0 %v1090
  %1119 = vmatpush.msra.mxu0 %v1089
  %1120 = vmatmul.f32.gmra.mxu0 %v1099
  %v1121 = vpop.f32.mrf.mxu0
  %v1122 = vadd.f32 %v1096, %v1121
  %1123 = vmatmul.f32.gmra.mxu0 %v1102
  %v1124 = vpop.f32.mrf.mxu0
  %v1125 = vadd.f32 %v1096, %v1124
  %1126 = vdwg.mxu0
  %1128 = vrot.lane.b32.xlu0 %v1122, 96
  %v1129 = vpop.permute.xlu0 %1128
  %v1130 = vsel %vm168, %v1122, 0
  %v1132 = vsel %vm168, %v1129, 0
  %1134 = vmatpush.xpose.msra.mxu0 0.0
  %1135 = vmatpush.xpose.msra.mxu0 0.0
  %1136 = vmatpush.xpose.msra.mxu0 0.0
  %1137 = vmatpush.xpose.msra.mxu0 0.0
  %1138 = vmatpush.xpose.msra.mxu0 0.0
  %1139 = vmatpush.xpose.msra.mxu0 0.0
  %1140 = vmatpush.xpose.msra.mxu0 0.0
  %1141 = vmatpush.xpose.msra.mxu0 0.0
  %1142 = vmatpush.xpose.msra.mxu0 0.0
  %1143 = vmatpush.xpose.msra.mxu0 0.0
  %1144 = vmatpush.xpose.msra.mxu0 0.0
  %1145 = vmatpush.xpose.msra.mxu0 0.0
  %1146 = vmatpush.xpose.msra.mxu0 0.0
  %1147 = vmatpush.xpose.msra.mxu0 0.0
  %1148 = vmatpush.xpose.msra.mxu0 0.0
  %1149 = vmatpush.xpose.msra.mxu0 %v1132
  %1150 = vmatmul.f32.gmra.mxu0 %v1130
  %v1151 = vpop.f32.mrf.mxu0
  %v1152 = vadd.f32 0.0, %v1151
  %1153 = vdwg.mxu0
  %v1154 = vmul.f32 %v1152, 0.35355338
  %v1155 = vadd.f32 %v1154, %v194
  %v1156 = vsel %vm168, %v1155, -inf
  %1157 = vmax.xlane.f32.xlu0 %v1156
  %v1158 = vpop.xlane.xlu0 %1157
  %v1159 = vsub.f32 %v1155, %v1158
  %v1160 = vmul.f32 %v1159, 1.442695
  %v1161 = vpow.pop %v1160
  %v1162 = vsel %vm168, %v1161, 0.0
  %1163 = vadd.xlane.f32.xlu0 %v1162
  %v1164 = vpop.xlane.xlu0 %1163
  %v1165 = vrcp.pop %v1164
  %v1166 = vmul.f32 %v1164, %v1165
  %v1167 = vsub.f32 1.0, %v1166
  %v1168 = vmul.f32 %v1165, %v1167
  %v1169 = vadd.f32 %v1165, %v1168
  %vm1170 = vweird.f32 %v1164
  %vm1171 = vweird.f32 %v1165
  %vm1172 = vmor %vm1170, %vm1171
  %v1173 = vsel %vm1172, %v1165, %v1169
  %v1174 = vand.u32 2147483647, %v1164
  %vm1175 = vcmp.eq.f32.partialorder %v1174, 8.507059e+37
  %v1176 = vand.u32 %v1164, 2147483648
  %v1177 = vor.u32 1.1754944e-38, %v1176
  %v1178 = vsel %vm1175, %v1177, %v1173
  %v1179 = vmul.f32 %v1161, %v1178
  %1180 = vrot.lane.b32.xlu0 %v1122, 64
  %v1181 = vpop.permute.xlu0 %1180
  %v1184 = vsel %vm168, %v1179, 0
  %1186 = vmatpush.msra.mxu0 0.0
  %1187 = vmatpush.msra.mxu0 0.0
  %1188 = vmatpush.msra.mxu0 0.0
  %1189 = vmatpush.msra.mxu0 0.0
  %1190 = vmatpush.msra.mxu0 0.0
  %1191 = vmatpush.msra.mxu0 0.0
  %1192 = vmatpush.msra.mxu0 0.0
  %1193 = vmatpush.msra.mxu0 0.0
  %1194 = vmatpush.msra.mxu0 0.0
  %1195 = vmatpush.msra.mxu0 0.0
  %1196 = vmatpush.msra.mxu0 0.0
  %1197 = vmatpush.msra.mxu0 0.0
  %1198 = vmatpush.msra.mxu0 0.0
  %1199 = vmatpush.msra.mxu0 0.0
  %1200 = vmatpush.msra.mxu0 0.0
  %1201 = vmatpush.msra.mxu0 %v1181
  %1202 = vmatmul.f32.gmra.mxu0 %v1184
  %v1203 = vpop.f32.mrf.mxu0
  %v1204 = vadd.f32 0.0, %v1203
  %1205 = vdwg.mxu0
  %1206 = vrot.lane.b32.xlu0 %v1122, 120
  %v1207 = vpop.permute.xlu0 %1206
  %1208 = vrot.lane.b32.xlu0 %v1122, 88
  %v1209 = vpop.permute.xlu0 %1208
  %v1210 = vsel %vm168, %v1207, 0
  %v1212 = vsel %vm168, %v1209, 0
  %1214 = vmatpush.xpose.msra.mxu0 0.0
  %1215 = vmatpush.xpose.msra.mxu0 0.0
  %1216 = vmatpush.xpose.msra.mxu0 0.0
  %1217 = vmatpush.xpose.msra.mxu0 0.0
  %1218 = vmatpush.xpose.msra.mxu0 0.0
  %1219 = vmatpush.xpose.msra.mxu0 0.0
  %1220 = vmatpush.xpose.msra.mxu0 0.0
  %1221 = vmatpush.xpose.msra.mxu0 0.0
  %1222 = vmatpush.xpose.msra.mxu0 0.0
  %1223 = vmatpush.xpose.msra.mxu0 0.0
  %1224 = vmatpush.xpose.msra.mxu0 0.0
  %1225 = vmatpush.xpose.msra.mxu0 0.0
  %1226 = vmatpush.xpose.msra.mxu0 0.0
  %1227 = vmatpush.xpose.msra.mxu0 0.0
  %1228 = vmatpush.xpose.msra.mxu0 0.0
  %1229 = vmatpush.xpose.msra.mxu0 %v1212
  %1230 = vmatmul.f32.gmra.mxu0 %v1210
  %v1231 = vpop.f32.mrf.mxu0
  %v1232 = vadd.f32 0.0, %v1231
  %1233 = vdwg.mxu0
  %v1234 = vmul.f32 %v1232, 0.35355338
  %v1235 = vadd.f32 %v1234, %v194
  %v1236 = vsel %vm168, %v1235, -inf
  %1237 = vmax.xlane.f32.xlu0 %v1236
  %v1238 = vpop.xlane.xlu0 %1237
  %v1239 = vsub.f32 %v1235, %v1238
  %v1240 = vmul.f32 %v1239, 1.442695
  %v1241 = vpow.pop %v1240
  %v1242 = vsel %vm168, %v1241, 0.0
  %1243 = vadd.xlane.f32.xlu0 %v1242
  %v1244 = vpop.xlane.xlu0 %1243
  %v1245 = vrcp.pop %v1244
  %v1246 = vmul.f32 %v1244, %v1245
  %v1247 = vsub.f32 1.0, %v1246
  %v1248 = vmul.f32 %v1245, %v1247
  %v1249 = vadd.f32 %v1245, %v1248
  %vm1250 = vweird.f32 %v1244
  %vm1251 = vweird.f32 %v1245
  %vm1252 = vmor %vm1250, %vm1251
  %v1253 = vsel %vm1252, %v1245, %v1249
  %v1254 = vand.u32 2147483647, %v1244
  %vm1255 = vcmp.eq.f32.partialorder %v1254, 8.507059e+37
  %v1256 = vand.u32 %v1244, 2147483648
  %v1257 = vor.u32 1.1754944e-38, %v1256
  %v1258 = vsel %vm1255, %v1257, %v1253
  %v1259 = vmul.f32 %v1241, %v1258
  %1260 = vrot.lane.b32.xlu0 %v1122, 56
  %v1261 = vpop.permute.xlu0 %1260
  %v1264 = vsel %vm168, %v1259, 0
  %1266 = vmatpush.msra.mxu0 0.0
  %1267 = vmatpush.msra.mxu0 0.0
  %1268 = vmatpush.msra.mxu0 0.0
  %1269 = vmatpush.msra.mxu0 0.0
  %1270 = vmatpush.msra.mxu0 0.0
  %1271 = vmatpush.msra.mxu0 0.0
  %1272 = vmatpush.msra.mxu0 0.0
  %1273 = vmatpush.msra.mxu0 0.0
  %1274 = vmatpush.msra.mxu0 0.0
  %1275 = vmatpush.msra.mxu0 0.0
  %1276 = vmatpush.msra.mxu0 0.0
  %1277 = vmatpush.msra.mxu0 0.0
  %1278 = vmatpush.msra.mxu0 0.0
  %1279 = vmatpush.msra.mxu0 0.0
  %1280 = vmatpush.msra.mxu0 0.0
  %1281 = vmatpush.msra.mxu0 %v1261
  %1282 = vmatmul.f32.gmra.mxu0 %v1264
  %v1283 = vpop.f32.mrf.mxu0
  %v1284 = vadd.f32 0.0, %v1283
  %1285 = vdwg.mxu0
  %1286 = vrot.lane.b32.xlu0 %v1122, 112
  %v1287 = vpop.permute.xlu0 %1286
  %1288 = vrot.lane.b32.xlu0 %v1122, 80
  %v1289 = vpop.permute.xlu0 %1288
  %v1290 = vsel %vm168, %v1287, 0
  %v1292 = vsel %vm168, %v1289, 0
  %1294 = vmatpush.xpose.msra.mxu0 0.0
  %1295 = vmatpush.xpose.msra.mxu0 0.0
  %1296 = vmatpush.xpose.msra.mxu0 0.0
  %1297 = vmatpush.xpose.msra.mxu0 0.0
  %1298 = vmatpush.xpose.msra.mxu0 0.0
  %1299 = vmatpush.xpose.msra.mxu0 0.0
  %1300 = vmatpush.xpose.msra.mxu0 0.0
  %1301 = vmatpush.xpose.msra.mxu0 0.0
  %1302 = vmatpush.xpose.msra.mxu0 0.0
  %1303 = vmatpush.xpose.msra.mxu0 0.0
  %1304 = vmatpush.xpose.msra.mxu0 0.0
  %1305 = vmatpush.xpose.msra.mxu0 0.0
  %1306 = vmatpush.xpose.msra.mxu0 0.0
  %1307 = vmatpush.xpose.msra.mxu0 0.0
  %1308 = vmatpush.xpose.msra.mxu0 0.0
  %1309 = vmatpush.xpose.msra.mxu0 %v1292
  %1310 = vmatmul.f32.gmra.mxu0 %v1290
  %v1311 = vpop.f32.mrf.mxu0
  %v1312 = vadd.f32 0.0, %v1311
  %1313 = vdwg.mxu0
  %v1314 = vmul.f32 %v1312, 0.35355338
  %v1315 = vadd.f32 %v1314, %v194
  %v1316 = vsel %vm168, %v1315, -inf
  %1317 = vmax.xlane.f32.xlu0 %v1316
  %v1318 = vpop.xlane.xlu0 %1317
  %v1319 = vsub.f32 %v1315, %v1318
  %v1320 = vmul.f32 %v1319, 1.442695
  %v1321 = vpow.pop %v1320
  %v1322 = vsel %vm168, %v1321, 0.0
  %1323 = vadd.xlane.f32.xlu0 %v1322
  %v1324 = vpop.xlane.xlu0 %1323
  %v1325 = vrcp.pop %v1324
  %v1326 = vmul.f32 %v1324, %v1325
  %v1327 = vsub.f32 1.0, %v1326
  %v1328 = vmul.f32 %v1325, %v1327
  %v1329 = vadd.f32 %v1325, %v1328
  %vm1330 = vweird.f32 %v1324
  %vm1331 = vweird.f32 %v1325
  %vm1332 = vmor %vm1330, %vm1331
  %v1333 = vsel %vm1332, %v1325, %v1329
  %v1334 = vand.u32 2147483647, %v1324
  %vm1335 = vcmp.eq.f32.partialorder %v1334, 8.507059e+37
  %v1336 = vand.u32 %v1324, 2147483648
  %v1337 = vor.u32 1.1754944e-38, %v1336
  %v1338 = vsel %vm1335, %v1337, %v1333
  %v1339 = vmul.f32 %v1321, %v1338
  %1340 = vrot.lane.b32.xlu0 %v1122, 48
  %v1341 = vpop.permute.xlu0 %1340
  %v1344 = vsel %vm168, %v1339, 0
  %1346 = vmatpush.msra.mxu0 0.0
  %1347 = vmatpush.msra.mxu0 0.0
  %1348 = vmatpush.msra.mxu0 0.0
  %1349 = vmatpush.msra.mxu0 0.0
  %1350 = vmatpush.msra.mxu0 0.0
  %1351 = vmatpush.msra.mxu0 0.0
  %1352 = vmatpush.msra.mxu0 0.0
  %1353 = vmatpush.msra.mxu0 0.0
  %1354 = vmatpush.msra.mxu0 0.0
  %1355 = vmatpush.msra.mxu0 0.0
  %1356 = vmatpush.msra.mxu0 0.0
  %1357 = vmatpush.msra.mxu0 0.0
  %1358 = vmatpush.msra.mxu0 0.0
  %1359 = vmatpush.msra.mxu0 0.0
  %1360 = vmatpush.msra.mxu0 0.0
  %1361 = vmatpush.msra.mxu0 %v1341
  %1362 = vmatmul.f32.gmra.mxu0 %v1344
  %v1363 = vpop.f32.mrf.mxu0
  %v1364 = vadd.f32 0.0, %v1363
  %1365 = vdwg.mxu0
  %1366 = vrot.lane.b32.xlu0 %v1122, 104
  %v1367 = vpop.permute.xlu0 %1366
  %1368 = vrot.lane.b32.xlu0 %v1122, 72
  %v1369 = vpop.permute.xlu0 %1368
  %v1370 = vsel %vm168, %v1367, 0
  %v1372 = vsel %vm168, %v1369, 0
  %1374 = vmatpush.xpose.msra.mxu0 0.0
  %1375 = vmatpush.xpose.msra.mxu0 0.0
  %1376 = vmatpush.xpose.msra.mxu0 0.0
  %1377 = vmatpush.xpose.msra.mxu0 0.0
  %1378 = vmatpush.xpose.msra.mxu0 0.0
  %1379 = vmatpush.xpose.msra.mxu0 0.0
  %1380 = vmatpush.xpose.msra.mxu0 0.0
  %1381 = vmatpush.xpose.msra.mxu0 0.0
  %1382 = vmatpush.xpose.msra.mxu0 0.0
  %1383 = vmatpush.xpose.msra.mxu0 0.0
  %1384 = vmatpush.xpose.msra.mxu0 0.0
  %1385 = vmatpush.xpose.msra.mxu0 0.0
  %1386 = vmatpush.xpose.msra.mxu0 0.0
  %1387 = vmatpush.xpose.msra.mxu0 0.0
  %1388 = vmatpush.xpose.msra.mxu0 0.0
  %1389 = vmatpush.xpose.msra.mxu0 %v1372
  %1390 = vmatmul.f32.gmra.mxu0 %v1370
  %v1391 = vpop.f32.mrf.mxu0
  %v1392 = vadd.f32 0.0, %v1391
  %1393 = vdwg.mxu0
  %v1394 = vmul.f32 %v1392, 0.35355338
  %v1395 = vadd.f32 %v1394, %v194
  %v1396 = vsel %vm168, %v1395, -inf
  %1397 = vmax.xlane.f32.xlu0 %v1396
  %v1398 = vpop.xlane.xlu0 %1397
  %v1399 = vsub.f32 %v1395, %v1398
  %v1400 = vmul.f32 %v1399, 1.442695
  %v1401 = vpow.pop %v1400
  %v1402 = vsel %vm168, %v1401, 0.0
  %1403 = vadd.xlane.f32.xlu0 %v1402
  %v1404 = vpop.xlane.xlu0 %1403
  %v1405 = vrcp.pop %v1404
  %v1406 = vmul.f32 %v1404, %v1405
  %v1407 = vsub.f32 1.0, %v1406
  %v1408 = vmul.f32 %v1405, %v1407
  %v1409 = vadd.f32 %v1405, %v1408
  %vm1410 = vweird.f32 %v1404
  %vm1411 = vweird.f32 %v1405
  %vm1412 = vmor %vm1410, %vm1411
  %v1413 = vsel %vm1412, %v1405, %v1409
  %v1414 = vand.u32 2147483647, %v1404
  %vm1415 = vcmp.eq.f32.partialorder %v1414, 8.507059e+37
  %v1416 = vand.u32 %v1404, 2147483648
  %v1417 = vor.u32 1.1754944e-38, %v1416
  %v1418 = vsel %vm1415, %v1417, %v1413
  %v1419 = vmul.f32 %v1401, %v1418
  %1420 = vrot.lane.b32.xlu0 %v1122, 40
  %v1421 = vpop.permute.xlu0 %1420
  %v1424 = vsel %vm168, %v1419, 0
  %1426 = vmatpush.msra.mxu0 0.0
  %1427 = vmatpush.msra.mxu0 0.0
  %1428 = vmatpush.msra.mxu0 0.0
  %1429 = vmatpush.msra.mxu0 0.0
  %1430 = vmatpush.msra.mxu0 0.0
  %1431 = vmatpush.msra.mxu0 0.0
  %1432 = vmatpush.msra.mxu0 0.0
  %1433 = vmatpush.msra.mxu0 0.0
  %1434 = vmatpush.msra.mxu0 0.0
  %1435 = vmatpush.msra.mxu0 0.0
  %1436 = vmatpush.msra.mxu0 0.0
  %1437 = vmatpush.msra.mxu0 0.0
  %1438 = vmatpush.msra.mxu0 0.0
  %1439 = vmatpush.msra.mxu0 0.0
  %1440 = vmatpush.msra.mxu0 0.0
  %1441 = vmatpush.msra.mxu0 %v1421
  %1442 = vmatmul.f32.gmra.mxu0 %v1424
  %v1443 = vpop.f32.mrf.mxu0
  %v1444 = vadd.f32 0.0, %v1443
  %1445 = vdwg.mxu0
  %1447 = vrot.lane.b32.xlu0 %v1284, 8
  %v1448 = vpop.permute.xlu0 %1447
  %1451 = vrot.lane.b32.xlu0 %v1364, 16
  %v1452 = vpop.permute.xlu0 %1451
  %1455 = vrot.lane.b32.xlu0 %v1444, 24
  %v1456 = vpop.permute.xlu0 %1455
  %v1458 = vsel %vm168, %v1204, %v1448
  %v1459 = vsel %vm499, %v1458, %v1452
  %v1460 = vsel %vm501, %v1459, %v1456
  %1462 = vrot.lane.b32.xlu0 %v1125, 96
  %v1463 = vpop.permute.xlu0 %1462
  %v1464 = vsel %vm168, %v1125, 0
  %v1466 = vsel %vm168, %v1463, 0
  %1468 = vmatpush.xpose.msra.mxu0 0.0
  %1469 = vmatpush.xpose.msra.mxu0 0.0
  %1470 = vmatpush.xpose.msra.mxu0 0.0
  %1471 = vmatpush.xpose.msra.mxu0 0.0
  %1472 = vmatpush.xpose.msra.mxu0 0.0
  %1473 = vmatpush.xpose.msra.mxu0 0.0
  %1474 = vmatpush.xpose.msra.mxu0 0.0
  %1475 = vmatpush.xpose.msra.mxu0 0.0
  %1476 = vmatpush.xpose.msra.mxu0 0.0
  %1477 = vmatpush.xpose.msra.mxu0 0.0
  %1478 = vmatpush.xpose.msra.mxu0 0.0
  %1479 = vmatpush.xpose.msra.mxu0 0.0
  %1480 = vmatpush.xpose.msra.mxu0 0.0
  %1481 = vmatpush.xpose.msra.mxu0 0.0
  %1482 = vmatpush.xpose.msra.mxu0 0.0
  %1483 = vmatpush.xpose.msra.mxu0 %v1466
  %1484 = vmatmul.f32.gmra.mxu0 %v1464
  %v1485 = vpop.f32.mrf.mxu0
  %v1486 = vadd.f32 0.0, %v1485
  %1487 = vdwg.mxu0
  %v1488 = vmul.f32 %v1486, 0.35355338
  %v1489 = vadd.f32 %v1488, %v531
  %v1490 = vsel %vm168, %v1489, -inf
  %1491 = vmax.xlane.f32.xlu0 %v1490
  %v1492 = vpop.xlane.xlu0 %1491
  %v1493 = vsub.f32 %v1489, %v1492
  %v1494 = vmul.f32 %v1493, 1.442695
  %v1495 = vpow.pop %v1494
  %v1496 = vsel %vm168, %v1495, 0.0
  %1497 = vadd.xlane.f32.xlu0 %v1496
  %v1498 = vpop.xlane.xlu0 %1497
  %v1499 = vrcp.pop %v1498
  %v1500 = vmul.f32 %v1498, %v1499
  %v1501 = vsub.f32 1.0, %v1500
  %v1502 = vmul.f32 %v1499, %v1501
  %v1503 = vadd.f32 %v1499, %v1502
  %vm1504 = vweird.f32 %v1498
  %vm1505 = vweird.f32 %v1499
  %vm1506 = vmor %vm1504, %vm1505
  %v1507 = vsel %vm1506, %v1499, %v1503
  %v1508 = vand.u32 2147483647, %v1498
  %vm1509 = vcmp.eq.f32.partialorder %v1508, 8.507059e+37
  %v1510 = vand.u32 %v1498, 2147483648
  %v1511 = vor.u32 1.1754944e-38, %v1510
  %v1512 = vsel %vm1509, %v1511, %v1507
  %v1513 = vmul.f32 %v1495, %v1512
  %1514 = vrot.lane.b32.xlu0 %v1125, 64
  %v1515 = vpop.permute.xlu0 %1514
  %v1518 = vsel %vm168, %v1513, 0
  %1520 = vmatpush.msra.mxu0 0.0
  %1521 = vmatpush.msra.mxu0 0.0
  %1522 = vmatpush.msra.mxu0 0.0
  %1523 = vmatpush.msra.mxu0 0.0
  %1524 = vmatpush.msra.mxu0 0.0
  %1525 = vmatpush.msra.mxu0 0.0
  %1526 = vmatpush.msra.mxu0 0.0
  %1527 = vmatpush.msra.mxu0 0.0
  %1528 = vmatpush.msra.mxu0 0.0
  %1529 = vmatpush.msra.mxu0 0.0
  %1530 = vmatpush.msra.mxu0 0.0
  %1531 = vmatpush.msra.mxu0 0.0
  %1532 = vmatpush.msra.mxu0 0.0
  %1533 = vmatpush.msra.mxu0 0.0
  %1534 = vmatpush.msra.mxu0 0.0
  %1535 = vmatpush.msra.mxu0 %v1515
  %1536 = vmatmul.f32.gmra.mxu0 %v1518
  %v1537 = vpop.f32.mrf.mxu0
  %v1538 = vadd.f32 0.0, %v1537
  %1539 = vdwg.mxu0
  %1540 = vrot.lane.b32.xlu0 %v1125, 120
  %v1541 = vpop.permute.xlu0 %1540
  %1542 = vrot.lane.b32.xlu0 %v1125, 88
  %v1543 = vpop.permute.xlu0 %1542
  %v1544 = vsel %vm168, %v1541, 0
  %v1546 = vsel %vm168, %v1543, 0
  %1548 = vmatpush.xpose.msra.mxu0 0.0
  %1549 = vmatpush.xpose.msra.mxu0 0.0
  %1550 = vmatpush.xpose.msra.mxu0 0.0
  %1551 = vmatpush.xpose.msra.mxu0 0.0
  %1552 = vmatpush.xpose.msra.mxu0 0.0
  %1553 = vmatpush.xpose.msra.mxu0 0.0
  %1554 = vmatpush.xpose.msra.mxu0 0.0
  %1555 = vmatpush.xpose.msra.mxu0 0.0
  %1556 = vmatpush.xpose.msra.mxu0 0.0
  %1557 = vmatpush.xpose.msra.mxu0 0.0
  %1558 = vmatpush.xpose.msra.mxu0 0.0
  %1559 = vmatpush.xpose.msra.mxu0 0.0
  %1560 = vmatpush.xpose.msra.mxu0 0.0
  %1561 = vmatpush.xpose.msra.mxu0 0.0
  %1562 = vmatpush.xpose.msra.mxu0 0.0
  %1563 = vmatpush.xpose.msra.mxu0 %v1546
  %1564 = vmatmul.f32.gmra.mxu0 %v1544
  %v1565 = vpop.f32.mrf.mxu0
  %v1566 = vadd.f32 0.0, %v1565
  %1567 = vdwg.mxu0
  %v1568 = vmul.f32 %v1566, 0.35355338
  %v1569 = vadd.f32 %v1568, %v531
  %v1570 = vsel %vm168, %v1569, -inf
  %1571 = vmax.xlane.f32.xlu0 %v1570
  %v1572 = vpop.xlane.xlu0 %1571
  %v1573 = vsub.f32 %v1569, %v1572
  %v1574 = vmul.f32 %v1573, 1.442695
  %v1575 = vpow.pop %v1574
  %v1576 = vsel %vm168, %v1575, 0.0
  %1577 = vadd.xlane.f32.xlu0 %v1576
  %v1578 = vpop.xlane.xlu0 %1577
  %v1579 = vrcp.pop %v1578
  %v1580 = vmul.f32 %v1578, %v1579
  %v1581 = vsub.f32 1.0, %v1580
  %v1582 = vmul.f32 %v1579, %v1581
  %v1583 = vadd.f32 %v1579, %v1582
  %vm1584 = vweird.f32 %v1578
  %vm1585 = vweird.f32 %v1579
  %vm1586 = vmor %vm1584, %vm1585
  %v1587 = vsel %vm1586, %v1579, %v1583
  %v1588 = vand.u32 2147483647, %v1578
  %vm1589 = vcmp.eq.f32.partialorder %v1588, 8.507059e+37
  %v1590 = vand.u32 %v1578, 2147483648
  %v1591 = vor.u32 1.1754944e-38, %v1590
  %v1592 = vsel %vm1589, %v1591, %v1587
  %v1593 = vmul.f32 %v1575, %v1592
  %1594 = vrot.lane.b32.xlu0 %v1125, 56
  %v1595 = vpop.permute.xlu0 %1594
  %v1598 = vsel %vm168, %v1593, 0
  %1600 = vmatpush.msra.mxu0 0.0
  %1601 = vmatpush.msra.mxu0 0.0
  %1602 = vmatpush.msra.mxu0 0.0
  %1603 = vmatpush.msra.mxu0 0.0
  %1604 = vmatpush.msra.mxu0 0.0
  %1605 = vmatpush.msra.mxu0 0.0
  %1606 = vmatpush.msra.mxu0 0.0
  %1607 = vmatpush.msra.mxu0 0.0
  %1608 = vmatpush.msra.mxu0 0.0
  %1609 = vmatpush.msra.mxu0 0.0
  %1610 = vmatpush.msra.mxu0 0.0
  %1611 = vmatpush.msra.mxu0 0.0
  %1612 = vmatpush.msra.mxu0 0.0
  %1613 = vmatpush.msra.mxu0 0.0
  %1614 = vmatpush.msra.mxu0 0.0
  %1615 = vmatpush.msra.mxu0 %v1595
  %1616 = vmatmul.f32.gmra.mxu0 %v1598
  %v1617 = vpop.f32.mrf.mxu0
  %v1618 = vadd.f32 0.0, %v1617
  %1619 = vdwg.mxu0
  %1620 = vrot.lane.b32.xlu0 %v1125, 112
  %v1621 = vpop.permute.xlu0 %1620
  %1622 = vrot.lane.b32.xlu0 %v1125, 80
  %v1623 = vpop.permute.xlu0 %1622
  %v1624 = vsel %vm168, %v1621, 0
  %v1626 = vsel %vm168, %v1623, 0
  %1628 = vmatpush.xpose.msra.mxu0 0.0
  %1629 = vmatpush.xpose.msra.mxu0 0.0
  %1630 = vmatpush.xpose.msra.mxu0 0.0
  %1631 = vmatpush.xpose.msra.mxu0 0.0
  %1632 = vmatpush.xpose.msra.mxu0 0.0
  %1633 = vmatpush.xpose.msra.mxu0 0.0
  %1634 = vmatpush.xpose.msra.mxu0 0.0
  %1635 = vmatpush.xpose.msra.mxu0 0.0
  %1636 = vmatpush.xpose.msra.mxu0 0.0
  %1637 = vmatpush.xpose.msra.mxu0 0.0
  %1638 = vmatpush.xpose.msra.mxu0 0.0
  %1639 = vmatpush.xpose.msra.mxu0 0.0
  %1640 = vmatpush.xpose.msra.mxu0 0.0
  %1641 = vmatpush.xpose.msra.mxu0 0.0
  %1642 = vmatpush.xpose.msra.mxu0 0.0
  %1643 = vmatpush.xpose.msra.mxu0 %v1626
  %1644 = vmatmul.f32.gmra.mxu0 %v1624
  %v1645 = vpop.f32.mrf.mxu0
  %v1646 = vadd.f32 0.0, %v1645
  %1647 = vdwg.mxu0
  %v1648 = vmul.f32 %v1646, 0.35355338
  %v1649 = vadd.f32 %v1648, %v531
  %v1650 = vsel %vm168, %v1649, -inf
  %1651 = vmax.xlane.f32.xlu0 %v1650
  %v1652 = vpop.xlane.xlu0 %1651
  %v1653 = vsub.f32 %v1649, %v1652
  %v1654 = vmul.f32 %v1653, 1.442695
  %v1655 = vpow.pop %v1654
  %v1656 = vsel %vm168, %v1655, 0.0
  %1657 = vadd.xlane.f32.xlu0 %v1656
  %v1658 = vpop.xlane.xlu0 %1657
  %v1659 = vrcp.pop %v1658
  %v1660 = vmul.f32 %v1658, %v1659
  %v1661 = vsub.f32 1.0, %v1660
  %v1662 = vmul.f32 %v1659, %v1661
  %v1663 = vadd.f32 %v1659, %v1662
  %vm1664 = vweird.f32 %v1658
  %vm1665 = vweird.f32 %v1659
  %vm1666 = vmor %vm1664, %vm1665
  %v1667 = vsel %vm1666, %v1659, %v1663
  %v1668 = vand.u32 2147483647, %v1658
  %vm1669 = vcmp.eq.f32.partialorder %v1668, 8.507059e+37
  %v1670 = vand.u32 %v1658, 2147483648
  %v1671 = vor.u32 1.1754944e-38, %v1670
  %v1672 = vsel %vm1669, %v1671, %v1667
  %v1673 = vmul.f32 %v1655, %v1672
  %1674 = vrot.lane.b32.xlu0 %v1125, 48
  %v1675 = vpop.permute.xlu0 %1674
  %v1678 = vsel %vm168, %v1673, 0
  %1680 = vmatpush.msra.mxu0 0.0
  %1681 = vmatpush.msra.mxu0 0.0
  %1682 = vmatpush.msra.mxu0 0.0
  %1683 = vmatpush.msra.mxu0 0.0
  %1684 = vmatpush.msra.mxu0 0.0
  %1685 = vmatpush.msra.mxu0 0.0
  %1686 = vmatpush.msra.mxu0 0.0
  %1687 = vmatpush.msra.mxu0 0.0
  %1688 = vmatpush.msra.mxu0 0.0
  %1689 = vmatpush.msra.mxu0 0.0
  %1690 = vmatpush.msra.mxu0 0.0
  %1691 = vmatpush.msra.mxu0 0.0
  %1692 = vmatpush.msra.mxu0 0.0
  %1693 = vmatpush.msra.mxu0 0.0
  %1694 = vmatpush.msra.mxu0 0.0
  %1695 = vmatpush.msra.mxu0 %v1675
  %1696 = vmatmul.f32.gmra.mxu0 %v1678
  %v1697 = vpop.f32.mrf.mxu0
  %v1698 = vadd.f32 0.0, %v1697
  %1699 = vdwg.mxu0
  %1700 = vrot.lane.b32.xlu0 %v1125, 104
  %v1701 = vpop.permute.xlu0 %1700
  %1702 = vrot.lane.b32.xlu0 %v1125, 72
  %v1703 = vpop.permute.xlu0 %1702
  %v1704 = vsel %vm168, %v1701, 0
  %v1706 = vsel %vm168, %v1703, 0
  %1708 = vmatpush.xpose.msra.mxu0 0.0
  %1709 = vmatpush.xpose.msra.mxu0 0.0
  %1710 = vmatpush.xpose.msra.mxu0 0.0
  %1711 = vmatpush.xpose.msra.mxu0 0.0
  %1712 = vmatpush.xpose.msra.mxu0 0.0
  %1713 = vmatpush.xpose.msra.mxu0 0.0
  %1714 = vmatpush.xpose.msra.mxu0 0.0
  %1715 = vmatpush.xpose.msra.mxu0 0.0
  %1716 = vmatpush.xpose.msra.mxu0 0.0
  %1717 = vmatpush.xpose.msra.mxu0 0.0
  %1718 = vmatpush.xpose.msra.mxu0 0.0
  %1719 = vmatpush.xpose.msra.mxu0 0.0
  %1720 = vmatpush.xpose.msra.mxu0 0.0
  %1721 = vmatpush.xpose.msra.mxu0 0.0
  %1722 = vmatpush.xpose.msra.mxu0 0.0
  %1723 = vmatpush.xpose.msra.mxu0 %v1706
  %1724 = vmatmul.f32.gmra.mxu0 %v1704
  %v1725 = vpop.f32.mrf.mxu0
  %v1726 = vadd.f32 0.0, %v1725
  %1727 = vdwg.mxu0
  %v1728 = vmul.f32 %v1726, 0.35355338
  %v1729 = vadd.f32 %v1728, %v531
  %v1730 = vsel %vm168, %v1729, -inf
  %1731 = vmax.xlane.f32.xlu0 %v1730
  %v1732 = vpop.xlane.xlu0 %1731
  %v1733 = vsub.f32 %v1729, %v1732
  %v1734 = vmul.f32 %v1733, 1.442695
  %v1735 = vpow.pop %v1734
  %v1736 = vsel %vm168, %v1735, 0.0
  %1737 = vadd.xlane.f32.xlu0 %v1736
  %v1738 = vpop.xlane.xlu0 %1737
  %v1739 = vrcp.pop %v1738
  %v1740 = vmul.f32 %v1738, %v1739
  %v1741 = vsub.f32 1.0, %v1740
  %v1742 = vmul.f32 %v1739, %v1741
  %v1743 = vadd.f32 %v1739, %v1742
  %vm1744 = vweird.f32 %v1738
  %vm1745 = vweird.f32 %v1739
  %vm1746 = vmor %vm1744, %vm1745
  %v1747 = vsel %vm1746, %v1739, %v1743
  %v1748 = vand.u32 2147483647, %v1738
  %vm1749 = vcmp.eq.f32.partialorder %v1748, 8.507059e+37
  %v1750 = vand.u32 %v1738, 2147483648
  %v1751 = vor.u32 1.1754944e-38, %v1750
  %v1752 = vsel %vm1749, %v1751, %v1747
  %v1753 = vmul.f32 %v1735, %v1752
  %1754 = vrot.lane.b32.xlu0 %v1125, 40
  %v1755 = vpop.permute.xlu0 %1754
  %v1758 = vsel %vm168, %v1753, 0
  %1760 = vmatpush.msra.mxu0 0.0
  %1761 = vmatpush.msra.mxu0 0.0
  %1762 = vmatpush.msra.mxu0 0.0
  %1763 = vmatpush.msra.mxu0 0.0
  %1764 = vmatpush.msra.mxu0 0.0
  %1765 = vmatpush.msra.mxu0 0.0
  %1766 = vmatpush.msra.mxu0 0.0
  %1767 = vmatpush.msra.mxu0 0.0
  %1768 = vmatpush.msra.mxu0 0.0
  %1769 = vmatpush.msra.mxu0 0.0
  %1770 = vmatpush.msra.mxu0 0.0
  %1771 = vmatpush.msra.mxu0 0.0
  %1772 = vmatpush.msra.mxu0 0.0
  %1773 = vmatpush.msra.mxu0 0.0
  %1774 = vmatpush.msra.mxu0 0.0
  %1775 = vmatpush.msra.mxu0 %v1755
  %1776 = vmatmul.f32.gmra.mxu0 %v1758
  %v1777 = vpop.f32.mrf.mxu0
  %v1778 = vadd.f32 0.0, %v1777
  %1779 = vdwg.mxu0
  %1781 = vrot.lane.b32.xlu0 %v1618, 8
  %v1782 = vpop.permute.xlu0 %1781
  %1785 = vrot.lane.b32.xlu0 %v1698, 16
  %v1786 = vpop.permute.xlu0 %1785
  %1789 = vrot.lane.b32.xlu0 %v1778, 24
  %v1790 = vpop.permute.xlu0 %1789
  %v1792 = vsel %vm168, %v1538, %v1782
  %v1793 = vsel %vm499, %v1792, %v1786
  %v1794 = vsel %vm501, %v1793, %v1790
  %s1795 = scalar_lea.vmem %s6, 32
  %v1796 = vld [vmem:[%s1795] sm:$0xff]
  %v1797 = vld [vmem:[%s1795 + $0x8] sm:$0xff]
  %v1798 = vld [vmem:[%s1795 + $0x10] sm:$0xff]
  %v1799 = vld [vmem:[%s1795 + $0x18] sm:$0xff]
  %s1800 = scalar_lea.vmem %s7, 1
  %v1801 = vld [vmem:[%s1800] sm:$0x1]
  %v1803 = vperm.slane %v1801, 0
  %v1806 = vsel %vm66, %v1460, 0
  %v1809 = vsel %vm66, %v1794, 0
  %1811 = vmatpush.msra.mxu0 0.0
  %1812 = vmatpush.msra.mxu0 0.0
  %1813 = vmatpush.msra.mxu0 0.0
  %1814 = vmatpush.msra.mxu0 0.0
  %1815 = vmatpush.msra.mxu0 0.0
  %1816 = vmatpush.msra.mxu0 0.0
  %1817 = vmatpush.msra.mxu0 0.0
  %1818 = vmatpush.msra.mxu0 0.0
  %1819 = vmatpush.msra.mxu0 0.0
  %1820 = vmatpush.msra.mxu0 0.0
  %1821 = vmatpush.msra.mxu0 0.0
  %1822 = vmatpush.msra.mxu0 0.0
  %1823 = vmatpush.msra.mxu0 %v1799
  %1824 = vmatpush.msra.mxu0 %v1798
  %1825 = vmatpush.msra.mxu0 %v1797
  %1826 = vmatpush.msra.mxu0 %v1796
  %1827 = vmatmul.f32.gmra.mxu0 %v1806
  %v1828 = vpop.f32.mrf.mxu0
  %v1829 = vadd.f32 %v1803, %v1828
  %1830 = vmatmul.f32.gmra.mxu0 %v1809
  %v1831 = vpop.f32.mrf.mxu0
  %v1832 = vadd.f32 %v1803, %v1831
  %1833 = vdwg.mxu0
  %v1834 = vadd.f32 %v1829, %v1086
  %v1835 = vadd.f32 %v1832, %v1087
  %s1836 = scalar_lea.vmem %s8, 1
  %v1837 = vld [vmem:[%s1836] sm:$0x1]
  %s1838 = scalar_lea.vmem %s9, 1
  %v1839 = vld [vmem:[%s1838] sm:$0x1]
  %v1840 = vsel %vm66, %v1834, 0.0
  %1841 = vadd.xlane.f32.xlu0 %v1840
  %v1842 = vpop.xlane.xlu0 %1841
  %v1843 = vsel %vm66, %v1835, 0.0
  %1844 = vadd.xlane.f32.xlu0 %v1843
  %v1845 = vpop.xlane.xlu0 %1844
  %v1846 = vmul.f32 %v1842, %v79
  %v1847 = vmul.f32 %v1845, %v79
  %v1848 = vsub.f32 %v1834, %v1846
  %v1849 = vsub.f32 %v1835, %v1847
  %v1850 = vmul.f32 %v1848, %v1848
  %v1851 = vmul.f32 %v1849, %v1849
  %v1852 = vsel %vm66, %v1850, 0.0
  %1853 = vadd.xlane.f32.xlu0 %v1852
  %v1854 = vpop.xlane.xlu0 %1853
  %v1855 = vsel %vm66, %v1851, 0.0
  %1856 = vadd.xlane.f32.xlu0 %v1855
  %v1857 = vpop.xlane.xlu0 %1856
  %v1858 = vmul.f32 %v1854, %v79
  %v1859 = vmul.f32 %v1857, %v79
  %v1860 = vadd.f32 %v1858, 1e-12
  %v1861 = vadd.f32 %v1859, 1e-12
  %v1862 = vrsqrt.pop %v1860
  %v1863 = vmul.f32 %v1862, %v1860
  %v1864 = vmul.f32 %v1863, %v1862
  %v1865 = vmul.f32 0.5, %v1864
  %v1866 = vsub.f32 1.5, %v1865
  %v1867 = vmul.f32 %v1862, %v1866
  %vm1868 = vweird.f32 %v1860
  %vm1869 = vweird.f32 %v1862
  %vm1870 = vmor %vm1868, %vm1869
  %v1871 = vsel %vm1870, %v1862, %v1867
  %v1872 = vrsqrt.pop %v1861
  %v1873 = vmul.f32 %v1872, %v1861
  %v1874 = vmul.f32 %v1873, %v1872
  %v1875 = vmul.f32 0.5, %v1874
  %v1876 = vsub.f32 1.5, %v1875
  %v1877 = vmul.f32 %v1872, %v1876
  %vm1878 = vweird.f32 %v1861
  %vm1879 = vweird.f32 %v1872
  %vm1880 = vmor %vm1878, %vm1879
  %v1881 = vsel %vm1880, %v1872, %v1877
  %v1882 = vmul.f32 %v1848, %v1871
  %v1883 = vmul.f32 %v1849, %v1881
  %v1885 = vperm.slane %v1837, 0
  %v1887 = vmul.f32 %v1882, %v1885
  %v1888 = vmul.f32 %v1883, %v1885
  %v1890 = vperm.slane %v1839, 0
  %v1892 = vadd.f32 %v1887, %v1890
  %v1893 = vadd.f32 %v1888, %v1890
  %s1894 = scalar_lea.vmem %s10, 32
  %v1895 = vld [vmem:[%s1894] sm:$0xff]
  %v1896 = vld [vmem:[%s1894 + $0x8] sm:$0xff]
  %v1897 = vld [vmem:[%s1894 + $0x10] sm:$0xff]
  %v1898 = vld [vmem:[%s1894 + $0x18] sm:$0xff]
  %s1899 = scalar_lea.vmem %s11, 1
  %v1900 = vld [vmem:[%s1899] sm:$0x1]
  %v1902 = vperm.slane %v1900, 0
  %v1905 = vsel %vm66, %v1892, 0
  %v1908 = vsel %vm66, %v1893, 0
  %1910 = vmatpush.msra.mxu0 0.0
  %1911 = vmatpush.msra.mxu0 0.0
  %1912 = vmatpush.msra.mxu0 0.0
  %1913 = vmatpush.msra.mxu0 0.0
  %1914 = vmatpush.msra.mxu0 0.0
  %1915 = vmatpush.msra.mxu0 0.0
  %1916 = vmatpush.msra.mxu0 0.0
  %1917 = vmatpush.msra.mxu0 0.0
  %1918 = vmatpush.msra.mxu0 0.0
  %1919 = vmatpush.msra.mxu0 0.0
  %1920 = vmatpush.msra.mxu0 0.0
  %1921 = vmatpush.msra.mxu0 0.0
  %1922 = vmatpush.msra.mxu0 %v1898
  %1923 = vmatpush.msra.mxu0 %v1897
  %1924 = vmatpush.msra.mxu0 %v1896
  %1925 = vmatpush.msra.mxu0 %v1895
  %1926 = vmatmul.f32.gmra.mxu0 %v1905
  %v1927 = vpop.f32.mrf.mxu0
  %v1928 = vadd.f32 %v1902, %v1927
  %1929 = vmatmul.f32.gmra.mxu0 %v1908
  %v1930 = vpop.f32.mrf.mxu0
  %v1931 = vadd.f32 %v1902, %v1930
  %1932 = vdwg.mxu0
  %v1933 = vmul.f32 %v1928, 0.5
  %v1934 = vmul.f32 %v1931, 0.5
  %v1935 = vmul.f32 %v1928, 0.044715
  %v1936 = vmul.f32 %v1931, 0.044715
  %v1937 = vmul.f32 %v1935, %v1928
  %v1938 = vmul.f32 %v1936, %v1931
  %v1939 = vmul.f32 %v1937, %v1928
  %v1940 = vmul.f32 %v1938, %v1931
  %v1941 = vadd.f32 %v1928, %v1939
  %v1942 = vadd.f32 %v1931, %v1940
  %v1943 = vmul.f32 %v1941, 0.7978846
  %v1944 = vmul.f32 %v1942, 0.7978846
  %v1945 = vtanh.pop %v1943
  %v1946 = vtanh.pop %v1944
  %v1947 = vadd.f32 %v1945, 1.0
  %v1948 = vadd.f32 %v1946, 1.0
  %v1949 = vmul.f32 %v1933, %v1947
  %v1950 = vmul.f32 %v1934, %v1948
  %s1951 = scalar_lea.vmem %s12, 64
  %v1952 = vld [vmem:[%s1951] sm:$0xff]
  %v1953 = vld [vmem:[%s1951 + $0x8] sm:$0xff]
  %v1954 = vld [vmem:[%s1951 + $0x10] sm:$0xff]
  %v1955 = vld [vmem:[%s1951 + $0x18] sm:$0xff]
  %v1956 = vld [vmem:[%s1951 + $0x20] sm:$0xff]
  %v1957 = vld [vmem:[%s1951 + $0x28] sm:$0xff]
  %v1958 = vld [vmem:[%s1951 + $0x30] sm:$0xff]
  %v1959 = vld [vmem:[%s1951 + $0x38] sm:$0xff]
  %s1960 = scalar_lea.vmem %s13, 1
  %v1961 = vld [vmem:[%s1960] sm:$0x1]
  %v1963 = vperm.slane %v1961, 0
  %v1966 = vsel %vm1000, %v1949, 0
  %v1969 = vsel %vm1000, %v1950, 0
  %1971 = vmatpush.msra.mxu0 0.0
  %1972 = vmatpush.msra.mxu0 0.0
  %1973 = vmatpush.msra.mxu0 0.0
  %1974 = vmatpush.msra.mxu0 0.0
  %1975 = vmatpush.msra.mxu0 0.0
  %1976 = vmatpush.msra.mxu0 0.0
  %1977 = vmatpush.msra.mxu0 0.0
  %1978 = vmatpush.msra.mxu0 0.0
  %1979 = vmatpush.msra.mxu0 %v1959
  %1980 = vmatpush.msra.mxu0 %v1958
  %1981 = vmatpush.msra.mxu0 %v1957
  %1982 = vmatpush.msra.mxu0 %v1956
  %1983 = vmatpush.msra.mxu0 %v1955
  %1984 = vmatpush.msra.mxu0 %v1954
  %1985 = vmatpush.msra.mxu0 %v1953
  %1986 = vmatpush.msra.mxu0 %v1952
  %1987 = vmatmul.f32.gmra.mxu0 %v1966
  %v1988 = vpop.f32.mrf.mxu0
  %v1989 = vadd.f32 %v1963, %v1988
  %1990 = vmatmul.f32.gmra.mxu0 %v1969
  %v1991 = vpop.f32.mrf.mxu0
  %v1992 = vadd.f32 %v1963, %v1991
  %1993 = vdwg.mxu0
  %v1994 = vadd.f32 %v1989, %v1892
  %v1995 = vadd.f32 %v1992, %v1893
  %s1996 = scalar_lea.vmem %s14, 1
  %v1997 = vld [vmem:[%s1996] sm:$0x1]
  %s1998 = scalar_lea.vmem %s15, 1
  %v1999 = vld [vmem:[%s1998] sm:$0x1]
  %v2000 = vsel %vm66, %v1994, 0.0
  %2001 = vadd.xlane.f32.xlu0 %v2000
  %v2002 = vpop.xlane.xlu0 %2001
  %v2003 = vsel %vm66, %v1995, 0.0
  %2004 = vadd.xlane.f32.xlu0 %v2003
  %v2005 = vpop.xlane.xlu0 %2004
  %v2006 = vmul.f32 %v2002, %v79
  %v2007 = vmul.f32 %v2005, %v79
  %v2008 = vsub.f32 %v1994, %v2006
  %v2009 = vsub.f32 %v1995, %v2007
  %v2010 = vmul.f32 %v2008, %v2008
  %v2011 = vmul.f32 %v2009, %v2009
  %v2012 = vsel %vm66, %v2010, 0.0
  %2013 = vadd.xlane.f32.xlu0 %v2012
  %v2014 = vpop.xlane.xlu0 %2013
  %v2015 = vsel %vm66, %v2011, 0.0
  %2016 = vadd.xlane.f32.xlu0 %v2015
  %v2017 = vpop.xlane.xlu0 %2016
  %v2018 = vmul.f32 %v2014, %v79
  %v2019 = vmul.f32 %v2017, %v79
  %v2020 = vadd.f32 %v2018, 1e-12
  %v2021 = vadd.f32 %v2019, 1e-12
  %v2022 = vrsqrt.pop %v2020
  %v2023 = vmul.f32 %v2022, %v2020
  %v2024 = vmul.f32 %v2023, %v2022
  %v2025 = vmul.f32 0.5, %v2024
  %v2026 = vsub.f32 1.5, %v2025
  %v2027 = vmul.f32 %v2022, %v2026
  %vm2028 = vweird.f32 %v2020
  %vm2029 = vweird.f32 %v2022
  %vm2030 = vmor %vm2028, %vm2029
  %v2031 = vsel %vm2030, %v2022, %v2027
  %v2032 = vrsqrt.pop %v2021
  %v2033 = vmul.f32 %v2032, %v2021
  %v2034 = vmul.f32 %v2033, %v2032
  %v2035 = vmul.f32 0.5, %v2034
  %v2036 = vsub.f32 1.5, %v2035
  %v2037 = vmul.f32 %v2032, %v2036
  %vm2038 = vweird.f32 %v2021
  %vm2039 = vweird.f32 %v2032
  %vm2040 = vmor %vm2038, %vm2039
  %v2041 = vsel %vm2040, %v2032, %v2037
  %v2042 = vmul.f32 %v2008, %v2031
  %v2043 = vmul.f32 %v2009, %v2041
  %v2045 = vperm.slane %v1997, 0
  %v2047 = vmul.f32 %v2042, %v2045
  %v2048 = vmul.f32 %v2043, %v2045
  %v2050 = vperm.slane %v1999, 0
  %v2052 = vadd.f32 %v2047, %v2050
  %v2053 = vadd.f32 %v2048, %v2050
  %v2054 = vld [vmem:[%s16] sm:$0xff]
  %v2055 = vld [vmem:[%s16 + $0x8] sm:$0xff]
  %v2056 = vld [vmem:[%s16 + $0x10] sm:$0xff]
  %v2057 = vld [vmem:[%s16 + $0x18] sm:$0xff]
  %v2058 = vld [vmem:[%s17] sm:$0x1]
  %v2060 = vperm.slane %v2058, 0
  %v2063 = vsel %vm66, %v2052, 0
  %2065 = vmatpush.msra.mxu0 0.0
  %2066 = vmatpush.msra.mxu0 0.0
  %2067 = vmatpush.msra.mxu0 0.0
  %2068 = vmatpush.msra.mxu0 0.0
  %2069 = vmatpush.msra.mxu0 0.0
  %2070 = vmatpush.msra.mxu0 0.0
  %2071 = vmatpush.msra.mxu0 0.0
  %2072 = vmatpush.msra.mxu0 0.0
  %2073 = vmatpush.msra.mxu0 0.0
  %2074 = vmatpush.msra.mxu0 0.0
  %2075 = vmatpush.msra.mxu0 0.0
  %2076 = vmatpush.msra.mxu0 0.0
  %2077 = vmatpush.msra.mxu0 %v2057
  %2078 = vmatpush.msra.mxu0 %v2056
  %2079 = vmatpush.msra.mxu0 %v2055
  %2080 = vmatpush.msra.mxu0 %v2054
  %2081 = vmatmul.f32.gmra.mxu0 %v2063
  %v2082 = vpop.f32.mrf.mxu0
  %v2083 = vadd.f32 %v2060, %v2082
  %2084 = vdwg.mxu0
  %vm2085 = vcmask 15360
  %v2086 = vsel %vm2085, %v2083, -inf
  %v2087 = vrot.slane %v2086, 4
  %v2088 = vmax.f32 %v2086, %v2087
  %v2089 = vrot.slane %v2088, 2
  %v2090 = vmax.f32 %v2088, %v2089
  %v2091 = vrot.slane %v2090, 1
  %v2092 = vmax.f32 %v2090, %v2091
  %v2093 = vsub.f32 %v2083, %v2092
  %v2094 = vmul.f32 %v2093, 1.442695
  %v2095 = vpow.pop %v2094
  %v2096 = vsel %vm2085, %v2095, 0.0
  %v2097 = vrot.slane %v2096, 4
  %v2098 = vadd.f32 %v2096, %v2097
  %v2099 = vrot.slane %v2098, 2
  %v2100 = vadd.f32 %v2098, %v2099
  %v2101 = vrot.slane %v2100, 1
  %v2102 = vadd.f32 %v2100, %v2101
  %v2103 = vrcp.pop %v2102
  %v2104 = vmul.f32 %v2102, %v2103
  %v2105 = vsub.f32 1.0, %v2104
  %v2106 = vmul.f32 %v2103, %v2105
  %v2107 = vadd.f32 %v2103, %v2106
  %vm2108 = vweird.f32 %v2102
  %vm2109 = vweird.f32 %v2103
  %vm2110 = vmor %vm2108, %vm2109
  %v2111 = vsel %vm2110, %v2103, %v2107
  %v2112 = vand.u32 2147483647, %v2102
  %vm2113 = vcmp.eq.f32.partialorder %v2112, 8.507059e+37
  %v2114 = vand.u32 %v2102, 2147483648
  %v2115 = vor.u32 1.1754944e-38, %v2114
  %v2116 = vsel %vm2113, %v2115, %v2111
  %v2117 = vmul.f32 %v2095, %v2116
  %2118 = vst.msk [vmem:[%s18] sm:$0xff] %vm2085, %v2117
  %v2119 = vld [vmem:[%s16] sm:$0xff]
  %v2120 = vld [vmem:[%s16 + $0x8] sm:$0xff]
  %v2121 = vld [vmem:[%s16 + $0x10] sm:$0xff]
  %v2122 = vld [vmem:[%s16 + $0x18] sm:$0xff]
  %v2123 = vld [vmem:[%s17] sm:$0x1]
  %v2125 = vperm.slane %v2123, 0
  %v2128 = vsel %vm66, %v2053, 0
  %2130 = vmatpush.msra.mxu0 0.0
  %2131 = vmatpush.msra.mxu0 0.0
  %2132 = vmatpush.msra.mxu0 0.0
  %2133 = vmatpush.msra.mxu0 0.0
  %2134 = vmatpush.msra.mxu0 0.0
  %2135 = vmatpush.msra.mxu0 0.0
  %2136 = vmatpush.msra.mxu0 0.0
  %2137 = vmatpush.msra.mxu0 0.0
  %2138 = vmatpush.msra.mxu0 0.0
  %2139 = vmatpush.msra.mxu0 0.0
  %2140 = vmatpush.msra.mxu0 0.0
  %2141 = vmatpush.msra.mxu0 0.0
  %2142 = vmatpush.msra.mxu0 %v2122
  %2143 = vmatpush.msra.mxu0 %v2121
  %2144 = vmatpush.msra.mxu0 %v2120
  %2145 = vmatpush.msra.mxu0 %v2119
  %2146 = vmatmul.f32.gmra.mxu0 %v2128
  %v2147 = vpop.f32.mrf.mxu0
  %v2148 = vadd.f32 %v2125, %v2147
  %2149 = vdwg.mxu0
  %v2150 = vsel %vm2085, %v2148, -inf
  %v2151 = vrot.slane %v2150, 4
  %v2152 = vmax.f32 %v2150, %v2151
  %v2153 = vrot.slane %v2152, 2
  %v2154 = vmax.f32 %v2152, %v2153
  %v2155 = vrot.slane %v2154, 1
  %v2156 = vmax.f32 %v2154, %v2155
  %v2157 = vsub.f32 %v2148, %v2156
  %v2158 = vmul.f32 %v2157, 1.442695
  %v2159 = vpow.pop %v2158
  %v2160 = vsel %vm2085, %v2159, 0.0
  %v2161 = vrot.slane %v2160, 4
  %v2162 = vadd.f32 %v2160, %v2161
  %v2163 = vrot.slane %v2162, 2
  %v2164 = vadd.f32 %v2162, %v2163
  %v2165 = vrot.slane %v2164, 1
  %v2166 = vadd.f32 %v2164, %v2165
  %v2167 = vrcp.pop %v2166
  %v2168 = vmul.f32 %v2166, %v2167
  %v2169 = vsub.f32 1.0, %v2168
  %v2170 = vmul.f32 %v2167, %v2169
  %v2171 = vadd.f32 %v2167, %v2170
  %vm2172 = vweird.f32 %v2166
  %vm2173 = vweird.f32 %v2167
  %vm2174 = vmor %vm2172, %vm2173
  %v2175 = vsel %vm2174, %v2167, %v2171
  %v2176 = vand.u32 2147483647, %v2166
  %vm2177 = vcmp.eq.f32.partialorder %v2176, 8.507059e+37
  %v2178 = vand.u32 %v2166, 2147483648
  %v2179 = vor.u32 1.1754944e-38, %v2178
  %v2180 = vsel %vm2177, %v2179, %v2175
  %v2181 = vmul.f32 %v2159, %v2180
  %s2182 = scalar_lea.vmem %s18, 8
  %2183 = vst.msk [vmem:[%s2182] sm:$0xff] %vm2085, %v2181
  // Predicated region
  $region74: #{intensive_reader_forward.2} parent=0 // pred_check
    _
  $region75: #{intensive_reader_forward.2} parent=0 // pred_check_branch
    %2185 = sbr.rel (0) target = $region77
  $region76: #{intensive_reader_forward.2} parent=0 // pred_region
    _
  $region77: #{intensive_reader_forward.2} parent=0 // pred_fallthru
    _
  // Predicated region
  $region78: #{intensive_reader_forward.2} parent=0 // pred_check
    _
  $region79: #{intensive_reader_forward.2} parent=0 // pred_check_branch
    %2187 = sbr.rel (0) target = $region81
  $region80: #{intensive_reader_forward.2} parent=0 // pred_region
    _
  $region81: #{intensive_reader_forward.2} parent=0 // pred_fallthru
    _

// kernel: intensive_reader_forward.3
$region0: #{intensive_reader_forward.3}
  #allocation0 [shape = 'u32[]', space=smem, size = 0x4, offset = 0x4, fixed_abs, tag = 'smem constant byte address 0x4 - core index']
  #allocation1 [shape = 'u32[72,128]{1,0:T(1,128)}', space=vmem, size = 0x9000, scoped, tag = 'internal scratch']
  %s0 = inlined_call_operand.vmem [shape: f32[16,32], index: 0, kind: input, shape index: {}]
  %s1 = inlined_call_operand.vmem [shape: f32[2,8], index: 1, kind: input, shape index: {}]
  %s2 = inlined_call_operand.vmem [shape: f32[1,32], index: 2, kind: input, shape index: {}]
  %s3 = inlined_call_operand.vmem [shape: f32[1,32], index: 3, kind: input, shape index: {}]
  %s4 = inlined_call_operand.vmem [shape: f32[2,32,96], index: 4, kind: input, shape index: {}]
  %s5 = inlined_call_operand.vmem [shape: f32[2,1,96], index: 5, kind: input, shape index: {}]
  %s6 = inlined_call_operand.vmem [shape: f32[2,32,32], index: 6, kind: input, shape index: {}]
  %s7 = inlined_call_operand.vmem [shape: f32[2,1,32], index: 7, kind: input, shape index: {}]
  %s8 = inlined_call_operand.vmem [shape: f32[2,1,32], index: 8, kind: input, shape index: {}]
  %s9 = inlined_call_operand.vmem [shape: f32[2,1,32], index: 9, kind: input, shape index: {}]
  %s10 = inlined_call_operand.vmem [shape: f32[2,32,64], index: 10, kind: input, shape index: {}]
  %s11 = inlined_call_operand.vmem [shape: f32[2,1,64], index: 11, kind: input, shape index: {}]
  %s12 = inlined_call_operand.vmem [shape: f32[2,64,32], index: 12, kind: input, shape index: {}]
  %s13 = inlined_call_operand.vmem [shape: f32[2,1,32], index: 13, kind: input, shape index: {}]
  %s14 = inlined_call_operand.vmem [shape: f32[2,1,32], index: 14, kind: input, shape index: {}]
  %s15 = inlined_call_operand.vmem [shape: f32[2,1,32], index: 15, kind: input, shape index: {}]
  %s16 = inlined_call_operand.vmem [shape: f32[32,32], index: 16, kind: input, shape index: {}]
  %s17 = inlined_call_operand.vmem [shape: f32[1,32], index: 17, kind: input, shape index: {}]
  %s18 = inlined_call_operand.vmem [shape: f32[32,2], index: 18, kind: input, shape index: {}]
  %s19 = inlined_call_operand.vmem [shape: f32[1,2], index: 19, kind: input, shape index: {}]
  %s20 = inlined_call_operand.vmem [shape: f32[2,1], index: 20, kind: output, shape index: {}]
  %s21 = sld [smem:[#allocation0]]
  $region90: #{intensive_reader_forward.3} parent=0
    _
  %s23 = ssub.s32 1, %s21
  %s24 = scalar_select 0, %s23, %s21
  // Predicated region
  $region2: #{intensive_reader_forward.3} parent=0 // pred_check
    _
  $region3: #{intensive_reader_forward.3} parent=0 // pred_check_branch
    %26 = sbr.rel (0) target = $region5
  $region4: #{intensive_reader_forward.3} parent=0 // pred_region
    _
  $region5: #{intensive_reader_forward.3} parent=0 // pred_fallthru
    _
  // Predicated region
  $region6: #{intensive_reader_forward.3} parent=0 // pred_check
    _
  $region7: #{intensive_reader_forward.3} parent=0 // pred_check_branch
    %28 = sbr.rel (0) target = $region9
  $region8: #{intensive_reader_forward.3} parent=0 // pred_region
    _
  $region9: #{intensive_reader_forward.3} parent=0 // pred_fallthru
    _
  // Predicated region
  $region10: #{intensive_reader_forward.3} parent=0 // pred_check
    _
  $region11: #{intensive_reader_forward.3} parent=0 // pred_check_branch
    %30 = sbr.rel (0) target = $region13
  $region12: #{intensive_reader_forward.3} parent=0 // pred_region
    _
  $region13: #{intensive_reader_forward.3} parent=0 // pred_fallthru
    _
  // Predicated region
  $region14: #{intensive_reader_forward.3} parent=0 // pred_check
    _
  $region15: #{intensive_reader_forward.3} parent=0 // pred_check_branch
    %32 = sbr.rel (0) target = $region17
  $region16: #{intensive_reader_forward.3} parent=0 // pred_region
    _
  $region17: #{intensive_reader_forward.3} parent=0 // pred_fallthru
    _
  // Predicated region
  $region18: #{intensive_reader_forward.3} parent=0 // pred_check
    _
  $region19: #{intensive_reader_forward.3} parent=0 // pred_check_branch
    %34 = sbr.rel (0) target = $region21
  $region20: #{intensive_reader_forward.3} parent=0 // pred_region
    _
  $region21: #{intensive_reader_forward.3} parent=0 // pred_fallthru
    _
  // Predicated region
  $region22: #{intensive_reader_forward.3} parent=0 // pred_check
    _
  $region23: #{intensive_reader_forward.3} parent=0 // pred_check_branch
    %36 = sbr.rel (0) target = $region25
  $region24: #{intensive_reader_forward.3} parent=0 // pred_region
    _
  $region25: #{intensive_reader_forward.3} parent=0 // pred_fallthru
    _
  // Predicated region
  $region26: #{intensive_reader_forward.3} parent=0 // pred_check
    _
  $region27: #{intensive_reader_forward.3} parent=0 // pred_check_branch
    %38 = sbr.rel (0) target = $region29
  $region28: #{intensive_reader_forward.3} parent=0 // pred_region
    _
  $region29: #{intensive_reader_forward.3} parent=0 // pred_fallthru
    _
  // Predicated region
  $region30: #{intensive_reader_forward.3} parent=0 // pred_check
    _
  $region31: #{intensive_reader_forward.3} parent=0 // pred_check_branch
    %40 = sbr.rel (0) target = $region33
  $region32: #{intensive_reader_forward.3} parent=0 // pred_region
    _
  $region33: #{intensive_reader_forward.3} parent=0 // pred_fallthru
    _
  // Predicated region
  $region34: #{intensive_reader_forward.3} parent=0 // pred_check
    _
  $region35: #{intensive_reader_forward.3} parent=0 // pred_check_branch
    %42 = sbr.rel (0) target = $region37
  $region36: #{intensive_reader_forward.3} parent=0 // pred_region
    _
  $region37: #{intensive_reader_forward.3} parent=0 // pred_fallthru
    _
  // Predicated region
  $region38: #{intensive_reader_forward.3} parent=0 // pred_check
    _
  $region39: #{intensive_reader_forward.3} parent=0 // pred_check_branch
    %44 = sbr.rel (0) target = $region41
  $region40: #{intensive_reader_forward.3} parent=0 // pred_region
    _
  $region41: #{intensive_reader_forward.3} parent=0 // pred_fallthru
    _
  // Predicated region
  $region42: #{intensive_reader_forward.3} parent=0 // pred_check
    _
  $region43: #{intensive_reader_forward.3} parent=0 // pred_check_branch
    %46 = sbr.rel (0) target = $region45
  $region44: #{intensive_reader_forward.3} parent=0 // pred_region
    _
  $region45: #{intensive_reader_forward.3} parent=0 // pred_fallthru
    _
  // Predicated region
  $region46: #{intensive_reader_forward.3} parent=0 // pred_check
    _
  $region47: #{intensive_reader_forward.3} parent=0 // pred_check_branch
    %48 = sbr.rel (0) target = $region49
  $region48: #{intensive_reader_forward.3} parent=0 // pred_region
    _
  $region49: #{intensive_reader_forward.3} parent=0 // pred_fallthru
    _
  // Predicated region
  $region50: #{intensive_reader_forward.3} parent=0 // pred_check
    _
  $region51: #{intensive_reader_forward.3} parent=0 // pred_check_branch
    %50 = sbr.rel (0) target = $region53
  $region52: #{intensive_reader_forward.3} parent=0 // pred_region
    _
  $region53: #{intensive_reader_forward.3} parent=0 // pred_fallthru
    _
  // Predicated region
  $region54: #{intensive_reader_forward.3} parent=0 // pred_check
    _
  $region55: #{intensive_reader_forward.3} parent=0 // pred_check_branch
    %52 = sbr.rel (0) target = $region57
  $region56: #{intensive_reader_forward.3} parent=0 // pred_region
    _
  $region57: #{intensive_reader_forward.3} parent=0 // pred_fallthru
    _
  // Predicated region
  $region58: #{intensive_reader_forward.3} parent=0 // pred_check
    _
  $region59: #{intensive_reader_forward.3} parent=0 // pred_check_branch
    %54 = sbr.rel (0) target = $region61
  $region60: #{intensive_reader_forward.3} parent=0 // pred_region
    _
  $region61: #{intensive_reader_forward.3} parent=0 // pred_fallthru
    _
  // Predicated region
  $region62: #{intensive_reader_forward.3} parent=0 // pred_check
    _
  $region63: #{intensive_reader_forward.3} parent=0 // pred_check_branch
    %56 = sbr.rel (0) target = $region65
  $region64: #{intensive_reader_forward.3} parent=0 // pred_region
    _
  $region65: #{intensive_reader_forward.3} parent=0 // pred_fallthru
    _
  // Predicated region
  $region66: #{intensive_reader_forward.3} parent=0 // pred_check
    _
  $region67: #{intensive_reader_forward.3} parent=0 // pred_check_branch
    %58 = sbr.rel (0) target = $region69
  $region68: #{intensive_reader_forward.3} parent=0 // pred_region
    _
  $region69: #{intensive_reader_forward.3} parent=0 // pred_fallthru
    _
  // Predicated region
  $region70: #{intensive_reader_forward.3} parent=0 // pred_check
    _
  $region71: #{intensive_reader_forward.3} parent=0 // pred_check_branch
    %60 = sbr.rel (0) target = $region73
  $region72: #{intensive_reader_forward.3} parent=0 // pred_region
    _
  $region73: #{intensive_reader_forward.3} parent=0 // pred_fallthru
    _
  // Predicated region
  $region74: #{intensive_reader_forward.3} parent=0 // pred_check
    _
  $region75: #{intensive_reader_forward.3} parent=0 // pred_check_branch
    %62 = sbr.rel (0) target = $region77
  $region76: #{intensive_reader_forward.3} parent=0 // pred_region
    _
  $region77: #{intensive_reader_forward.3} parent=0 // pred_fallthru
    _
  // Predicated region
  $region78: #{intensive_reader_forward.3} parent=0 // pred_check
    _
  $region79: #{intensive_reader_forward.3} parent=0 // pred_check_branch
    %64 = sbr.rel (0) target = $region81
  $region80: #{intensive_reader_forward.3} parent=0 // pred_region
    _
  $region81: #{intensive_reader_forward.3} parent=0 // pred_fallthru
    _
  %v65 = vld [vmem:[%s1] sm:$0x3]
  %vm66 = vcmp.gt.f32.partialorder %v65, 0.5
  %v67 = vsel %vm66, 0.0, -1e+09
  %v68 = vld [vmem:[%s0] sm:$0xff]
  %v69 = vld [vmem:[%s0 + $0x8] sm:$0xff]
  %v70 = vld [vmem:[%s2] sm:$0x1]
  %v71 = vld [vmem:[%s3] sm:$0x1]
  %vm72 = vcmask 261120
  %v73 = vsel %vm72, %v68, 0.0
  %74 = vadd.xlane.f32.xlu0 %v73
  %v75 = vpop.xlane.xlu0 %74
  %v76 = vsel %vm72, %v69, 0.0
  %77 = vadd.xlane.f32.xlu0 %v76
  %v78 = vpop.xlane.xlu0 %77
  %v79 = vrcp.pop 32.0
  %v80 = vmul.f32 32.0, %v79
  %v81 = vsub.f32 1.0, %v80
  %v82 = vmul.f32 %v79, %v81
  %v83 = vadd.f32 %v79, %v82
  %vm84 = vweird.f32 %v79
  %v85 = vsel %vm84, %v79, %v83
  %v86 = vmul.f32 %v75, %v85
  %v87 = vmul.f32 %v78, %v85
  %v88 = vsub.f32 %v68, %v86
  %v89 = vsub.f32 %v69, %v87
  %v90 = vmul.f32 %v88, %v88
  %v91 = vmul.f32 %v89, %v89
  %v92 = vsel %vm72, %v90, 0.0
  %93 = vadd.xlane.f32.xlu0 %v92
  %v94 = vpop.xlane.xlu0 %93
  %v95 = vsel %vm72, %v91, 0.0
  %96 = vadd.xlane.f32.xlu0 %v95
  %v97 = vpop.xlane.xlu0 %96
  %v98 = vmul.f32 %v94, %v85
  %v99 = vmul.f32 %v97, %v85
  %v100 = vadd.f32 %v98, 1e-12
  %v101 = vadd.f32 %v99, 1e-12
  %v102 = vrsqrt.pop %v100
  %v103 = vmul.f32 %v102, %v100
  %v104 = vmul.f32 %v103, %v102
  %v105 = vmul.f32 0.5, %v104
  %v106 = vsub.f32 1.5, %v105
  %v107 = vmul.f32 %v102, %v106
  %vm108 = vweird.f32 %v100
  %vm109 = vweird.f32 %v102
  %vm110 = vmor %vm108, %vm109
  %v111 = vsel %vm110, %v102, %v107
  %v112 = vrsqrt.pop %v101
  %v113 = vmul.f32 %v112, %v101
  %v114 = vmul.f32 %v113, %v112
  %v115 = vmul.f32 0.5, %v114
  %v116 = vsub.f32 1.5, %v115
  %v117 = vmul.f32 %v112, %v116
  %vm118 = vweird.f32 %v101
  %vm119 = vweird.f32 %v112
  %vm120 = vmor %vm118, %vm119
  %v121 = vsel %vm120, %v112, %v117
  %v122 = vmul.f32 %v88, %v111
  %v123 = vmul.f32 %v89, %v121
  %v125 = vperm.slane %v70, 0
  %v127 = vmul.f32 %v122, %v125
  %v128 = vmul.f32 %v123, %v125
  %v130 = vperm.slane %v71, 0
  %v132 = vadd.f32 %v127, %v130
  %v133 = vadd.f32 %v128, %v130
  %v134 = vld [vmem:[%s4] sm:$0xff]
  %v135 = vld [vmem:[%s4 + $0x8] sm:$0xff]
  %v136 = vld [vmem:[%s4 + $0x10] sm:$0xff]
  %v137 = vld [vmem:[%s4 + $0x18] sm:$0xff]
  %v138 = vld [vmem:[%s5] sm:$0x1]
  %v140 = vperm.slane %v138, 0
  %v143 = vsel %vm72, %v132, 0
  %v146 = vsel %vm72, %v133, 0
  %148 = vmatpush.msra.mxu0 0.0
  %149 = vmatpush.msra.mxu0 0.0
  %150 = vmatpush.msra.mxu0 0.0
  %151 = vmatpush.msra.mxu0 0.0
  %152 = vmatpush.msra.mxu0 0.0
  %153 = vmatpush.msra.mxu0 0.0
  %154 = vmatpush.msra.mxu0 0.0
  %155 = vmatpush.msra.mxu0 0.0
  %156 = vmatpush.msra.mxu0 0.0
  %157 = vmatpush.msra.mxu0 0.0
  %158 = vmatpush.msra.mxu0 0.0
  %159 = vmatpush.msra.mxu0 0.0
  %160 = vmatpush.msra.mxu0 %v137
  %161 = vmatpush.msra.mxu0 %v136
  %162 = vmatpush.msra.mxu0 %v135
  %163 = vmatpush.msra.mxu0 %v134
  %164 = vmatmul.f32.gmra.mxu0 %v143
  %v165 = vpop.f32.mrf.mxu0
  %v166 = vadd.f32 %v140, %v165
  %167 = vmatmul.f32.gmra.mxu0 %v146
  %v168 = vpop.f32.mrf.mxu0
  %v169 = vadd.f32 %v140, %v168
  %170 = vdwg.mxu0
  %172 = vrot.lane.b32.xlu0 %v166, 96
  %v173 = vpop.permute.xlu0 %172
  %vm174 = vcmask 64512
  %v175 = vsel %vm174, %v166, 0
  %v177 = vsel %vm174, %v173, 0
  %179 = vmatpush.xpose.msra.mxu0 0.0
  %180 = vmatpush.xpose.msra.mxu0 0.0
  %181 = vmatpush.xpose.msra.mxu0 0.0
  %182 = vmatpush.xpose.msra.mxu0 0.0
  %183 = vmatpush.xpose.msra.mxu0 0.0
  %184 = vmatpush.xpose.msra.mxu0 0.0
  %185 = vmatpush.xpose.msra.mxu0 0.0
  %186 = vmatpush.xpose.msra.mxu0 0.0
  %187 = vmatpush.xpose.msra.mxu0 0.0
  %188 = vmatpush.xpose.msra.mxu0 0.0
  %189 = vmatpush.xpose.msra.mxu0 0.0
  %190 = vmatpush.xpose.msra.mxu0 0.0
  %191 = vmatpush.xpose.msra.mxu0 0.0
  %192 = vmatpush.xpose.msra.mxu0 0.0
  %193 = vmatpush.xpose.msra.mxu0 0.0
  %194 = vmatpush.xpose.msra.mxu0 %v177
  %195 = vmatmul.f32.gmra.mxu0 %v175
  %v196 = vpop.f32.mrf.mxu0
  %v197 = vadd.f32 0.0, %v196
  %198 = vdwg.mxu0
  %v199 = vmul.f32 %v197, 0.35355338
  %v200 = vperm.slane %v67, 0
  %v201 = vadd.f32 %v199, %v200
  %v202 = vsel %vm174, %v201, -inf
  %203 = vmax.xlane.f32.xlu0 %v202
  %v204 = vpop.xlane.xlu0 %203
  %v205 = vsub.f32 %v201, %v204
  %v206 = vmul.f32 %v205, 1.442695
  %v207 = vpow.pop %v206
  %v208 = vsel %vm174, %v207, 0.0
  %209 = vadd.xlane.f32.xlu0 %v208
  %v210 = vpop.xlane.xlu0 %209
  %v211 = vrcp.pop %v210
  %v212 = vmul.f32 %v210, %v211
  %v213 = vsub.f32 1.0, %v212
  %v214 = vmul.f32 %v211, %v213
  %v215 = vadd.f32 %v211, %v214
  %vm216 = vweird.f32 %v210
  %vm217 = vweird.f32 %v211
  %vm218 = vmor %vm216, %vm217
  %v219 = vsel %vm218, %v211, %v215
  %v220 = vand.u32 2147483647, %v210
  %vm221 = vcmp.eq.f32.partialorder %v220, 8.507059e+37
  %v222 = vand.u32 %v210, 2147483648
  %v223 = vor.u32 1.1754944e-38, %v222
  %v224 = vsel %vm221, %v223, %v219
  %v225 = vmul.f32 %v207, %v224
  %226 = vrot.lane.b32.xlu0 %v166, 64
  %v227 = vpop.permute.xlu0 %226
  %v230 = vsel %vm174, %v225, 0
  %232 = vmatpush.msra.mxu0 0.0
  %233 = vmatpush.msra.mxu0 0.0
  %234 = vmatpush.msra.mxu0 0.0
  %235 = vmatpush.msra.mxu0 0.0
  %236 = vmatpush.msra.mxu0 0.0
  %237 = vmatpush.msra.mxu0 0.0
  %238 = vmatpush.msra.mxu0 0.0
  %239 = vmatpush.msra.mxu0 0.0
  %240 = vmatpush.msra.mxu0 0.0
  %241 = vmatpush.msra.mxu0 0.0
  %242 = vmatpush.msra.mxu0 0.0
  %243 = vmatpush.msra.mxu0 0.0
  %244 = vmatpush.msra.mxu0 0.0
  %245 = vmatpush.msra.mxu0 0.0
  %246 = vmatpush.msra.mxu0 0.0
  %247 = vmatpush.msra.mxu0 %v227
  %248 = vmatmul.f32.gmra.mxu0 %v230
  %v249 = vpop.f32.mrf.mxu0
  %v250 = vadd.f32 0.0, %v249
  %251 = vdwg.mxu0
  %252 = vrot.lane.b32.xlu0 %v166, 120
  %v253 = vpop.permute.xlu0 %252
  %254 = vrot.lane.b32.xlu0 %v166, 88
  %v255 = vpop.permute.xlu0 %254
  %v256 = vsel %vm174, %v253, 0
  %v258 = vsel %vm174, %v255, 0
  %260 = vmatpush.xpose.msra.mxu0 0.0
  %261 = vmatpush.xpose.msra.mxu0 0.0
  %262 = vmatpush.xpose.msra.mxu0 0.0
  %263 = vmatpush.xpose.msra.mxu0 0.0
  %264 = vmatpush.xpose.msra.mxu0 0.0
  %265 = vmatpush.xpose.msra.mxu0 0.0
  %266 = vmatpush.xpose.msra.mxu0 0.0
  %267 = vmatpush.xpose.msra.mxu0 0.0
  %268 = vmatpush.xpose.msra.mxu0 0.0
  %269 = vmatpush.xpose.msra.mxu0 0.0
  %270 = vmatpush.xpose.msra.mxu0 0.0
  %271 = vmatpush.xpose.msra.mxu0 0.0
  %272 = vmatpush.xpose.msra.mxu0 0.0
  %273 = vmatpush.xpose.msra.mxu0 0.0
  %274 = vmatpush.xpose.msra.mxu0 0.0
  %275 = vmatpush.xpose.msra.mxu0 %v258
  %276 = vmatmul.f32.gmra.mxu0 %v256
  %v277 = vpop.f32.mrf.mxu0
  %v278 = vadd.f32 0.0, %v277
  %279 = vdwg.mxu0
  %v280 = vmul.f32 %v278, 0.35355338
  %v281 = vadd.f32 %v280, %v200
  %v282 = vsel %vm174, %v281, -inf
  %283 = vmax.xlane.f32.xlu0 %v282
  %v284 = vpop.xlane.xlu0 %283
  %v285 = vsub.f32 %v281, %v284
  %v286 = vmul.f32 %v285, 1.442695
  %v287 = vpow.pop %v286
  %v288 = vsel %vm174, %v287, 0.0
  %289 = vadd.xlane.f32.xlu0 %v288
  %v290 = vpop.xlane.xlu0 %289
  %v291 = vrcp.pop %v290
  %v292 = vmul.f32 %v290, %v291
  %v293 = vsub.f32 1.0, %v292
  %v294 = vmul.f32 %v291, %v293
  %v295 = vadd.f32 %v291, %v294
  %vm296 = vweird.f32 %v290
  %vm297 = vweird.f32 %v291
  %vm298 = vmor %vm296, %vm297
  %v299 = vsel %vm298, %v291, %v295
  %v300 = vand.u32 2147483647, %v290
  %vm301 = vcmp.eq.f32.partialorder %v300, 8.507059e+37
  %v302 = vand.u32 %v290, 2147483648
  %v303 = vor.u32 1.1754944e-38, %v302
  %v304 = vsel %vm301, %v303, %v299
  %v305 = vmul.f32 %v287, %v304
  %306 = vrot.lane.b32.xlu0 %v166, 56
  %v307 = vpop.permute.xlu0 %306
  %v310 = vsel %vm174, %v305, 0
  %312 = vmatpush.msra.mxu0 0.0
  %313 = vmatpush.msra.mxu0 0.0
  %314 = vmatpush.msra.mxu0 0.0
  %315 = vmatpush.msra.mxu0 0.0
  %316 = vmatpush.msra.mxu0 0.0
  %317 = vmatpush.msra.mxu0 0.0
  %318 = vmatpush.msra.mxu0 0.0
  %319 = vmatpush.msra.mxu0 0.0
  %320 = vmatpush.msra.mxu0 0.0
  %321 = vmatpush.msra.mxu0 0.0
  %322 = vmatpush.msra.mxu0 0.0
  %323 = vmatpush.msra.mxu0 0.0
  %324 = vmatpush.msra.mxu0 0.0
  %325 = vmatpush.msra.mxu0 0.0
  %326 = vmatpush.msra.mxu0 0.0
  %327 = vmatpush.msra.mxu0 %v307
  %328 = vmatmul.f32.gmra.mxu0 %v310
  %v329 = vpop.f32.mrf.mxu0
  %v330 = vadd.f32 0.0, %v329
  %331 = vdwg.mxu0
  %332 = vrot.lane.b32.xlu0 %v166, 112
  %v333 = vpop.permute.xlu0 %332
  %334 = vrot.lane.b32.xlu0 %v166, 80
  %v335 = vpop.permute.xlu0 %334
  %v336 = vsel %vm174, %v333, 0
  %v338 = vsel %vm174, %v335, 0
  %340 = vmatpush.xpose.msra.mxu0 0.0
  %341 = vmatpush.xpose.msra.mxu0 0.0
  %342 = vmatpush.xpose.msra.mxu0 0.0
  %343 = vmatpush.xpose.msra.mxu0 0.0
  %344 = vmatpush.xpose.msra.mxu0 0.0
  %345 = vmatpush.xpose.msra.mxu0 0.0
  %346 = vmatpush.xpose.msra.mxu0 0.0
  %347 = vmatpush.xpose.msra.mxu0 0.0
  %348 = vmatpush.xpose.msra.mxu0 0.0
  %349 = vmatpush.xpose.msra.mxu0 0.0
  %350 = vmatpush.xpose.msra.mxu0 0.0
  %351 = vmatpush.xpose.msra.mxu0 0.0
  %352 = vmatpush.xpose.msra.mxu0 0.0
  %353 = vmatpush.xpose.msra.mxu0 0.0
  %354 = vmatpush.xpose.msra.mxu0 0.0
  %355 = vmatpush.xpose.msra.mxu0 %v338
  %356 = vmatmul.f32.gmra.mxu0 %v336
  %v357 = vpop.f32.mrf.mxu0
  %v358 = vadd.f32 0.0, %v357
  %359 = vdwg.mxu0
  %v360 = vmul.f32 %v358, 0.35355338
  %v361 = vadd.f32 %v360, %v200
  %v362 = vsel %vm174, %v361, -inf
  %363 = vmax.xlane.f32.xlu0 %v362
  %v364 = vpop.xlane.xlu0 %363
  %v365 = vsub.f32 %v361, %v364
  %v366 = vmul.f32 %v365, 1.442695
  %v367 = vpow.pop %v366
  %v368 = vsel %vm174, %v367, 0.0
  %369 = vadd.xlane.f32.xlu0 %v368
  %v370 = vpop.xlane.xlu0 %369
  %v371 = vrcp.pop %v370
  %v372 = vmul.f32 %v370, %v371
  %v373 = vsub.f32 1.0, %v372
  %v374 = vmul.f32 %v371, %v373
  %v375 = vadd.f32 %v371, %v374
  %vm376 = vweird.f32 %v370
  %vm377 = vweird.f32 %v371
  %vm378 = vmor %vm376, %vm377
  %v379 = vsel %vm378, %v371, %v375
  %v380 = vand.u32 2147483647, %v370
  %vm381 = vcmp.eq.f32.partialorder %v380, 8.507059e+37
  %v382 = vand.u32 %v370, 2147483648
  %v383 = vor.u32 1.1754944e-38, %v382
  %v384 = vsel %vm381, %v383, %v379
  %v385 = vmul.f32 %v367, %v384
  %386 = vrot.lane.b32.xlu0 %v166, 48
  %v387 = vpop.permute.xlu0 %386
  %v390 = vsel %vm174, %v385, 0
  %392 = vmatpush.msra.mxu0 0.0
  %393 = vmatpush.msra.mxu0 0.0
  %394 = vmatpush.msra.mxu0 0.0
  %395 = vmatpush.msra.mxu0 0.0
  %396 = vmatpush.msra.mxu0 0.0
  %397 = vmatpush.msra.mxu0 0.0
  %398 = vmatpush.msra.mxu0 0.0
  %399 = vmatpush.msra.mxu0 0.0
  %400 = vmatpush.msra.mxu0 0.0
  %401 = vmatpush.msra.mxu0 0.0
  %402 = vmatpush.msra.mxu0 0.0
  %403 = vmatpush.msra.mxu0 0.0
  %404 = vmatpush.msra.mxu0 0.0
  %405 = vmatpush.msra.mxu0 0.0
  %406 = vmatpush.msra.mxu0 0.0
  %407 = vmatpush.msra.mxu0 %v387
  %408 = vmatmul.f32.gmra.mxu0 %v390
  %v409 = vpop.f32.mrf.mxu0
  %v410 = vadd.f32 0.0, %v409
  %411 = vdwg.mxu0
  %412 = vrot.lane.b32.xlu0 %v166, 104
  %v413 = vpop.permute.xlu0 %412
  %414 = vrot.lane.b32.xlu0 %v166, 72
  %v415 = vpop.permute.xlu0 %414
  %v416 = vsel %vm174, %v413, 0
  %v418 = vsel %vm174, %v415, 0
  %420 = vmatpush.xpose.msra.mxu0 0.0
  %421 = vmatpush.xpose.msra.mxu0 0.0
  %422 = vmatpush.xpose.msra.mxu0 0.0
  %423 = vmatpush.xpose.msra.mxu0 0.0
  %424 = vmatpush.xpose.msra.mxu0 0.0
  %425 = vmatpush.xpose.msra.mxu0 0.0
  %426 = vmatpush.xpose.msra.mxu0 0.0
  %427 = vmatpush.xpose.msra.mxu0 0.0
  %428 = vmatpush.xpose.msra.mxu0 0.0
  %429 = vmatpush.xpose.msra.mxu0 0.0
  %430 = vmatpush.xpose.msra.mxu0 0.0
  %431 = vmatpush.xpose.msra.mxu0 0.0
  %432 = vmatpush.xpose.msra.mxu0 0.0
  %433 = vmatpush.xpose.msra.mxu0 0.0
  %434 = vmatpush.xpose.msra.mxu0 0.0
  %435 = vmatpush.xpose.msra.mxu0 %v418
  %436 = vmatmul.f32.gmra.mxu0 %v416
  %v437 = vpop.f32.mrf.mxu0
  %v438 = vadd.f32 0.0, %v437
  %439 = vdwg.mxu0
  %v440 = vmul.f32 %v438, 0.35355338
  %v441 = vadd.f32 %v440, %v200
  %v442 = vsel %vm174, %v441, -inf
  %443 = vmax.xlane.f32.xlu0 %v442
  %v444 = vpop.xlane.xlu0 %443
  %v445 = vsub.f32 %v441, %v444
  %v446 = vmul.f32 %v445, 1.442695
  %v447 = vpow.pop %v446
  %v448 = vsel %vm174, %v447, 0.0
  %449 = vadd.xlane.f32.xlu0 %v448
  %v450 = vpop.xlane.xlu0 %449
  %v451 = vrcp.pop %v450
  %v452 = vmul.f32 %v450, %v451
  %v453 = vsub.f32 1.0, %v452
  %v454 = vmul.f32 %v451, %v453
  %v455 = vadd.f32 %v451, %v454
  %vm456 = vweird.f32 %v450
  %vm457 = vweird.f32 %v451
  %vm458 = vmor %vm456, %vm457
  %v459 = vsel %vm458, %v451, %v455
  %v460 = vand.u32 2147483647, %v450
  %vm461 = vcmp.eq.f32.partialorder %v460, 8.507059e+37
  %v462 = vand.u32 %v450, 2147483648
  %v463 = vor.u32 1.1754944e-38, %v462
  %v464 = vsel %vm461, %v463, %v459
  %v465 = vmul.f32 %v447, %v464
  %466 = vrot.lane.b32.xlu0 %v166, 40
  %v467 = vpop.permute.xlu0 %466
  %v470 = vsel %vm174, %v465, 0
  %472 = vmatpush.msra.mxu0 0.0
  %473 = vmatpush.msra.mxu0 0.0
  %474 = vmatpush.msra.mxu0 0.0
  %475 = vmatpush.msra.mxu0 0.0
  %476 = vmatpush.msra.mxu0 0.0
  %477 = vmatpush.msra.mxu0 0.0
  %478 = vmatpush.msra.mxu0 0.0
  %479 = vmatpush.msra.mxu0 0.0
  %480 = vmatpush.msra.mxu0 0.0
  %481 = vmatpush.msra.mxu0 0.0
  %482 = vmatpush.msra.mxu0 0.0
  %483 = vmatpush.msra.mxu0 0.0
  %484 = vmatpush.msra.mxu0 0.0
  %485 = vmatpush.msra.mxu0 0.0
  %486 = vmatpush.msra.mxu0 0.0
  %487 = vmatpush.msra.mxu0 %v467
  %488 = vmatmul.f32.gmra.mxu0 %v470
  %v489 = vpop.f32.mrf.mxu0
  %v490 = vadd.f32 0.0, %v489
  %491 = vdwg.mxu0
  %493 = vrot.lane.b32.xlu0 %v330, 8
  %v494 = vpop.permute.xlu0 %493
  %497 = vrot.lane.b32.xlu0 %v410, 16
  %v498 = vpop.permute.xlu0 %497
  %501 = vrot.lane.b32.xlu0 %v490, 24
  %v502 = vpop.permute.xlu0 %501
  %v504 = vsel %vm174, %v250, %v494
  %vm505 = vcmask 130048
  %v506 = vsel %vm505, %v504, %v498
  %vm507 = vcmask 195584
  %v508 = vsel %vm507, %v506, %v502
  %510 = vrot.lane.b32.xlu0 %v169, 96
  %v511 = vpop.permute.xlu0 %510
  %v512 = vsel %vm174, %v169, 0
  %v514 = vsel %vm174, %v511, 0
  %516 = vmatpush.xpose.msra.mxu0 0.0
  %517 = vmatpush.xpose.msra.mxu0 0.0
  %518 = vmatpush.xpose.msra.mxu0 0.0
  %519 = vmatpush.xpose.msra.mxu0 0.0
  %520 = vmatpush.xpose.msra.mxu0 0.0
  %521 = vmatpush.xpose.msra.mxu0 0.0
  %522 = vmatpush.xpose.msra.mxu0 0.0
  %523 = vmatpush.xpose.msra.mxu0 0.0
  %524 = vmatpush.xpose.msra.mxu0 0.0
  %525 = vmatpush.xpose.msra.mxu0 0.0
  %526 = vmatpush.xpose.msra.mxu0 0.0
  %527 = vmatpush.xpose.msra.mxu0 0.0
  %528 = vmatpush.xpose.msra.mxu0 0.0
  %529 = vmatpush.xpose.msra.mxu0 0.0
  %530 = vmatpush.xpose.msra.mxu0 0.0
  %531 = vmatpush.xpose.msra.mxu0 %v514
  %532 = vmatmul.f32.gmra.mxu0 %v512
  %v533 = vpop.f32.mrf.mxu0
  %v534 = vadd.f32 0.0, %v533
  %535 = vdwg.mxu0
  %v536 = vmul.f32 %v534, 0.35355338
  %v537 = vperm.slane %v67, 1
  %v538 = vadd.f32 %v536, %v537
  %v539 = vsel %vm174, %v538, -inf
  %540 = vmax.xlane.f32.xlu0 %v539
  %v541 = vpop.xlane.xlu0 %540
  %v542 = vsub.f32 %v538, %v541
  %v543 = vmul.f32 %v542, 1.442695
  %v544 = vpow.pop %v543
  %v545 = vsel %vm174, %v544, 0.0
  %546 = vadd.xlane.f32.xlu0 %v545
  %v547 = vpop.xlane.xlu0 %546
  %v548 = vrcp.pop %v547
  %v549 = vmul.f32 %v547, %v548
  %v550 = vsub.f32 1.0, %v549
  %v551 = vmul.f32 %v548, %v550
  %v552 = vadd.f32 %v548, %v551
  %vm553 = vweird.f32 %v547
  %vm554 = vweird.f32 %v548
  %vm555 = vmor %vm553, %vm554
  %v556 = vsel %vm555, %v548, %v552
  %v557 = vand.u32 2147483647, %v547
  %vm558 = vcmp.eq.f32.partialorder %v557, 8.507059e+37
  %v559 = vand.u32 %v547, 2147483648
  %v560 = vor.u32 1.1754944e-38, %v559
  %v561 = vsel %vm558, %v560, %v556
  %v562 = vmul.f32 %v544, %v561
  %563 = vrot.lane.b32.xlu0 %v169, 64
  %v564 = vpop.permute.xlu0 %563
  %v567 = vsel %vm174, %v562, 0
  %569 = vmatpush.msra.mxu0 0.0
  %570 = vmatpush.msra.mxu0 0.0
  %571 = vmatpush.msra.mxu0 0.0
  %572 = vmatpush.msra.mxu0 0.0
  %573 = vmatpush.msra.mxu0 0.0
  %574 = vmatpush.msra.mxu0 0.0
  %575 = vmatpush.msra.mxu0 0.0
  %576 = vmatpush.msra.mxu0 0.0
  %577 = vmatpush.msra.mxu0 0.0
  %578 = vmatpush.msra.mxu0 0.0
  %579 = vmatpush.msra.mxu0 0.0
  %580 = vmatpush.msra.mxu0 0.0
  %581 = vmatpush.msra.mxu0 0.0
  %582 = vmatpush.msra.mxu0 0.0
  %583 = vmatpush.msra.mxu0 0.0
  %584 = vmatpush.msra.mxu0 %v564
  %585 = vmatmul.f32.gmra.mxu0 %v567
  %v586 = vpop.f32.mrf.mxu0
  %v587 = vadd.f32 0.0, %v586
  %588 = vdwg.mxu0
  %589 = vrot.lane.b32.xlu0 %v169, 120
  %v590 = vpop.permute.xlu0 %589
  %591 = vrot.lane.b32.xlu0 %v169, 88
  %v592 = vpop.permute.xlu0 %591
  %v593 = vsel %vm174, %v590, 0
  %v595 = vsel %vm174, %v592, 0
  %597 = vmatpush.xpose.msra.mxu0 0.0
  %598 = vmatpush.xpose.msra.mxu0 0.0
  %599 = vmatpush.xpose.msra.mxu0 0.0
  %600 = vmatpush.xpose.msra.mxu0 0.0
  %601 = vmatpush.xpose.msra.mxu0 0.0
  %602 = vmatpush.xpose.msra.mxu0 0.0
  %603 = vmatpush.xpose.msra.mxu0 0.0
  %604 = vmatpush.xpose.msra.mxu0 0.0
  %605 = vmatpush.xpose.msra.mxu0 0.0
  %606 = vmatpush.xpose.msra.mxu0 0.0
  %607 = vmatpush.xpose.msra.mxu0 0.0
  %608 = vmatpush.xpose.msra.mxu0 0.0
  %609 = vmatpush.xpose.msra.mxu0 0.0
  %610 = vmatpush.xpose.msra.mxu0 0.0
  %611 = vmatpush.xpose.msra.mxu0 0.0
  %612 = vmatpush.xpose.msra.mxu0 %v595
  %613 = vmatmul.f32.gmra.mxu0 %v593
  %v614 = vpop.f32.mrf.mxu0
  %v615 = vadd.f32 0.0, %v614
  %616 = vdwg.mxu0
  %v617 = vmul.f32 %v615, 0.35355338
  %v618 = vadd.f32 %v617, %v537
  %v619 = vsel %vm174, %v618, -inf
  %620 = vmax.xlane.f32.xlu0 %v619
  %v621 = vpop.xlane.xlu0 %620
  %v622 = vsub.f32 %v618, %v621
  %v623 = vmul.f32 %v622, 1.442695
  %v624 = vpow.pop %v623
  %v625 = vsel %vm174, %v624, 0.0
  %626 = vadd.xlane.f32.xlu0 %v625
  %v627 = vpop.xlane.xlu0 %626
  %v628 = vrcp.pop %v627
  %v629 = vmul.f32 %v627, %v628
  %v630 = vsub.f32 1.0, %v629
  %v631 = vmul.f32 %v628, %v630
  %v632 = vadd.f32 %v628, %v631
  %vm633 = vweird.f32 %v627
  %vm634 = vweird.f32 %v628
  %vm635 = vmor %vm633, %vm634
  %v636 = vsel %vm635, %v628, %v632
  %v637 = vand.u32 2147483647, %v627
  %vm638 = vcmp.eq.f32.partialorder %v637, 8.507059e+37
  %v639 = vand.u32 %v627, 2147483648
  %v640 = vor.u32 1.1754944e-38, %v639
  %v641 = vsel %vm638, %v640, %v636
  %v642 = vmul.f32 %v624, %v641
  %643 = vrot.lane.b32.xlu0 %v169, 56
  %v644 = vpop.permute.xlu0 %643
  %v647 = vsel %vm174, %v642, 0
  %649 = vmatpush.msra.mxu0 0.0
  %650 = vmatpush.msra.mxu0 0.0
  %651 = vmatpush.msra.mxu0 0.0
  %652 = vmatpush.msra.mxu0 0.0
  %653 = vmatpush.msra.mxu0 0.0
  %654 = vmatpush.msra.mxu0 0.0
  %655 = vmatpush.msra.mxu0 0.0
  %656 = vmatpush.msra.mxu0 0.0
  %657 = vmatpush.msra.mxu0 0.0
  %658 = vmatpush.msra.mxu0 0.0
  %659 = vmatpush.msra.mxu0 0.0
  %660 = vmatpush.msra.mxu0 0.0
  %661 = vmatpush.msra.mxu0 0.0
  %662 = vmatpush.msra.mxu0 0.0
  %663 = vmatpush.msra.mxu0 0.0
  %664 = vmatpush.msra.mxu0 %v644
  %665 = vmatmul.f32.gmra.mxu0 %v647
  %v666 = vpop.f32.mrf.mxu0
  %v667 = vadd.f32 0.0, %v666
  %668 = vdwg.mxu0
  %669 = vrot.lane.b32.xlu0 %v169, 112
  %v670 = vpop.permute.xlu0 %669
  %671 = vrot.lane.b32.xlu0 %v169, 80
  %v672 = vpop.permute.xlu0 %671
  %v673 = vsel %vm174, %v670, 0
  %v675 = vsel %vm174, %v672, 0
  %677 = vmatpush.xpose.msra.mxu0 0.0
  %678 = vmatpush.xpose.msra.mxu0 0.0
  %679 = vmatpush.xpose.msra.mxu0 0.0
  %680 = vmatpush.xpose.msra.mxu0 0.0
  %681 = vmatpush.xpose.msra.mxu0 0.0
  %682 = vmatpush.xpose.msra.mxu0 0.0
  %683 = vmatpush.xpose.msra.mxu0 0.0
  %684 = vmatpush.xpose.msra.mxu0 0.0
  %685 = vmatpush.xpose.msra.mxu0 0.0
  %686 = vmatpush.xpose.msra.mxu0 0.0
  %687 = vmatpush.xpose.msra.mxu0 0.0
  %688 = vmatpush.xpose.msra.mxu0 0.0
  %689 = vmatpush.xpose.msra.mxu0 0.0
  %690 = vmatpush.xpose.msra.mxu0 0.0
  %691 = vmatpush.xpose.msra.mxu0 0.0
  %692 = vmatpush.xpose.msra.mxu0 %v675
  %693 = vmatmul.f32.gmra.mxu0 %v673
  %v694 = vpop.f32.mrf.mxu0
  %v695 = vadd.f32 0.0, %v694
  %696 = vdwg.mxu0
  %v697 = vmul.f32 %v695, 0.35355338
  %v698 = vadd.f32 %v697, %v537
  %v699 = vsel %vm174, %v698, -inf
  %700 = vmax.xlane.f32.xlu0 %v699
  %v701 = vpop.xlane.xlu0 %700
  %v702 = vsub.f32 %v698, %v701
  %v703 = vmul.f32 %v702, 1.442695
  %v704 = vpow.pop %v703
  %v705 = vsel %vm174, %v704, 0.0
  %706 = vadd.xlane.f32.xlu0 %v705
  %v707 = vpop.xlane.xlu0 %706
  %v708 = vrcp.pop %v707
  %v709 = vmul.f32 %v707, %v708
  %v710 = vsub.f32 1.0, %v709
  %v711 = vmul.f32 %v708, %v710
  %v712 = vadd.f32 %v708, %v711
  %vm713 = vweird.f32 %v707
  %vm714 = vweird.f32 %v708
  %vm715 = vmor %vm713, %vm714
  %v716 = vsel %vm715, %v708, %v712
  %v717 = vand.u32 2147483647, %v707
  %vm718 = vcmp.eq.f32.partialorder %v717, 8.507059e+37
  %v719 = vand.u32 %v707, 2147483648
  %v720 = vor.u32 1.1754944e-38, %v719
  %v721 = vsel %vm718, %v720, %v716
  %v722 = vmul.f32 %v704, %v721
  %723 = vrot.lane.b32.xlu0 %v169, 48
  %v724 = vpop.permute.xlu0 %723
  %v727 = vsel %vm174, %v722, 0
  %729 = vmatpush.msra.mxu0 0.0
  %730 = vmatpush.msra.mxu0 0.0
  %731 = vmatpush.msra.mxu0 0.0
  %732 = vmatpush.msra.mxu0 0.0
  %733 = vmatpush.msra.mxu0 0.0
  %734 = vmatpush.msra.mxu0 0.0
  %735 = vmatpush.msra.mxu0 0.0
  %736 = vmatpush.msra.mxu0 0.0
  %737 = vmatpush.msra.mxu0 0.0
  %738 = vmatpush.msra.mxu0 0.0
  %739 = vmatpush.msra.mxu0 0.0
  %740 = vmatpush.msra.mxu0 0.0
  %741 = vmatpush.msra.mxu0 0.0
  %742 = vmatpush.msra.mxu0 0.0
  %743 = vmatpush.msra.mxu0 0.0
  %744 = vmatpush.msra.mxu0 %v724
  %745 = vmatmul.f32.gmra.mxu0 %v727
  %v746 = vpop.f32.mrf.mxu0
  %v747 = vadd.f32 0.0, %v746
  %748 = vdwg.mxu0
  %749 = vrot.lane.b32.xlu0 %v169, 104
  %v750 = vpop.permute.xlu0 %749
  %751 = vrot.lane.b32.xlu0 %v169, 72
  %v752 = vpop.permute.xlu0 %751
  %v753 = vsel %vm174, %v750, 0
  %v755 = vsel %vm174, %v752, 0
  %757 = vmatpush.xpose.msra.mxu0 0.0
  %758 = vmatpush.xpose.msra.mxu0 0.0
  %759 = vmatpush.xpose.msra.mxu0 0.0
  %760 = vmatpush.xpose.msra.mxu0 0.0
  %761 = vmatpush.xpose.msra.mxu0 0.0
  %762 = vmatpush.xpose.msra.mxu0 0.0
  %763 = vmatpush.xpose.msra.mxu0 0.0
  %764 = vmatpush.xpose.msra.mxu0 0.0
  %765 = vmatpush.xpose.msra.mxu0 0.0
  %766 = vmatpush.xpose.msra.mxu0 0.0
  %767 = vmatpush.xpose.msra.mxu0 0.0
  %768 = vmatpush.xpose.msra.mxu0 0.0
  %769 = vmatpush.xpose.msra.mxu0 0.0
  %770 = vmatpush.xpose.msra.mxu0 0.0
  %771 = vmatpush.xpose.msra.mxu0 0.0
  %772 = vmatpush.xpose.msra.mxu0 %v755
  %773 = vmatmul.f32.gmra.mxu0 %v753
  %v774 = vpop.f32.mrf.mxu0
  %v775 = vadd.f32 0.0, %v774
  %776 = vdwg.mxu0
  %v777 = vmul.f32 %v775, 0.35355338
  %v778 = vadd.f32 %v777, %v537
  %v779 = vsel %vm174, %v778, -inf
  %780 = vmax.xlane.f32.xlu0 %v779
  %v781 = vpop.xlane.xlu0 %780
  %v782 = vsub.f32 %v778, %v781
  %v783 = vmul.f32 %v782, 1.442695
  %v784 = vpow.pop %v783
  %v785 = vsel %vm174, %v784, 0.0
  %786 = vadd.xlane.f32.xlu0 %v785
  %v787 = vpop.xlane.xlu0 %786
  %v788 = vrcp.pop %v787
  %v789 = vmul.f32 %v787, %v788
  %v790 = vsub.f32 1.0, %v789
  %v791 = vmul.f32 %v788, %v790
  %v792 = vadd.f32 %v788, %v791
  %vm793 = vweird.f32 %v787
  %vm794 = vweird.f32 %v788
  %vm795 = vmor %vm793, %vm794
  %v796 = vsel %vm795, %v788, %v792
  %v797 = vand.u32 2147483647, %v787
  %vm798 = vcmp.eq.f32.partialorder %v797, 8.507059e+37
  %v799 = vand.u32 %v787, 2147483648
  %v800 = vor.u32 1.1754944e-38, %v799
  %v801 = vsel %vm798, %v800, %v796
  %v802 = vmul.f32 %v784, %v801
  %803 = vrot.lane.b32.xlu0 %v169, 40
  %v804 = vpop.permute.xlu0 %803
  %v807 = vsel %vm174, %v802, 0
  %809 = vmatpush.msra.mxu0 0.0
  %810 = vmatpush.msra.mxu0 0.0
  %811 = vmatpush.msra.mxu0 0.0
  %812 = vmatpush.msra.mxu0 0.0
  %813 = vmatpush.msra.mxu0 0.0
  %814 = vmatpush.msra.mxu0 0.0
  %815 = vmatpush.msra.mxu0 0.0
  %816 = vmatpush.msra.mxu0 0.0
  %817 = vmatpush.msra.mxu0 0.0
  %818 = vmatpush.msra.mxu0 0.0
  %819 = vmatpush.msra.mxu0 0.0
  %820 = vmatpush.msra.mxu0 0.0
  %821 = vmatpush.msra.mxu0 0.0
  %822 = vmatpush.msra.mxu0 0.0
  %823 = vmatpush.msra.mxu0 0.0
  %824 = vmatpush.msra.mxu0 %v804
  %825 = vmatmul.f32.gmra.mxu0 %v807
  %v826 = vpop.f32.mrf.mxu0
  %v827 = vadd.f32 0.0, %v826
  %828 = vdwg.mxu0
  %830 = vrot.lane.b32.xlu0 %v667, 8
  %v831 = vpop.permute.xlu0 %830
  %834 = vrot.lane.b32.xlu0 %v747, 16
  %v835 = vpop.permute.xlu0 %834
  %838 = vrot.lane.b32.xlu0 %v827, 24
  %v839 = vpop.permute.xlu0 %838
  %v841 = vsel %vm174, %v587, %v831
  %v842 = vsel %vm505, %v841, %v835
  %v843 = vsel %vm507, %v842, %v839
  %v844 = vld [vmem:[%s6] sm:$0xff]
  %v845 = vld [vmem:[%s6 + $0x8] sm:$0xff]
  %v846 = vld [vmem:[%s6 + $0x10] sm:$0xff]
  %v847 = vld [vmem:[%s6 + $0x18] sm:$0xff]
  %v848 = vld [vmem:[%s7] sm:$0x1]
  %v850 = vperm.slane %v848, 0
  %v853 = vsel %vm72, %v508, 0
  %v856 = vsel %vm72, %v843, 0
  %858 = vmatpush.msra.mxu0 0.0
  %859 = vmatpush.msra.mxu0 0.0
  %860 = vmatpush.msra.mxu0 0.0
  %861 = vmatpush.msra.mxu0 0.0
  %862 = vmatpush.msra.mxu0 0.0
  %863 = vmatpush.msra.mxu0 0.0
  %864 = vmatpush.msra.mxu0 0.0
  %865 = vmatpush.msra.mxu0 0.0
  %866 = vmatpush.msra.mxu0 0.0
  %867 = vmatpush.msra.mxu0 0.0
  %868 = vmatpush.msra.mxu0 0.0
  %869 = vmatpush.msra.mxu0 0.0
  %870 = vmatpush.msra.mxu0 %v847
  %871 = vmatpush.msra.mxu0 %v846
  %872 = vmatpush.msra.mxu0 %v845
  %873 = vmatpush.msra.mxu0 %v844
  %874 = vmatmul.f32.gmra.mxu0 %v853
  %v875 = vpop.f32.mrf.mxu0
  %v876 = vadd.f32 %v850, %v875
  %877 = vmatmul.f32.gmra.mxu0 %v856
  %v878 = vpop.f32.mrf.mxu0
  %v879 = vadd.f32 %v850, %v878
  %880 = vdwg.mxu0
  %v881 = vadd.f32 %v876, %v132
  %v882 = vadd.f32 %v879, %v133
  %v883 = vld [vmem:[%s8] sm:$0x1]
  %v884 = vld [vmem:[%s9] sm:$0x1]
  %v885 = vsel %vm72, %v881, 0.0
  %886 = vadd.xlane.f32.xlu0 %v885
  %v887 = vpop.xlane.xlu0 %886
  %v888 = vsel %vm72, %v882, 0.0
  %889 = vadd.xlane.f32.xlu0 %v888
  %v890 = vpop.xlane.xlu0 %889
  %v891 = vmul.f32 %v887, %v85
  %v892 = vmul.f32 %v890, %v85
  %v893 = vsub.f32 %v881, %v891
  %v894 = vsub.f32 %v882, %v892
  %v895 = vmul.f32 %v893, %v893
  %v896 = vmul.f32 %v894, %v894
  %v897 = vsel %vm72, %v895, 0.0
  %898 = vadd.xlane.f32.xlu0 %v897
  %v899 = vpop.xlane.xlu0 %898
  %v900 = vsel %vm72, %v896, 0.0
  %901 = vadd.xlane.f32.xlu0 %v900
  %v902 = vpop.xlane.xlu0 %901
  %v903 = vmul.f32 %v899, %v85
  %v904 = vmul.f32 %v902, %v85
  %v905 = vadd.f32 %v903, 1e-12
  %v906 = vadd.f32 %v904, 1e-12
  %v907 = vrsqrt.pop %v905
  %v908 = vmul.f32 %v907, %v905
  %v909 = vmul.f32 %v908, %v907
  %v910 = vmul.f32 0.5, %v909
  %v911 = vsub.f32 1.5, %v910
  %v912 = vmul.f32 %v907, %v911
  %vm913 = vweird.f32 %v905
  %vm914 = vweird.f32 %v907
  %vm915 = vmor %vm913, %vm914
  %v916 = vsel %vm915, %v907, %v912
  %v917 = vrsqrt.pop %v906
  %v918 = vmul.f32 %v917, %v906
  %v919 = vmul.f32 %v918, %v917
  %v920 = vmul.f32 0.5, %v919
  %v921 = vsub.f32 1.5, %v920
  %v922 = vmul.f32 %v917, %v921
  %vm923 = vweird.f32 %v906
  %vm924 = vweird.f32 %v917
  %vm925 = vmor %vm923, %vm924
  %v926 = vsel %vm925, %v917, %v922
  %v927 = vmul.f32 %v893, %v916
  %v928 = vmul.f32 %v894, %v926
  %v930 = vperm.slane %v883, 0
  %v932 = vmul.f32 %v927, %v930
  %v933 = vmul.f32 %v928, %v930
  %v935 = vperm.slane %v884, 0
  %v937 = vadd.f32 %v932, %v935
  %v938 = vadd.f32 %v933, %v935
  %v939 = vld [vmem:[%s10] sm:$0xff]
  %v940 = vld [vmem:[%s10 + $0x8] sm:$0xff]
  %v941 = vld [vmem:[%s10 + $0x10] sm:$0xff]
  %v942 = vld [vmem:[%s10 + $0x18] sm:$0xff]
  %v943 = vld [vmem:[%s11] sm:$0x1]
  %v945 = vperm.slane %v943, 0
  %v948 = vsel %vm72, %v937, 0
  %v951 = vsel %vm72, %v938, 0
  %953 = vmatpush.msra.mxu0 0.0
  %954 = vmatpush.msra.mxu0 0.0
  %955 = vmatpush.msra.mxu0 0.0
  %956 = vmatpush.msra.mxu0 0.0
  %957 = vmatpush.msra.mxu0 0.0
  %958 = vmatpush.msra.mxu0 0.0
  %959 = vmatpush.msra.mxu0 0.0
  %960 = vmatpush.msra.mxu0 0.0
  %961 = vmatpush.msra.mxu0 0.0
  %962 = vmatpush.msra.mxu0 0.0
  %963 = vmatpush.msra.mxu0 0.0
  %964 = vmatpush.msra.mxu0 0.0
  %965 = vmatpush.msra.mxu0 %v942
  %966 = vmatpush.msra.mxu0 %v941
  %967 = vmatpush.msra.mxu0 %v940
  %968 = vmatpush.msra.mxu0 %v939
  %969 = vmatmul.f32.gmra.mxu0 %v948
  %v970 = vpop.f32.mrf.mxu0
  %v971 = vadd.f32 %v945, %v970
  %972 = vmatmul.f32.gmra.mxu0 %v951
  %v973 = vpop.f32.mrf.mxu0
  %v974 = vadd.f32 %v945, %v973
  %975 = vdwg.mxu0
  %v976 = vmul.f32 %v971, 0.5
  %v977 = vmul.f32 %v974, 0.5
  %v978 = vmul.f32 %v971, 0.044715
  %v979 = vmul.f32 %v974, 0.044715
  %v980 = vmul.f32 %v978, %v971
  %v981 = vmul.f32 %v979, %v974
  %v982 = vmul.f32 %v980, %v971
  %v983 = vmul.f32 %v981, %v974
  %v984 = vadd.f32 %v971, %v982
  %v985 = vadd.f32 %v974, %v983
  %v986 = vmul.f32 %v984, 0.7978846
  %v987 = vmul.f32 %v985, 0.7978846
  %v988 = vtanh.pop %v986
  %v989 = vtanh.pop %v987
  %v990 = vadd.f32 %v988, 1.0
  %v991 = vadd.f32 %v989, 1.0
  %v992 = vmul.f32 %v976, %v990
  %v993 = vmul.f32 %v977, %v991
  %v994 = vld [vmem:[%s12] sm:$0xff]
  %v995 = vld [vmem:[%s12 + $0x8] sm:$0xff]
  %v996 = vld [vmem:[%s12 + $0x10] sm:$0xff]
  %v997 = vld [vmem:[%s12 + $0x18] sm:$0xff]
  %v998 = vld [vmem:[%s12 + $0x20] sm:$0xff]
  %v999 = vld [vmem:[%s12 + $0x28] sm:$0xff]
  %v1000 = vld [vmem:[%s12 + $0x30] sm:$0xff]
  %v1001 = vld [vmem:[%s12 + $0x38] sm:$0xff]
  %v1002 = vld [vmem:[%s13] sm:$0x1]
  %v1004 = vperm.slane %v1002, 0
  %vm1006 = vcmask 523264
  %v1008 = vsel %vm1006, %v992, 0
  %v1011 = vsel %vm1006, %v993, 0
  %1013 = vmatpush.msra.mxu0 0.0
  %1014 = vmatpush.msra.mxu0 0.0
  %1015 = vmatpush.msra.mxu0 0.0
  %1016 = vmatpush.msra.mxu0 0.0
  %1017 = vmatpush.msra.mxu0 0.0
  %1018 = vmatpush.msra.mxu0 0.0
  %1019 = vmatpush.msra.mxu0 0.0
  %1020 = vmatpush.msra.mxu0 0.0
  %1021 = vmatpush.msra.mxu0 %v1001
  %1022 = vmatpush.msra.mxu0 %v1000
  %1023 = vmatpush.msra.mxu0 %v999
  %1024 = vmatpush.msra.mxu0 %v998
  %1025 = vmatpush.msra.mxu0 %v997
  %1026 = vmatpush.msra.mxu0 %v996
  %1027 = vmatpush.msra.mxu0 %v995
  %1028 = vmatpush.msra.mxu0 %v994
  %1029 = vmatmul.f32.gmra.mxu0 %v1008
  %v1030 = vpop.f32.mrf.mxu0
  %v1031 = vadd.f32 %v1004, %v1030
  %1032 = vmatmul.f32.gmra.mxu0 %v1011
  %v1033 = vpop.f32.mrf.mxu0
  %v1034 = vadd.f32 %v1004, %v1033
  %1035 = vdwg.mxu0
  %v1036 = vadd.f32 %v1031, %v937
  %v1037 = vadd.f32 %v1034, %v938
  %v1038 = vld [vmem:[%s14] sm:$0x1]
  %v1039 = vld [vmem:[%s15] sm:$0x1]
  %v1040 = vsel %vm72, %v1036, 0.0
  %1041 = vadd.xlane.f32.xlu0 %v1040
  %v1042 = vpop.xlane.xlu0 %1041
  %v1043 = vsel %vm72, %v1037, 0.0
  %1044 = vadd.xlane.f32.xlu0 %v1043
  %v1045 = vpop.xlane.xlu0 %1044
  %v1046 = vmul.f32 %v1042, %v85
  %v1047 = vmul.f32 %v1045, %v85
  %v1048 = vsub.f32 %v1036, %v1046
  %v1049 = vsub.f32 %v1037, %v1047
  %v1050 = vmul.f32 %v1048, %v1048
  %v1051 = vmul.f32 %v1049, %v1049
  %v1052 = vsel %vm72, %v1050, 0.0
  %1053 = vadd.xlane.f32.xlu0 %v1052
  %v1054 = vpop.xlane.xlu0 %1053
  %v1055 = vsel %vm72, %v1051, 0.0
  %1056 = vadd.xlane.f32.xlu0 %v1055
  %v1057 = vpop.xlane.xlu0 %1056
  %v1058 = vmul.f32 %v1054, %v85
  %v1059 = vmul.f32 %v1057, %v85
  %v1060 = vadd.f32 %v1058, 1e-12
  %v1061 = vadd.f32 %v1059, 1e-12
  %v1062 = vrsqrt.pop %v1060
  %v1063 = vmul.f32 %v1062, %v1060
  %v1064 = vmul.f32 %v1063, %v1062
  %v1065 = vmul.f32 0.5, %v1064
  %v1066 = vsub.f32 1.5, %v1065
  %v1067 = vmul.f32 %v1062, %v1066
  %vm1068 = vweird.f32 %v1060
  %vm1069 = vweird.f32 %v1062
  %vm1070 = vmor %vm1068, %vm1069
  %v1071 = vsel %vm1070, %v1062, %v1067
  %v1072 = vrsqrt.pop %v1061
  %v1073 = vmul.f32 %v1072, %v1061
  %v1074 = vmul.f32 %v1073, %v1072
  %v1075 = vmul.f32 0.5, %v1074
  %v1076 = vsub.f32 1.5, %v1075
  %v1077 = vmul.f32 %v1072, %v1076
  %vm1078 = vweird.f32 %v1061
  %vm1079 = vweird.f32 %v1072
  %vm1080 = vmor %vm1078, %vm1079
  %v1081 = vsel %vm1080, %v1072, %v1077
  %v1082 = vmul.f32 %v1048, %v1071
  %v1083 = vmul.f32 %v1049, %v1081
  %v1085 = vperm.slane %v1038, 0
  %v1087 = vmul.f32 %v1082, %v1085
  %v1088 = vmul.f32 %v1083, %v1085
  %v1090 = vperm.slane %v1039, 0
  %v1092 = vadd.f32 %v1087, %v1090
  %v1093 = vadd.f32 %v1088, %v1090
  %s1094 = scalar_lea.vmem %s4, 32
  %v1095 = vld [vmem:[%s1094] sm:$0xff]
  %v1096 = vld [vmem:[%s1094 + $0x8] sm:$0xff]
  %v1097 = vld [vmem:[%s1094 + $0x10] sm:$0xff]
  %v1098 = vld [vmem:[%s1094 + $0x18] sm:$0xff]
  %s1099 = scalar_lea.vmem %s5, 1
  %v1100 = vld [vmem:[%s1099] sm:$0x1]
  %v1102 = vperm.slane %v1100, 0
  %v1105 = vsel %vm72, %v1092, 0
  %v1108 = vsel %vm72, %v1093, 0
  %1110 = vmatpush.msra.mxu0 0.0
  %1111 = vmatpush.msra.mxu0 0.0
  %1112 = vmatpush.msra.mxu0 0.0
  %1113 = vmatpush.msra.mxu0 0.0
  %1114 = vmatpush.msra.mxu0 0.0
  %1115 = vmatpush.msra.mxu0 0.0
  %1116 = vmatpush.msra.mxu0 0.0
  %1117 = vmatpush.msra.mxu0 0.0
  %1118 = vmatpush.msra.mxu0 0.0
  %1119 = vmatpush.msra.mxu0 0.0
  %1120 = vmatpush.msra.mxu0 0.0
  %1121 = vmatpush.msra.mxu0 0.0
  %1122 = vmatpush.msra.mxu0 %v1098
  %1123 = vmatpush.msra.mxu0 %v1097
  %1124 = vmatpush.msra.mxu0 %v1096
  %1125 = vmatpush.msra.mxu0 %v1095
  %1126 = vmatmul.f32.gmra.mxu0 %v1105
  %v1127 = vpop.f32.mrf.mxu0
  %v1128 = vadd.f32 %v1102, %v1127
  %1129 = vmatmul.f32.gmra.mxu0 %v1108
  %v1130 = vpop.f32.mrf.mxu0
  %v1131 = vadd.f32 %v1102, %v1130
  %1132 = vdwg.mxu0
  %1134 = vrot.lane.b32.xlu0 %v1128, 96
  %v1135 = vpop.permute.xlu0 %1134
  %v1136 = vsel %vm174, %v1128, 0
  %v1138 = vsel %vm174, %v1135, 0
  %1140 = vmatpush.xpose.msra.mxu0 0.0
  %1141 = vmatpush.xpose.msra.mxu0 0.0
  %1142 = vmatpush.xpose.msra.mxu0 0.0
  %1143 = vmatpush.xpose.msra.mxu0 0.0
  %1144 = vmatpush.xpose.msra.mxu0 0.0
  %1145 = vmatpush.xpose.msra.mxu0 0.0
  %1146 = vmatpush.xpose.msra.mxu0 0.0
  %1147 = vmatpush.xpose.msra.mxu0 0.0
  %1148 = vmatpush.xpose.msra.mxu0 0.0
  %1149 = vmatpush.xpose.msra.mxu0 0.0
  %1150 = vmatpush.xpose.msra.mxu0 0.0
  %1151 = vmatpush.xpose.msra.mxu0 0.0
  %1152 = vmatpush.xpose.msra.mxu0 0.0
  %1153 = vmatpush.xpose.msra.mxu0 0.0
  %1154 = vmatpush.xpose.msra.mxu0 0.0
  %1155 = vmatpush.xpose.msra.mxu0 %v1138
  %1156 = vmatmul.f32.gmra.mxu0 %v1136
  %v1157 = vpop.f32.mrf.mxu0
  %v1158 = vadd.f32 0.0, %v1157
  %1159 = vdwg.mxu0
  %v1160 = vmul.f32 %v1158, 0.35355338
  %v1161 = vadd.f32 %v1160, %v200
  %v1162 = vsel %vm174, %v1161, -inf
  %1163 = vmax.xlane.f32.xlu0 %v1162
  %v1164 = vpop.xlane.xlu0 %1163
  %v1165 = vsub.f32 %v1161, %v1164
  %v1166 = vmul.f32 %v1165, 1.442695
  %v1167 = vpow.pop %v1166
  %v1168 = vsel %vm174, %v1167, 0.0
  %1169 = vadd.xlane.f32.xlu0 %v1168
  %v1170 = vpop.xlane.xlu0 %1169
  %v1171 = vrcp.pop %v1170
  %v1172 = vmul.f32 %v1170, %v1171
  %v1173 = vsub.f32 1.0, %v1172
  %v1174 = vmul.f32 %v1171, %v1173
  %v1175 = vadd.f32 %v1171, %v1174
  %vm1176 = vweird.f32 %v1170
  %vm1177 = vweird.f32 %v1171
  %vm1178 = vmor %vm1176, %vm1177
  %v1179 = vsel %vm1178, %v1171, %v1175
  %v1180 = vand.u32 2147483647, %v1170
  %vm1181 = vcmp.eq.f32.partialorder %v1180, 8.507059e+37
  %v1182 = vand.u32 %v1170, 2147483648
  %v1183 = vor.u32 1.1754944e-38, %v1182
  %v1184 = vsel %vm1181, %v1183, %v1179
  %v1185 = vmul.f32 %v1167, %v1184
  %1186 = vrot.lane.b32.xlu0 %v1128, 64
  %v1187 = vpop.permute.xlu0 %1186
  %v1190 = vsel %vm174, %v1185, 0
  %1192 = vmatpush.msra.mxu0 0.0
  %1193 = vmatpush.msra.mxu0 0.0
  %1194 = vmatpush.msra.mxu0 0.0
  %1195 = vmatpush.msra.mxu0 0.0
  %1196 = vmatpush.msra.mxu0 0.0
  %1197 = vmatpush.msra.mxu0 0.0
  %1198 = vmatpush.msra.mxu0 0.0
  %1199 = vmatpush.msra.mxu0 0.0
  %1200 = vmatpush.msra.mxu0 0.0
  %1201 = vmatpush.msra.mxu0 0.0
  %1202 = vmatpush.msra.mxu0 0.0
  %1203 = vmatpush.msra.mxu0 0.0
  %1204 = vmatpush.msra.mxu0 0.0
  %1205 = vmatpush.msra.mxu0 0.0
  %1206 = vmatpush.msra.mxu0 0.0
  %1207 = vmatpush.msra.mxu0 %v1187
  %1208 = vmatmul.f32.gmra.mxu0 %v1190
  %v1209 = vpop.f32.mrf.mxu0
  %v1210 = vadd.f32 0.0, %v1209
  %1211 = vdwg.mxu0
  %1212 = vrot.lane.b32.xlu0 %v1128, 120
  %v1213 = vpop.permute.xlu0 %1212
  %1214 = vrot.lane.b32.xlu0 %v1128, 88
  %v1215 = vpop.permute.xlu0 %1214
  %v1216 = vsel %vm174, %v1213, 0
  %v1218 = vsel %vm174, %v1215, 0
  %1220 = vmatpush.xpose.msra.mxu0 0.0
  %1221 = vmatpush.xpose.msra.mxu0 0.0
  %1222 = vmatpush.xpose.msra.mxu0 0.0
  %1223 = vmatpush.xpose.msra.mxu0 0.0
  %1224 = vmatpush.xpose.msra.mxu0 0.0
  %1225 = vmatpush.xpose.msra.mxu0 0.0
  %1226 = vmatpush.xpose.msra.mxu0 0.0
  %1227 = vmatpush.xpose.msra.mxu0 0.0
  %1228 = vmatpush.xpose.msra.mxu0 0.0
  %1229 = vmatpush.xpose.msra.mxu0 0.0
  %1230 = vmatpush.xpose.msra.mxu0 0.0
  %1231 = vmatpush.xpose.msra.mxu0 0.0
  %1232 = vmatpush.xpose.msra.mxu0 0.0
  %1233 = vmatpush.xpose.msra.mxu0 0.0
  %1234 = vmatpush.xpose.msra.mxu0 0.0
  %1235 = vmatpush.xpose.msra.mxu0 %v1218
  %1236 = vmatmul.f32.gmra.mxu0 %v1216
  %v1237 = vpop.f32.mrf.mxu0
  %v1238 = vadd.f32 0.0, %v1237
  %1239 = vdwg.mxu0
  %v1240 = vmul.f32 %v1238, 0.35355338
  %v1241 = vadd.f32 %v1240, %v200
  %v1242 = vsel %vm174, %v1241, -inf
  %1243 = vmax.xlane.f32.xlu0 %v1242
  %v1244 = vpop.xlane.xlu0 %1243
  %v1245 = vsub.f32 %v1241, %v1244
  %v1246 = vmul.f32 %v1245, 1.442695
  %v1247 = vpow.pop %v1246
  %v1248 = vsel %vm174, %v1247, 0.0
  %1249 = vadd.xlane.f32.xlu0 %v1248
  %v1250 = vpop.xlane.xlu0 %1249
  %v1251 = vrcp.pop %v1250
  %v1252 = vmul.f32 %v1250, %v1251
  %v1253 = vsub.f32 1.0, %v1252
  %v1254 = vmul.f32 %v1251, %v1253
  %v1255 = vadd.f32 %v1251, %v1254
  %vm1256 = vweird.f32 %v1250
  %vm1257 = vweird.f32 %v1251
  %vm1258 = vmor %vm1256, %vm1257
  %v1259 = vsel %vm1258, %v1251, %v1255
  %v1260 = vand.u32 2147483647, %v1250
  %vm1261 = vcmp.eq.f32.partialorder %v1260, 8.507059e+37
  %v1262 = vand.u32 %v1250, 2147483648
  %v1263 = vor.u32 1.1754944e-38, %v1262
  %v1264 = vsel %vm1261, %v1263, %v1259
  %v1265 = vmul.f32 %v1247, %v1264
  %1266 = vrot.lane.b32.xlu0 %v1128, 56
  %v1267 = vpop.permute.xlu0 %1266
  %v1270 = vsel %vm174, %v1265, 0
  %1272 = vmatpush.msra.mxu0 0.0
  %1273 = vmatpush.msra.mxu0 0.0
  %1274 = vmatpush.msra.mxu0 0.0
  %1275 = vmatpush.msra.mxu0 0.0
  %1276 = vmatpush.msra.mxu0 0.0
  %1277 = vmatpush.msra.mxu0 0.0
  %1278 = vmatpush.msra.mxu0 0.0
  %1279 = vmatpush.msra.mxu0 0.0
  %1280 = vmatpush.msra.mxu0 0.0
  %1281 = vmatpush.msra.mxu0 0.0
  %1282 = vmatpush.msra.mxu0 0.0
  %1283 = vmatpush.msra.mxu0 0.0
  %1284 = vmatpush.msra.mxu0 0.0
  %1285 = vmatpush.msra.mxu0 0.0
  %1286 = vmatpush.msra.mxu0 0.0
  %1287 = vmatpush.msra.mxu0 %v1267
  %1288 = vmatmul.f32.gmra.mxu0 %v1270
  %v1289 = vpop.f32.mrf.mxu0
  %v1290 = vadd.f32 0.0, %v1289
  %1291 = vdwg.mxu0
  %1292 = vrot.lane.b32.xlu0 %v1128, 112
  %v1293 = vpop.permute.xlu0 %1292
  %1294 = vrot.lane.b32.xlu0 %v1128, 80
  %v1295 = vpop.permute.xlu0 %1294
  %v1296 = vsel %vm174, %v1293, 0
  %v1298 = vsel %vm174, %v1295, 0
  %1300 = vmatpush.xpose.msra.mxu0 0.0
  %1301 = vmatpush.xpose.msra.mxu0 0.0
  %1302 = vmatpush.xpose.msra.mxu0 0.0
  %1303 = vmatpush.xpose.msra.mxu0 0.0
  %1304 = vmatpush.xpose.msra.mxu0 0.0
  %1305 = vmatpush.xpose.msra.mxu0 0.0
  %1306 = vmatpush.xpose.msra.mxu0 0.0
  %1307 = vmatpush.xpose.msra.mxu0 0.0
  %1308 = vmatpush.xpose.msra.mxu0 0.0
  %1309 = vmatpush.xpose.msra.mxu0 0.0
  %1310 = vmatpush.xpose.msra.mxu0 0.0
  %1311 = vmatpush.xpose.msra.mxu0 0.0
  %1312 = vmatpush.xpose.msra.mxu0 0.0
  %1313 = vmatpush.xpose.msra.mxu0 0.0
  %1314 = vmatpush.xpose.msra.mxu0 0.0
  %1315 = vmatpush.xpose.msra.mxu0 %v1298
  %1316 = vmatmul.f32.gmra.mxu0 %v1296
  %v1317 = vpop.f32.mrf.mxu0
  %v1318 = vadd.f32 0.0, %v1317
  %1319 = vdwg.mxu0
  %v1320 = vmul.f32 %v1318, 0.35355338
  %v1321 = vadd.f32 %v1320, %v200
  %v1322 = vsel %vm174, %v1321, -inf
  %1323 = vmax.xlane.f32.xlu0 %v1322
  %v1324 = vpop.xlane.xlu0 %1323
  %v1325 = vsub.f32 %v1321, %v1324
  %v1326 = vmul.f32 %v1325, 1.442695
  %v1327 = vpow.pop %v1326
  %v1328 = vsel %vm174, %v1327, 0.0
  %1329 = vadd.xlane.f32.xlu0 %v1328
  %v1330 = vpop.xlane.xlu0 %1329
  %v1331 = vrcp.pop %v1330
  %v1332 = vmul.f32 %v1330, %v1331
  %v1333 = vsub.f32 1.0, %v1332
  %v1334 = vmul.f32 %v1331, %v1333
  %v1335 = vadd.f32 %v1331, %v1334
  %vm1336 = vweird.f32 %v1330
  %vm1337 = vweird.f32 %v1331
  %vm1338 = vmor %vm1336, %vm1337
  %v1339 = vsel %vm1338, %v1331, %v1335
  %v1340 = vand.u32 2147483647, %v1330
  %vm1341 = vcmp.eq.f32.partialorder %v1340, 8.507059e+37
  %v1342 = vand.u32 %v1330, 2147483648
  %v1343 = vor.u32 1.1754944e-38, %v1342
  %v1344 = vsel %vm1341, %v1343, %v1339
  %v1345 = vmul.f32 %v1327, %v1344
  %1346 = vrot.lane.b32.xlu0 %v1128, 48
  %v1347 = vpop.permute.xlu0 %1346
  %v1350 = vsel %vm174, %v1345, 0
  %1352 = vmatpush.msra.mxu0 0.0
  %1353 = vmatpush.msra.mxu0 0.0
  %1354 = vmatpush.msra.mxu0 0.0
  %1355 = vmatpush.msra.mxu0 0.0
  %1356 = vmatpush.msra.mxu0 0.0
  %1357 = vmatpush.msra.mxu0 0.0
  %1358 = vmatpush.msra.mxu0 0.0
  %1359 = vmatpush.msra.mxu0 0.0
  %1360 = vmatpush.msra.mxu0 0.0
  %1361 = vmatpush.msra.mxu0 0.0
  %1362 = vmatpush.msra.mxu0 0.0
  %1363 = vmatpush.msra.mxu0 0.0
  %1364 = vmatpush.msra.mxu0 0.0
  %1365 = vmatpush.msra.mxu0 0.0
  %1366 = vmatpush.msra.mxu0 0.0
  %1367 = vmatpush.msra.mxu0 %v1347
  %1368 = vmatmul.f32.gmra.mxu0 %v1350
  %v1369 = vpop.f32.mrf.mxu0
  %v1370 = vadd.f32 0.0, %v1369
  %1371 = vdwg.mxu0
  %1372 = vrot.lane.b32.xlu0 %v1128, 104
  %v1373 = vpop.permute.xlu0 %1372
  %1374 = vrot.lane.b32.xlu0 %v1128, 72
  %v1375 = vpop.permute.xlu0 %1374
  %v1376 = vsel %vm174, %v1373, 0
  %v1378 = vsel %vm174, %v1375, 0
  %1380 = vmatpush.xpose.msra.mxu0 0.0
  %1381 = vmatpush.xpose.msra.mxu0 0.0
  %1382 = vmatpush.xpose.msra.mxu0 0.0
  %1383 = vmatpush.xpose.msra.mxu0 0.0
  %1384 = vmatpush.xpose.msra.mxu0 0.0
  %1385 = vmatpush.xpose.msra.mxu0 0.0
  %1386 = vmatpush.xpose.msra.mxu0 0.0
  %1387 = vmatpush.xpose.msra.mxu0 0.0
  %1388 = vmatpush.xpose.msra.mxu0 0.0
  %1389 = vmatpush.xpose.msra.mxu0 0.0
  %1390 = vmatpush.xpose.msra.mxu0 0.0
  %1391 = vmatpush.xpose.msra.mxu0 0.0
  %1392 = vmatpush.xpose.msra.mxu0 0.0
  %1393 = vmatpush.xpose.msra.mxu0 0.0
  %1394 = vmatpush.xpose.msra.mxu0 0.0
  %1395 = vmatpush.xpose.msra.mxu0 %v1378
  %1396 = vmatmul.f32.gmra.mxu0 %v1376
  %v1397 = vpop.f32.mrf.mxu0
  %v1398 = vadd.f32 0.0, %v1397
  %1399 = vdwg.mxu0
  %v1400 = vmul.f32 %v1398, 0.35355338
  %v1401 = vadd.f32 %v1400, %v200
  %v1402 = vsel %vm174, %v1401, -inf
  %1403 = vmax.xlane.f32.xlu0 %v1402
  %v1404 = vpop.xlane.xlu0 %1403
  %v1405 = vsub.f32 %v1401, %v1404
  %v1406 = vmul.f32 %v1405, 1.442695
  %v1407 = vpow.pop %v1406
  %v1408 = vsel %vm174, %v1407, 0.0
  %1409 = vadd.xlane.f32.xlu0 %v1408
  %v1410 = vpop.xlane.xlu0 %1409
  %v1411 = vrcp.pop %v1410
  %v1412 = vmul.f32 %v1410, %v1411
  %v1413 = vsub.f32 1.0, %v1412
  %v1414 = vmul.f32 %v1411, %v1413
  %v1415 = vadd.f32 %v1411, %v1414
  %vm1416 = vweird.f32 %v1410
  %vm1417 = vweird.f32 %v1411
  %vm1418 = vmor %vm1416, %vm1417
  %v1419 = vsel %vm1418, %v1411, %v1415
  %v1420 = vand.u32 2147483647, %v1410
  %vm1421 = vcmp.eq.f32.partialorder %v1420, 8.507059e+37
  %v1422 = vand.u32 %v1410, 2147483648
  %v1423 = vor.u32 1.1754944e-38, %v1422
  %v1424 = vsel %vm1421, %v1423, %v1419
  %v1425 = vmul.f32 %v1407, %v1424
  %1426 = vrot.lane.b32.xlu0 %v1128, 40
  %v1427 = vpop.permute.xlu0 %1426
  %v1430 = vsel %vm174, %v1425, 0
  %1432 = vmatpush.msra.mxu0 0.0
  %1433 = vmatpush.msra.mxu0 0.0
  %1434 = vmatpush.msra.mxu0 0.0
  %1435 = vmatpush.msra.mxu0 0.0
  %1436 = vmatpush.msra.mxu0 0.0
  %1437 = vmatpush.msra.mxu0 0.0
  %1438 = vmatpush.msra.mxu0 0.0
  %1439 = vmatpush.msra.mxu0 0.0
  %1440 = vmatpush.msra.mxu0 0.0
  %1441 = vmatpush.msra.mxu0 0.0
  %1442 = vmatpush.msra.mxu0 0.0
  %1443 = vmatpush.msra.mxu0 0.0
  %1444 = vmatpush.msra.mxu0 0.0
  %1445 = vmatpush.msra.mxu0 0.0
  %1446 = vmatpush.msra.mxu0 0.0
  %1447 = vmatpush.msra.mxu0 %v1427
  %1448 = vmatmul.f32.gmra.mxu0 %v1430
  %v1449 = vpop.f32.mrf.mxu0
  %v1450 = vadd.f32 0.0, %v1449
  %1451 = vdwg.mxu0
  %1453 = vrot.lane.b32.xlu0 %v1290, 8
  %v1454 = vpop.permute.xlu0 %1453
  %1457 = vrot.lane.b32.xlu0 %v1370, 16
  %v1458 = vpop.permute.xlu0 %1457
  %1461 = vrot.lane.b32.xlu0 %v1450, 24
  %v1462 = vpop.permute.xlu0 %1461
  %v1464 = vsel %vm174, %v1210, %v1454
  %v1465 = vsel %vm505, %v1464, %v1458
  %v1466 = vsel %vm507, %v1465, %v1462
  %1468 = vrot.lane.b32.xlu0 %v1131, 96
  %v1469 = vpop.permute.xlu0 %1468
  %v1470 = vsel %vm174, %v1131, 0
  %v1472 = vsel %vm174, %v1469, 0
  %1474 = vmatpush.xpose.msra.mxu0 0.0
  %1475 = vmatpush.xpose.msra.mxu0 0.0
  %1476 = vmatpush.xpose.msra.mxu0 0.0
  %1477 = vmatpush.xpose.msra.mxu0 0.0
  %1478 = vmatpush.xpose.msra.mxu0 0.0
  %1479 = vmatpush.xpose.msra.mxu0 0.0
  %1480 = vmatpush.xpose.msra.mxu0 0.0
  %1481 = vmatpush.xpose.msra.mxu0 0.0
  %1482 = vmatpush.xpose.msra.mxu0 0.0
  %1483 = vmatpush.xpose.msra.mxu0 0.0
  %1484 = vmatpush.xpose.msra.mxu0 0.0
  %1485 = vmatpush.xpose.msra.mxu0 0.0
  %1486 = vmatpush.xpose.msra.mxu0 0.0
  %1487 = vmatpush.xpose.msra.mxu0 0.0
  %1488 = vmatpush.xpose.msra.mxu0 0.0
  %1489 = vmatpush.xpose.msra.mxu0 %v1472
  %1490 = vmatmul.f32.gmra.mxu0 %v1470
  %v1491 = vpop.f32.mrf.mxu0
  %v1492 = vadd.f32 0.0, %v1491
  %1493 = vdwg.mxu0
  %v1494 = vmul.f32 %v1492, 0.35355338
  %v1495 = vadd.f32 %v1494, %v537
  %v1496 = vsel %vm174, %v1495, -inf
  %1497 = vmax.xlane.f32.xlu0 %v1496
  %v1498 = vpop.xlane.xlu0 %1497
  %v1499 = vsub.f32 %v1495, %v1498
  %v1500 = vmul.f32 %v1499, 1.442695
  %v1501 = vpow.pop %v1500
  %v1502 = vsel %vm174, %v1501, 0.0
  %1503 = vadd.xlane.f32.xlu0 %v1502
  %v1504 = vpop.xlane.xlu0 %1503
  %v1505 = vrcp.pop %v1504
  %v1506 = vmul.f32 %v1504, %v1505
  %v1507 = vsub.f32 1.0, %v1506
  %v1508 = vmul.f32 %v1505, %v1507
  %v1509 = vadd.f32 %v1505, %v1508
  %vm1510 = vweird.f32 %v1504
  %vm1511 = vweird.f32 %v1505
  %vm1512 = vmor %vm1510, %vm1511
  %v1513 = vsel %vm1512, %v1505, %v1509
  %v1514 = vand.u32 2147483647, %v1504
  %vm1515 = vcmp.eq.f32.partialorder %v1514, 8.507059e+37
  %v1516 = vand.u32 %v1504, 2147483648
  %v1517 = vor.u32 1.1754944e-38, %v1516
  %v1518 = vsel %vm1515, %v1517, %v1513
  %v1519 = vmul.f32 %v1501, %v1518
  %1520 = vrot.lane.b32.xlu0 %v1131, 64
  %v1521 = vpop.permute.xlu0 %1520
  %v1524 = vsel %vm174, %v1519, 0
  %1526 = vmatpush.msra.mxu0 0.0
  %1527 = vmatpush.msra.mxu0 0.0
  %1528 = vmatpush.msra.mxu0 0.0
  %1529 = vmatpush.msra.mxu0 0.0
  %1530 = vmatpush.msra.mxu0 0.0
  %1531 = vmatpush.msra.mxu0 0.0
  %1532 = vmatpush.msra.mxu0 0.0
  %1533 = vmatpush.msra.mxu0 0.0
  %1534 = vmatpush.msra.mxu0 0.0
  %1535 = vmatpush.msra.mxu0 0.0
  %1536 = vmatpush.msra.mxu0 0.0
  %1537 = vmatpush.msra.mxu0 0.0
  %1538 = vmatpush.msra.mxu0 0.0
  %1539 = vmatpush.msra.mxu0 0.0
  %1540 = vmatpush.msra.mxu0 0.0
  %1541 = vmatpush.msra.mxu0 %v1521
  %1542 = vmatmul.f32.gmra.mxu0 %v1524
  %v1543 = vpop.f32.mrf.mxu0
  %v1544 = vadd.f32 0.0, %v1543
  %1545 = vdwg.mxu0
  %1546 = vrot.lane.b32.xlu0 %v1131, 120
  %v1547 = vpop.permute.xlu0 %1546
  %1548 = vrot.lane.b32.xlu0 %v1131, 88
  %v1549 = vpop.permute.xlu0 %1548
  %v1550 = vsel %vm174, %v1547, 0
  %v1552 = vsel %vm174, %v1549, 0
  %1554 = vmatpush.xpose.msra.mxu0 0.0
  %1555 = vmatpush.xpose.msra.mxu0 0.0
  %1556 = vmatpush.xpose.msra.mxu0 0.0
  %1557 = vmatpush.xpose.msra.mxu0 0.0
  %1558 = vmatpush.xpose.msra.mxu0 0.0
  %1559 = vmatpush.xpose.msra.mxu0 0.0
  %1560 = vmatpush.xpose.msra.mxu0 0.0
  %1561 = vmatpush.xpose.msra.mxu0 0.0
  %1562 = vmatpush.xpose.msra.mxu0 0.0
  %1563 = vmatpush.xpose.msra.mxu0 0.0
  %1564 = vmatpush.xpose.msra.mxu0 0.0
  %1565 = vmatpush.xpose.msra.mxu0 0.0
  %1566 = vmatpush.xpose.msra.mxu0 0.0
  %1567 = vmatpush.xpose.msra.mxu0 0.0
  %1568 = vmatpush.xpose.msra.mxu0 0.0
  %1569 = vmatpush.xpose.msra.mxu0 %v1552
  %1570 = vmatmul.f32.gmra.mxu0 %v1550
  %v1571 = vpop.f32.mrf.mxu0
  %v1572 = vadd.f32 0.0, %v1571
  %1573 = vdwg.mxu0
  %v1574 = vmul.f32 %v1572, 0.35355338
  %v1575 = vadd.f32 %v1574, %v537
  %v1576 = vsel %vm174, %v1575, -inf
  %1577 = vmax.xlane.f32.xlu0 %v1576
  %v1578 = vpop.xlane.xlu0 %1577
  %v1579 = vsub.f32 %v1575, %v1578
  %v1580 = vmul.f32 %v1579, 1.442695
  %v1581 = vpow.pop %v1580
  %v1582 = vsel %vm174, %v1581, 0.0
  %1583 = vadd.xlane.f32.xlu0 %v1582
  %v1584 = vpop.xlane.xlu0 %1583
  %v1585 = vrcp.pop %v1584
  %v1586 = vmul.f32 %v1584, %v1585
  %v1587 = vsub.f32 1.0, %v1586
  %v1588 = vmul.f32 %v1585, %v1587
  %v1589 = vadd.f32 %v1585, %v1588
  %vm1590 = vweird.f32 %v1584
  %vm1591 = vweird.f32 %v1585
  %vm1592 = vmor %vm1590, %vm1591
  %v1593 = vsel %vm1592, %v1585, %v1589
  %v1594 = vand.u32 2147483647, %v1584
  %vm1595 = vcmp.eq.f32.partialorder %v1594, 8.507059e+37
  %v1596 = vand.u32 %v1584, 2147483648
  %v1597 = vor.u32 1.1754944e-38, %v1596
  %v1598 = vsel %vm1595, %v1597, %v1593
  %v1599 = vmul.f32 %v1581, %v1598
  %1600 = vrot.lane.b32.xlu0 %v1131, 56
  %v1601 = vpop.permute.xlu0 %1600
  %v1604 = vsel %vm174, %v1599, 0
  %1606 = vmatpush.msra.mxu0 0.0
  %1607 = vmatpush.msra.mxu0 0.0
  %1608 = vmatpush.msra.mxu0 0.0
  %1609 = vmatpush.msra.mxu0 0.0
  %1610 = vmatpush.msra.mxu0 0.0
  %1611 = vmatpush.msra.mxu0 0.0
  %1612 = vmatpush.msra.mxu0 0.0
  %1613 = vmatpush.msra.mxu0 0.0
  %1614 = vmatpush.msra.mxu0 0.0
  %1615 = vmatpush.msra.mxu0 0.0
  %1616 = vmatpush.msra.mxu0 0.0
  %1617 = vmatpush.msra.mxu0 0.0
  %1618 = vmatpush.msra.mxu0 0.0
  %1619 = vmatpush.msra.mxu0 0.0
  %1620 = vmatpush.msra.mxu0 0.0
  %1621 = vmatpush.msra.mxu0 %v1601
  %1622 = vmatmul.f32.gmra.mxu0 %v1604
  %v1623 = vpop.f32.mrf.mxu0
  %v1624 = vadd.f32 0.0, %v1623
  %1625 = vdwg.mxu0
  %1626 = vrot.lane.b32.xlu0 %v1131, 112
  %v1627 = vpop.permute.xlu0 %1626
  %1628 = vrot.lane.b32.xlu0 %v1131, 80
  %v1629 = vpop.permute.xlu0 %1628
  %v1630 = vsel %vm174, %v1627, 0
  %v1632 = vsel %vm174, %v1629, 0
  %1634 = vmatpush.xpose.msra.mxu0 0.0
  %1635 = vmatpush.xpose.msra.mxu0 0.0
  %1636 = vmatpush.xpose.msra.mxu0 0.0
  %1637 = vmatpush.xpose.msra.mxu0 0.0
  %1638 = vmatpush.xpose.msra.mxu0 0.0
  %1639 = vmatpush.xpose.msra.mxu0 0.0
  %1640 = vmatpush.xpose.msra.mxu0 0.0
  %1641 = vmatpush.xpose.msra.mxu0 0.0
  %1642 = vmatpush.xpose.msra.mxu0 0.0
  %1643 = vmatpush.xpose.msra.mxu0 0.0
  %1644 = vmatpush.xpose.msra.mxu0 0.0
  %1645 = vmatpush.xpose.msra.mxu0 0.0
  %1646 = vmatpush.xpose.msra.mxu0 0.0
  %1647 = vmatpush.xpose.msra.mxu0 0.0
  %1648 = vmatpush.xpose.msra.mxu0 0.0
  %1649 = vmatpush.xpose.msra.mxu0 %v1632
  %1650 = vmatmul.f32.gmra.mxu0 %v1630
  %v1651 = vpop.f32.mrf.mxu0
  %v1652 = vadd.f32 0.0, %v1651
  %1653 = vdwg.mxu0
  %v1654 = vmul.f32 %v1652, 0.35355338
  %v1655 = vadd.f32 %v1654, %v537
  %v1656 = vsel %vm174, %v1655, -inf
  %1657 = vmax.xlane.f32.xlu0 %v1656
  %v1658 = vpop.xlane.xlu0 %1657
  %v1659 = vsub.f32 %v1655, %v1658
  %v1660 = vmul.f32 %v1659, 1.442695
  %v1661 = vpow.pop %v1660
  %v1662 = vsel %vm174, %v1661, 0.0
  %1663 = vadd.xlane.f32.xlu0 %v1662
  %v1664 = vpop.xlane.xlu0 %1663
  %v1665 = vrcp.pop %v1664
  %v1666 = vmul.f32 %v1664, %v1665
  %v1667 = vsub.f32 1.0, %v1666
  %v1668 = vmul.f32 %v1665, %v1667
  %v1669 = vadd.f32 %v1665, %v1668
  %vm1670 = vweird.f32 %v1664
  %vm1671 = vweird.f32 %v1665
  %vm1672 = vmor %vm1670, %vm1671
  %v1673 = vsel %vm1672, %v1665, %v1669
  %v1674 = vand.u32 2147483647, %v1664
  %vm1675 = vcmp.eq.f32.partialorder %v1674, 8.507059e+37
  %v1676 = vand.u32 %v1664, 2147483648
  %v1677 = vor.u32 1.1754944e-38, %v1676
  %v1678 = vsel %vm1675, %v1677, %v1673
  %v1679 = vmul.f32 %v1661, %v1678
  %1680 = vrot.lane.b32.xlu0 %v1131, 48
  %v1681 = vpop.permute.xlu0 %1680
  %v1684 = vsel %vm174, %v1679, 0
  %1686 = vmatpush.msra.mxu0 0.0
  %1687 = vmatpush.msra.mxu0 0.0
  %1688 = vmatpush.msra.mxu0 0.0
  %1689 = vmatpush.msra.mxu0 0.0
  %1690 = vmatpush.msra.mxu0 0.0
  %1691 = vmatpush.msra.mxu0 0.0
  %1692 = vmatpush.msra.mxu0 0.0
  %1693 = vmatpush.msra.mxu0 0.0
  %1694 = vmatpush.msra.mxu0 0.0
  %1695 = vmatpush.msra.mxu0 0.0
  %1696 = vmatpush.msra.mxu0 0.0
  %1697 = vmatpush.msra.mxu0 0.0
  %1698 = vmatpush.msra.mxu0 0.0
  %1699 = vmatpush.msra.mxu0 0.0
  %1700 = vmatpush.msra.mxu0 0.0
  %1701 = vmatpush.msra.mxu0 %v1681
  %1702 = vmatmul.f32.gmra.mxu0 %v1684
  %v1703 = vpop.f32.mrf.mxu0
  %v1704 = vadd.f32 0.0, %v1703
  %1705 = vdwg.mxu0
  %1706 = vrot.lane.b32.xlu0 %v1131, 104
  %v1707 = vpop.permute.xlu0 %1706
  %1708 = vrot.lane.b32.xlu0 %v1131, 72
  %v1709 = vpop.permute.xlu0 %1708
  %v1710 = vsel %vm174, %v1707, 0
  %v1712 = vsel %vm174, %v1709, 0
  %1714 = vmatpush.xpose.msra.mxu0 0.0
  %1715 = vmatpush.xpose.msra.mxu0 0.0
  %1716 = vmatpush.xpose.msra.mxu0 0.0
  %1717 = vmatpush.xpose.msra.mxu0 0.0
  %1718 = vmatpush.xpose.msra.mxu0 0.0
  %1719 = vmatpush.xpose.msra.mxu0 0.0
  %1720 = vmatpush.xpose.msra.mxu0 0.0
  %1721 = vmatpush.xpose.msra.mxu0 0.0
  %1722 = vmatpush.xpose.msra.mxu0 0.0
  %1723 = vmatpush.xpose.msra.mxu0 0.0
  %1724 = vmatpush.xpose.msra.mxu0 0.0
  %1725 = vmatpush.xpose.msra.mxu0 0.0
  %1726 = vmatpush.xpose.msra.mxu0 0.0
  %1727 = vmatpush.xpose.msra.mxu0 0.0
  %1728 = vmatpush.xpose.msra.mxu0 0.0
  %1729 = vmatpush.xpose.msra.mxu0 %v1712
  %1730 = vmatmul.f32.gmra.mxu0 %v1710
  %v1731 = vpop.f32.mrf.mxu0
  %v1732 = vadd.f32 0.0, %v1731
  %1733 = vdwg.mxu0
  %v1734 = vmul.f32 %v1732, 0.35355338
  %v1735 = vadd.f32 %v1734, %v537
  %v1736 = vsel %vm174, %v1735, -inf
  %1737 = vmax.xlane.f32.xlu0 %v1736
  %v1738 = vpop.xlane.xlu0 %1737
  %v1739 = vsub.f32 %v1735, %v1738
  %v1740 = vmul.f32 %v1739, 1.442695
  %v1741 = vpow.pop %v1740
  %v1742 = vsel %vm174, %v1741, 0.0
  %1743 = vadd.xlane.f32.xlu0 %v1742
  %v1744 = vpop.xlane.xlu0 %1743
  %v1745 = vrcp.pop %v1744
  %v1746 = vmul.f32 %v1744, %v1745
  %v1747 = vsub.f32 1.0, %v1746
  %v1748 = vmul.f32 %v1745, %v1747
  %v1749 = vadd.f32 %v1745, %v1748
  %vm1750 = vweird.f32 %v1744
  %vm1751 = vweird.f32 %v1745
  %vm1752 = vmor %vm1750, %vm1751
  %v1753 = vsel %vm1752, %v1745, %v1749
  %v1754 = vand.u32 2147483647, %v1744
  %vm1755 = vcmp.eq.f32.partialorder %v1754, 8.507059e+37
  %v1756 = vand.u32 %v1744, 2147483648
  %v1757 = vor.u32 1.1754944e-38, %v1756
  %v1758 = vsel %vm1755, %v1757, %v1753
  %v1759 = vmul.f32 %v1741, %v1758
  %1760 = vrot.lane.b32.xlu0 %v1131, 40
  %v1761 = vpop.permute.xlu0 %1760
  %v1764 = vsel %vm174, %v1759, 0
  %1766 = vmatpush.msra.mxu0 0.0
  %1767 = vmatpush.msra.mxu0 0.0
  %1768 = vmatpush.msra.mxu0 0.0
  %1769 = vmatpush.msra.mxu0 0.0
  %1770 = vmatpush.msra.mxu0 0.0
  %1771 = vmatpush.msra.mxu0 0.0
  %1772 = vmatpush.msra.mxu0 0.0
  %1773 = vmatpush.msra.mxu0 0.0
  %1774 = vmatpush.msra.mxu0 0.0
  %1775 = vmatpush.msra.mxu0 0.0
  %1776 = vmatpush.msra.mxu0 0.0
  %1777 = vmatpush.msra.mxu0 0.0
  %1778 = vmatpush.msra.mxu0 0.0
  %1779 = vmatpush.msra.mxu0 0.0
  %1780 = vmatpush.msra.mxu0 0.0
  %1781 = vmatpush.msra.mxu0 %v1761
  %1782 = vmatmul.f32.gmra.mxu0 %v1764
  %v1783 = vpop.f32.mrf.mxu0
  %v1784 = vadd.f32 0.0, %v1783
  %1785 = vdwg.mxu0
  %1787 = vrot.lane.b32.xlu0 %v1624, 8
  %v1788 = vpop.permute.xlu0 %1787
  %1791 = vrot.lane.b32.xlu0 %v1704, 16
  %v1792 = vpop.permute.xlu0 %1791
  %1795 = vrot.lane.b32.xlu0 %v1784, 24
  %v1796 = vpop.permute.xlu0 %1795
  %v1798 = vsel %vm174, %v1544, %v1788
  %v1799 = vsel %vm505, %v1798, %v1792
  %v1800 = vsel %vm507, %v1799, %v1796
  %s1801 = scalar_lea.vmem %s6, 32
  %v1802 = vld [vmem:[%s1801] sm:$0xff]
  %v1803 = vld [vmem:[%s1801 + $0x8] sm:$0xff]
  %v1804 = vld [vmem:[%s1801 + $0x10] sm:$0xff]
  %v1805 = vld [vmem:[%s1801 + $0x18] sm:$0xff]
  %s1806 = scalar_lea.vmem %s7, 1
  %v1807 = vld [vmem:[%s1806] sm:$0x1]
  %v1809 = vperm.slane %v1807, 0
  %v1812 = vsel %vm72, %v1466, 0
  %v1815 = vsel %vm72, %v1800, 0
  %1817 = vmatpush.msra.mxu0 0.0
  %1818 = vmatpush.msra.mxu0 0.0
  %1819 = vmatpush.msra.mxu0 0.0
  %1820 = vmatpush.msra.mxu0 0.0
  %1821 = vmatpush.msra.mxu0 0.0
  %1822 = vmatpush.msra.mxu0 0.0
  %1823 = vmatpush.msra.mxu0 0.0
  %1824 = vmatpush.msra.mxu0 0.0
  %1825 = vmatpush.msra.mxu0 0.0
  %1826 = vmatpush.msra.mxu0 0.0
  %1827 = vmatpush.msra.mxu0 0.0
  %1828 = vmatpush.msra.mxu0 0.0
  %1829 = vmatpush.msra.mxu0 %v1805
  %1830 = vmatpush.msra.mxu0 %v1804
  %1831 = vmatpush.msra.mxu0 %v1803
  %1832 = vmatpush.msra.mxu0 %v1802
  %1833 = vmatmul.f32.gmra.mxu0 %v1812
  %v1834 = vpop.f32.mrf.mxu0
  %v1835 = vadd.f32 %v1809, %v1834
  %1836 = vmatmul.f32.gmra.mxu0 %v1815
  %v1837 = vpop.f32.mrf.mxu0
  %v1838 = vadd.f32 %v1809, %v1837
  %1839 = vdwg.mxu0
  %v1840 = vadd.f32 %v1835, %v1092
  %v1841 = vadd.f32 %v1838, %v1093
  %s1842 = scalar_lea.vmem %s8, 1
  %v1843 = vld [vmem:[%s1842] sm:$0x1]
  %s1844 = scalar_lea.vmem %s9, 1
  %v1845 = vld [vmem:[%s1844] sm:$0x1]
  %v1846 = vsel %vm72, %v1840, 0.0
  %1847 = vadd.xlane.f32.xlu0 %v1846
  %v1848 = vpop.xlane.xlu0 %1847
  %v1849 = vsel %vm72, %v1841, 0.0
  %1850 = vadd.xlane.f32.xlu0 %v1849
  %v1851 = vpop.xlane.xlu0 %1850
  %v1852 = vmul.f32 %v1848, %v85
  %v1853 = vmul.f32 %v1851, %v85
  %v1854 = vsub.f32 %v1840, %v1852
  %v1855 = vsub.f32 %v1841, %v1853
  %v1856 = vmul.f32 %v1854, %v1854
  %v1857 = vmul.f32 %v1855, %v1855
  %v1858 = vsel %vm72, %v1856, 0.0
  %1859 = vadd.xlane.f32.xlu0 %v1858
  %v1860 = vpop.xlane.xlu0 %1859
  %v1861 = vsel %vm72, %v1857, 0.0
  %1862 = vadd.xlane.f32.xlu0 %v1861
  %v1863 = vpop.xlane.xlu0 %1862
  %v1864 = vmul.f32 %v1860, %v85
  %v1865 = vmul.f32 %v1863, %v85
  %v1866 = vadd.f32 %v1864, 1e-12
  %v1867 = vadd.f32 %v1865, 1e-12
  %v1868 = vrsqrt.pop %v1866
  %v1869 = vmul.f32 %v1868, %v1866
  %v1870 = vmul.f32 %v1869, %v1868
  %v1871 = vmul.f32 0.5, %v1870
  %v1872 = vsub.f32 1.5, %v1871
  %v1873 = vmul.f32 %v1868, %v1872
  %vm1874 = vweird.f32 %v1866
  %vm1875 = vweird.f32 %v1868
  %vm1876 = vmor %vm1874, %vm1875
  %v1877 = vsel %vm1876, %v1868, %v1873
  %v1878 = vrsqrt.pop %v1867
  %v1879 = vmul.f32 %v1878, %v1867
  %v1880 = vmul.f32 %v1879, %v1878
  %v1881 = vmul.f32 0.5, %v1880
  %v1882 = vsub.f32 1.5, %v1881
  %v1883 = vmul.f32 %v1878, %v1882
  %vm1884 = vweird.f32 %v1867
  %vm1885 = vweird.f32 %v1878
  %vm1886 = vmor %vm1884, %vm1885
  %v1887 = vsel %vm1886, %v1878, %v1883
  %v1888 = vmul.f32 %v1854, %v1877
  %v1889 = vmul.f32 %v1855, %v1887
  %v1891 = vperm.slane %v1843, 0
  %v1893 = vmul.f32 %v1888, %v1891
  %v1894 = vmul.f32 %v1889, %v1891
  %v1896 = vperm.slane %v1845, 0
  %v1898 = vadd.f32 %v1893, %v1896
  %v1899 = vadd.f32 %v1894, %v1896
  %s1900 = scalar_lea.vmem %s10, 32
  %v1901 = vld [vmem:[%s1900] sm:$0xff]
  %v1902 = vld [vmem:[%s1900 + $0x8] sm:$0xff]
  %v1903 = vld [vmem:[%s1900 + $0x10] sm:$0xff]
  %v1904 = vld [vmem:[%s1900 + $0x18] sm:$0xff]
  %s1905 = scalar_lea.vmem %s11, 1
  %v1906 = vld [vmem:[%s1905] sm:$0x1]
  %v1908 = vperm.slane %v1906, 0
  %v1911 = vsel %vm72, %v1898, 0
  %v1914 = vsel %vm72, %v1899, 0
  %1916 = vmatpush.msra.mxu0 0.0
  %1917 = vmatpush.msra.mxu0 0.0
  %1918 = vmatpush.msra.mxu0 0.0
  %1919 = vmatpush.msra.mxu0 0.0
  %1920 = vmatpush.msra.mxu0 0.0
  %1921 = vmatpush.msra.mxu0 0.0
  %1922 = vmatpush.msra.mxu0 0.0
  %1923 = vmatpush.msra.mxu0 0.0
  %1924 = vmatpush.msra.mxu0 0.0
  %1925 = vmatpush.msra.mxu0 0.0
  %1926 = vmatpush.msra.mxu0 0.0
  %1927 = vmatpush.msra.mxu0 0.0
  %1928 = vmatpush.msra.mxu0 %v1904
  %1929 = vmatpush.msra.mxu0 %v1903
  %1930 = vmatpush.msra.mxu0 %v1902
  %1931 = vmatpush.msra.mxu0 %v1901
  %1932 = vmatmul.f32.gmra.mxu0 %v1911
  %v1933 = vpop.f32.mrf.mxu0
  %v1934 = vadd.f32 %v1908, %v1933
  %1935 = vmatmul.f32.gmra.mxu0 %v1914
  %v1936 = vpop.f32.mrf.mxu0
  %v1937 = vadd.f32 %v1908, %v1936
  %1938 = vdwg.mxu0
  %v1939 = vmul.f32 %v1934, 0.5
  %v1940 = vmul.f32 %v1937, 0.5
  %v1941 = vmul.f32 %v1934, 0.044715
  %v1942 = vmul.f32 %v1937, 0.044715
  %v1943 = vmul.f32 %v1941, %v1934
  %v1944 = vmul.f32 %v1942, %v1937
  %v1945 = vmul.f32 %v1943, %v1934
  %v1946 = vmul.f32 %v1944, %v1937
  %v1947 = vadd.f32 %v1934, %v1945
  %v1948 = vadd.f32 %v1937, %v1946
  %v1949 = vmul.f32 %v1947, 0.7978846
  %v1950 = vmul.f32 %v1948, 0.7978846
  %v1951 = vtanh.pop %v1949
  %v1952 = vtanh.pop %v1950
  %v1953 = vadd.f32 %v1951, 1.0
  %v1954 = vadd.f32 %v1952, 1.0
  %v1955 = vmul.f32 %v1939, %v1953
  %v1956 = vmul.f32 %v1940, %v1954
  %s1957 = scalar_lea.vmem %s12, 64
  %v1958 = vld [vmem:[%s1957] sm:$0xff]
  %v1959 = vld [vmem:[%s1957 + $0x8] sm:$0xff]
  %v1960 = vld [vmem:[%s1957 + $0x10] sm:$0xff]
  %v1961 = vld [vmem:[%s1957 + $0x18] sm:$0xff]
  %v1962 = vld [vmem:[%s1957 + $0x20] sm:$0xff]
  %v1963 = vld [vmem:[%s1957 + $0x28] sm:$0xff]
  %v1964 = vld [vmem:[%s1957 + $0x30] sm:$0xff]
  %v1965 = vld [vmem:[%s1957 + $0x38] sm:$0xff]
  %s1966 = scalar_lea.vmem %s13, 1
  %v1967 = vld [vmem:[%s1966] sm:$0x1]
  %v1969 = vperm.slane %v1967, 0
  %v1972 = vsel %vm1006, %v1955, 0
  %v1975 = vsel %vm1006, %v1956, 0
  %1977 = vmatpush.msra.mxu0 0.0
  %1978 = vmatpush.msra.mxu0 0.0
  %1979 = vmatpush.msra.mxu0 0.0
  %1980 = vmatpush.msra.mxu0 0.0
  %1981 = vmatpush.msra.mxu0 0.0
  %1982 = vmatpush.msra.mxu0 0.0
  %1983 = vmatpush.msra.mxu0 0.0
  %1984 = vmatpush.msra.mxu0 0.0
  %1985 = vmatpush.msra.mxu0 %v1965
  %1986 = vmatpush.msra.mxu0 %v1964
  %1987 = vmatpush.msra.mxu0 %v1963
  %1988 = vmatpush.msra.mxu0 %v1962
  %1989 = vmatpush.msra.mxu0 %v1961
  %1990 = vmatpush.msra.mxu0 %v1960
  %1991 = vmatpush.msra.mxu0 %v1959
  %1992 = vmatpush.msra.mxu0 %v1958
  %1993 = vmatmul.f32.gmra.mxu0 %v1972
  %v1994 = vpop.f32.mrf.mxu0
  %v1995 = vadd.f32 %v1969, %v1994
  %1996 = vmatmul.f32.gmra.mxu0 %v1975
  %v1997 = vpop.f32.mrf.mxu0
  %v1998 = vadd.f32 %v1969, %v1997
  %1999 = vdwg.mxu0
  %v2000 = vadd.f32 %v1995, %v1898
  %v2001 = vadd.f32 %v1998, %v1899
  %s2002 = scalar_lea.vmem %s14, 1
  %v2003 = vld [vmem:[%s2002] sm:$0x1]
  %s2004 = scalar_lea.vmem %s15, 1
  %v2005 = vld [vmem:[%s2004] sm:$0x1]
  %v2006 = vsel %vm72, %v2000, 0.0
  %2007 = vadd.xlane.f32.xlu0 %v2006
  %v2008 = vpop.xlane.xlu0 %2007
  %v2009 = vsel %vm72, %v2001, 0.0
  %2010 = vadd.xlane.f32.xlu0 %v2009
  %v2011 = vpop.xlane.xlu0 %2010
  %v2012 = vmul.f32 %v2008, %v85
  %v2013 = vmul.f32 %v2011, %v85
  %v2014 = vsub.f32 %v2000, %v2012
  %v2015 = vsub.f32 %v2001, %v2013
  %v2016 = vmul.f32 %v2014, %v2014
  %v2017 = vmul.f32 %v2015, %v2015
  %v2018 = vsel %vm72, %v2016, 0.0
  %2019 = vadd.xlane.f32.xlu0 %v2018
  %v2020 = vpop.xlane.xlu0 %2019
  %v2021 = vsel %vm72, %v2017, 0.0
  %2022 = vadd.xlane.f32.xlu0 %v2021
  %v2023 = vpop.xlane.xlu0 %2022
  %v2024 = vmul.f32 %v2020, %v85
  %v2025 = vmul.f32 %v2023, %v85
  %v2026 = vadd.f32 %v2024, 1e-12
  %v2027 = vadd.f32 %v2025, 1e-12
  %v2028 = vrsqrt.pop %v2026
  %v2029 = vmul.f32 %v2028, %v2026
  %v2030 = vmul.f32 %v2029, %v2028
  %v2031 = vmul.f32 0.5, %v2030
  %v2032 = vsub.f32 1.5, %v2031
  %v2033 = vmul.f32 %v2028, %v2032
  %vm2034 = vweird.f32 %v2026
  %vm2035 = vweird.f32 %v2028
  %vm2036 = vmor %vm2034, %vm2035
  %v2037 = vsel %vm2036, %v2028, %v2033
  %v2038 = vrsqrt.pop %v2027
  %v2039 = vmul.f32 %v2038, %v2027
  %v2040 = vmul.f32 %v2039, %v2038
  %v2041 = vmul.f32 0.5, %v2040
  %v2042 = vsub.f32 1.5, %v2041
  %v2043 = vmul.f32 %v2038, %v2042
  %vm2044 = vweird.f32 %v2027
  %vm2045 = vweird.f32 %v2038
  %vm2046 = vmor %vm2044, %vm2045
  %v2047 = vsel %vm2046, %v2038, %v2043
  %v2048 = vmul.f32 %v2014, %v2037
  %v2049 = vmul.f32 %v2015, %v2047
  %v2051 = vperm.slane %v2003, 0
  %v2053 = vmul.f32 %v2048, %v2051
  %v2054 = vmul.f32 %v2049, %v2051
  %v2056 = vperm.slane %v2005, 0
  %v2058 = vadd.f32 %v2053, %v2056
  %v2059 = vadd.f32 %v2054, %v2056
  %v2061 = vrot.slane %v2059, 7
  %vm2063 = vcmask 1040384
  %v2064 = vsel %vm2063, %v2058, %v2061
  %v2065 = vld [vmem:[%s16] sm:$0xff]
  %v2066 = vld [vmem:[%s16 + $0x8] sm:$0xff]
  %v2067 = vld [vmem:[%s16 + $0x10] sm:$0xff]
  %v2068 = vld [vmem:[%s16 + $0x18] sm:$0xff]
  %v2069 = vld [vmem:[%s17] sm:$0x1]
  %v2071 = vperm.slane %v2069, 0
  %v2074 = vsel %vm72, %v2064, 0
  %2076 = vmatpush.msra.mxu0 0.0
  %2077 = vmatpush.msra.mxu0 0.0
  %2078 = vmatpush.msra.mxu0 0.0
  %2079 = vmatpush.msra.mxu0 0.0
  %2080 = vmatpush.msra.mxu0 0.0
  %2081 = vmatpush.msra.mxu0 0.0
  %2082 = vmatpush.msra.mxu0 0.0
  %2083 = vmatpush.msra.mxu0 0.0
  %2084 = vmatpush.msra.mxu0 0.0
  %2085 = vmatpush.msra.mxu0 0.0
  %2086 = vmatpush.msra.mxu0 0.0
  %2087 = vmatpush.msra.mxu0 0.0
  %2088 = vmatpush.msra.mxu0 %v2068
  %2089 = vmatpush.msra.mxu0 %v2067
  %2090 = vmatpush.msra.mxu0 %v2066
  %2091 = vmatpush.msra.mxu0 %v2065
  %2092 = vmatmul.f32.gmra.mxu0 %v2074
  %v2093 = vpop.f32.mrf.mxu0
  %v2094 = vadd.f32 %v2071, %v2093
  %2095 = vdwg.mxu0
  %v2096 = vtanh.pop %v2094
  %v2097 = vld [vmem:[%s18] sm:$0xff]
  %v2098 = vld [vmem:[%s18 + $0x8] sm:$0xff]
  %v2099 = vld [vmem:[%s18 + $0x10] sm:$0xff]
  %v2100 = vld [vmem:[%s18 + $0x18] sm:$0xff]
  %v2101 = vld [vmem:[%s19] sm:$0x1]
  %v2103 = vperm.slane %v2101, 0
  %v2106 = vsel %vm72, %v2096, 0
  %2108 = vmatpush.msra.mxu0 0.0
  %2109 = vmatpush.msra.mxu0 0.0
  %2110 = vmatpush.msra.mxu0 0.0
  %2111 = vmatpush.msra.mxu0 0.0
  %2112 = vmatpush.msra.mxu0 0.0
  %2113 = vmatpush.msra.mxu0 0.0
  %2114 = vmatpush.msra.mxu0 0.0
  %2115 = vmatpush.msra.mxu0 0.0
  %2116 = vmatpush.msra.mxu0 0.0
  %2117 = vmatpush.msra.mxu0 0.0
  %2118 = vmatpush.msra.mxu0 0.0
  %2119 = vmatpush.msra.mxu0 0.0
  %2120 = vmatpush.msra.mxu0 %v2100
  %2121 = vmatpush.msra.mxu0 %v2099
  %2122 = vmatpush.msra.mxu0 %v2098
  %2123 = vmatpush.msra.mxu0 %v2097
  %2124 = vmatmul.f32.gmra.mxu0 %v2106
  %v2125 = vpop.f32.mrf.mxu0
  %v2126 = vadd.f32 %v2103, %v2125
  %2127 = vdwg.mxu0
  %2129 = vrot.lane.b32.xlu0 %v2126, 1
  %v2130 = vpop.permute.xlu0 %2129
  %v2132 = vsub.f32 %v2126, %v2130
  %2134 = vrot.lane.b32.xlu0 %v2132, 127
  %v2135 = vpop.permute.xlu0 %2134
  %vm2137 = vcmask 1024
  %2138 = vst.msk [vmem:[%s20] sm:$0x3] %vm2137, %v2135
  // Predicated region
  $region82: #{intensive_reader_forward.3} parent=0 // pred_check
    _
  $region83: #{intensive_reader_forward.3} parent=0 // pred_check_branch
    %2140 = sbr.rel (0) target = $region85
  $region84: #{intensive_reader_forward.3} parent=0 // pred_region
    _
  $region85: #{intensive_reader_forward.3} parent=0 // pred_fallthru
    _
  // Predicated region
  $region86: #{intensive_reader_forward.3} parent=0 // pred_check
    _
  $region87: #{intensive_reader_forward.3} parent=0 // pred_check_branch
    %2142 = sbr.rel (0) target = $region89
  $region88: #{intensive_reader_forward.3} parent=0 // pred_region
    _
  $region89: #{intensive_reader_forward.3} parent=0 // pred_fallthru
    _

</llo_original>
